<compile_context>
chip_gen: v6e
topology: v6e:2x2x1
jax: 0.10.0
libtpu: 0.0.40
codegen_flags: <defaults>
</compile_context>

<pallas_src>
import functools
import math

import jax
import jax.numpy as jnp
from jax.experimental import pallas as pl
from jax.experimental.pallas import tpu as pltpu


def _round_up(x, m):
    return ((x + m - 1) // m) * m


def mixer_agg_kernel(tok_ref, nnf_ref, nef_ref, etf_ref, vec_ref,
                     w0c_ref, w1c_ref, wout_ref, out_ref, *,
                     Bt, K, D, Kh, Dh, out_pad, mm_dtype, approx_gelu):
    f32 = jnp.float32

    def gelu(z):
        if approx_gelu:
            # opt-in tanh approximation (EUP path); deviates from torch's default erf GeLU
            return 0.5 * z * (1.0 + jnp.tanh(0.7978845608028654 *
                                             (z + 0.044715 * z * z * z)))
        return 0.5 * z * (1.0 + jax.lax.erf(z * 0.7071067811865476))

    def ln(z, g, b, eps=1e-5):
        # fused one-pass statistics: var = E[z^2] - E[z]^2
        m = jnp.mean(z, axis=-1, keepdims=True)
        ms = jnp.mean(z * z, axis=-1, keepdims=True)
        return (z - m) * jax.lax.rsqrt(ms - m * m + eps) * g + b

    def mm(a, w_ref):
        # weights are pre-cast to mm_dtype in the wrapper; f32 accumulation kept
        return jnp.dot(a.astype(mm_dtype), w_ref[...],
                       preferred_element_type=jnp.float32)

    vec = vec_ref[...].astype(f32)                      # (9, maxw) packed LN params/biases
    tln_g, tln_b = vec[0:1, :D], vec[1:2, :D]
    cln_g, cln_b = vec[2:3, :D], vec[3:4, :D]
    fln_g, fln_b = vec[4:5, :D], vec[5:6, :D]
    b0c = vec[6:7, :Dh]
    b1c = vec[7:8, :D]
    bout = vec[8:9, :out_pad]

    # ---- assemble the (Bt*K, D) activation slab directly in VMEM (no wrapper concat) ----
    x = jnp.concatenate([nnf_ref[...], nef_ref[...], etf_ref[...]],
                        axis=-1).astype(f32)            # (Bt*K, D)
    x3 = x.reshape(Bt, K, D)
    x_k = [x3[:, k, :] for k in range(K)]               # K lane-dense (Bt, D) slabs

    # ---- token mixer: per-neighbor scalar-broadcast FMAs (no transposes, no skinny MXU) ----
    # SMEM table layout: [w0t (Kh*K) | b0t (Kh) | w1t (K*Kh) | b1t (K)]
    O1 = Kh * K
    O2 = O1 + Kh
    O3 = O2 + K * Kh

    xn_k = [ln(xk, tln_g, tln_b) for xk in x_k]
    t0 = []
    for h in range(Kh):
        a = xn_k[0] * tok_ref[h * K]
        for k in range(1, K):
            a = a + xn_k[k] * tok_ref[h * K + k]
        t0.append(gelu(a + tok_ref[O1 + h]))
    for k in range(K):
        a = t0[0] * tok_ref[O2 + k * Kh]
        for h in range(1, Kh):
            a = a + t0[h] * tok_ref[O2 + k * Kh + h]
        x_k[k] = x_k[k] + a + tok_ref[O3 + k]           # residual

    # ---- channel mixer + final LN + neighbor mean, per slab (stays lane-dense) ----
    h_sum = None
    for k in range(K):
        cn = ln(x_k[k], cln_g, cln_b)                   # (Bt, D)
        c0 = gelu(mm(cn, w0c_ref) + b0c)                # (Bt, Dh)
        xk = x_k[k] + mm(c0, w1c_ref) + b1c             # (Bt, D)
        hk = ln(xk, fln_g, fln_b)
        h_sum = hk if h_sum is None else h_sum + hk
    h = h_sum * (1.0 / K)                               # mean over neighbors, (Bt, D)

    # ---- output Linear (lane-dense: out_pad is a multiple of 128) ----
    out_ref[...] = (mm(h, wout_ref) + bout).astype(out_ref.dtype)


def init_params(key, num_neighbor, dim_node, dim_edge, dim_time, dim_out):
    """Deterministic synthetic parameters (PyTorch Linear-like uniform init)."""
    D = dim_node + dim_edge + dim_time
    Kh = max(int(0.5 * num_neighbor), 1)        # token_expansion_factor = 0.5
    Dh = max(int(4.0 * D), 1)                   # channel_expansion_factor = 4.0
    ks = jax.random.split(key, 5)

    def lin(k, out_d, in_d):
        k1, k2 = jax.random.split(k)
        bound = 1.0 / math.sqrt(in_d)
        w = jax.random.uniform(k1, (out_d, in_d), jnp.float32, -bound, bound)
        b = jax.random.uniform(k2, (1, out_d), jnp.float32, -bound, bound)
        return w, b

    w0t, b0t = lin(ks[0], Kh, num_neighbor)
    w1t, b1t = lin(ks[1], num_neighbor, Kh)
    w0c, b0c = lin(ks[2], Dh, D)
    w1c, b1c = lin(ks[3], D, Dh)
    wout, bout = lin(ks[4], dim_out, D)
    ones = jnp.ones((1, D), jnp.float32)
    zeros = jnp.zeros((1, D), jnp.float32)
    return dict(tln_g=ones, tln_b=zeros, w0t=w0t, b0t=b0t, w1t=w1t, b1t=b1t,
                cln_g=ones, cln_b=zeros, w0c=w0c, b0c=b0c, w1c=w1c, b1c=b1c,
                fln_g=ones, fln_b=zeros, wout=wout, bout=bout)


def _pack_params(params, K, D, Kh, Dh, dim_out, out_pad, mm_dtype):
    """SMEM scalar table (token mixer), packed VMEM vec table, pre-transposed MXU weights."""
    # token-mixer scalars -> flat SMEM table: [w0t | b0t | w1t | b1t]
    tok = jnp.concatenate([
        params["w0t"].reshape(-1),              # (Kh, K) row-major: w0t[h,k] at h*K+k
        params["b0t"].reshape(-1),              # (Kh,)
        params["w1t"].reshape(-1),              # (K, Kh) row-major: w1t[k,h] at k*Kh+h
        params["b1t"].reshape(-1),              # (K,)
    ]).astype(jnp.float32)

    # LN params + channel/out biases -> one small VMEM table
    maxw = _round_up(max(D, Dh, out_pad), 128)

    def row(v, n):
        return jnp.pad(v.reshape(-1).astype(jnp.float32), (0, maxw - n))

    bout_p = jnp.pad(params["bout"].reshape(-1).astype(jnp.float32),
                     (0, out_pad - dim_out))
    vec = jnp.stack([
        row(params["tln_g"], D), row(params["tln_b"], D),
        row(params["cln_g"], D), row(params["cln_b"], D),
        row(params["fln_g"], D), row(params["fln_b"], D),
        row(params["b0c"], Dh), row(params["b1c"], D),
        row(bout_p, out_pad),
    ], axis=0)                                  # (9, maxw)

    # pre-transposed (contraction on last dim) and pre-cast MXU weights
    w0c_T = params["w0c"].T.astype(mm_dtype)                               # (D, Dh)
    w1c_T = params["w1c"].T.astype(mm_dtype)                               # (Dh, D)
    wout_T = jnp.pad(params["wout"].astype(jnp.float32),
                     ((0, out_pad - dim_out), (0, 0))).T.astype(mm_dtype)  # (D, out_pad)
    return tok, vec, w0c_T, w1c_T, wout_T


def mixer_aggregator(params, root_node_feature, zero_time_feat,
                     neighbor_node_feature, neighbor_edge_feature, edge_time_feat,
                     *, num_neighbor, batch_tile=512,
                     matmul_dtype=jnp.bfloat16, approx_gelu=False):
    # root_node_feature / zero_time_feat are unused by the PyTorch forward.
    del root_node_feature, zero_time_feat
    # matmul_dtype=jnp.float32 gives an exact (1e-4) match of the f32 reference.
    K = num_neighbor
    d_n = neighbor_node_feature.shape[-1]
    d_e = neighbor_edge_feature.shape[-1]
    d_t = edge_time_feat.shape[-1]
    # TODO(synk): zero-width feature groups (e.g. dim_edge_feat == 0) would need the
    # corresponding input dropped from in_specs; not handled here.
    assert d_n > 0 and d_e > 0 and d_t > 0
    D = d_n + d_e + d_t
    BK = neighbor_node_feature.shape[0]
    assert BK % K == 0
    B = BK // K
    dim_out = params["wout"].shape[0]
    Kh = params["w0t"].shape[0]
    Dh = params["w0c"].shape[0]
    out_pad = _round_up(dim_out, 128)

    # batch tiling: one big tile when it fits; no forced grid split (single-TC v5e/v6e).
    Bt = max(8, min(_round_up(batch_tile, 8), _round_up(B, 8)))
    n_steps = pl.cdiv(B, Bt)
    B_pad = n_steps * Bt

    def prep(a):
        if a.dtype != jnp.float32:
            a = a.astype(jnp.float32)
        if B_pad != B:
            a = jnp.pad(a, ((0, (B_pad - B) * K), (0, 0)))
        return a

    nnf = prep(neighbor_node_feature)
    nef = prep(neighbor_edge_feature)
    etf = prep(edge_time_feat)

    tok, vec, w0c_T, w1c_T, wout_T = _pack_params(
        params, K, D, Kh, Dh, dim_out, out_pad, matmul_dtype)

    kernel = functools.partial(
        mixer_agg_kernel, Bt=Bt, K=K, D=D, Kh=Kh, Dh=Dh, out_pad=out_pad,
        mm_dtype=matmul_dtype, approx_gelu=approx_gelu)

    def full(shape):
        return pl.BlockSpec(shape, lambda i, _n=len(shape): (0,) * _n)

    # rough per-step VMEM footprint -> explicit scoped-VMEM limit (capped for v7x's 64 MiB)
    est = Bt * 4 * (2 * K * D + 2 * out_pad + 10 * K * D + 4 * Dh)
    vmem_limit = int(min(64 * 2**20, max(32 * 2**20, 2 * est)))

    out = pl.pallas_call(
        kernel,
        grid=(n_steps,),
        in_specs=[
            pl.BlockSpec(memory_space=pltpu.MemorySpace.SMEM),   # token-mixer scalars
            pl.BlockSpec((Bt * K, d_n), lambda i: (i, 0)),       # neighbor node feats
            pl.BlockSpec((Bt * K, d_e), lambda i: (i, 0)),       # neighbor edge feats
            pl.BlockSpec((Bt * K, d_t), lambda i: (i, 0)),       # edge time feats
            full(vec.shape), full(w0c_T.shape), full(w1c_T.shape), full(wout_T.shape),
        ],
        out_specs=pl.BlockSpec((Bt, out_pad), lambda i: (i, 0)),
        out_shape=jax.ShapeDtypeStruct((B_pad, out_pad), jnp.float32),
        compiler_params=pltpu.CompilerParams(
            dimension_semantics=("parallel",),
            vmem_limit_bytes=vmem_limit),
    )(tok, nnf, nef, etf, vec, w0c_T, w1c_T, wout_T)
    # NOTE: the padded (B_pad, out_pad) buffer is what the kernel stores (lane-dense);
    # this slice is only for API semantics — let downstream read the padded buffer if possible.
    return out[:B, :dim_out]


def _gelu(x):
    return 0.5 * x * (1.0 + jax.lax.erf(x * 0.7071067811865476))


def _layernorm(x, g, b, eps=1e-5):
    m = jnp.mean(x, axis=-1, keepdims=True)
    v = jnp.mean(jnp.square(x - m), axis=-1, keepdims=True)
    return (x - m) * jax.lax.rsqrt(v + eps) * g + b


def reference(params, nnf, nef, etf, num_neighbor):
    """Pure-JAX replica of the PyTorch forward for a correctness check."""
    feats = jnp.concatenate([nnf, nef, etf], axis=1)
    D = feats.shape[-1]
    x = feats.reshape(-1, num_neighbor, D).astype(jnp.float32)
    xn = _layernorm(x, params["tln_g"], params["tln_b"])
    xt = jnp.transpose(xn, (0, 2, 1))
    t = _gelu(jnp.einsum("bdk,hk->bdh", xt, params["w0t"]) + params["b0t"])
    t = jnp.einsum("bdh,kh->bdk", t, params["w1t"]) + params["b1t"]
    x = x + jnp.transpose(t, (0, 2, 1))
    cn = _layernorm(x, params["cln_g"], params["cln_b"])
    c = _gelu(jnp.einsum("bkd,hd->bkh", cn, params["w0c"]) + params["b0c"])
    c = jnp.einsum("bkh,dh->bkd", c, params["w1c"]) + params["b1c"]
    x = x + c
    hn = _layernorm(x, params["fln_g"], params["fln_b"])
    h = jnp.mean(hn, axis=1)
    return jnp.einsum("bd,od->bo", h, params["wout"]) + params["bout"]


if __name__ == "__main__":
    B, K = 16, 8                               # batch, num_neighbor
    dim_node, dim_edge, dim_time = 16, 8, 8    # -> D = 32
    dim_memory, dim_out = 0, 32

    key = jax.random.PRNGKey(0)
    kp, k1, k2, k3, k4, k5 = jax.random.split(key, 6)
    params = init_params(kp, K, dim_node, dim_edge, dim_time, dim_out)

    root_node_feature = jax.random.normal(k1, (B, dim_node), jnp.float32)   # unused by forward
    zero_time_feat = jax.random.normal(k2, (B, dim_time), jnp.float32)      # unused by forward
    neighbor_node_feature = jax.random.normal(k3, (B * K, dim_node), jnp.float32)
    neighbor_edge_feature = jax.random.normal(k4, (B * K, dim_edge), jnp.float32)
    edge_time_feat = jax.random.normal(k5, (B * K, dim_time), jnp.float32)

    ref = reference(params, neighbor_node_feature, neighbor_edge_feature,
                    edge_time_feat, K)

    # exact f32 path (matches the torch-f32 reference to 1e-4)
    out_f32 = mixer_aggregator(params, root_node_feature, zero_time_feat,
                               neighbor_node_feature, neighbor_edge_feature,
                               edge_time_feat, num_neighbor=K,
                               matmul_dtype=jnp.float32)
    out_f32 = jax.block_until_ready(out_f32)
    assert out_f32.shape == (B, dim_out)
    assert jnp.allclose(out_f32, ref, atol=1e-4, rtol=1e-4)

    # default production path: bf16 MXU inputs, f32 accumulation / elementwise
    out_bf16 = mixer_aggregator(params, root_node_feature, zero_time_feat,
                                neighbor_node_feature, neighbor_edge_feature,
                                edge_time_feat, num_neighbor=K)
    out_bf16 = jax.block_until_ready(out_bf16)
    assert out_bf16.shape == (B, dim_out)
    assert jnp.allclose(out_bf16, ref, atol=5e-2, rtol=5e-2)

    print("KERNEL_OK")
</pallas_src>

<mosaic_0001>
module attributes {stable_mosaic.version = 11 : i64} {
  func.func @mixer_agg_kernel(%arg0: i32, %arg1: memref<76xf32, #tpu.memory_space<smem>>, %arg2: memref<128x16xf32, #tpu.memory_space<vmem>>, %arg3: memref<128x8xf32, #tpu.memory_space<vmem>>, %arg4: memref<128x8xf32, #tpu.memory_space<vmem>>, %arg5: memref<9x128xf32, #tpu.memory_space<vmem>>, %arg6: memref<32x128xf32, #tpu.memory_space<vmem>>, %arg7: memref<128x32xf32, #tpu.memory_space<vmem>>, %arg8: memref<32x128xf32, #tpu.memory_space<vmem>>, %arg9: memref<16x128xf32, #tpu.memory_space<vmem>>) attributes {dimension_semantics = [#tpu.dimension_semantics<parallel>], iteration_bounds = array<i64: 1>, scalar_prefetch = 0 : i64, scratch_operands = 0 : i64, tpu.core_type = #tpu.core_type<tc>, window_params = [{transform_indices = @transform_0, window_bounds = array<i64: 76>}, {transform_indices = @transform_1, window_bounds = array<i64: 128, 16>}, {transform_indices = @transform_2, window_bounds = array<i64: 128, 8>}, {transform_indices = @transform_3, window_bounds = array<i64: 128, 8>}, {pipeline_mode = #tpu.pipeline_mode<synchronous>, transform_indices = @transform_4, window_bounds = array<i64: 9, 128>}, {pipeline_mode = #tpu.pipeline_mode<synchronous>, transform_indices = @transform_5, window_bounds = array<i64: 32, 128>}, {pipeline_mode = #tpu.pipeline_mode<synchronous>, transform_indices = @transform_6, window_bounds = array<i64: 128, 32>}, {pipeline_mode = #tpu.pipeline_mode<synchronous>, transform_indices = @transform_7, window_bounds = array<i64: 32, 128>}, {transform_indices = @transform_8, window_bounds = array<i64: 16, 128>}]} {
    %c0 = arith.constant 0 : index
    %c0_0 = arith.constant 0 : index
    %0 = vector.load %arg5[%c0, %c0_0] : memref<9x128xf32, #tpu.memory_space<vmem>>, vector<9x128xf32>
    %1 = vector.extract_strided_slice %0 {offsets = [0, 0], sizes = [1, 32], strides = [1, 1]} : vector<9x128xf32> to vector<1x32xf32>
    %2 = vector.extract_strided_slice %0 {offsets = [1, 0], sizes = [1, 32], strides = [1, 1]} : vector<9x128xf32> to vector<1x32xf32>
    %3 = vector.extract_strided_slice %0 {offsets = [2, 0], sizes = [1, 32], strides = [1, 1]} : vector<9x128xf32> to vector<1x32xf32>
    %4 = vector.extract_strided_slice %0 {offsets = [3, 0], sizes = [1, 32], strides = [1, 1]} : vector<9x128xf32> to vector<1x32xf32>
    %5 = vector.extract_strided_slice %0 {offsets = [4, 0], sizes = [1, 32], strides = [1, 1]} : vector<9x128xf32> to vector<1x32xf32>
    %6 = vector.extract_strided_slice %0 {offsets = [5, 0], sizes = [1, 32], strides = [1, 1]} : vector<9x128xf32> to vector<1x32xf32>
    %7 = vector.extract_strided_slice %0 {offsets = [6, 0], sizes = [1, 128], strides = [1, 1]} : vector<9x128xf32> to vector<1x128xf32>
    %8 = vector.extract_strided_slice %0 {offsets = [7, 0], sizes = [1, 32], strides = [1, 1]} : vector<9x128xf32> to vector<1x32xf32>
    %9 = vector.extract_strided_slice %0 {offsets = [8, 0], sizes = [1, 128], strides = [1, 1]} : vector<9x128xf32> to vector<1x128xf32>
    %c0_1 = arith.constant 0 : index
    %c0_2 = arith.constant 0 : index
    %10 = vector.load %arg2[%c0_1, %c0_2] : memref<128x16xf32, #tpu.memory_space<vmem>>, vector<128x16xf32>
    %c0_3 = arith.constant 0 : index
    %c0_4 = arith.constant 0 : index
    %11 = vector.load %arg3[%c0_3, %c0_4] : memref<128x8xf32, #tpu.memory_space<vmem>>, vector<128x8xf32>
    %c0_5 = arith.constant 0 : index
    %c0_6 = arith.constant 0 : index
    %12 = vector.load %arg4[%c0_5, %c0_6] : memref<128x8xf32, #tpu.memory_space<vmem>>, vector<128x8xf32>
    %13 = tpu.concatenate %10, %11, %12 in 1 : vector<128x16xf32>, vector<128x8xf32>, vector<128x8xf32> -> vector<128x32xf32>
    %14 = vector.shape_cast %13 : vector<128x32xf32> to vector<16x8x32xf32>
    %15 = vector.extract_strided_slice %14 {offsets = [0, 0, 0], sizes = [16, 1, 32], strides = [1, 1, 1]} : vector<16x8x32xf32> to vector<16x1x32xf32>
    %16 = vector.shape_cast %15 : vector<16x1x32xf32> to vector<16x32xf32>
    %17 = vector.extract_strided_slice %14 {offsets = [0, 1, 0], sizes = [16, 1, 32], strides = [1, 1, 1]} : vector<16x8x32xf32> to vector<16x1x32xf32>
    %18 = vector.shape_cast %17 : vector<16x1x32xf32> to vector<16x32xf32>
    %19 = vector.extract_strided_slice %14 {offsets = [0, 2, 0], sizes = [16, 1, 32], strides = [1, 1, 1]} : vector<16x8x32xf32> to vector<16x1x32xf32>
    %20 = vector.shape_cast %19 : vector<16x1x32xf32> to vector<16x32xf32>
    %21 = vector.extract_strided_slice %14 {offsets = [0, 3, 0], sizes = [16, 1, 32], strides = [1, 1, 1]} : vector<16x8x32xf32> to vector<16x1x32xf32>
    %22 = vector.shape_cast %21 : vector<16x1x32xf32> to vector<16x32xf32>
    %23 = vector.extract_strided_slice %14 {offsets = [0, 4, 0], sizes = [16, 1, 32], strides = [1, 1, 1]} : vector<16x8x32xf32> to vector<16x1x32xf32>
    %24 = vector.shape_cast %23 : vector<16x1x32xf32> to vector<16x32xf32>
    %25 = vector.extract_strided_slice %14 {offsets = [0, 5, 0], sizes = [16, 1, 32], strides = [1, 1, 1]} : vector<16x8x32xf32> to vector<16x1x32xf32>
    %26 = vector.shape_cast %25 : vector<16x1x32xf32> to vector<16x32xf32>
    %27 = vector.extract_strided_slice %14 {offsets = [0, 6, 0], sizes = [16, 1, 32], strides = [1, 1, 1]} : vector<16x8x32xf32> to vector<16x1x32xf32>
    %28 = vector.shape_cast %27 : vector<16x1x32xf32> to vector<16x32xf32>
    %29 = vector.extract_strided_slice %14 {offsets = [0, 7, 0], sizes = [16, 1, 32], strides = [1, 1, 1]} : vector<16x8x32xf32> to vector<16x1x32xf32>
    %30 = vector.shape_cast %29 : vector<16x1x32xf32> to vector<16x32xf32>
    %cst = arith.constant dense<0.000000e+00> : vector<16xf32>
    %31 = vector.multi_reduction <add>, %16, %cst [1] : vector<16x32xf32> to vector<16xf32>
    %32 = vector.shape_cast %31 : vector<16xf32> to vector<16x1xf32>
    %cst_7 = arith.constant 3.200000e+01 : f32
    %33 = vector.broadcast %cst_7 : f32 to vector<16x1xf32>
    %34 = arith.divf %32, %33 : vector<16x1xf32>
    %35 = arith.mulf %16, %16 : vector<16x32xf32>
    %cst_8 = arith.constant dense<0.000000e+00> : vector<16xf32>
    %36 = vector.multi_reduction <add>, %35, %cst_8 [1] : vector<16x32xf32> to vector<16xf32>
    %37 = vector.shape_cast %36 : vector<16xf32> to vector<16x1xf32>
    %cst_9 = arith.constant 3.200000e+01 : f32
    %38 = vector.broadcast %cst_9 : f32 to vector<16x1xf32>
    %39 = arith.divf %37, %38 : vector<16x1xf32>
    %40 = vector.broadcast %34 : vector<16x1xf32> to vector<16x32xf32>
    %41 = arith.subf %16, %40 : vector<16x32xf32>
    %42 = arith.mulf %34, %34 : vector<16x1xf32>
    %43 = arith.subf %39, %42 : vector<16x1xf32>
    %cst_10 = arith.constant 9.99999974E-6 : f32
    %44 = vector.broadcast %cst_10 : f32 to vector<16x1xf32>
    %45 = arith.addf %43, %44 : vector<16x1xf32>
    %46 = math.rsqrt %45 : vector<16x1xf32>
    %47 = vector.broadcast %46 : vector<16x1xf32> to vector<16x32xf32>
    %48 = arith.mulf %41, %47 : vector<16x32xf32>
    %49 = vector.broadcast %1 : vector<1x32xf32> to vector<16x32xf32>
    %50 = arith.mulf %48, %49 : vector<16x32xf32>
    %51 = vector.broadcast %2 : vector<1x32xf32> to vector<16x32xf32>
    %52 = arith.addf %50, %51 : vector<16x32xf32>
    %cst_11 = arith.constant dense<0.000000e+00> : vector<16xf32>
    %53 = vector.multi_reduction <add>, %18, %cst_11 [1] : vector<16x32xf32> to vector<16xf32>
    %54 = vector.shape_cast %53 : vector<16xf32> to vector<16x1xf32>
    %cst_12 = arith.constant 3.200000e+01 : f32
    %55 = vector.broadcast %cst_12 : f32 to vector<16x1xf32>
    %56 = arith.divf %54, %55 : vector<16x1xf32>
    %57 = arith.mulf %18, %18 : vector<16x32xf32>
    %cst_13 = arith.constant dense<0.000000e+00> : vector<16xf32>
    %58 = vector.multi_reduction <add>, %57, %cst_13 [1] : vector<16x32xf32> to vector<16xf32>
    %59 = vector.shape_cast %58 : vector<16xf32> to vector<16x1xf32>
    %cst_14 = arith.constant 3.200000e+01 : f32
    %60 = vector.broadcast %cst_14 : f32 to vector<16x1xf32>
    %61 = arith.divf %59, %60 : vector<16x1xf32>
    %62 = vector.broadcast %56 : vector<16x1xf32> to vector<16x32xf32>
    %63 = arith.subf %18, %62 : vector<16x32xf32>
    %64 = arith.mulf %56, %56 : vector<16x1xf32>
    %65 = arith.subf %61, %64 : vector<16x1xf32>
    %cst_15 = arith.constant 9.99999974E-6 : f32
    %66 = vector.broadcast %cst_15 : f32 to vector<16x1xf32>
    %67 = arith.addf %65, %66 : vector<16x1xf32>
    %68 = math.rsqrt %67 : vector<16x1xf32>
    %69 = vector.broadcast %68 : vector<16x1xf32> to vector<16x32xf32>
    %70 = arith.mulf %63, %69 : vector<16x32xf32>
    %71 = vector.broadcast %1 : vector<1x32xf32> to vector<16x32xf32>
    %72 = arith.mulf %70, %71 : vector<16x32xf32>
    %73 = vector.broadcast %2 : vector<1x32xf32> to vector<16x32xf32>
    %74 = arith.addf %72, %73 : vector<16x32xf32>
    %cst_16 = arith.constant dense<0.000000e+00> : vector<16xf32>
    %75 = vector.multi_reduction <add>, %20, %cst_16 [1] : vector<16x32xf32> to vector<16xf32>
    %76 = vector.shape_cast %75 : vector<16xf32> to vector<16x1xf32>
    %cst_17 = arith.constant 3.200000e+01 : f32
    %77 = vector.broadcast %cst_17 : f32 to vector<16x1xf32>
    %78 = arith.divf %76, %77 : vector<16x1xf32>
    %79 = arith.mulf %20, %20 : vector<16x32xf32>
    %cst_18 = arith.constant dense<0.000000e+00> : vector<16xf32>
    %80 = vector.multi_reduction <add>, %79, %cst_18 [1] : vector<16x32xf32> to vector<16xf32>
    %81 = vector.shape_cast %80 : vector<16xf32> to vector<16x1xf32>
    %cst_19 = arith.constant 3.200000e+01 : f32
    %82 = vector.broadcast %cst_19 : f32 to vector<16x1xf32>
    %83 = arith.divf %81, %82 : vector<16x1xf32>
    %84 = vector.broadcast %78 : vector<16x1xf32> to vector<16x32xf32>
    %85 = arith.subf %20, %84 : vector<16x32xf32>
    %86 = arith.mulf %78, %78 : vector<16x1xf32>
    %87 = arith.subf %83, %86 : vector<16x1xf32>
    %cst_20 = arith.constant 9.99999974E-6 : f32
    %88 = vector.broadcast %cst_20 : f32 to vector<16x1xf32>
    %89 = arith.addf %87, %88 : vector<16x1xf32>
    %90 = math.rsqrt %89 : vector<16x1xf32>
    %91 = vector.broadcast %90 : vector<16x1xf32> to vector<16x32xf32>
    %92 = arith.mulf %85, %91 : vector<16x32xf32>
    %93 = vector.broadcast %1 : vector<1x32xf32> to vector<16x32xf32>
    %94 = arith.mulf %92, %93 : vector<16x32xf32>
    %95 = vector.broadcast %2 : vector<1x32xf32> to vector<16x32xf32>
    %96 = arith.addf %94, %95 : vector<16x32xf32>
    %cst_21 = arith.constant dense<0.000000e+00> : vector<16xf32>
    %97 = vector.multi_reduction <add>, %22, %cst_21 [1] : vector<16x32xf32> to vector<16xf32>
    %98 = vector.shape_cast %97 : vector<16xf32> to vector<16x1xf32>
    %cst_22 = arith.constant 3.200000e+01 : f32
    %99 = vector.broadcast %cst_22 : f32 to vector<16x1xf32>
    %100 = arith.divf %98, %99 : vector<16x1xf32>
    %101 = arith.mulf %22, %22 : vector<16x32xf32>
    %cst_23 = arith.constant dense<0.000000e+00> : vector<16xf32>
    %102 = vector.multi_reduction <add>, %101, %cst_23 [1] : vector<16x32xf32> to vector<16xf32>
    %103 = vector.shape_cast %102 : vector<16xf32> to vector<16x1xf32>
    %cst_24 = arith.constant 3.200000e+01 : f32
    %104 = vector.broadcast %cst_24 : f32 to vector<16x1xf32>
    %105 = arith.divf %103, %104 : vector<16x1xf32>
    %106 = vector.broadcast %100 : vector<16x1xf32> to vector<16x32xf32>
    %107 = arith.subf %22, %106 : vector<16x32xf32>
    %108 = arith.mulf %100, %100 : vector<16x1xf32>
    %109 = arith.subf %105, %108 : vector<16x1xf32>
    %cst_25 = arith.constant 9.99999974E-6 : f32
    %110 = vector.broadcast %cst_25 : f32 to vector<16x1xf32>
    %111 = arith.addf %109, %110 : vector<16x1xf32>
    %112 = math.rsqrt %111 : vector<16x1xf32>
    %113 = vector.broadcast %112 : vector<16x1xf32> to vector<16x32xf32>
    %114 = arith.mulf %107, %113 : vector<16x32xf32>
    %115 = vector.broadcast %1 : vector<1x32xf32> to vector<16x32xf32>
    %116 = arith.mulf %114, %115 : vector<16x32xf32>
    %117 = vector.broadcast %2 : vector<1x32xf32> to vector<16x32xf32>
    %118 = arith.addf %116, %117 : vector<16x32xf32>
    %cst_26 = arith.constant dense<0.000000e+00> : vector<16xf32>
    %119 = vector.multi_reduction <add>, %24, %cst_26 [1] : vector<16x32xf32> to vector<16xf32>
    %120 = vector.shape_cast %119 : vector<16xf32> to vector<16x1xf32>
    %cst_27 = arith.constant 3.200000e+01 : f32
    %121 = vector.broadcast %cst_27 : f32 to vector<16x1xf32>
    %122 = arith.divf %120, %121 : vector<16x1xf32>
    %123 = arith.mulf %24, %24 : vector<16x32xf32>
    %cst_28 = arith.constant dense<0.000000e+00> : vector<16xf32>
    %124 = vector.multi_reduction <add>, %123, %cst_28 [1] : vector<16x32xf32> to vector<16xf32>
    %125 = vector.shape_cast %124 : vector<16xf32> to vector<16x1xf32>
    %cst_29 = arith.constant 3.200000e+01 : f32
    %126 = vector.broadcast %cst_29 : f32 to vector<16x1xf32>
    %127 = arith.divf %125, %126 : vector<16x1xf32>
    %128 = vector.broadcast %122 : vector<16x1xf32> to vector<16x32xf32>
    %129 = arith.subf %24, %128 : vector<16x32xf32>
    %130 = arith.mulf %122, %122 : vector<16x1xf32>
    %131 = arith.subf %127, %130 : vector<16x1xf32>
    %cst_30 = arith.constant 9.99999974E-6 : f32
    %132 = vector.broadcast %cst_30 : f32 to vector<16x1xf32>
    %133 = arith.addf %131, %132 : vector<16x1xf32>
    %134 = math.rsqrt %133 : vector<16x1xf32>
    %135 = vector.broadcast %134 : vector<16x1xf32> to vector<16x32xf32>
    %136 = arith.mulf %129, %135 : vector<16x32xf32>
    %137 = vector.broadcast %1 : vector<1x32xf32> to vector<16x32xf32>
    %138 = arith.mulf %136, %137 : vector<16x32xf32>
    %139 = vector.broadcast %2 : vector<1x32xf32> to vector<16x32xf32>
    %140 = arith.addf %138, %139 : vector<16x32xf32>
    %cst_31 = arith.constant dense<0.000000e+00> : vector<16xf32>
    %141 = vector.multi_reduction <add>, %26, %cst_31 [1] : vector<16x32xf32> to vector<16xf32>
    %142 = vector.shape_cast %141 : vector<16xf32> to vector<16x1xf32>
    %cst_32 = arith.constant 3.200000e+01 : f32
    %143 = vector.broadcast %cst_32 : f32 to vector<16x1xf32>
    %144 = arith.divf %142, %143 : vector<16x1xf32>
    %145 = arith.mulf %26, %26 : vector<16x32xf32>
    %cst_33 = arith.constant dense<0.000000e+00> : vector<16xf32>
    %146 = vector.multi_reduction <add>, %145, %cst_33 [1] : vector<16x32xf32> to vector<16xf32>
    %147 = vector.shape_cast %146 : vector<16xf32> to vector<16x1xf32>
    %cst_34 = arith.constant 3.200000e+01 : f32
    %148 = vector.broadcast %cst_34 : f32 to vector<16x1xf32>
    %149 = arith.divf %147, %148 : vector<16x1xf32>
    %150 = vector.broadcast %144 : vector<16x1xf32> to vector<16x32xf32>
    %151 = arith.subf %26, %150 : vector<16x32xf32>
    %152 = arith.mulf %144, %144 : vector<16x1xf32>
    %153 = arith.subf %149, %152 : vector<16x1xf32>
    %cst_35 = arith.constant 9.99999974E-6 : f32
    %154 = vector.broadcast %cst_35 : f32 to vector<16x1xf32>
    %155 = arith.addf %153, %154 : vector<16x1xf32>
    %156 = math.rsqrt %155 : vector<16x1xf32>
    %157 = vector.broadcast %156 : vector<16x1xf32> to vector<16x32xf32>
    %158 = arith.mulf %151, %157 : vector<16x32xf32>
    %159 = vector.broadcast %1 : vector<1x32xf32> to vector<16x32xf32>
    %160 = arith.mulf %158, %159 : vector<16x32xf32>
    %161 = vector.broadcast %2 : vector<1x32xf32> to vector<16x32xf32>
    %162 = arith.addf %160, %161 : vector<16x32xf32>
    %cst_36 = arith.constant dense<0.000000e+00> : vector<16xf32>
    %163 = vector.multi_reduction <add>, %28, %cst_36 [1] : vector<16x32xf32> to vector<16xf32>
    %164 = vector.shape_cast %163 : vector<16xf32> to vector<16x1xf32>
    %cst_37 = arith.constant 3.200000e+01 : f32
    %165 = vector.broadcast %cst_37 : f32 to vector<16x1xf32>
    %166 = arith.divf %164, %165 : vector<16x1xf32>
    %167 = arith.mulf %28, %28 : vector<16x32xf32>
    %cst_38 = arith.constant dense<0.000000e+00> : vector<16xf32>
    %168 = vector.multi_reduction <add>, %167, %cst_38 [1] : vector<16x32xf32> to vector<16xf32>
    %169 = vector.shape_cast %168 : vector<16xf32> to vector<16x1xf32>
    %cst_39 = arith.constant 3.200000e+01 : f32
    %170 = vector.broadcast %cst_39 : f32 to vector<16x1xf32>
    %171 = arith.divf %169, %170 : vector<16x1xf32>
    %172 = vector.broadcast %166 : vector<16x1xf32> to vector<16x32xf32>
    %173 = arith.subf %28, %172 : vector<16x32xf32>
    %174 = arith.mulf %166, %166 : vector<16x1xf32>
    %175 = arith.subf %171, %174 : vector<16x1xf32>
    %cst_40 = arith.constant 9.99999974E-6 : f32
    %176 = vector.broadcast %cst_40 : f32 to vector<16x1xf32>
    %177 = arith.addf %175, %176 : vector<16x1xf32>
    %178 = math.rsqrt %177 : vector<16x1xf32>
    %179 = vector.broadcast %178 : vector<16x1xf32> to vector<16x32xf32>
    %180 = arith.mulf %173, %179 : vector<16x32xf32>
    %181 = vector.broadcast %1 : vector<1x32xf32> to vector<16x32xf32>
    %182 = arith.mulf %180, %181 : vector<16x32xf32>
    %183 = vector.broadcast %2 : vector<1x32xf32> to vector<16x32xf32>
    %184 = arith.addf %182, %183 : vector<16x32xf32>
    %cst_41 = arith.constant dense<0.000000e+00> : vector<16xf32>
    %185 = vector.multi_reduction <add>, %30, %cst_41 [1] : vector<16x32xf32> to vector<16xf32>
    %186 = vector.shape_cast %185 : vector<16xf32> to vector<16x1xf32>
    %cst_42 = arith.constant 3.200000e+01 : f32
    %187 = vector.broadcast %cst_42 : f32 to vector<16x1xf32>
    %188 = arith.divf %186, %187 : vector<16x1xf32>
    %189 = arith.mulf %30, %30 : vector<16x32xf32>
    %cst_43 = arith.constant dense<0.000000e+00> : vector<16xf32>
    %190 = vector.multi_reduction <add>, %189, %cst_43 [1] : vector<16x32xf32> to vector<16xf32>
    %191 = vector.shape_cast %190 : vector<16xf32> to vector<16x1xf32>
    %cst_44 = arith.constant 3.200000e+01 : f32
    %192 = vector.broadcast %cst_44 : f32 to vector<16x1xf32>
    %193 = arith.divf %191, %192 : vector<16x1xf32>
    %194 = vector.broadcast %188 : vector<16x1xf32> to vector<16x32xf32>
    %195 = arith.subf %30, %194 : vector<16x32xf32>
    %196 = arith.mulf %188, %188 : vector<16x1xf32>
    %197 = arith.subf %193, %196 : vector<16x1xf32>
    %cst_45 = arith.constant 9.99999974E-6 : f32
    %198 = vector.broadcast %cst_45 : f32 to vector<16x1xf32>
    %199 = arith.addf %197, %198 : vector<16x1xf32>
    %200 = math.rsqrt %199 : vector<16x1xf32>
    %201 = vector.broadcast %200 : vector<16x1xf32> to vector<16x32xf32>
    %202 = arith.mulf %195, %201 : vector<16x32xf32>
    %203 = vector.broadcast %1 : vector<1x32xf32> to vector<16x32xf32>
    %204 = arith.mulf %202, %203 : vector<16x32xf32>
    %205 = vector.broadcast %2 : vector<1x32xf32> to vector<16x32xf32>
    %206 = arith.addf %204, %205 : vector<16x32xf32>
    %c0_46 = arith.constant 0 : index
    %207 = memref.load %arg1[%c0_46] : memref<76xf32, #tpu.memory_space<smem>>
    %208 = vector.broadcast %207 : f32 to vector<16x32xf32>
    %209 = arith.mulf %52, %208 : vector<16x32xf32>
    %c1 = arith.constant 1 : index
    %210 = memref.load %arg1[%c1] : memref<76xf32, #tpu.memory_space<smem>>
    %211 = vector.broadcast %210 : f32 to vector<16x32xf32>
    %212 = arith.mulf %74, %211 : vector<16x32xf32>
    %213 = arith.addf %209, %212 : vector<16x32xf32>
    %c2 = arith.constant 2 : index
    %214 = memref.load %arg1[%c2] : memref<76xf32, #tpu.memory_space<smem>>
    %215 = vector.broadcast %214 : f32 to vector<16x32xf32>
    %216 = arith.mulf %96, %215 : vector<16x32xf32>
    %217 = arith.addf %213, %216 : vector<16x32xf32>
    %c3 = arith.constant 3 : index
    %218 = memref.load %arg1[%c3] : memref<76xf32, #tpu.memory_space<smem>>
    %219 = vector.broadcast %218 : f32 to vector<16x32xf32>
    %220 = arith.mulf %118, %219 : vector<16x32xf32>
    %221 = arith.addf %217, %220 : vector<16x32xf32>
    %c4 = arith.constant 4 : index
    %222 = memref.load %arg1[%c4] : memref<76xf32, #tpu.memory_space<smem>>
    %223 = vector.broadcast %222 : f32 to vector<16x32xf32>
    %224 = arith.mulf %140, %223 : vector<16x32xf32>
    %225 = arith.addf %221, %224 : vector<16x32xf32>
    %c5 = arith.constant 5 : index
    %226 = memref.load %arg1[%c5] : memref<76xf32, #tpu.memory_space<smem>>
    %227 = vector.broadcast %226 : f32 to vector<16x32xf32>
    %228 = arith.mulf %162, %227 : vector<16x32xf32>
    %229 = arith.addf %225, %228 : vector<16x32xf32>
    %c6 = arith.constant 6 : index
    %230 = memref.load %arg1[%c6] : memref<76xf32, #tpu.memory_space<smem>>
    %231 = vector.broadcast %230 : f32 to vector<16x32xf32>
    %232 = arith.mulf %184, %231 : vector<16x32xf32>
    %233 = arith.addf %229, %232 : vector<16x32xf32>
    %c7 = arith.constant 7 : index
    %234 = memref.load %arg1[%c7] : memref<76xf32, #tpu.memory_space<smem>>
    %235 = vector.broadcast %234 : f32 to vector<16x32xf32>
    %236 = arith.mulf %206, %235 : vector<16x32xf32>
    %237 = arith.addf %233, %236 : vector<16x32xf32>
    %c32 = arith.constant 32 : index
    %238 = memref.load %arg1[%c32] : memref<76xf32, #tpu.memory_space<smem>>
    %239 = vector.broadcast %238 : f32 to vector<16x32xf32>
    %240 = arith.addf %237, %239 : vector<16x32xf32>
    %cst_47 = arith.constant 5.000000e-01 : f32
    %241 = vector.broadcast %cst_47 : f32 to vector<16x32xf32>
    %242 = arith.mulf %241, %240 : vector<16x32xf32>
    %cst_48 = arith.constant 0.707106769 : f32
    %243 = vector.broadcast %cst_48 : f32 to vector<16x32xf32>
    %244 = arith.mulf %240, %243 : vector<16x32xf32>
    %245 = math.erf %244 : vector<16x32xf32>
    %cst_49 = arith.constant 1.000000e+00 : f32
    %246 = vector.broadcast %cst_49 : f32 to vector<16x32xf32>
    %247 = arith.addf %246, %245 : vector<16x32xf32>
    %248 = arith.mulf %242, %247 : vector<16x32xf32>
    %c8 = arith.constant 8 : index
    %249 = memref.load %arg1[%c8] : memref<76xf32, #tpu.memory_space<smem>>
    %250 = vector.broadcast %249 : f32 to vector<16x32xf32>
    %251 = arith.mulf %52, %250 : vector<16x32xf32>
    %c9 = arith.constant 9 : index
    %252 = memref.load %arg1[%c9] : memref<76xf32, #tpu.memory_space<smem>>
    %253 = vector.broadcast %252 : f32 to vector<16x32xf32>
    %254 = arith.mulf %74, %253 : vector<16x32xf32>
    %255 = arith.addf %251, %254 : vector<16x32xf32>
    %c10 = arith.constant 10 : index
    %256 = memref.load %arg1[%c10] : memref<76xf32, #tpu.memory_space<smem>>
    %257 = vector.broadcast %256 : f32 to vector<16x32xf32>
    %258 = arith.mulf %96, %257 : vector<16x32xf32>
    %259 = arith.addf %255, %258 : vector<16x32xf32>
    %c11 = arith.constant 11 : index
    %260 = memref.load %arg1[%c11] : memref<76xf32, #tpu.memory_space<smem>>
    %261 = vector.broadcast %260 : f32 to vector<16x32xf32>
    %262 = arith.mulf %118, %261 : vector<16x32xf32>
    %263 = arith.addf %259, %262 : vector<16x32xf32>
    %c12 = arith.constant 12 : index
    %264 = memref.load %arg1[%c12] : memref<76xf32, #tpu.memory_space<smem>>
    %265 = vector.broadcast %264 : f32 to vector<16x32xf32>
    %266 = arith.mulf %140, %265 : vector<16x32xf32>
    %267 = arith.addf %263, %266 : vector<16x32xf32>
    %c13 = arith.constant 13 : index
    %268 = memref.load %arg1[%c13] : memref<76xf32, #tpu.memory_space<smem>>
    %269 = vector.broadcast %268 : f32 to vector<16x32xf32>
    %270 = arith.mulf %162, %269 : vector<16x32xf32>
    %271 = arith.addf %267, %270 : vector<16x32xf32>
    %c14 = arith.constant 14 : index
    %272 = memref.load %arg1[%c14] : memref<76xf32, #tpu.memory_space<smem>>
    %273 = vector.broadcast %272 : f32 to vector<16x32xf32>
    %274 = arith.mulf %184, %273 : vector<16x32xf32>
    %275 = arith.addf %271, %274 : vector<16x32xf32>
    %c15 = arith.constant 15 : index
    %276 = memref.load %arg1[%c15] : memref<76xf32, #tpu.memory_space<smem>>
    %277 = vector.broadcast %276 : f32 to vector<16x32xf32>
    %278 = arith.mulf %206, %277 : vector<16x32xf32>
    %279 = arith.addf %275, %278 : vector<16x32xf32>
    %c33 = arith.constant 33 : index
    %280 = memref.load %arg1[%c33] : memref<76xf32, #tpu.memory_space<smem>>
    %281 = vector.broadcast %280 : f32 to vector<16x32xf32>
    %282 = arith.addf %279, %281 : vector<16x32xf32>
    %cst_50 = arith.constant 5.000000e-01 : f32
    %283 = vector.broadcast %cst_50 : f32 to vector<16x32xf32>
    %284 = arith.mulf %283, %282 : vector<16x32xf32>
    %cst_51 = arith.constant 0.707106769 : f32
    %285 = vector.broadcast %cst_51 : f32 to vector<16x32xf32>
    %286 = arith.mulf %282, %285 : vector<16x32xf32>
    %287 = math.erf %286 : vector<16x32xf32>
    %cst_52 = arith.constant 1.000000e+00 : f32
    %288 = vector.broadcast %cst_52 : f32 to vector<16x32xf32>
    %289 = arith.addf %288, %287 : vector<16x32xf32>
    %290 = arith.mulf %284, %289 : vector<16x32xf32>
    %c16 = arith.constant 16 : index
    %291 = memref.load %arg1[%c16] : memref<76xf32, #tpu.memory_space<smem>>
    %292 = vector.broadcast %291 : f32 to vector<16x32xf32>
    %293 = arith.mulf %52, %292 : vector<16x32xf32>
    %c17 = arith.constant 17 : index
    %294 = memref.load %arg1[%c17] : memref<76xf32, #tpu.memory_space<smem>>
    %295 = vector.broadcast %294 : f32 to vector<16x32xf32>
    %296 = arith.mulf %74, %295 : vector<16x32xf32>
    %297 = arith.addf %293, %296 : vector<16x32xf32>
    %c18 = arith.constant 18 : index
    %298 = memref.load %arg1[%c18] : memref<76xf32, #tpu.memory_space<smem>>
    %299 = vector.broadcast %298 : f32 to vector<16x32xf32>
    %300 = arith.mulf %96, %299 : vector<16x32xf32>
    %301 = arith.addf %297, %300 : vector<16x32xf32>
    %c19 = arith.constant 19 : index
    %302 = memref.load %arg1[%c19] : memref<76xf32, #tpu.memory_space<smem>>
    %303 = vector.broadcast %302 : f32 to vector<16x32xf32>
    %304 = arith.mulf %118, %303 : vector<16x32xf32>
    %305 = arith.addf %301, %304 : vector<16x32xf32>
    %c20 = arith.constant 20 : index
    %306 = memref.load %arg1[%c20] : memref<76xf32, #tpu.memory_space<smem>>
    %307 = vector.broadcast %306 : f32 to vector<16x32xf32>
    %308 = arith.mulf %140, %307 : vector<16x32xf32>
    %309 = arith.addf %305, %308 : vector<16x32xf32>
    %c21 = arith.constant 21 : index
    %310 = memref.load %arg1[%c21] : memref<76xf32, #tpu.memory_space<smem>>
    %311 = vector.broadcast %310 : f32 to vector<16x32xf32>
    %312 = arith.mulf %162, %311 : vector<16x32xf32>
    %313 = arith.addf %309, %312 : vector<16x32xf32>
    %c22 = arith.constant 22 : index
    %314 = memref.load %arg1[%c22] : memref<76xf32, #tpu.memory_space<smem>>
    %315 = vector.broadcast %314 : f32 to vector<16x32xf32>
    %316 = arith.mulf %184, %315 : vector<16x32xf32>
    %317 = arith.addf %313, %316 : vector<16x32xf32>
    %c23 = arith.constant 23 : index
    %318 = memref.load %arg1[%c23] : memref<76xf32, #tpu.memory_space<smem>>
    %319 = vector.broadcast %318 : f32 to vector<16x32xf32>
    %320 = arith.mulf %206, %319 : vector<16x32xf32>
    %321 = arith.addf %317, %320 : vector<16x32xf32>
    %c34 = arith.constant 34 : index
    %322 = memref.load %arg1[%c34] : memref<76xf32, #tpu.memory_space<smem>>
    %323 = vector.broadcast %322 : f32 to vector<16x32xf32>
    %324 = arith.addf %321, %323 : vector<16x32xf32>
    %cst_53 = arith.constant 5.000000e-01 : f32
    %325 = vector.broadcast %cst_53 : f32 to vector<16x32xf32>
    %326 = arith.mulf %325, %324 : vector<16x32xf32>
    %cst_54 = arith.constant 0.707106769 : f32
    %327 = vector.broadcast %cst_54 : f32 to vector<16x32xf32>
    %328 = arith.mulf %324, %327 : vector<16x32xf32>
    %329 = math.erf %328 : vector<16x32xf32>
    %cst_55 = arith.constant 1.000000e+00 : f32
    %330 = vector.broadcast %cst_55 : f32 to vector<16x32xf32>
    %331 = arith.addf %330, %329 : vector<16x32xf32>
    %332 = arith.mulf %326, %331 : vector<16x32xf32>
    %c24 = arith.constant 24 : index
    %333 = memref.load %arg1[%c24] : memref<76xf32, #tpu.memory_space<smem>>
    %334 = vector.broadcast %333 : f32 to vector<16x32xf32>
    %335 = arith.mulf %52, %334 : vector<16x32xf32>
    %c25 = arith.constant 25 : index
    %336 = memref.load %arg1[%c25] : memref<76xf32, #tpu.memory_space<smem>>
    %337 = vector.broadcast %336 : f32 to vector<16x32xf32>
    %338 = arith.mulf %74, %337 : vector<16x32xf32>
    %339 = arith.addf %335, %338 : vector<16x32xf32>
    %c26 = arith.constant 26 : index
    %340 = memref.load %arg1[%c26] : memref<76xf32, #tpu.memory_space<smem>>
    %341 = vector.broadcast %340 : f32 to vector<16x32xf32>
    %342 = arith.mulf %96, %341 : vector<16x32xf32>
    %343 = arith.addf %339, %342 : vector<16x32xf32>
    %c27 = arith.constant 27 : index
    %344 = memref.load %arg1[%c27] : memref<76xf32, #tpu.memory_space<smem>>
    %345 = vector.broadcast %344 : f32 to vector<16x32xf32>
    %346 = arith.mulf %118, %345 : vector<16x32xf32>
    %347 = arith.addf %343, %346 : vector<16x32xf32>
    %c28 = arith.constant 28 : index
    %348 = memref.load %arg1[%c28] : memref<76xf32, #tpu.memory_space<smem>>
    %349 = vector.broadcast %348 : f32 to vector<16x32xf32>
    %350 = arith.mulf %140, %349 : vector<16x32xf32>
    %351 = arith.addf %347, %350 : vector<16x32xf32>
    %c29 = arith.constant 29 : index
    %352 = memref.load %arg1[%c29] : memref<76xf32, #tpu.memory_space<smem>>
    %353 = vector.broadcast %352 : f32 to vector<16x32xf32>
    %354 = arith.mulf %162, %353 : vector<16x32xf32>
    %355 = arith.addf %351, %354 : vector<16x32xf32>
    %c30 = arith.constant 30 : index
    %356 = memref.load %arg1[%c30] : memref<76xf32, #tpu.memory_space<smem>>
    %357 = vector.broadcast %356 : f32 to vector<16x32xf32>
    %358 = arith.mulf %184, %357 : vector<16x32xf32>
    %359 = arith.addf %355, %358 : vector<16x32xf32>
    %c31 = arith.constant 31 : index
    %360 = memref.load %arg1[%c31] : memref<76xf32, #tpu.memory_space<smem>>
    %361 = vector.broadcast %360 : f32 to vector<16x32xf32>
    %362 = arith.mulf %206, %361 : vector<16x32xf32>
    %363 = arith.addf %359, %362 : vector<16x32xf32>
    %c35 = arith.constant 35 : index
    %364 = memref.load %arg1[%c35] : memref<76xf32, #tpu.memory_space<smem>>
    %365 = vector.broadcast %364 : f32 to vector<16x32xf32>
    %366 = arith.addf %363, %365 : vector<16x32xf32>
    %cst_56 = arith.constant 5.000000e-01 : f32
    %367 = vector.broadcast %cst_56 : f32 to vector<16x32xf32>
    %368 = arith.mulf %367, %366 : vector<16x32xf32>
    %cst_57 = arith.constant 0.707106769 : f32
    %369 = vector.broadcast %cst_57 : f32 to vector<16x32xf32>
    %370 = arith.mulf %366, %369 : vector<16x32xf32>
    %371 = math.erf %370 : vector<16x32xf32>
    %cst_58 = arith.constant 1.000000e+00 : f32
    %372 = vector.broadcast %cst_58 : f32 to vector<16x32xf32>
    %373 = arith.addf %372, %371 : vector<16x32xf32>
    %374 = arith.mulf %368, %373 : vector<16x32xf32>
    %c36 = arith.constant 36 : index
    %375 = memref.load %arg1[%c36] : memref<76xf32, #tpu.memory_space<smem>>
    %376 = vector.broadcast %375 : f32 to vector<16x32xf32>
    %377 = arith.mulf %248, %376 : vector<16x32xf32>
    %c37 = arith.constant 37 : index
    %378 = memref.load %arg1[%c37] : memref<76xf32, #tpu.memory_space<smem>>
    %379 = vector.broadcast %378 : f32 to vector<16x32xf32>
    %380 = arith.mulf %290, %379 : vector<16x32xf32>
    %381 = arith.addf %377, %380 : vector<16x32xf32>
    %c38 = arith.constant 38 : index
    %382 = memref.load %arg1[%c38] : memref<76xf32, #tpu.memory_space<smem>>
    %383 = vector.broadcast %382 : f32 to vector<16x32xf32>
    %384 = arith.mulf %332, %383 : vector<16x32xf32>
    %385 = arith.addf %381, %384 : vector<16x32xf32>
    %c39 = arith.constant 39 : index
    %386 = memref.load %arg1[%c39] : memref<76xf32, #tpu.memory_space<smem>>
    %387 = vector.broadcast %386 : f32 to vector<16x32xf32>
    %388 = arith.mulf %374, %387 : vector<16x32xf32>
    %389 = arith.addf %385, %388 : vector<16x32xf32>
    %390 = arith.addf %16, %389 : vector<16x32xf32>
    %c68 = arith.constant 68 : index
    %391 = memref.load %arg1[%c68] : memref<76xf32, #tpu.memory_space<smem>>
    %392 = vector.broadcast %391 : f32 to vector<16x32xf32>
    %393 = arith.addf %390, %392 : vector<16x32xf32>
    %c40 = arith.constant 40 : index
    %394 = memref.load %arg1[%c40] : memref<76xf32, #tpu.memory_space<smem>>
    %395 = vector.broadcast %394 : f32 to vector<16x32xf32>
    %396 = arith.mulf %248, %395 : vector<16x32xf32>
    %c41 = arith.constant 41 : index
    %397 = memref.load %arg1[%c41] : memref<76xf32, #tpu.memory_space<smem>>
    %398 = vector.broadcast %397 : f32 to vector<16x32xf32>
    %399 = arith.mulf %290, %398 : vector<16x32xf32>
    %400 = arith.addf %396, %399 : vector<16x32xf32>
    %c42 = arith.constant 42 : index
    %401 = memref.load %arg1[%c42] : memref<76xf32, #tpu.memory_space<smem>>
    %402 = vector.broadcast %401 : f32 to vector<16x32xf32>
    %403 = arith.mulf %332, %402 : vector<16x32xf32>
    %404 = arith.addf %400, %403 : vector<16x32xf32>
    %c43 = arith.constant 43 : index
    %405 = memref.load %arg1[%c43] : memref<76xf32, #tpu.memory_space<smem>>
    %406 = vector.broadcast %405 : f32 to vector<16x32xf32>
    %407 = arith.mulf %374, %406 : vector<16x32xf32>
    %408 = arith.addf %404, %407 : vector<16x32xf32>
    %409 = arith.addf %18, %408 : vector<16x32xf32>
    %c69 = arith.constant 69 : index
    %410 = memref.load %arg1[%c69] : memref<76xf32, #tpu.memory_space<smem>>
    %411 = vector.broadcast %410 : f32 to vector<16x32xf32>
    %412 = arith.addf %409, %411 : vector<16x32xf32>
    %c44 = arith.constant 44 : index
    %413 = memref.load %arg1[%c44] : memref<76xf32, #tpu.memory_space<smem>>
    %414 = vector.broadcast %413 : f32 to vector<16x32xf32>
    %415 = arith.mulf %248, %414 : vector<16x32xf32>
    %c45 = arith.constant 45 : index
    %416 = memref.load %arg1[%c45] : memref<76xf32, #tpu.memory_space<smem>>
    %417 = vector.broadcast %416 : f32 to vector<16x32xf32>
    %418 = arith.mulf %290, %417 : vector<16x32xf32>
    %419 = arith.addf %415, %418 : vector<16x32xf32>
    %c46 = arith.constant 46 : index
    %420 = memref.load %arg1[%c46] : memref<76xf32, #tpu.memory_space<smem>>
    %421 = vector.broadcast %420 : f32 to vector<16x32xf32>
    %422 = arith.mulf %332, %421 : vector<16x32xf32>
    %423 = arith.addf %419, %422 : vector<16x32xf32>
    %c47 = arith.constant 47 : index
    %424 = memref.load %arg1[%c47] : memref<76xf32, #tpu.memory_space<smem>>
    %425 = vector.broadcast %424 : f32 to vector<16x32xf32>
    %426 = arith.mulf %374, %425 : vector<16x32xf32>
    %427 = arith.addf %423, %426 : vector<16x32xf32>
    %428 = arith.addf %20, %427 : vector<16x32xf32>
    %c70 = arith.constant 70 : index
    %429 = memref.load %arg1[%c70] : memref<76xf32, #tpu.memory_space<smem>>
    %430 = vector.broadcast %429 : f32 to vector<16x32xf32>
    %431 = arith.addf %428, %430 : vector<16x32xf32>
    %c48 = arith.constant 48 : index
    %432 = memref.load %arg1[%c48] : memref<76xf32, #tpu.memory_space<smem>>
    %433 = vector.broadcast %432 : f32 to vector<16x32xf32>
    %434 = arith.mulf %248, %433 : vector<16x32xf32>
    %c49 = arith.constant 49 : index
    %435 = memref.load %arg1[%c49] : memref<76xf32, #tpu.memory_space<smem>>
    %436 = vector.broadcast %435 : f32 to vector<16x32xf32>
    %437 = arith.mulf %290, %436 : vector<16x32xf32>
    %438 = arith.addf %434, %437 : vector<16x32xf32>
    %c50 = arith.constant 50 : index
    %439 = memref.load %arg1[%c50] : memref<76xf32, #tpu.memory_space<smem>>
    %440 = vector.broadcast %439 : f32 to vector<16x32xf32>
    %441 = arith.mulf %332, %440 : vector<16x32xf32>
    %442 = arith.addf %438, %441 : vector<16x32xf32>
    %c51 = arith.constant 51 : index
    %443 = memref.load %arg1[%c51] : memref<76xf32, #tpu.memory_space<smem>>
    %444 = vector.broadcast %443 : f32 to vector<16x32xf32>
    %445 = arith.mulf %374, %444 : vector<16x32xf32>
    %446 = arith.addf %442, %445 : vector<16x32xf32>
    %447 = arith.addf %22, %446 : vector<16x32xf32>
    %c71 = arith.constant 71 : index
    %448 = memref.load %arg1[%c71] : memref<76xf32, #tpu.memory_space<smem>>
    %449 = vector.broadcast %448 : f32 to vector<16x32xf32>
    %450 = arith.addf %447, %449 : vector<16x32xf32>
    %c52 = arith.constant 52 : index
    %451 = memref.load %arg1[%c52] : memref<76xf32, #tpu.memory_space<smem>>
    %452 = vector.broadcast %451 : f32 to vector<16x32xf32>
    %453 = arith.mulf %248, %452 : vector<16x32xf32>
    %c53 = arith.constant 53 : index
    %454 = memref.load %arg1[%c53] : memref<76xf32, #tpu.memory_space<smem>>
    %455 = vector.broadcast %454 : f32 to vector<16x32xf32>
    %456 = arith.mulf %290, %455 : vector<16x32xf32>
    %457 = arith.addf %453, %456 : vector<16x32xf32>
    %c54 = arith.constant 54 : index
    %458 = memref.load %arg1[%c54] : memref<76xf32, #tpu.memory_space<smem>>
    %459 = vector.broadcast %458 : f32 to vector<16x32xf32>
    %460 = arith.mulf %332, %459 : vector<16x32xf32>
    %461 = arith.addf %457, %460 : vector<16x32xf32>
    %c55 = arith.constant 55 : index
    %462 = memref.load %arg1[%c55] : memref<76xf32, #tpu.memory_space<smem>>
    %463 = vector.broadcast %462 : f32 to vector<16x32xf32>
    %464 = arith.mulf %374, %463 : vector<16x32xf32>
    %465 = arith.addf %461, %464 : vector<16x32xf32>
    %466 = arith.addf %24, %465 : vector<16x32xf32>
    %c72 = arith.constant 72 : index
    %467 = memref.load %arg1[%c72] : memref<76xf32, #tpu.memory_space<smem>>
    %468 = vector.broadcast %467 : f32 to vector<16x32xf32>
    %469 = arith.addf %466, %468 : vector<16x32xf32>
    %c56 = arith.constant 56 : index
    %470 = memref.load %arg1[%c56] : memref<76xf32, #tpu.memory_space<smem>>
    %471 = vector.broadcast %470 : f32 to vector<16x32xf32>
    %472 = arith.mulf %248, %471 : vector<16x32xf32>
    %c57 = arith.constant 57 : index
    %473 = memref.load %arg1[%c57] : memref<76xf32, #tpu.memory_space<smem>>
    %474 = vector.broadcast %473 : f32 to vector<16x32xf32>
    %475 = arith.mulf %290, %474 : vector<16x32xf32>
    %476 = arith.addf %472, %475 : vector<16x32xf32>
    %c58 = arith.constant 58 : index
    %477 = memref.load %arg1[%c58] : memref<76xf32, #tpu.memory_space<smem>>
    %478 = vector.broadcast %477 : f32 to vector<16x32xf32>
    %479 = arith.mulf %332, %478 : vector<16x32xf32>
    %480 = arith.addf %476, %479 : vector<16x32xf32>
    %c59 = arith.constant 59 : index
    %481 = memref.load %arg1[%c59] : memref<76xf32, #tpu.memory_space<smem>>
    %482 = vector.broadcast %481 : f32 to vector<16x32xf32>
    %483 = arith.mulf %374, %482 : vector<16x32xf32>
    %484 = arith.addf %480, %483 : vector<16x32xf32>
    %485 = arith.addf %26, %484 : vector<16x32xf32>
    %c73 = arith.constant 73 : index
    %486 = memref.load %arg1[%c73] : memref<76xf32, #tpu.memory_space<smem>>
    %487 = vector.broadcast %486 : f32 to vector<16x32xf32>
    %488 = arith.addf %485, %487 : vector<16x32xf32>
    %c60 = arith.constant 60 : index
    %489 = memref.load %arg1[%c60] : memref<76xf32, #tpu.memory_space<smem>>
    %490 = vector.broadcast %489 : f32 to vector<16x32xf32>
    %491 = arith.mulf %248, %490 : vector<16x32xf32>
    %c61 = arith.constant 61 : index
    %492 = memref.load %arg1[%c61] : memref<76xf32, #tpu.memory_space<smem>>
    %493 = vector.broadcast %492 : f32 to vector<16x32xf32>
    %494 = arith.mulf %290, %493 : vector<16x32xf32>
    %495 = arith.addf %491, %494 : vector<16x32xf32>
    %c62 = arith.constant 62 : index
    %496 = memref.load %arg1[%c62] : memref<76xf32, #tpu.memory_space<smem>>
    %497 = vector.broadcast %496 : f32 to vector<16x32xf32>
    %498 = arith.mulf %332, %497 : vector<16x32xf32>
    %499 = arith.addf %495, %498 : vector<16x32xf32>
    %c63 = arith.constant 63 : index
    %500 = memref.load %arg1[%c63] : memref<76xf32, #tpu.memory_space<smem>>
    %501 = vector.broadcast %500 : f32 to vector<16x32xf32>
    %502 = arith.mulf %374, %501 : vector<16x32xf32>
    %503 = arith.addf %499, %502 : vector<16x32xf32>
    %504 = arith.addf %28, %503 : vector<16x32xf32>
    %c74 = arith.constant 74 : index
    %505 = memref.load %arg1[%c74] : memref<76xf32, #tpu.memory_space<smem>>
    %506 = vector.broadcast %505 : f32 to vector<16x32xf32>
    %507 = arith.addf %504, %506 : vector<16x32xf32>
    %c64 = arith.constant 64 : index
    %508 = memref.load %arg1[%c64] : memref<76xf32, #tpu.memory_space<smem>>
    %509 = vector.broadcast %508 : f32 to vector<16x32xf32>
    %510 = arith.mulf %248, %509 : vector<16x32xf32>
    %c65 = arith.constant 65 : index
    %511 = memref.load %arg1[%c65] : memref<76xf32, #tpu.memory_space<smem>>
    %512 = vector.broadcast %511 : f32 to vector<16x32xf32>
    %513 = arith.mulf %290, %512 : vector<16x32xf32>
    %514 = arith.addf %510, %513 : vector<16x32xf32>
    %c66 = arith.constant 66 : index
    %515 = memref.load %arg1[%c66] : memref<76xf32, #tpu.memory_space<smem>>
    %516 = vector.broadcast %515 : f32 to vector<16x32xf32>
    %517 = arith.mulf %332, %516 : vector<16x32xf32>
    %518 = arith.addf %514, %517 : vector<16x32xf32>
    %c67 = arith.constant 67 : index
    %519 = memref.load %arg1[%c67] : memref<76xf32, #tpu.memory_space<smem>>
    %520 = vector.broadcast %519 : f32 to vector<16x32xf32>
    %521 = arith.mulf %374, %520 : vector<16x32xf32>
    %522 = arith.addf %518, %521 : vector<16x32xf32>
    %523 = arith.addf %30, %522 : vector<16x32xf32>
    %c75 = arith.constant 75 : index
    %524 = memref.load %arg1[%c75] : memref<76xf32, #tpu.memory_space<smem>>
    %525 = vector.broadcast %524 : f32 to vector<16x32xf32>
    %526 = arith.addf %523, %525 : vector<16x32xf32>
    %cst_59 = arith.constant dense<0.000000e+00> : vector<16xf32>
    %527 = vector.multi_reduction <add>, %393, %cst_59 [1] : vector<16x32xf32> to vector<16xf32>
    %528 = vector.shape_cast %527 : vector<16xf32> to vector<16x1xf32>
    %cst_60 = arith.constant 3.200000e+01 : f32
    %529 = vector.broadcast %cst_60 : f32 to vector<16x1xf32>
    %530 = arith.divf %528, %529 : vector<16x1xf32>
    %531 = arith.mulf %393, %393 : vector<16x32xf32>
    %cst_61 = arith.constant dense<0.000000e+00> : vector<16xf32>
    %532 = vector.multi_reduction <add>, %531, %cst_61 [1] : vector<16x32xf32> to vector<16xf32>
    %533 = vector.shape_cast %532 : vector<16xf32> to vector<16x1xf32>
    %cst_62 = arith.constant 3.200000e+01 : f32
    %534 = vector.broadcast %cst_62 : f32 to vector<16x1xf32>
    %535 = arith.divf %533, %534 : vector<16x1xf32>
    %536 = vector.broadcast %530 : vector<16x1xf32> to vector<16x32xf32>
    %537 = arith.subf %393, %536 : vector<16x32xf32>
    %538 = arith.mulf %530, %530 : vector<16x1xf32>
    %539 = arith.subf %535, %538 : vector<16x1xf32>
    %cst_63 = arith.constant 9.99999974E-6 : f32
    %540 = vector.broadcast %cst_63 : f32 to vector<16x1xf32>
    %541 = arith.addf %539, %540 : vector<16x1xf32>
    %542 = math.rsqrt %541 : vector<16x1xf32>
    %543 = vector.broadcast %542 : vector<16x1xf32> to vector<16x32xf32>
    %544 = arith.mulf %537, %543 : vector<16x32xf32>
    %545 = vector.broadcast %3 : vector<1x32xf32> to vector<16x32xf32>
    %546 = arith.mulf %544, %545 : vector<16x32xf32>
    %547 = vector.broadcast %4 : vector<1x32xf32> to vector<16x32xf32>
    %548 = arith.addf %546, %547 : vector<16x32xf32>
    %c0_64 = arith.constant 0 : index
    %c0_65 = arith.constant 0 : index
    %549 = vector.load %arg6[%c0_64, %c0_65] : memref<32x128xf32, #tpu.memory_space<vmem>>, vector<32x128xf32>
    %cst_66 = arith.constant dense<0.000000e+00> : vector<16x128xf32>
    %550 = tpu.matmul %548, %549, %cst_66 {dimension_numbers = #tpu.dot_dimension_numbers<[1], [0], [0], [1], [0, 0, 1, 1], [], []>} : vector<16x32xf32>, vector<32x128xf32>, vector<16x128xf32> -> vector<16x128xf32>
    %551 = vector.broadcast %7 : vector<1x128xf32> to vector<16x128xf32>
    %552 = arith.addf %550, %551 : vector<16x128xf32>
    %cst_67 = arith.constant 5.000000e-01 : f32
    %553 = vector.broadcast %cst_67 : f32 to vector<16x128xf32>
    %554 = arith.mulf %553, %552 : vector<16x128xf32>
    %cst_68 = arith.constant 0.707106769 : f32
    %555 = vector.broadcast %cst_68 : f32 to vector<16x128xf32>
    %556 = arith.mulf %552, %555 : vector<16x128xf32>
    %557 = math.erf %556 : vector<16x128xf32>
    %cst_69 = arith.constant 1.000000e+00 : f32
    %558 = vector.broadcast %cst_69 : f32 to vector<16x128xf32>
    %559 = arith.addf %558, %557 : vector<16x128xf32>
    %560 = arith.mulf %554, %559 : vector<16x128xf32>
    %c0_70 = arith.constant 0 : index
    %c0_71 = arith.constant 0 : index
    %561 = vector.load %arg7[%c0_70, %c0_71] : memref<128x32xf32, #tpu.memory_space<vmem>>, vector<128x32xf32>
    %cst_72 = arith.constant dense<0.000000e+00> : vector<16x32xf32>
    %562 = tpu.matmul %560, %561, %cst_72 {dimension_numbers = #tpu.dot_dimension_numbers<[1], [0], [0], [1], [0, 0, 1, 1], [], []>} : vector<16x128xf32>, vector<128x32xf32>, vector<16x32xf32> -> vector<16x32xf32>
    %563 = arith.addf %393, %562 : vector<16x32xf32>
    %564 = vector.broadcast %8 : vector<1x32xf32> to vector<16x32xf32>
    %565 = arith.addf %563, %564 : vector<16x32xf32>
    %cst_73 = arith.constant dense<0.000000e+00> : vector<16xf32>
    %566 = vector.multi_reduction <add>, %565, %cst_73 [1] : vector<16x32xf32> to vector<16xf32>
    %567 = vector.shape_cast %566 : vector<16xf32> to vector<16x1xf32>
    %cst_74 = arith.constant 3.200000e+01 : f32
    %568 = vector.broadcast %cst_74 : f32 to vector<16x1xf32>
    %569 = arith.divf %567, %568 : vector<16x1xf32>
    %570 = arith.mulf %565, %565 : vector<16x32xf32>
    %cst_75 = arith.constant dense<0.000000e+00> : vector<16xf32>
    %571 = vector.multi_reduction <add>, %570, %cst_75 [1] : vector<16x32xf32> to vector<16xf32>
    %572 = vector.shape_cast %571 : vector<16xf32> to vector<16x1xf32>
    %cst_76 = arith.constant 3.200000e+01 : f32
    %573 = vector.broadcast %cst_76 : f32 to vector<16x1xf32>
    %574 = arith.divf %572, %573 : vector<16x1xf32>
    %575 = vector.broadcast %569 : vector<16x1xf32> to vector<16x32xf32>
    %576 = arith.subf %565, %575 : vector<16x32xf32>
    %577 = arith.mulf %569, %569 : vector<16x1xf32>
    %578 = arith.subf %574, %577 : vector<16x1xf32>
    %cst_77 = arith.constant 9.99999974E-6 : f32
    %579 = vector.broadcast %cst_77 : f32 to vector<16x1xf32>
    %580 = arith.addf %578, %579 : vector<16x1xf32>
    %581 = math.rsqrt %580 : vector<16x1xf32>
    %582 = vector.broadcast %581 : vector<16x1xf32> to vector<16x32xf32>
    %583 = arith.mulf %576, %582 : vector<16x32xf32>
    %584 = vector.broadcast %5 : vector<1x32xf32> to vector<16x32xf32>
    %585 = arith.mulf %583, %584 : vector<16x32xf32>
    %586 = vector.broadcast %6 : vector<1x32xf32> to vector<16x32xf32>
    %587 = arith.addf %585, %586 : vector<16x32xf32>
    %cst_78 = arith.constant dense<0.000000e+00> : vector<16xf32>
    %588 = vector.multi_reduction <add>, %412, %cst_78 [1] : vector<16x32xf32> to vector<16xf32>
    %589 = vector.shape_cast %588 : vector<16xf32> to vector<16x1xf32>
    %cst_79 = arith.constant 3.200000e+01 : f32
    %590 = vector.broadcast %cst_79 : f32 to vector<16x1xf32>
    %591 = arith.divf %589, %590 : vector<16x1xf32>
    %592 = arith.mulf %412, %412 : vector<16x32xf32>
    %cst_80 = arith.constant dense<0.000000e+00> : vector<16xf32>
    %593 = vector.multi_reduction <add>, %592, %cst_80 [1] : vector<16x32xf32> to vector<16xf32>
    %594 = vector.shape_cast %593 : vector<16xf32> to vector<16x1xf32>
    %cst_81 = arith.constant 3.200000e+01 : f32
    %595 = vector.broadcast %cst_81 : f32 to vector<16x1xf32>
    %596 = arith.divf %594, %595 : vector<16x1xf32>
    %597 = vector.broadcast %591 : vector<16x1xf32> to vector<16x32xf32>
    %598 = arith.subf %412, %597 : vector<16x32xf32>
    %599 = arith.mulf %591, %591 : vector<16x1xf32>
    %600 = arith.subf %596, %599 : vector<16x1xf32>
    %cst_82 = arith.constant 9.99999974E-6 : f32
    %601 = vector.broadcast %cst_82 : f32 to vector<16x1xf32>
    %602 = arith.addf %600, %601 : vector<16x1xf32>
    %603 = math.rsqrt %602 : vector<16x1xf32>
    %604 = vector.broadcast %603 : vector<16x1xf32> to vector<16x32xf32>
    %605 = arith.mulf %598, %604 : vector<16x32xf32>
    %606 = vector.broadcast %3 : vector<1x32xf32> to vector<16x32xf32>
    %607 = arith.mulf %605, %606 : vector<16x32xf32>
    %608 = vector.broadcast %4 : vector<1x32xf32> to vector<16x32xf32>
    %609 = arith.addf %607, %608 : vector<16x32xf32>
    %c0_83 = arith.constant 0 : index
    %c0_84 = arith.constant 0 : index
    %610 = vector.load %arg6[%c0_83, %c0_84] : memref<32x128xf32, #tpu.memory_space<vmem>>, vector<32x128xf32>
    %cst_85 = arith.constant dense<0.000000e+00> : vector<16x128xf32>
    %611 = tpu.matmul %609, %610, %cst_85 {dimension_numbers = #tpu.dot_dimension_numbers<[1], [0], [0], [1], [0, 0, 1, 1], [], []>} : vector<16x32xf32>, vector<32x128xf32>, vector<16x128xf32> -> vector<16x128xf32>
    %612 = vector.broadcast %7 : vector<1x128xf32> to vector<16x128xf32>
    %613 = arith.addf %611, %612 : vector<16x128xf32>
    %cst_86 = arith.constant 5.000000e-01 : f32
    %614 = vector.broadcast %cst_86 : f32 to vector<16x128xf32>
    %615 = arith.mulf %614, %613 : vector<16x128xf32>
    %cst_87 = arith.constant 0.707106769 : f32
    %616 = vector.broadcast %cst_87 : f32 to vector<16x128xf32>
    %617 = arith.mulf %613, %616 : vector<16x128xf32>
    %618 = math.erf %617 : vector<16x128xf32>
    %cst_88 = arith.constant 1.000000e+00 : f32
    %619 = vector.broadcast %cst_88 : f32 to vector<16x128xf32>
    %620 = arith.addf %619, %618 : vector<16x128xf32>
    %621 = arith.mulf %615, %620 : vector<16x128xf32>
    %c0_89 = arith.constant 0 : index
    %c0_90 = arith.constant 0 : index
    %622 = vector.load %arg7[%c0_89, %c0_90] : memref<128x32xf32, #tpu.memory_space<vmem>>, vector<128x32xf32>
    %cst_91 = arith.constant dense<0.000000e+00> : vector<16x32xf32>
    %623 = tpu.matmul %621, %622, %cst_91 {dimension_numbers = #tpu.dot_dimension_numbers<[1], [0], [0], [1], [0, 0, 1, 1], [], []>} : vector<16x128xf32>, vector<128x32xf32>, vector<16x32xf32> -> vector<16x32xf32>
    %624 = arith.addf %412, %623 : vector<16x32xf32>
    %625 = vector.broadcast %8 : vector<1x32xf32> to vector<16x32xf32>
    %626 = arith.addf %624, %625 : vector<16x32xf32>
    %cst_92 = arith.constant dense<0.000000e+00> : vector<16xf32>
    %627 = vector.multi_reduction <add>, %626, %cst_92 [1] : vector<16x32xf32> to vector<16xf32>
    %628 = vector.shape_cast %627 : vector<16xf32> to vector<16x1xf32>
    %cst_93 = arith.constant 3.200000e+01 : f32
    %629 = vector.broadcast %cst_93 : f32 to vector<16x1xf32>
    %630 = arith.divf %628, %629 : vector<16x1xf32>
    %631 = arith.mulf %626, %626 : vector<16x32xf32>
    %cst_94 = arith.constant dense<0.000000e+00> : vector<16xf32>
    %632 = vector.multi_reduction <add>, %631, %cst_94 [1] : vector<16x32xf32> to vector<16xf32>
    %633 = vector.shape_cast %632 : vector<16xf32> to vector<16x1xf32>
    %cst_95 = arith.constant 3.200000e+01 : f32
    %634 = vector.broadcast %cst_95 : f32 to vector<16x1xf32>
    %635 = arith.divf %633, %634 : vector<16x1xf32>
    %636 = vector.broadcast %630 : vector<16x1xf32> to vector<16x32xf32>
    %637 = arith.subf %626, %636 : vector<16x32xf32>
    %638 = arith.mulf %630, %630 : vector<16x1xf32>
    %639 = arith.subf %635, %638 : vector<16x1xf32>
    %cst_96 = arith.constant 9.99999974E-6 : f32
    %640 = vector.broadcast %cst_96 : f32 to vector<16x1xf32>
    %641 = arith.addf %639, %640 : vector<16x1xf32>
    %642 = math.rsqrt %641 : vector<16x1xf32>
    %643 = vector.broadcast %642 : vector<16x1xf32> to vector<16x32xf32>
    %644 = arith.mulf %637, %643 : vector<16x32xf32>
    %645 = vector.broadcast %5 : vector<1x32xf32> to vector<16x32xf32>
    %646 = arith.mulf %644, %645 : vector<16x32xf32>
    %647 = vector.broadcast %6 : vector<1x32xf32> to vector<16x32xf32>
    %648 = arith.addf %646, %647 : vector<16x32xf32>
    %649 = arith.addf %587, %648 : vector<16x32xf32>
    %cst_97 = arith.constant dense<0.000000e+00> : vector<16xf32>
    %650 = vector.multi_reduction <add>, %431, %cst_97 [1] : vector<16x32xf32> to vector<16xf32>
    %651 = vector.shape_cast %650 : vector<16xf32> to vector<16x1xf32>
    %cst_98 = arith.constant 3.200000e+01 : f32
    %652 = vector.broadcast %cst_98 : f32 to vector<16x1xf32>
    %653 = arith.divf %651, %652 : vector<16x1xf32>
    %654 = arith.mulf %431, %431 : vector<16x32xf32>
    %cst_99 = arith.constant dense<0.000000e+00> : vector<16xf32>
    %655 = vector.multi_reduction <add>, %654, %cst_99 [1] : vector<16x32xf32> to vector<16xf32>
    %656 = vector.shape_cast %655 : vector<16xf32> to vector<16x1xf32>
    %cst_100 = arith.constant 3.200000e+01 : f32
    %657 = vector.broadcast %cst_100 : f32 to vector<16x1xf32>
    %658 = arith.divf %656, %657 : vector<16x1xf32>
    %659 = vector.broadcast %653 : vector<16x1xf32> to vector<16x32xf32>
    %660 = arith.subf %431, %659 : vector<16x32xf32>
    %661 = arith.mulf %653, %653 : vector<16x1xf32>
    %662 = arith.subf %658, %661 : vector<16x1xf32>
    %cst_101 = arith.constant 9.99999974E-6 : f32
    %663 = vector.broadcast %cst_101 : f32 to vector<16x1xf32>
    %664 = arith.addf %662, %663 : vector<16x1xf32>
    %665 = math.rsqrt %664 : vector<16x1xf32>
    %666 = vector.broadcast %665 : vector<16x1xf32> to vector<16x32xf32>
    %667 = arith.mulf %660, %666 : vector<16x32xf32>
    %668 = vector.broadcast %3 : vector<1x32xf32> to vector<16x32xf32>
    %669 = arith.mulf %667, %668 : vector<16x32xf32>
    %670 = vector.broadcast %4 : vector<1x32xf32> to vector<16x32xf32>
    %671 = arith.addf %669, %670 : vector<16x32xf32>
    %c0_102 = arith.constant 0 : index
    %c0_103 = arith.constant 0 : index
    %672 = vector.load %arg6[%c0_102, %c0_103] : memref<32x128xf32, #tpu.memory_space<vmem>>, vector<32x128xf32>
    %cst_104 = arith.constant dense<0.000000e+00> : vector<16x128xf32>
    %673 = tpu.matmul %671, %672, %cst_104 {dimension_numbers = #tpu.dot_dimension_numbers<[1], [0], [0], [1], [0, 0, 1, 1], [], []>} : vector<16x32xf32>, vector<32x128xf32>, vector<16x128xf32> -> vector<16x128xf32>
    %674 = vector.broadcast %7 : vector<1x128xf32> to vector<16x128xf32>
    %675 = arith.addf %673, %674 : vector<16x128xf32>
    %cst_105 = arith.constant 5.000000e-01 : f32
    %676 = vector.broadcast %cst_105 : f32 to vector<16x128xf32>
    %677 = arith.mulf %676, %675 : vector<16x128xf32>
    %cst_106 = arith.constant 0.707106769 : f32
    %678 = vector.broadcast %cst_106 : f32 to vector<16x128xf32>
    %679 = arith.mulf %675, %678 : vector<16x128xf32>
    %680 = math.erf %679 : vector<16x128xf32>
    %cst_107 = arith.constant 1.000000e+00 : f32
    %681 = vector.broadcast %cst_107 : f32 to vector<16x128xf32>
    %682 = arith.addf %681, %680 : vector<16x128xf32>
    %683 = arith.mulf %677, %682 : vector<16x128xf32>
    %c0_108 = arith.constant 0 : index
    %c0_109 = arith.constant 0 : index
    %684 = vector.load %arg7[%c0_108, %c0_109] : memref<128x32xf32, #tpu.memory_space<vmem>>, vector<128x32xf32>
    %cst_110 = arith.constant dense<0.000000e+00> : vector<16x32xf32>
    %685 = tpu.matmul %683, %684, %cst_110 {dimension_numbers = #tpu.dot_dimension_numbers<[1], [0], [0], [1], [0, 0, 1, 1], [], []>} : vector<16x128xf32>, vector<128x32xf32>, vector<16x32xf32> -> vector<16x32xf32>
    %686 = arith.addf %431, %685 : vector<16x32xf32>
    %687 = vector.broadcast %8 : vector<1x32xf32> to vector<16x32xf32>
    %688 = arith.addf %686, %687 : vector<16x32xf32>
    %cst_111 = arith.constant dense<0.000000e+00> : vector<16xf32>
    %689 = vector.multi_reduction <add>, %688, %cst_111 [1] : vector<16x32xf32> to vector<16xf32>
    %690 = vector.shape_cast %689 : vector<16xf32> to vector<16x1xf32>
    %cst_112 = arith.constant 3.200000e+01 : f32
    %691 = vector.broadcast %cst_112 : f32 to vector<16x1xf32>
    %692 = arith.divf %690, %691 : vector<16x1xf32>
    %693 = arith.mulf %688, %688 : vector<16x32xf32>
    %cst_113 = arith.constant dense<0.000000e+00> : vector<16xf32>
    %694 = vector.multi_reduction <add>, %693, %cst_113 [1] : vector<16x32xf32> to vector<16xf32>
    %695 = vector.shape_cast %694 : vector<16xf32> to vector<16x1xf32>
    %cst_114 = arith.constant 3.200000e+01 : f32
    %696 = vector.broadcast %cst_114 : f32 to vector<16x1xf32>
    %697 = arith.divf %695, %696 : vector<16x1xf32>
    %698 = vector.broadcast %692 : vector<16x1xf32> to vector<16x32xf32>
    %699 = arith.subf %688, %698 : vector<16x32xf32>
    %700 = arith.mulf %692, %692 : vector<16x1xf32>
    %701 = arith.subf %697, %700 : vector<16x1xf32>
    %cst_115 = arith.constant 9.99999974E-6 : f32
    %702 = vector.broadcast %cst_115 : f32 to vector<16x1xf32>
    %703 = arith.addf %701, %702 : vector<16x1xf32>
    %704 = math.rsqrt %703 : vector<16x1xf32>
    %705 = vector.broadcast %704 : vector<16x1xf32> to vector<16x32xf32>
    %706 = arith.mulf %699, %705 : vector<16x32xf32>
    %707 = vector.broadcast %5 : vector<1x32xf32> to vector<16x32xf32>
    %708 = arith.mulf %706, %707 : vector<16x32xf32>
    %709 = vector.broadcast %6 : vector<1x32xf32> to vector<16x32xf32>
    %710 = arith.addf %708, %709 : vector<16x32xf32>
    %711 = arith.addf %649, %710 : vector<16x32xf32>
    %cst_116 = arith.constant dense<0.000000e+00> : vector<16xf32>
    %712 = vector.multi_reduction <add>, %450, %cst_116 [1] : vector<16x32xf32> to vector<16xf32>
    %713 = vector.shape_cast %712 : vector<16xf32> to vector<16x1xf32>
    %cst_117 = arith.constant 3.200000e+01 : f32
    %714 = vector.broadcast %cst_117 : f32 to vector<16x1xf32>
    %715 = arith.divf %713, %714 : vector<16x1xf32>
    %716 = arith.mulf %450, %450 : vector<16x32xf32>
    %cst_118 = arith.constant dense<0.000000e+00> : vector<16xf32>
    %717 = vector.multi_reduction <add>, %716, %cst_118 [1] : vector<16x32xf32> to vector<16xf32>
    %718 = vector.shape_cast %717 : vector<16xf32> to vector<16x1xf32>
    %cst_119 = arith.constant 3.200000e+01 : f32
    %719 = vector.broadcast %cst_119 : f32 to vector<16x1xf32>
    %720 = arith.divf %718, %719 : vector<16x1xf32>
    %721 = vector.broadcast %715 : vector<16x1xf32> to vector<16x32xf32>
    %722 = arith.subf %450, %721 : vector<16x32xf32>
    %723 = arith.mulf %715, %715 : vector<16x1xf32>
    %724 = arith.subf %720, %723 : vector<16x1xf32>
    %cst_120 = arith.constant 9.99999974E-6 : f32
    %725 = vector.broadcast %cst_120 : f32 to vector<16x1xf32>
    %726 = arith.addf %724, %725 : vector<16x1xf32>
    %727 = math.rsqrt %726 : vector<16x1xf32>
    %728 = vector.broadcast %727 : vector<16x1xf32> to vector<16x32xf32>
    %729 = arith.mulf %722, %728 : vector<16x32xf32>
    %730 = vector.broadcast %3 : vector<1x32xf32> to vector<16x32xf32>
    %731 = arith.mulf %729, %730 : vector<16x32xf32>
    %732 = vector.broadcast %4 : vector<1x32xf32> to vector<16x32xf32>
    %733 = arith.addf %731, %732 : vector<16x32xf32>
    %c0_121 = arith.constant 0 : index
    %c0_122 = arith.constant 0 : index
    %734 = vector.load %arg6[%c0_121, %c0_122] : memref<32x128xf32, #tpu.memory_space<vmem>>, vector<32x128xf32>
    %cst_123 = arith.constant dense<0.000000e+00> : vector<16x128xf32>
    %735 = tpu.matmul %733, %734, %cst_123 {dimension_numbers = #tpu.dot_dimension_numbers<[1], [0], [0], [1], [0, 0, 1, 1], [], []>} : vector<16x32xf32>, vector<32x128xf32>, vector<16x128xf32> -> vector<16x128xf32>
    %736 = vector.broadcast %7 : vector<1x128xf32> to vector<16x128xf32>
    %737 = arith.addf %735, %736 : vector<16x128xf32>
    %cst_124 = arith.constant 5.000000e-01 : f32
    %738 = vector.broadcast %cst_124 : f32 to vector<16x128xf32>
    %739 = arith.mulf %738, %737 : vector<16x128xf32>
    %cst_125 = arith.constant 0.707106769 : f32
    %740 = vector.broadcast %cst_125 : f32 to vector<16x128xf32>
    %741 = arith.mulf %737, %740 : vector<16x128xf32>
    %742 = math.erf %741 : vector<16x128xf32>
    %cst_126 = arith.constant 1.000000e+00 : f32
    %743 = vector.broadcast %cst_126 : f32 to vector<16x128xf32>
    %744 = arith.addf %743, %742 : vector<16x128xf32>
    %745 = arith.mulf %739, %744 : vector<16x128xf32>
    %c0_127 = arith.constant 0 : index
    %c0_128 = arith.constant 0 : index
    %746 = vector.load %arg7[%c0_127, %c0_128] : memref<128x32xf32, #tpu.memory_space<vmem>>, vector<128x32xf32>
    %cst_129 = arith.constant dense<0.000000e+00> : vector<16x32xf32>
    %747 = tpu.matmul %745, %746, %cst_129 {dimension_numbers = #tpu.dot_dimension_numbers<[1], [0], [0], [1], [0, 0, 1, 1], [], []>} : vector<16x128xf32>, vector<128x32xf32>, vector<16x32xf32> -> vector<16x32xf32>
    %748 = arith.addf %450, %747 : vector<16x32xf32>
    %749 = vector.broadcast %8 : vector<1x32xf32> to vector<16x32xf32>
    %750 = arith.addf %748, %749 : vector<16x32xf32>
    %cst_130 = arith.constant dense<0.000000e+00> : vector<16xf32>
    %751 = vector.multi_reduction <add>, %750, %cst_130 [1] : vector<16x32xf32> to vector<16xf32>
    %752 = vector.shape_cast %751 : vector<16xf32> to vector<16x1xf32>
    %cst_131 = arith.constant 3.200000e+01 : f32
    %753 = vector.broadcast %cst_131 : f32 to vector<16x1xf32>
    %754 = arith.divf %752, %753 : vector<16x1xf32>
    %755 = arith.mulf %750, %750 : vector<16x32xf32>
    %cst_132 = arith.constant dense<0.000000e+00> : vector<16xf32>
    %756 = vector.multi_reduction <add>, %755, %cst_132 [1] : vector<16x32xf32> to vector<16xf32>
    %757 = vector.shape_cast %756 : vector<16xf32> to vector<16x1xf32>
    %cst_133 = arith.constant 3.200000e+01 : f32
    %758 = vector.broadcast %cst_133 : f32 to vector<16x1xf32>
    %759 = arith.divf %757, %758 : vector<16x1xf32>
    %760 = vector.broadcast %754 : vector<16x1xf32> to vector<16x32xf32>
    %761 = arith.subf %750, %760 : vector<16x32xf32>
    %762 = arith.mulf %754, %754 : vector<16x1xf32>
    %763 = arith.subf %759, %762 : vector<16x1xf32>
    %cst_134 = arith.constant 9.99999974E-6 : f32
    %764 = vector.broadcast %cst_134 : f32 to vector<16x1xf32>
    %765 = arith.addf %763, %764 : vector<16x1xf32>
    %766 = math.rsqrt %765 : vector<16x1xf32>
    %767 = vector.broadcast %766 : vector<16x1xf32> to vector<16x32xf32>
    %768 = arith.mulf %761, %767 : vector<16x32xf32>
    %769 = vector.broadcast %5 : vector<1x32xf32> to vector<16x32xf32>
    %770 = arith.mulf %768, %769 : vector<16x32xf32>
    %771 = vector.broadcast %6 : vector<1x32xf32> to vector<16x32xf32>
    %772 = arith.addf %770, %771 : vector<16x32xf32>
    %773 = arith.addf %711, %772 : vector<16x32xf32>
    %cst_135 = arith.constant dense<0.000000e+00> : vector<16xf32>
    %774 = vector.multi_reduction <add>, %469, %cst_135 [1] : vector<16x32xf32> to vector<16xf32>
    %775 = vector.shape_cast %774 : vector<16xf32> to vector<16x1xf32>
    %cst_136 = arith.constant 3.200000e+01 : f32
    %776 = vector.broadcast %cst_136 : f32 to vector<16x1xf32>
    %777 = arith.divf %775, %776 : vector<16x1xf32>
    %778 = arith.mulf %469, %469 : vector<16x32xf32>
    %cst_137 = arith.constant dense<0.000000e+00> : vector<16xf32>
    %779 = vector.multi_reduction <add>, %778, %cst_137 [1] : vector<16x32xf32> to vector<16xf32>
    %780 = vector.shape_cast %779 : vector<16xf32> to vector<16x1xf32>
    %cst_138 = arith.constant 3.200000e+01 : f32
    %781 = vector.broadcast %cst_138 : f32 to vector<16x1xf32>
    %782 = arith.divf %780, %781 : vector<16x1xf32>
    %783 = vector.broadcast %777 : vector<16x1xf32> to vector<16x32xf32>
    %784 = arith.subf %469, %783 : vector<16x32xf32>
    %785 = arith.mulf %777, %777 : vector<16x1xf32>
    %786 = arith.subf %782, %785 : vector<16x1xf32>
    %cst_139 = arith.constant 9.99999974E-6 : f32
    %787 = vector.broadcast %cst_139 : f32 to vector<16x1xf32>
    %788 = arith.addf %786, %787 : vector<16x1xf32>
    %789 = math.rsqrt %788 : vector<16x1xf32>
    %790 = vector.broadcast %789 : vector<16x1xf32> to vector<16x32xf32>
    %791 = arith.mulf %784, %790 : vector<16x32xf32>
    %792 = vector.broadcast %3 : vector<1x32xf32> to vector<16x32xf32>
    %793 = arith.mulf %791, %792 : vector<16x32xf32>
    %794 = vector.broadcast %4 : vector<1x32xf32> to vector<16x32xf32>
    %795 = arith.addf %793, %794 : vector<16x32xf32>
    %c0_140 = arith.constant 0 : index
    %c0_141 = arith.constant 0 : index
    %796 = vector.load %arg6[%c0_140, %c0_141] : memref<32x128xf32, #tpu.memory_space<vmem>>, vector<32x128xf32>
    %cst_142 = arith.constant dense<0.000000e+00> : vector<16x128xf32>
    %797 = tpu.matmul %795, %796, %cst_142 {dimension_numbers = #tpu.dot_dimension_numbers<[1], [0], [0], [1], [0, 0, 1, 1], [], []>} : vector<16x32xf32>, vector<32x128xf32>, vector<16x128xf32> -> vector<16x128xf32>
    %798 = vector.broadcast %7 : vector<1x128xf32> to vector<16x128xf32>
    %799 = arith.addf %797, %798 : vector<16x128xf32>
    %cst_143 = arith.constant 5.000000e-01 : f32
    %800 = vector.broadcast %cst_143 : f32 to vector<16x128xf32>
    %801 = arith.mulf %800, %799 : vector<16x128xf32>
    %cst_144 = arith.constant 0.707106769 : f32
    %802 = vector.broadcast %cst_144 : f32 to vector<16x128xf32>
    %803 = arith.mulf %799, %802 : vector<16x128xf32>
    %804 = math.erf %803 : vector<16x128xf32>
    %cst_145 = arith.constant 1.000000e+00 : f32
    %805 = vector.broadcast %cst_145 : f32 to vector<16x128xf32>
    %806 = arith.addf %805, %804 : vector<16x128xf32>
    %807 = arith.mulf %801, %806 : vector<16x128xf32>
    %c0_146 = arith.constant 0 : index
    %c0_147 = arith.constant 0 : index
    %808 = vector.load %arg7[%c0_146, %c0_147] : memref<128x32xf32, #tpu.memory_space<vmem>>, vector<128x32xf32>
    %cst_148 = arith.constant dense<0.000000e+00> : vector<16x32xf32>
    %809 = tpu.matmul %807, %808, %cst_148 {dimension_numbers = #tpu.dot_dimension_numbers<[1], [0], [0], [1], [0, 0, 1, 1], [], []>} : vector<16x128xf32>, vector<128x32xf32>, vector<16x32xf32> -> vector<16x32xf32>
    %810 = arith.addf %469, %809 : vector<16x32xf32>
    %811 = vector.broadcast %8 : vector<1x32xf32> to vector<16x32xf32>
    %812 = arith.addf %810, %811 : vector<16x32xf32>
    %cst_149 = arith.constant dense<0.000000e+00> : vector<16xf32>
    %813 = vector.multi_reduction <add>, %812, %cst_149 [1] : vector<16x32xf32> to vector<16xf32>
    %814 = vector.shape_cast %813 : vector<16xf32> to vector<16x1xf32>
    %cst_150 = arith.constant 3.200000e+01 : f32
    %815 = vector.broadcast %cst_150 : f32 to vector<16x1xf32>
    %816 = arith.divf %814, %815 : vector<16x1xf32>
    %817 = arith.mulf %812, %812 : vector<16x32xf32>
    %cst_151 = arith.constant dense<0.000000e+00> : vector<16xf32>
    %818 = vector.multi_reduction <add>, %817, %cst_151 [1] : vector<16x32xf32> to vector<16xf32>
    %819 = vector.shape_cast %818 : vector<16xf32> to vector<16x1xf32>
    %cst_152 = arith.constant 3.200000e+01 : f32
    %820 = vector.broadcast %cst_152 : f32 to vector<16x1xf32>
    %821 = arith.divf %819, %820 : vector<16x1xf32>
    %822 = vector.broadcast %816 : vector<16x1xf32> to vector<16x32xf32>
    %823 = arith.subf %812, %822 : vector<16x32xf32>
    %824 = arith.mulf %816, %816 : vector<16x1xf32>
    %825 = arith.subf %821, %824 : vector<16x1xf32>
    %cst_153 = arith.constant 9.99999974E-6 : f32
    %826 = vector.broadcast %cst_153 : f32 to vector<16x1xf32>
    %827 = arith.addf %825, %826 : vector<16x1xf32>
    %828 = math.rsqrt %827 : vector<16x1xf32>
    %829 = vector.broadcast %828 : vector<16x1xf32> to vector<16x32xf32>
    %830 = arith.mulf %823, %829 : vector<16x32xf32>
    %831 = vector.broadcast %5 : vector<1x32xf32> to vector<16x32xf32>
    %832 = arith.mulf %830, %831 : vector<16x32xf32>
    %833 = vector.broadcast %6 : vector<1x32xf32> to vector<16x32xf32>
    %834 = arith.addf %832, %833 : vector<16x32xf32>
    %835 = arith.addf %773, %834 : vector<16x32xf32>
    %cst_154 = arith.constant dense<0.000000e+00> : vector<16xf32>
    %836 = vector.multi_reduction <add>, %488, %cst_154 [1] : vector<16x32xf32> to vector<16xf32>
    %837 = vector.shape_cast %836 : vector<16xf32> to vector<16x1xf32>
    %cst_155 = arith.constant 3.200000e+01 : f32
    %838 = vector.broadcast %cst_155 : f32 to vector<16x1xf32>
    %839 = arith.divf %837, %838 : vector<16x1xf32>
    %840 = arith.mulf %488, %488 : vector<16x32xf32>
    %cst_156 = arith.constant dense<0.000000e+00> : vector<16xf32>
    %841 = vector.multi_reduction <add>, %840, %cst_156 [1] : vector<16x32xf32> to vector<16xf32>
    %842 = vector.shape_cast %841 : vector<16xf32> to vector<16x1xf32>
    %cst_157 = arith.constant 3.200000e+01 : f32
    %843 = vector.broadcast %cst_157 : f32 to vector<16x1xf32>
    %844 = arith.divf %842, %843 : vector<16x1xf32>
    %845 = vector.broadcast %839 : vector<16x1xf32> to vector<16x32xf32>
    %846 = arith.subf %488, %845 : vector<16x32xf32>
    %847 = arith.mulf %839, %839 : vector<16x1xf32>
    %848 = arith.subf %844, %847 : vector<16x1xf32>
    %cst_158 = arith.constant 9.99999974E-6 : f32
    %849 = vector.broadcast %cst_158 : f32 to vector<16x1xf32>
    %850 = arith.addf %848, %849 : vector<16x1xf32>
    %851 = math.rsqrt %850 : vector<16x1xf32>
    %852 = vector.broadcast %851 : vector<16x1xf32> to vector<16x32xf32>
    %853 = arith.mulf %846, %852 : vector<16x32xf32>
    %854 = vector.broadcast %3 : vector<1x32xf32> to vector<16x32xf32>
    %855 = arith.mulf %853, %854 : vector<16x32xf32>
    %856 = vector.broadcast %4 : vector<1x32xf32> to vector<16x32xf32>
    %857 = arith.addf %855, %856 : vector<16x32xf32>
    %c0_159 = arith.constant 0 : index
    %c0_160 = arith.constant 0 : index
    %858 = vector.load %arg6[%c0_159, %c0_160] : memref<32x128xf32, #tpu.memory_space<vmem>>, vector<32x128xf32>
    %cst_161 = arith.constant dense<0.000000e+00> : vector<16x128xf32>
    %859 = tpu.matmul %857, %858, %cst_161 {dimension_numbers = #tpu.dot_dimension_numbers<[1], [0], [0], [1], [0, 0, 1, 1], [], []>} : vector<16x32xf32>, vector<32x128xf32>, vector<16x128xf32> -> vector<16x128xf32>
    %860 = vector.broadcast %7 : vector<1x128xf32> to vector<16x128xf32>
    %861 = arith.addf %859, %860 : vector<16x128xf32>
    %cst_162 = arith.constant 5.000000e-01 : f32
    %862 = vector.broadcast %cst_162 : f32 to vector<16x128xf32>
    %863 = arith.mulf %862, %861 : vector<16x128xf32>
    %cst_163 = arith.constant 0.707106769 : f32
    %864 = vector.broadcast %cst_163 : f32 to vector<16x128xf32>
    %865 = arith.mulf %861, %864 : vector<16x128xf32>
    %866 = math.erf %865 : vector<16x128xf32>
    %cst_164 = arith.constant 1.000000e+00 : f32
    %867 = vector.broadcast %cst_164 : f32 to vector<16x128xf32>
    %868 = arith.addf %867, %866 : vector<16x128xf32>
    %869 = arith.mulf %863, %868 : vector<16x128xf32>
    %c0_165 = arith.constant 0 : index
    %c0_166 = arith.constant 0 : index
    %870 = vector.load %arg7[%c0_165, %c0_166] : memref<128x32xf32, #tpu.memory_space<vmem>>, vector<128x32xf32>
    %cst_167 = arith.constant dense<0.000000e+00> : vector<16x32xf32>
    %871 = tpu.matmul %869, %870, %cst_167 {dimension_numbers = #tpu.dot_dimension_numbers<[1], [0], [0], [1], [0, 0, 1, 1], [], []>} : vector<16x128xf32>, vector<128x32xf32>, vector<16x32xf32> -> vector<16x32xf32>
    %872 = arith.addf %488, %871 : vector<16x32xf32>
    %873 = vector.broadcast %8 : vector<1x32xf32> to vector<16x32xf32>
    %874 = arith.addf %872, %873 : vector<16x32xf32>
    %cst_168 = arith.constant dense<0.000000e+00> : vector<16xf32>
    %875 = vector.multi_reduction <add>, %874, %cst_168 [1] : vector<16x32xf32> to vector<16xf32>
    %876 = vector.shape_cast %875 : vector<16xf32> to vector<16x1xf32>
    %cst_169 = arith.constant 3.200000e+01 : f32
    %877 = vector.broadcast %cst_169 : f32 to vector<16x1xf32>
    %878 = arith.divf %876, %877 : vector<16x1xf32>
    %879 = arith.mulf %874, %874 : vector<16x32xf32>
    %cst_170 = arith.constant dense<0.000000e+00> : vector<16xf32>
    %880 = vector.multi_reduction <add>, %879, %cst_170 [1] : vector<16x32xf32> to vector<16xf32>
    %881 = vector.shape_cast %880 : vector<16xf32> to vector<16x1xf32>
    %cst_171 = arith.constant 3.200000e+01 : f32
    %882 = vector.broadcast %cst_171 : f32 to vector<16x1xf32>
    %883 = arith.divf %881, %882 : vector<16x1xf32>
    %884 = vector.broadcast %878 : vector<16x1xf32> to vector<16x32xf32>
    %885 = arith.subf %874, %884 : vector<16x32xf32>
    %886 = arith.mulf %878, %878 : vector<16x1xf32>
    %887 = arith.subf %883, %886 : vector<16x1xf32>
    %cst_172 = arith.constant 9.99999974E-6 : f32
    %888 = vector.broadcast %cst_172 : f32 to vector<16x1xf32>
    %889 = arith.addf %887, %888 : vector<16x1xf32>
    %890 = math.rsqrt %889 : vector<16x1xf32>
    %891 = vector.broadcast %890 : vector<16x1xf32> to vector<16x32xf32>
    %892 = arith.mulf %885, %891 : vector<16x32xf32>
    %893 = vector.broadcast %5 : vector<1x32xf32> to vector<16x32xf32>
    %894 = arith.mulf %892, %893 : vector<16x32xf32>
    %895 = vector.broadcast %6 : vector<1x32xf32> to vector<16x32xf32>
    %896 = arith.addf %894, %895 : vector<16x32xf32>
    %897 = arith.addf %835, %896 : vector<16x32xf32>
    %cst_173 = arith.constant dense<0.000000e+00> : vector<16xf32>
    %898 = vector.multi_reduction <add>, %507, %cst_173 [1] : vector<16x32xf32> to vector<16xf32>
    %899 = vector.shape_cast %898 : vector<16xf32> to vector<16x1xf32>
    %cst_174 = arith.constant 3.200000e+01 : f32
    %900 = vector.broadcast %cst_174 : f32 to vector<16x1xf32>
    %901 = arith.divf %899, %900 : vector<16x1xf32>
    %902 = arith.mulf %507, %507 : vector<16x32xf32>
    %cst_175 = arith.constant dense<0.000000e+00> : vector<16xf32>
    %903 = vector.multi_reduction <add>, %902, %cst_175 [1] : vector<16x32xf32> to vector<16xf32>
    %904 = vector.shape_cast %903 : vector<16xf32> to vector<16x1xf32>
    %cst_176 = arith.constant 3.200000e+01 : f32
    %905 = vector.broadcast %cst_176 : f32 to vector<16x1xf32>
    %906 = arith.divf %904, %905 : vector<16x1xf32>
    %907 = vector.broadcast %901 : vector<16x1xf32> to vector<16x32xf32>
    %908 = arith.subf %507, %907 : vector<16x32xf32>
    %909 = arith.mulf %901, %901 : vector<16x1xf32>
    %910 = arith.subf %906, %909 : vector<16x1xf32>
    %cst_177 = arith.constant 9.99999974E-6 : f32
    %911 = vector.broadcast %cst_177 : f32 to vector<16x1xf32>
    %912 = arith.addf %910, %911 : vector<16x1xf32>
    %913 = math.rsqrt %912 : vector<16x1xf32>
    %914 = vector.broadcast %913 : vector<16x1xf32> to vector<16x32xf32>
    %915 = arith.mulf %908, %914 : vector<16x32xf32>
    %916 = vector.broadcast %3 : vector<1x32xf32> to vector<16x32xf32>
    %917 = arith.mulf %915, %916 : vector<16x32xf32>
    %918 = vector.broadcast %4 : vector<1x32xf32> to vector<16x32xf32>
    %919 = arith.addf %917, %918 : vector<16x32xf32>
    %c0_178 = arith.constant 0 : index
    %c0_179 = arith.constant 0 : index
    %920 = vector.load %arg6[%c0_178, %c0_179] : memref<32x128xf32, #tpu.memory_space<vmem>>, vector<32x128xf32>
    %cst_180 = arith.constant dense<0.000000e+00> : vector<16x128xf32>
    %921 = tpu.matmul %919, %920, %cst_180 {dimension_numbers = #tpu.dot_dimension_numbers<[1], [0], [0], [1], [0, 0, 1, 1], [], []>} : vector<16x32xf32>, vector<32x128xf32>, vector<16x128xf32> -> vector<16x128xf32>
    %922 = vector.broadcast %7 : vector<1x128xf32> to vector<16x128xf32>
    %923 = arith.addf %921, %922 : vector<16x128xf32>
    %cst_181 = arith.constant 5.000000e-01 : f32
    %924 = vector.broadcast %cst_181 : f32 to vector<16x128xf32>
    %925 = arith.mulf %924, %923 : vector<16x128xf32>
    %cst_182 = arith.constant 0.707106769 : f32
    %926 = vector.broadcast %cst_182 : f32 to vector<16x128xf32>
    %927 = arith.mulf %923, %926 : vector<16x128xf32>
    %928 = math.erf %927 : vector<16x128xf32>
    %cst_183 = arith.constant 1.000000e+00 : f32
    %929 = vector.broadcast %cst_183 : f32 to vector<16x128xf32>
    %930 = arith.addf %929, %928 : vector<16x128xf32>
    %931 = arith.mulf %925, %930 : vector<16x128xf32>
    %c0_184 = arith.constant 0 : index
    %c0_185 = arith.constant 0 : index
    %932 = vector.load %arg7[%c0_184, %c0_185] : memref<128x32xf32, #tpu.memory_space<vmem>>, vector<128x32xf32>
    %cst_186 = arith.constant dense<0.000000e+00> : vector<16x32xf32>
    %933 = tpu.matmul %931, %932, %cst_186 {dimension_numbers = #tpu.dot_dimension_numbers<[1], [0], [0], [1], [0, 0, 1, 1], [], []>} : vector<16x128xf32>, vector<128x32xf32>, vector<16x32xf32> -> vector<16x32xf32>
    %934 = arith.addf %507, %933 : vector<16x32xf32>
    %935 = vector.broadcast %8 : vector<1x32xf32> to vector<16x32xf32>
    %936 = arith.addf %934, %935 : vector<16x32xf32>
    %cst_187 = arith.constant dense<0.000000e+00> : vector<16xf32>
    %937 = vector.multi_reduction <add>, %936, %cst_187 [1] : vector<16x32xf32> to vector<16xf32>
    %938 = vector.shape_cast %937 : vector<16xf32> to vector<16x1xf32>
    %cst_188 = arith.constant 3.200000e+01 : f32
    %939 = vector.broadcast %cst_188 : f32 to vector<16x1xf32>
    %940 = arith.divf %938, %939 : vector<16x1xf32>
    %941 = arith.mulf %936, %936 : vector<16x32xf32>
    %cst_189 = arith.constant dense<0.000000e+00> : vector<16xf32>
    %942 = vector.multi_reduction <add>, %941, %cst_189 [1] : vector<16x32xf32> to vector<16xf32>
    %943 = vector.shape_cast %942 : vector<16xf32> to vector<16x1xf32>
    %cst_190 = arith.constant 3.200000e+01 : f32
    %944 = vector.broadcast %cst_190 : f32 to vector<16x1xf32>
    %945 = arith.divf %943, %944 : vector<16x1xf32>
    %946 = vector.broadcast %940 : vector<16x1xf32> to vector<16x32xf32>
    %947 = arith.subf %936, %946 : vector<16x32xf32>
    %948 = arith.mulf %940, %940 : vector<16x1xf32>
    %949 = arith.subf %945, %948 : vector<16x1xf32>
    %cst_191 = arith.constant 9.99999974E-6 : f32
    %950 = vector.broadcast %cst_191 : f32 to vector<16x1xf32>
    %951 = arith.addf %949, %950 : vector<16x1xf32>
    %952 = math.rsqrt %951 : vector<16x1xf32>
    %953 = vector.broadcast %952 : vector<16x1xf32> to vector<16x32xf32>
    %954 = arith.mulf %947, %953 : vector<16x32xf32>
    %955 = vector.broadcast %5 : vector<1x32xf32> to vector<16x32xf32>
    %956 = arith.mulf %954, %955 : vector<16x32xf32>
    %957 = vector.broadcast %6 : vector<1x32xf32> to vector<16x32xf32>
    %958 = arith.addf %956, %957 : vector<16x32xf32>
    %959 = arith.addf %897, %958 : vector<16x32xf32>
    %cst_192 = arith.constant dense<0.000000e+00> : vector<16xf32>
    %960 = vector.multi_reduction <add>, %526, %cst_192 [1] : vector<16x32xf32> to vector<16xf32>
    %961 = vector.shape_cast %960 : vector<16xf32> to vector<16x1xf32>
    %cst_193 = arith.constant 3.200000e+01 : f32
    %962 = vector.broadcast %cst_193 : f32 to vector<16x1xf32>
    %963 = arith.divf %961, %962 : vector<16x1xf32>
    %964 = arith.mulf %526, %526 : vector<16x32xf32>
    %cst_194 = arith.constant dense<0.000000e+00> : vector<16xf32>
    %965 = vector.multi_reduction <add>, %964, %cst_194 [1] : vector<16x32xf32> to vector<16xf32>
    %966 = vector.shape_cast %965 : vector<16xf32> to vector<16x1xf32>
    %cst_195 = arith.constant 3.200000e+01 : f32
    %967 = vector.broadcast %cst_195 : f32 to vector<16x1xf32>
    %968 = arith.divf %966, %967 : vector<16x1xf32>
    %969 = vector.broadcast %963 : vector<16x1xf32> to vector<16x32xf32>
    %970 = arith.subf %526, %969 : vector<16x32xf32>
    %971 = arith.mulf %963, %963 : vector<16x1xf32>
    %972 = arith.subf %968, %971 : vector<16x1xf32>
    %cst_196 = arith.constant 9.99999974E-6 : f32
    %973 = vector.broadcast %cst_196 : f32 to vector<16x1xf32>
    %974 = arith.addf %972, %973 : vector<16x1xf32>
    %975 = math.rsqrt %974 : vector<16x1xf32>
    %976 = vector.broadcast %975 : vector<16x1xf32> to vector<16x32xf32>
    %977 = arith.mulf %970, %976 : vector<16x32xf32>
    %978 = vector.broadcast %3 : vector<1x32xf32> to vector<16x32xf32>
    %979 = arith.mulf %977, %978 : vector<16x32xf32>
    %980 = vector.broadcast %4 : vector<1x32xf32> to vector<16x32xf32>
    %981 = arith.addf %979, %980 : vector<16x32xf32>
    %c0_197 = arith.constant 0 : index
    %c0_198 = arith.constant 0 : index
    %982 = vector.load %arg6[%c0_197, %c0_198] : memref<32x128xf32, #tpu.memory_space<vmem>>, vector<32x128xf32>
    %cst_199 = arith.constant dense<0.000000e+00> : vector<16x128xf32>
    %983 = tpu.matmul %981, %982, %cst_199 {dimension_numbers = #tpu.dot_dimension_numbers<[1], [0], [0], [1], [0, 0, 1, 1], [], []>} : vector<16x32xf32>, vector<32x128xf32>, vector<16x128xf32> -> vector<16x128xf32>
    %984 = vector.broadcast %7 : vector<1x128xf32> to vector<16x128xf32>
    %985 = arith.addf %983, %984 : vector<16x128xf32>
    %cst_200 = arith.constant 5.000000e-01 : f32
    %986 = vector.broadcast %cst_200 : f32 to vector<16x128xf32>
    %987 = arith.mulf %986, %985 : vector<16x128xf32>
    %cst_201 = arith.constant 0.707106769 : f32
    %988 = vector.broadcast %cst_201 : f32 to vector<16x128xf32>
    %989 = arith.mulf %985, %988 : vector<16x128xf32>
    %990 = math.erf %989 : vector<16x128xf32>
    %cst_202 = arith.constant 1.000000e+00 : f32
    %991 = vector.broadcast %cst_202 : f32 to vector<16x128xf32>
    %992 = arith.addf %991, %990 : vector<16x128xf32>
    %993 = arith.mulf %987, %992 : vector<16x128xf32>
    %c0_203 = arith.constant 0 : index
    %c0_204 = arith.constant 0 : index
    %994 = vector.load %arg7[%c0_203, %c0_204] : memref<128x32xf32, #tpu.memory_space<vmem>>, vector<128x32xf32>
    %cst_205 = arith.constant dense<0.000000e+00> : vector<16x32xf32>
    %995 = tpu.matmul %993, %994, %cst_205 {dimension_numbers = #tpu.dot_dimension_numbers<[1], [0], [0], [1], [0, 0, 1, 1], [], []>} : vector<16x128xf32>, vector<128x32xf32>, vector<16x32xf32> -> vector<16x32xf32>
    %996 = arith.addf %526, %995 : vector<16x32xf32>
    %997 = vector.broadcast %8 : vector<1x32xf32> to vector<16x32xf32>
    %998 = arith.addf %996, %997 : vector<16x32xf32>
    %cst_206 = arith.constant dense<0.000000e+00> : vector<16xf32>
    %999 = vector.multi_reduction <add>, %998, %cst_206 [1] : vector<16x32xf32> to vector<16xf32>
    %1000 = vector.shape_cast %999 : vector<16xf32> to vector<16x1xf32>
    %cst_207 = arith.constant 3.200000e+01 : f32
    %1001 = vector.broadcast %cst_207 : f32 to vector<16x1xf32>
    %1002 = arith.divf %1000, %1001 : vector<16x1xf32>
    %1003 = arith.mulf %998, %998 : vector<16x32xf32>
    %cst_208 = arith.constant dense<0.000000e+00> : vector<16xf32>
    %1004 = vector.multi_reduction <add>, %1003, %cst_208 [1] : vector<16x32xf32> to vector<16xf32>
    %1005 = vector.shape_cast %1004 : vector<16xf32> to vector<16x1xf32>
    %cst_209 = arith.constant 3.200000e+01 : f32
    %1006 = vector.broadcast %cst_209 : f32 to vector<16x1xf32>
    %1007 = arith.divf %1005, %1006 : vector<16x1xf32>
    %1008 = vector.broadcast %1002 : vector<16x1xf32> to vector<16x32xf32>
    %1009 = arith.subf %998, %1008 : vector<16x32xf32>
    %1010 = arith.mulf %1002, %1002 : vector<16x1xf32>
    %1011 = arith.subf %1007, %1010 : vector<16x1xf32>
    %cst_210 = arith.constant 9.99999974E-6 : f32
    %1012 = vector.broadcast %cst_210 : f32 to vector<16x1xf32>
    %1013 = arith.addf %1011, %1012 : vector<16x1xf32>
    %1014 = math.rsqrt %1013 : vector<16x1xf32>
    %1015 = vector.broadcast %1014 : vector<16x1xf32> to vector<16x32xf32>
    %1016 = arith.mulf %1009, %1015 : vector<16x32xf32>
    %1017 = vector.broadcast %5 : vector<1x32xf32> to vector<16x32xf32>
    %1018 = arith.mulf %1016, %1017 : vector<16x32xf32>
    %1019 = vector.broadcast %6 : vector<1x32xf32> to vector<16x32xf32>
    %1020 = arith.addf %1018, %1019 : vector<16x32xf32>
    %1021 = arith.addf %959, %1020 : vector<16x32xf32>
    %cst_211 = arith.constant 1.250000e-01 : f32
    %1022 = vector.broadcast %cst_211 : f32 to vector<16x32xf32>
    %1023 = arith.mulf %1021, %1022 : vector<16x32xf32>
    %c0_212 = arith.constant 0 : index
    %c0_213 = arith.constant 0 : index
    %1024 = vector.load %arg8[%c0_212, %c0_213] : memref<32x128xf32, #tpu.memory_space<vmem>>, vector<32x128xf32>
    %cst_214 = arith.constant dense<0.000000e+00> : vector<16x128xf32>
    %1025 = tpu.matmul %1023, %1024, %cst_214 {dimension_numbers = #tpu.dot_dimension_numbers<[1], [0], [0], [1], [0, 0, 1, 1], [], []>} : vector<16x32xf32>, vector<32x128xf32>, vector<16x128xf32> -> vector<16x128xf32>
    %1026 = vector.broadcast %9 : vector<1x128xf32> to vector<16x128xf32>
    %1027 = arith.addf %1025, %1026 : vector<16x128xf32>
    %c0_215 = arith.constant 0 : index
    %c0_216 = arith.constant 0 : index
    %1028 = vector.load %arg9[%c0_215, %c0_216] : memref<16x128xf32, #tpu.memory_space<vmem>>, vector<16x128xf32>
    tpu.vector_store %arg9[%c0_215, %c0_216], %1027 {strides = array<i32>} : memref<16x128xf32, #tpu.memory_space<vmem>>, vector<16x128xf32>,
    return
  }
  func.func @transform_0(%arg0: i32) -> i32 {
    %c0_i32 = arith.constant 0 : i32
    %c0_i32_0 = arith.constant 0 : i32
    return %c0_i32 : i32
  }
  func.func @transform_1(%arg0: i32) -> (i32, i32) {
    %c0_i32 = arith.constant 0 : i32
    %c0_i32_0 = arith.constant 0 : i32
    return %arg0, %c0_i32 : i32, i32
  }
  func.func @transform_2(%arg0: i32) -> (i32, i32) {
    %c0_i32 = arith.constant 0 : i32
    %c0_i32_0 = arith.constant 0 : i32
    return %arg0, %c0_i32 : i32, i32
  }
  func.func @transform_3(%arg0: i32) -> (i32, i32) {
    %c0_i32 = arith.constant 0 : i32
    %c0_i32_0 = arith.constant 0 : i32
    return %arg0, %c0_i32 : i32, i32
  }
  func.func @transform_4(%arg0: i32) -> (i32, i32) {
    %c0_i32 = arith.constant 0 : i32
    %c0_i32_0 = arith.constant 0 : i32
    %c0_i32_1 = arith.constant 0 : i32
    return %c0_i32, %c0_i32_0 : i32, i32
  }
  func.func @transform_5(%arg0: i32) -> (i32, i32) {
    %c0_i32 = arith.constant 0 : i32
    %c0_i32_0 = arith.constant 0 : i32
    %c0_i32_1 = arith.constant 0 : i32
    return %c0_i32, %c0_i32_0 : i32, i32
  }
  func.func @transform_6(%arg0: i32) -> (i32, i32) {
    %c0_i32 = arith.constant 0 : i32
    %c0_i32_0 = arith.constant 0 : i32
    %c0_i32_1 = arith.constant 0 : i32
    return %c0_i32, %c0_i32_0 : i32, i32
  }
  func.func @transform_7(%arg0: i32) -> (i32, i32) {
    %c0_i32 = arith.constant 0 : i32
    %c0_i32_0 = arith.constant 0 : i32
    %c0_i32_1 = arith.constant 0 : i32
    return %c0_i32, %c0_i32_0 : i32, i32
  }
  func.func @transform_8(%arg0: i32) -> (i32, i32) {
    %c0_i32 = arith.constant 0 : i32
    %c0_i32_0 = arith.constant 0 : i32
    return %arg0, %c0_i32 : i32, i32
  }
}

</mosaic_0001>

<llo_original>
// kernel: tpu_custom_call.1
$region0: #{tpu_custom_call.1}
  #allocation0 [shape = 'u32[]', space=smem, size = 0x4, offset = 0x4, fixed_abs, tag = 'smem constant byte address 0x4 - core index']
  #allocation1 [shape = 'u32[144,128]{1,0:T(1,128)}', space=vmem, size = 0x12000, scoped, tag = 'internal scratch']
  %s0 = inlined_call_operand.vmem [shape: f32[76], index: 0, kind: input, shape index: {}]
  %s1 = inlined_call_operand.vmem [shape: f32[128,16], index: 1, kind: input, shape index: {}]
  %s2 = inlined_call_operand.vmem [shape: f32[128,8], index: 2, kind: input, shape index: {}]
  %s3 = inlined_call_operand.vmem [shape: f32[128,8], index: 3, kind: input, shape index: {}]
  %s4 = inlined_call_operand.vmem [shape: f32[9,128], index: 4, kind: input, shape index: {}]
  %s5 = inlined_call_operand.vmem [shape: f32[32,128], index: 5, kind: input, shape index: {}]
  %s6 = inlined_call_operand.vmem [shape: f32[128,32], index: 6, kind: input, shape index: {}]
  %s7 = inlined_call_operand.vmem [shape: f32[32,128], index: 7, kind: input, shape index: {}]
  %s8 = inlined_call_operand.hbm [shape: f32[16,128], index: 8, kind: output, shape index: {}]
  %s9 = sld [smem:[#allocation0]]
  $region46: #{tpu_custom_call.1} parent=0
    _
  %s11 = ssub.s32 1, %s9
  %s12 = scalar_select 0, %s11, %s9
  $region1: #{tpu_custom_call.1} parent=0
    #allocation2 [shape = 'u8[512]{0}', space=smem, size = 0x200, scoped, tag = 'input window, operand 0, single buffered']
    #allocation3 [shape = 's32[1]{0}', space=sflag, size = 0x4, scoped, tag = 'scoped memory for tpu_custom_call.1']
    #allocation4 [shape = 's32[1]{0}', space=sflag, size = 0x4, scoped, tag = 'scoped memory for tpu_custom_call.1']
    #allocation5 [shape = 'u8[8192]{0}', space=vmem, size = 0x2000, scoped, tag = 'output window, operand 0, single buffered']
    %13 = vsyncpa [#allocation4], 0
    %14 = vsyncpa [#allocation3], 0
    // Predicated region
    $region2: #{tpu_custom_call.1} parent=1 // pred_check
      _
    $region3: #{tpu_custom_call.1} parent=1 // pred_check_branch
      %16 = sbr.rel (0) target = $region5
    $region4: #{tpu_custom_call.1} parent=1 // pred_region
      %s18 = ssub.s32 16, 16
      %19 = vsyncadd [#allocation4], %s18
      %s21 = sshll.u32 %s0, 4
      %s22 = int_to_ptr.vmem [resolvable:$true] %s21
      %24 = dma.vmem_to_smem %s22, 16, [#allocation2], [#allocation4]
    $region5: #{tpu_custom_call.1} parent=1 // pred_fallthru
      _
    // Predicated region
    $region6: #{tpu_custom_call.1} parent=1 // pred_check
      _
    $region7: #{tpu_custom_call.1} parent=1 // pred_check_branch
      %26 = sbr.rel (0) target = $region9
    $region8: #{tpu_custom_call.1} parent=1 // pred_region
      _
    $region9: #{tpu_custom_call.1} parent=1 // pred_fallthru
      _
    // Predicated region
    $region10: #{tpu_custom_call.1} parent=1 // pred_check
      _
    $region11: #{tpu_custom_call.1} parent=1 // pred_check_branch
      %28 = sbr.rel (0) target = $region13
    $region12: #{tpu_custom_call.1} parent=1 // pred_region
      _
    $region13: #{tpu_custom_call.1} parent=1 // pred_fallthru
      _
    // Predicated region
    $region14: #{tpu_custom_call.1} parent=1 // pred_check
      _
    $region15: #{tpu_custom_call.1} parent=1 // pred_check_branch
      %30 = sbr.rel (0) target = $region17
    $region16: #{tpu_custom_call.1} parent=1 // pred_region
      _
    $region17: #{tpu_custom_call.1} parent=1 // pred_fallthru
      _
    // Predicated region
    $region18: #{tpu_custom_call.1} parent=1 // pred_check
      _
    $region19: #{tpu_custom_call.1} parent=1 // pred_check_branch
      %32 = sbr.rel (0) target = $region21
    $region20: #{tpu_custom_call.1} parent=1 // pred_region
      _
    $region21: #{tpu_custom_call.1} parent=1 // pred_fallthru
      _
    // Predicated region
    $region22: #{tpu_custom_call.1} parent=1 // pred_check
      _
    $region23: #{tpu_custom_call.1} parent=1 // pred_check_branch
      %34 = sbr.rel (0) target = $region25
    $region24: #{tpu_custom_call.1} parent=1 // pred_region
      _
    $region25: #{tpu_custom_call.1} parent=1 // pred_fallthru
      _
    // Predicated region
    $region26: #{tpu_custom_call.1} parent=1 // pred_check
      _
    $region27: #{tpu_custom_call.1} parent=1 // pred_check_branch
      %36 = sbr.rel (0) target = $region29
    $region28: #{tpu_custom_call.1} parent=1 // pred_region
      _
    $region29: #{tpu_custom_call.1} parent=1 // pred_fallthru
      _
    // Predicated region
    $region30: #{tpu_custom_call.1} parent=1 // pred_check
      _
    $region31: #{tpu_custom_call.1} parent=1 // pred_check_branch
      %38 = sbr.rel (0) target = $region33
    $region32: #{tpu_custom_call.1} parent=1 // pred_region
      _
    $region33: #{tpu_custom_call.1} parent=1 // pred_fallthru
      _
    // Predicated region
    $region34: #{tpu_custom_call.1} parent=1 // pred_check
      _
    $region35: #{tpu_custom_call.1} parent=1 // pred_check_branch
      %40 = sbr.rel (0) target = $region37
    $region36: #{tpu_custom_call.1} parent=1 // pred_region
      %41 = dma.done [#allocation4], 16
    $region37: #{tpu_custom_call.1} parent=1 // pred_fallthru
      _
    %42 = sfence
    %v43 = vld [vmem:[%s4] sm:$0xff]
    %v44 = vld [vmem:[%s4 + $0x8] sm:$0x1]
    %v45 = vld [vmem:[%s1] sm:$0xff]
    %v46 = vld [vmem:[%s1 + $0x8] sm:$0xff]
    %v47 = vld [vmem:[%s1 + $0x10] sm:$0xff]
    %v48 = vld [vmem:[%s1 + $0x18] sm:$0xff]
    %v49 = vld [vmem:[%s1 + $0x20] sm:$0xff]
    %v50 = vld [vmem:[%s1 + $0x28] sm:$0xff]
    %v51 = vld [vmem:[%s1 + $0x30] sm:$0xff]
    %v52 = vld [vmem:[%s1 + $0x38] sm:$0xff]
    %v53 = vld [vmem:[%s1 + $0x40] sm:$0xff]
    %v54 = vld [vmem:[%s1 + $0x48] sm:$0xff]
    %v55 = vld [vmem:[%s1 + $0x50] sm:$0xff]
    %v56 = vld [vmem:[%s1 + $0x58] sm:$0xff]
    %v57 = vld [vmem:[%s1 + $0x60] sm:$0xff]
    %v58 = vld [vmem:[%s1 + $0x68] sm:$0xff]
    %v59 = vld [vmem:[%s1 + $0x70] sm:$0xff]
    %v60 = vld [vmem:[%s1 + $0x78] sm:$0xff]
    %v61 = vld [vmem:[%s2] sm:$0xff]
    %v62 = vld [vmem:[%s2 + $0x8] sm:$0xff]
    %v63 = vld [vmem:[%s2 + $0x10] sm:$0xff]
    %v64 = vld [vmem:[%s2 + $0x18] sm:$0xff]
    %v65 = vld [vmem:[%s2 + $0x20] sm:$0xff]
    %v66 = vld [vmem:[%s2 + $0x28] sm:$0xff]
    %v67 = vld [vmem:[%s2 + $0x30] sm:$0xff]
    %v68 = vld [vmem:[%s2 + $0x38] sm:$0xff]
    %v69 = vld [vmem:[%s2 + $0x40] sm:$0xff]
    %v70 = vld [vmem:[%s2 + $0x48] sm:$0xff]
    %v71 = vld [vmem:[%s2 + $0x50] sm:$0xff]
    %v72 = vld [vmem:[%s2 + $0x58] sm:$0xff]
    %v73 = vld [vmem:[%s2 + $0x60] sm:$0xff]
    %v74 = vld [vmem:[%s2 + $0x68] sm:$0xff]
    %v75 = vld [vmem:[%s2 + $0x70] sm:$0xff]
    %v76 = vld [vmem:[%s2 + $0x78] sm:$0xff]
    %v77 = vld [vmem:[%s3] sm:$0xff]
    %v78 = vld [vmem:[%s3 + $0x8] sm:$0xff]
    %v79 = vld [vmem:[%s3 + $0x10] sm:$0xff]
    %v80 = vld [vmem:[%s3 + $0x18] sm:$0xff]
    %v81 = vld [vmem:[%s3 + $0x20] sm:$0xff]
    %v82 = vld [vmem:[%s3 + $0x28] sm:$0xff]
    %v83 = vld [vmem:[%s3 + $0x30] sm:$0xff]
    %v84 = vld [vmem:[%s3 + $0x38] sm:$0xff]
    %v85 = vld [vmem:[%s3 + $0x40] sm:$0xff]
    %v86 = vld [vmem:[%s3 + $0x48] sm:$0xff]
    %v87 = vld [vmem:[%s3 + $0x50] sm:$0xff]
    %v88 = vld [vmem:[%s3 + $0x58] sm:$0xff]
    %v89 = vld [vmem:[%s3 + $0x60] sm:$0xff]
    %v90 = vld [vmem:[%s3 + $0x68] sm:$0xff]
    %v91 = vld [vmem:[%s3 + $0x70] sm:$0xff]
    %v92 = vld [vmem:[%s3 + $0x78] sm:$0xff]
    %109 = vrot.lane.b32.xlu0 %v61, 16
    %v110 = vpop.permute.xlu0 %109
    %111 = vrot.lane.b32.xlu0 %v62, 16
    %v112 = vpop.permute.xlu0 %111
    %113 = vrot.lane.b32.xlu0 %v63, 16
    %v114 = vpop.permute.xlu0 %113
    %115 = vrot.lane.b32.xlu0 %v64, 16
    %v116 = vpop.permute.xlu0 %115
    %117 = vrot.lane.b32.xlu0 %v65, 16
    %v118 = vpop.permute.xlu0 %117
    %119 = vrot.lane.b32.xlu0 %v66, 16
    %v120 = vpop.permute.xlu0 %119
    %121 = vrot.lane.b32.xlu0 %v67, 16
    %v122 = vpop.permute.xlu0 %121
    %123 = vrot.lane.b32.xlu0 %v68, 16
    %v124 = vpop.permute.xlu0 %123
    %125 = vrot.lane.b32.xlu0 %v69, 16
    %v126 = vpop.permute.xlu0 %125
    %127 = vrot.lane.b32.xlu0 %v70, 16
    %v128 = vpop.permute.xlu0 %127
    %129 = vrot.lane.b32.xlu0 %v71, 16
    %v130 = vpop.permute.xlu0 %129
    %131 = vrot.lane.b32.xlu0 %v72, 16
    %v132 = vpop.permute.xlu0 %131
    %133 = vrot.lane.b32.xlu0 %v73, 16
    %v134 = vpop.permute.xlu0 %133
    %135 = vrot.lane.b32.xlu0 %v74, 16
    %v136 = vpop.permute.xlu0 %135
    %137 = vrot.lane.b32.xlu0 %v75, 16
    %v138 = vpop.permute.xlu0 %137
    %139 = vrot.lane.b32.xlu0 %v76, 16
    %v140 = vpop.permute.xlu0 %139
    %173 = vrot.lane.b32.xlu0 %v77, 24
    %v174 = vpop.permute.xlu0 %173
    %175 = vrot.lane.b32.xlu0 %v78, 24
    %v176 = vpop.permute.xlu0 %175
    %177 = vrot.lane.b32.xlu0 %v79, 24
    %v178 = vpop.permute.xlu0 %177
    %179 = vrot.lane.b32.xlu0 %v80, 24
    %v180 = vpop.permute.xlu0 %179
    %181 = vrot.lane.b32.xlu0 %v81, 24
    %v182 = vpop.permute.xlu0 %181
    %183 = vrot.lane.b32.xlu0 %v82, 24
    %v184 = vpop.permute.xlu0 %183
    %185 = vrot.lane.b32.xlu0 %v83, 24
    %v186 = vpop.permute.xlu0 %185
    %187 = vrot.lane.b32.xlu0 %v84, 24
    %v188 = vpop.permute.xlu0 %187
    %189 = vrot.lane.b32.xlu0 %v85, 24
    %v190 = vpop.permute.xlu0 %189
    %191 = vrot.lane.b32.xlu0 %v86, 24
    %v192 = vpop.permute.xlu0 %191
    %193 = vrot.lane.b32.xlu0 %v87, 24
    %v194 = vpop.permute.xlu0 %193
    %195 = vrot.lane.b32.xlu0 %v88, 24
    %v196 = vpop.permute.xlu0 %195
    %197 = vrot.lane.b32.xlu0 %v89, 24
    %v198 = vpop.permute.xlu0 %197
    %199 = vrot.lane.b32.xlu0 %v90, 24
    %v200 = vpop.permute.xlu0 %199
    %201 = vrot.lane.b32.xlu0 %v91, 24
    %v202 = vpop.permute.xlu0 %201
    %203 = vrot.lane.b32.xlu0 %v92, 24
    %v204 = vpop.permute.xlu0 %203
    %vm221 = vcmask 130048
    %v222 = vsel %vm221, %v45, %v110
    %v223 = vsel %vm221, %v46, %v112
    %v224 = vsel %vm221, %v47, %v114
    %v225 = vsel %vm221, %v48, %v116
    %v226 = vsel %vm221, %v49, %v118
    %v227 = vsel %vm221, %v50, %v120
    %v228 = vsel %vm221, %v51, %v122
    %v229 = vsel %vm221, %v52, %v124
    %v230 = vsel %vm221, %v53, %v126
    %v231 = vsel %vm221, %v54, %v128
    %v232 = vsel %vm221, %v55, %v130
    %v233 = vsel %vm221, %v56, %v132
    %v234 = vsel %vm221, %v57, %v134
    %v235 = vsel %vm221, %v58, %v136
    %v236 = vsel %vm221, %v59, %v138
    %v237 = vsel %vm221, %v60, %v140
    %vm238 = vcmask 195584
    %v239 = vsel %vm238, %v222, %v174
    %v240 = vsel %vm238, %v223, %v176
    %v241 = vsel %vm238, %v224, %v178
    %v242 = vsel %vm238, %v225, %v180
    %v243 = vsel %vm238, %v226, %v182
    %v244 = vsel %vm238, %v227, %v184
    %v245 = vsel %vm238, %v228, %v186
    %v246 = vsel %vm238, %v229, %v188
    %v247 = vsel %vm238, %v230, %v190
    %v248 = vsel %vm238, %v231, %v192
    %v249 = vsel %vm238, %v232, %v194
    %v250 = vsel %vm238, %v233, %v196
    %v251 = vsel %vm238, %v234, %v198
    %v252 = vsel %vm238, %v235, %v200
    %v253 = vsel %vm238, %v236, %v202
    %v254 = vsel %vm238, %v237, %v204
    %v271 = vrot.slane %v240, 7
    %vm272 = vcmask 1041409
    %v273 = vsel %vm272, %v271, %v239
    %v274 = vrot.slane %v241, 6
    %vm275 = vcmask 1042434
    %v276 = vsel %vm275, %v274, %v273
    %v277 = vrot.slane %v242, 5
    %vm278 = vcmask 1043459
    %v279 = vsel %vm278, %v277, %v276
    %v280 = vrot.slane %v243, 4
    %vm281 = vcmask 1044484
    %v282 = vsel %vm281, %v280, %v279
    %v283 = vrot.slane %v244, 3
    %vm284 = vcmask 1045509
    %v285 = vsel %vm284, %v283, %v282
    %v286 = vrot.slane %v245, 2
    %vm287 = vcmask 1046534
    %v288 = vsel %vm287, %v286, %v285
    %v289 = vrot.slane %v246, 1
    %vm290 = vcmask 1047559
    %v291 = vsel %vm290, %v289, %v288
    %v292 = vrot.slane %v248, 7
    %v293 = vsel %vm272, %v292, %v247
    %v294 = vrot.slane %v249, 6
    %v295 = vsel %vm275, %v294, %v293
    %v296 = vrot.slane %v250, 5
    %v297 = vsel %vm278, %v296, %v295
    %v298 = vrot.slane %v251, 4
    %v299 = vsel %vm281, %v298, %v297
    %v300 = vrot.slane %v252, 3
    %v301 = vsel %vm284, %v300, %v299
    %v302 = vrot.slane %v253, 2
    %v303 = vsel %vm287, %v302, %v301
    %v304 = vrot.slane %v254, 1
    %v305 = vsel %vm290, %v304, %v303
    %vm308 = vcmask 261120
    %v309 = vsel %vm308, %v291, 0.0
    %310 = vadd.xlane.f32.xlu0 %v309
    %v311 = vpop.xlane.xlu0 %310
    %v312 = vsel %vm308, %v305, 0.0
    %313 = vadd.xlane.f32.xlu0 %v312
    %v314 = vpop.xlane.xlu0 %313
    %v315 = vrcp.pop 32.0
    %v316 = vmul.f32 %v311, %v315
    %v317 = vmul.f32 %v314, %v315
    %v318 = vmul.f32 %v239, %v239
    %v319 = vmul.f32 %v240, %v240
    %v320 = vmul.f32 %v241, %v241
    %v321 = vmul.f32 %v242, %v242
    %v322 = vmul.f32 %v243, %v243
    %v323 = vmul.f32 %v244, %v244
    %v324 = vmul.f32 %v245, %v245
    %v325 = vmul.f32 %v246, %v246
    %v326 = vmul.f32 %v247, %v247
    %v327 = vmul.f32 %v248, %v248
    %v328 = vmul.f32 %v249, %v249
    %v329 = vmul.f32 %v250, %v250
    %v330 = vmul.f32 %v251, %v251
    %v331 = vmul.f32 %v252, %v252
    %v332 = vmul.f32 %v253, %v253
    %v333 = vmul.f32 %v254, %v254
    %v350 = vrot.slane %v319, 7
    %v351 = vsel %vm272, %v350, %v318
    %v352 = vrot.slane %v320, 6
    %v353 = vsel %vm275, %v352, %v351
    %v354 = vrot.slane %v321, 5
    %v355 = vsel %vm278, %v354, %v353
    %v356 = vrot.slane %v322, 4
    %v357 = vsel %vm281, %v356, %v355
    %v358 = vrot.slane %v323, 3
    %v359 = vsel %vm284, %v358, %v357
    %v360 = vrot.slane %v324, 2
    %v361 = vsel %vm287, %v360, %v359
    %v362 = vrot.slane %v325, 1
    %v363 = vsel %vm290, %v362, %v361
    %v364 = vrot.slane %v327, 7
    %v365 = vsel %vm272, %v364, %v326
    %v366 = vrot.slane %v328, 6
    %v367 = vsel %vm275, %v366, %v365
    %v368 = vrot.slane %v329, 5
    %v369 = vsel %vm278, %v368, %v367
    %v370 = vrot.slane %v330, 4
    %v371 = vsel %vm281, %v370, %v369
    %v372 = vrot.slane %v331, 3
    %v373 = vsel %vm284, %v372, %v371
    %v374 = vrot.slane %v332, 2
    %v375 = vsel %vm287, %v374, %v373
    %v376 = vrot.slane %v333, 1
    %v377 = vsel %vm290, %v376, %v375
    %v380 = vsel %vm308, %v363, 0.0
    %381 = vadd.xlane.f32.xlu0 %v380
    %v382 = vpop.xlane.xlu0 %381
    %v383 = vsel %vm308, %v377, 0.0
    %384 = vadd.xlane.f32.xlu0 %v383
    %v385 = vpop.xlane.xlu0 %384
    %v386 = vmul.f32 %v382, %v315
    %v387 = vmul.f32 %v385, %v315
    %v390 = vrot.slane %v316, 1
    %v391 = vrot.slane %v316, 2
    %v392 = vrot.slane %v316, 3
    %v393 = vrot.slane %v316, 4
    %v394 = vrot.slane %v316, 5
    %v395 = vrot.slane %v316, 6
    %v396 = vrot.slane %v316, 7
    %v397 = vrot.slane %v317, 1
    %v398 = vrot.slane %v317, 2
    %v399 = vrot.slane %v317, 3
    %v400 = vrot.slane %v317, 4
    %v401 = vrot.slane %v317, 5
    %v402 = vrot.slane %v317, 6
    %v403 = vrot.slane %v317, 7
    %v420 = vsub.f32 %v239, %v316
    %v421 = vsub.f32 %v240, %v390
    %v422 = vsub.f32 %v241, %v391
    %v423 = vsub.f32 %v242, %v392
    %v424 = vsub.f32 %v243, %v393
    %v425 = vsub.f32 %v244, %v394
    %v426 = vsub.f32 %v245, %v395
    %v427 = vsub.f32 %v246, %v396
    %v428 = vsub.f32 %v247, %v317
    %v429 = vsub.f32 %v248, %v397
    %v430 = vsub.f32 %v249, %v398
    %v431 = vsub.f32 %v250, %v399
    %v432 = vsub.f32 %v251, %v400
    %v433 = vsub.f32 %v252, %v401
    %v434 = vsub.f32 %v253, %v402
    %v435 = vsub.f32 %v254, %v403
    %v436 = vmul.f32 %v316, %v316
    %v437 = vmul.f32 %v317, %v317
    %v438 = vsub.f32 %v386, %v436
    %v439 = vsub.f32 %v387, %v437
    %v440 = vadd.f32 %v438, 1e-05
    %v441 = vadd.f32 %v439, 1e-05
    %v442 = vrsqrt.pop %v440
    %v443 = vrsqrt.pop %v441
    %v446 = vrot.slane %v442, 1
    %v447 = vrot.slane %v442, 2
    %v448 = vrot.slane %v442, 3
    %v449 = vrot.slane %v442, 4
    %v450 = vrot.slane %v442, 5
    %v451 = vrot.slane %v442, 6
    %v452 = vrot.slane %v442, 7
    %v453 = vrot.slane %v443, 1
    %v454 = vrot.slane %v443, 2
    %v455 = vrot.slane %v443, 3
    %v456 = vrot.slane %v443, 4
    %v457 = vrot.slane %v443, 5
    %v458 = vrot.slane %v443, 6
    %v459 = vrot.slane %v443, 7
    %v476 = vmul.f32 %v420, %v442
    %v477 = vmul.f32 %v421, %v446
    %v478 = vmul.f32 %v422, %v447
    %v479 = vmul.f32 %v423, %v448
    %v480 = vmul.f32 %v424, %v449
    %v481 = vmul.f32 %v425, %v450
    %v482 = vmul.f32 %v426, %v451
    %v483 = vmul.f32 %v427, %v452
    %v484 = vmul.f32 %v428, %v443
    %v485 = vmul.f32 %v429, %v453
    %v486 = vmul.f32 %v430, %v454
    %v487 = vmul.f32 %v431, %v455
    %v488 = vmul.f32 %v432, %v456
    %v489 = vmul.f32 %v433, %v457
    %v490 = vmul.f32 %v434, %v458
    %v491 = vmul.f32 %v435, %v459
    %v492 = vlaneseq
    %v493 = vshrl.u32 %v492, 7
    %v494 = vsub.s32 0, %v493
    %v495 = vrot.slane %v43, %v494
    %v496 = vmul.f32 %v476, %v495
    %v497 = vmul.f32 %v477, %v495
    %v498 = vmul.f32 %v478, %v495
    %v499 = vmul.f32 %v479, %v495
    %v500 = vmul.f32 %v480, %v495
    %v501 = vmul.f32 %v481, %v495
    %v502 = vmul.f32 %v482, %v495
    %v503 = vmul.f32 %v483, %v495
    %v504 = vmul.f32 %v484, %v495
    %v505 = vmul.f32 %v485, %v495
    %v506 = vmul.f32 %v486, %v495
    %v507 = vmul.f32 %v487, %v495
    %v508 = vmul.f32 %v488, %v495
    %v509 = vmul.f32 %v489, %v495
    %v510 = vmul.f32 %v490, %v495
    %v511 = vmul.f32 %v491, %v495
    %v512 = vlaneseq
    %v513 = vshrl.u32 %v512, 7
    %v514 = vsub.s32 1, %v513
    %v515 = vrot.slane %v43, %v514
    %v516 = vadd.f32 %v496, %v515
    %v517 = vadd.f32 %v497, %v515
    %v518 = vadd.f32 %v498, %v515
    %v519 = vadd.f32 %v499, %v515
    %v520 = vadd.f32 %v500, %v515
    %v521 = vadd.f32 %v501, %v515
    %v522 = vadd.f32 %v502, %v515
    %v523 = vadd.f32 %v503, %v515
    %v524 = vadd.f32 %v504, %v515
    %v525 = vadd.f32 %v505, %v515
    %v526 = vadd.f32 %v506, %v515
    %v527 = vadd.f32 %v507, %v515
    %v528 = vadd.f32 %v508, %v515
    %v529 = vadd.f32 %v509, %v515
    %v530 = vadd.f32 %v510, %v515
    %v531 = vadd.f32 %v511, %v515
    %v532 = vsel %vm275, %v271, %v239
    %v533 = vsel %vm278, %v274, %v532
    %v534 = vsel %vm281, %v277, %v533
    %v535 = vsel %vm284, %v280, %v534
    %v536 = vsel %vm287, %v283, %v535
    %v537 = vsel %vm290, %v286, %v536
    %v538 = vsel %vm272, %v247, %v289
    %v539 = vsel %vm275, %v292, %v538
    %v540 = vsel %vm278, %v294, %v539
    %v541 = vsel %vm281, %v296, %v540
    %v542 = vsel %vm284, %v298, %v541
    %v543 = vsel %vm287, %v300, %v542
    %v544 = vsel %vm290, %v302, %v543
    %vm548 = vcmask 261121
    %v549 = vsel %vm548, %v537, 0.0
    %550 = vadd.xlane.f32.xlu0 %v549
    %v551 = vpop.xlane.xlu0 %550
    %v552 = vsel %vm308, %v544, 0.0
    %553 = vadd.xlane.f32.xlu0 %v552
    %v554 = vpop.xlane.xlu0 %553
    %vm555 = vcmask 253952
    %v556 = vsel %vm555, %v304, 0.0
    %557 = vadd.xlane.f32.xlu0 %v556
    %v558 = vpop.xlane.xlu0 %557
    %v559 = vmul.f32 %v551, %v315
    %v560 = vmul.f32 %v554, %v315
    %v561 = vmul.f32 %v558, %v315
    %v562 = vsel %vm275, %v350, %v318
    %v563 = vsel %vm278, %v352, %v562
    %v564 = vsel %vm281, %v354, %v563
    %v565 = vsel %vm284, %v356, %v564
    %v566 = vsel %vm287, %v358, %v565
    %v567 = vsel %vm290, %v360, %v566
    %v568 = vsel %vm272, %v326, %v362
    %v569 = vsel %vm275, %v364, %v568
    %v570 = vsel %vm278, %v366, %v569
    %v571 = vsel %vm281, %v368, %v570
    %v572 = vsel %vm284, %v370, %v571
    %v573 = vsel %vm287, %v372, %v572
    %v574 = vsel %vm290, %v374, %v573
    %v578 = vsel %vm548, %v567, 0.0
    %579 = vadd.xlane.f32.xlu0 %v578
    %v580 = vpop.xlane.xlu0 %579
    %v581 = vsel %vm308, %v574, 0.0
    %582 = vadd.xlane.f32.xlu0 %v581
    %v583 = vpop.xlane.xlu0 %582
    %v584 = vsel %vm555, %v376, 0.0
    %585 = vadd.xlane.f32.xlu0 %v584
    %v586 = vpop.xlane.xlu0 %585
    %v587 = vmul.f32 %v580, %v315
    %v588 = vmul.f32 %v583, %v315
    %v589 = vmul.f32 %v586, %v315
    %v593 = vrot.slane %v559, 1
    %v594 = vrot.slane %v559, 2
    %v595 = vrot.slane %v559, 3
    %v596 = vrot.slane %v559, 4
    %v597 = vrot.slane %v559, 5
    %v598 = vrot.slane %v559, 6
    %v599 = vrot.slane %v560, 7
    %v600 = vrot.slane %v560, 1
    %v601 = vrot.slane %v560, 2
    %v602 = vrot.slane %v560, 3
    %v603 = vrot.slane %v560, 4
    %v604 = vrot.slane %v560, 5
    %v605 = vrot.slane %v560, 6
    %v606 = vrot.slane %v561, 7
    %v623 = vsub.f32 %v239, %v559
    %v624 = vsub.f32 %v240, %v593
    %v625 = vsub.f32 %v241, %v594
    %v626 = vsub.f32 %v242, %v595
    %v627 = vsub.f32 %v243, %v596
    %v628 = vsub.f32 %v244, %v597
    %v629 = vsub.f32 %v245, %v598
    %v630 = vsub.f32 %v246, %v599
    %v631 = vsub.f32 %v247, %v560
    %v632 = vsub.f32 %v248, %v600
    %v633 = vsub.f32 %v249, %v601
    %v634 = vsub.f32 %v250, %v602
    %v635 = vsub.f32 %v251, %v603
    %v636 = vsub.f32 %v252, %v604
    %v637 = vsub.f32 %v253, %v605
    %v638 = vsub.f32 %v254, %v606
    %v639 = vmul.f32 %v559, %v559
    %v640 = vmul.f32 %v560, %v560
    %v641 = vmul.f32 %v561, %v561
    %v642 = vsub.f32 %v587, %v639
    %v643 = vsub.f32 %v588, %v640
    %v644 = vsub.f32 %v589, %v641
    %v645 = vadd.f32 %v642, 1e-05
    %v646 = vadd.f32 %v643, 1e-05
    %v647 = vadd.f32 %v644, 1e-05
    %v648 = vrsqrt.pop %v645
    %v649 = vrsqrt.pop %v646
    %v650 = vrsqrt.pop %v647
    %v654 = vrot.slane %v648, 1
    %v655 = vrot.slane %v648, 2
    %v656 = vrot.slane %v648, 3
    %v657 = vrot.slane %v648, 4
    %v658 = vrot.slane %v648, 5
    %v659 = vrot.slane %v648, 6
    %v660 = vrot.slane %v649, 7
    %v661 = vrot.slane %v649, 1
    %v662 = vrot.slane %v649, 2
    %v663 = vrot.slane %v649, 3
    %v664 = vrot.slane %v649, 4
    %v665 = vrot.slane %v649, 5
    %v666 = vrot.slane %v649, 6
    %v667 = vrot.slane %v650, 7
    %v684 = vmul.f32 %v623, %v648
    %v685 = vmul.f32 %v624, %v654
    %v686 = vmul.f32 %v625, %v655
    %v687 = vmul.f32 %v626, %v656
    %v688 = vmul.f32 %v627, %v657
    %v689 = vmul.f32 %v628, %v658
    %v690 = vmul.f32 %v629, %v659
    %v691 = vmul.f32 %v630, %v660
    %v692 = vmul.f32 %v631, %v649
    %v693 = vmul.f32 %v632, %v661
    %v694 = vmul.f32 %v633, %v662
    %v695 = vmul.f32 %v634, %v663
    %v696 = vmul.f32 %v635, %v664
    %v697 = vmul.f32 %v636, %v665
    %v698 = vmul.f32 %v637, %v666
    %v699 = vmul.f32 %v638, %v667
    %v700 = vmul.f32 %v684, %v495
    %v701 = vmul.f32 %v685, %v495
    %v702 = vmul.f32 %v686, %v495
    %v703 = vmul.f32 %v687, %v495
    %v704 = vmul.f32 %v688, %v495
    %v705 = vmul.f32 %v689, %v495
    %v706 = vmul.f32 %v690, %v495
    %v707 = vmul.f32 %v691, %v495
    %v708 = vmul.f32 %v692, %v495
    %v709 = vmul.f32 %v693, %v495
    %v710 = vmul.f32 %v694, %v495
    %v711 = vmul.f32 %v695, %v495
    %v712 = vmul.f32 %v696, %v495
    %v713 = vmul.f32 %v697, %v495
    %v714 = vmul.f32 %v698, %v495
    %v715 = vmul.f32 %v699, %v495
    %v716 = vadd.f32 %v700, %v515
    %v717 = vadd.f32 %v701, %v515
    %v718 = vadd.f32 %v702, %v515
    %v719 = vadd.f32 %v703, %v515
    %v720 = vadd.f32 %v704, %v515
    %v721 = vadd.f32 %v705, %v515
    %v722 = vadd.f32 %v706, %v515
    %v723 = vadd.f32 %v707, %v515
    %v724 = vadd.f32 %v708, %v515
    %v725 = vadd.f32 %v709, %v515
    %v726 = vadd.f32 %v710, %v515
    %v727 = vadd.f32 %v711, %v515
    %v728 = vadd.f32 %v712, %v515
    %v729 = vadd.f32 %v713, %v515
    %v730 = vadd.f32 %v714, %v515
    %v731 = vadd.f32 %v715, %v515
    %v732 = vsel %vm278, %v271, %v239
    %v733 = vsel %vm281, %v274, %v732
    %v734 = vsel %vm284, %v277, %v733
    %v735 = vsel %vm287, %v280, %v734
    %v736 = vsel %vm290, %v283, %v735
    %v737 = vsel %vm272, %v289, %v286
    %v738 = vsel %vm275, %v247, %v737
    %v739 = vsel %vm278, %v292, %v738
    %v740 = vsel %vm281, %v294, %v739
    %v741 = vsel %vm284, %v296, %v740
    %v742 = vsel %vm287, %v298, %v741
    %v743 = vsel %vm290, %v300, %v742
    %v744 = vsel %vm272, %v304, %v302
    %vm748 = vcmask 261122
    %v749 = vsel %vm748, %v736, 0.0
    %750 = vadd.xlane.f32.xlu0 %v749
    %v751 = vpop.xlane.xlu0 %750
    %v752 = vsel %vm308, %v743, 0.0
    %753 = vadd.xlane.f32.xlu0 %v752
    %v754 = vpop.xlane.xlu0 %753
    %vm755 = vcmask 254976
    %v756 = vsel %vm755, %v744, 0.0
    %757 = vadd.xlane.f32.xlu0 %v756
    %v758 = vpop.xlane.xlu0 %757
    %v759 = vmul.f32 %v751, %v315
    %v760 = vmul.f32 %v754, %v315
    %v761 = vmul.f32 %v758, %v315
    %v762 = vsel %vm278, %v350, %v318
    %v763 = vsel %vm281, %v352, %v762
    %v764 = vsel %vm284, %v354, %v763
    %v765 = vsel %vm287, %v356, %v764
    %v766 = vsel %vm290, %v358, %v765
    %v767 = vsel %vm272, %v362, %v360
    %v768 = vsel %vm275, %v326, %v767
    %v769 = vsel %vm278, %v364, %v768
    %v770 = vsel %vm281, %v366, %v769
    %v771 = vsel %vm284, %v368, %v770
    %v772 = vsel %vm287, %v370, %v771
    %v773 = vsel %vm290, %v372, %v772
    %v774 = vsel %vm272, %v376, %v374
    %v778 = vsel %vm748, %v766, 0.0
    %779 = vadd.xlane.f32.xlu0 %v778
    %v780 = vpop.xlane.xlu0 %779
    %v781 = vsel %vm308, %v773, 0.0
    %782 = vadd.xlane.f32.xlu0 %v781
    %v783 = vpop.xlane.xlu0 %782
    %v784 = vsel %vm755, %v774, 0.0
    %785 = vadd.xlane.f32.xlu0 %v784
    %v786 = vpop.xlane.xlu0 %785
    %v787 = vmul.f32 %v780, %v315
    %v788 = vmul.f32 %v783, %v315
    %v789 = vmul.f32 %v786, %v315
    %v793 = vrot.slane %v759, 1
    %v794 = vrot.slane %v759, 2
    %v795 = vrot.slane %v759, 3
    %v796 = vrot.slane %v759, 4
    %v797 = vrot.slane %v759, 5
    %v798 = vrot.slane %v760, 6
    %v799 = vrot.slane %v760, 7
    %v800 = vrot.slane %v760, 1
    %v801 = vrot.slane %v760, 2
    %v802 = vrot.slane %v760, 3
    %v803 = vrot.slane %v760, 4
    %v804 = vrot.slane %v760, 5
    %v805 = vrot.slane %v761, 6
    %v806 = vrot.slane %v761, 7
    %v823 = vsub.f32 %v239, %v759
    %v824 = vsub.f32 %v240, %v793
    %v825 = vsub.f32 %v241, %v794
    %v826 = vsub.f32 %v242, %v795
    %v827 = vsub.f32 %v243, %v796
    %v828 = vsub.f32 %v244, %v797
    %v829 = vsub.f32 %v245, %v798
    %v830 = vsub.f32 %v246, %v799
    %v831 = vsub.f32 %v247, %v760
    %v832 = vsub.f32 %v248, %v800
    %v833 = vsub.f32 %v249, %v801
    %v834 = vsub.f32 %v250, %v802
    %v835 = vsub.f32 %v251, %v803
    %v836 = vsub.f32 %v252, %v804
    %v837 = vsub.f32 %v253, %v805
    %v838 = vsub.f32 %v254, %v806
    %v839 = vmul.f32 %v759, %v759
    %v840 = vmul.f32 %v760, %v760
    %v841 = vmul.f32 %v761, %v761
    %v842 = vsub.f32 %v787, %v839
    %v843 = vsub.f32 %v788, %v840
    %v844 = vsub.f32 %v789, %v841
    %v845 = vadd.f32 %v842, 1e-05
    %v846 = vadd.f32 %v843, 1e-05
    %v847 = vadd.f32 %v844, 1e-05
    %v848 = vrsqrt.pop %v845
    %v849 = vrsqrt.pop %v846
    %v850 = vrsqrt.pop %v847
    %v854 = vrot.slane %v848, 1
    %v855 = vrot.slane %v848, 2
    %v856 = vrot.slane %v848, 3
    %v857 = vrot.slane %v848, 4
    %v858 = vrot.slane %v848, 5
    %v859 = vrot.slane %v849, 6
    %v860 = vrot.slane %v849, 7
    %v861 = vrot.slane %v849, 1
    %v862 = vrot.slane %v849, 2
    %v863 = vrot.slane %v849, 3
    %v864 = vrot.slane %v849, 4
    %v865 = vrot.slane %v849, 5
    %v866 = vrot.slane %v850, 6
    %v867 = vrot.slane %v850, 7
    %v884 = vmul.f32 %v823, %v848
    %v885 = vmul.f32 %v824, %v854
    %v886 = vmul.f32 %v825, %v855
    %v887 = vmul.f32 %v826, %v856
    %v888 = vmul.f32 %v827, %v857
    %v889 = vmul.f32 %v828, %v858
    %v890 = vmul.f32 %v829, %v859
    %v891 = vmul.f32 %v830, %v860
    %v892 = vmul.f32 %v831, %v849
    %v893 = vmul.f32 %v832, %v861
    %v894 = vmul.f32 %v833, %v862
    %v895 = vmul.f32 %v834, %v863
    %v896 = vmul.f32 %v835, %v864
    %v897 = vmul.f32 %v836, %v865
    %v898 = vmul.f32 %v837, %v866
    %v899 = vmul.f32 %v838, %v867
    %v900 = vmul.f32 %v884, %v495
    %v901 = vmul.f32 %v885, %v495
    %v902 = vmul.f32 %v886, %v495
    %v903 = vmul.f32 %v887, %v495
    %v904 = vmul.f32 %v888, %v495
    %v905 = vmul.f32 %v889, %v495
    %v906 = vmul.f32 %v890, %v495
    %v907 = vmul.f32 %v891, %v495
    %v908 = vmul.f32 %v892, %v495
    %v909 = vmul.f32 %v893, %v495
    %v910 = vmul.f32 %v894, %v495
    %v911 = vmul.f32 %v895, %v495
    %v912 = vmul.f32 %v896, %v495
    %v913 = vmul.f32 %v897, %v495
    %v914 = vmul.f32 %v898, %v495
    %v915 = vmul.f32 %v899, %v495
    %v916 = vadd.f32 %v900, %v515
    %v917 = vadd.f32 %v901, %v515
    %v918 = vadd.f32 %v902, %v515
    %v919 = vadd.f32 %v903, %v515
    %v920 = vadd.f32 %v904, %v515
    %v921 = vadd.f32 %v905, %v515
    %v922 = vadd.f32 %v906, %v515
    %v923 = vadd.f32 %v907, %v515
    %v924 = vadd.f32 %v908, %v515
    %v925 = vadd.f32 %v909, %v515
    %v926 = vadd.f32 %v910, %v515
    %v927 = vadd.f32 %v911, %v515
    %v928 = vadd.f32 %v912, %v515
    %v929 = vadd.f32 %v913, %v515
    %v930 = vadd.f32 %v914, %v515
    %v931 = vadd.f32 %v915, %v515
    %v932 = vsel %vm281, %v271, %v239
    %v933 = vsel %vm284, %v274, %v932
    %v934 = vsel %vm287, %v277, %v933
    %v935 = vsel %vm290, %v280, %v934
    %v936 = vsel %vm272, %v286, %v283
    %v937 = vsel %vm275, %v289, %v936
    %v938 = vsel %vm278, %v247, %v937
    %v939 = vsel %vm281, %v292, %v938
    %v940 = vsel %vm284, %v294, %v939
    %v941 = vsel %vm287, %v296, %v940
    %v942 = vsel %vm290, %v298, %v941
    %v943 = vsel %vm272, %v302, %v300
    %v944 = vsel %vm275, %v304, %v943
    %vm948 = vcmask 261123
    %v949 = vsel %vm948, %v935, 0.0
    %950 = vadd.xlane.f32.xlu0 %v949
    %v951 = vpop.xlane.xlu0 %950
    %v952 = vsel %vm308, %v942, 0.0
    %953 = vadd.xlane.f32.xlu0 %v952
    %v954 = vpop.xlane.xlu0 %953
    %vm955 = vcmask 256000
    %v956 = vsel %vm955, %v944, 0.0
    %957 = vadd.xlane.f32.xlu0 %v956
    %v958 = vpop.xlane.xlu0 %957
    %v959 = vmul.f32 %v951, %v315
    %v960 = vmul.f32 %v954, %v315
    %v961 = vmul.f32 %v958, %v315
    %v962 = vsel %vm281, %v350, %v318
    %v963 = vsel %vm284, %v352, %v962
    %v964 = vsel %vm287, %v354, %v963
    %v965 = vsel %vm290, %v356, %v964
    %v966 = vsel %vm272, %v360, %v358
    %v967 = vsel %vm275, %v362, %v966
    %v968 = vsel %vm278, %v326, %v967
    %v969 = vsel %vm281, %v364, %v968
    %v970 = vsel %vm284, %v366, %v969
    %v971 = vsel %vm287, %v368, %v970
    %v972 = vsel %vm290, %v370, %v971
    %v973 = vsel %vm272, %v374, %v372
    %v974 = vsel %vm275, %v376, %v973
    %v978 = vsel %vm948, %v965, 0.0
    %979 = vadd.xlane.f32.xlu0 %v978
    %v980 = vpop.xlane.xlu0 %979
    %v981 = vsel %vm308, %v972, 0.0
    %982 = vadd.xlane.f32.xlu0 %v981
    %v983 = vpop.xlane.xlu0 %982
    %v984 = vsel %vm955, %v974, 0.0
    %985 = vadd.xlane.f32.xlu0 %v984
    %v986 = vpop.xlane.xlu0 %985
    %v987 = vmul.f32 %v980, %v315
    %v988 = vmul.f32 %v983, %v315
    %v989 = vmul.f32 %v986, %v315
    %v993 = vrot.slane %v959, 1
    %v994 = vrot.slane %v959, 2
    %v995 = vrot.slane %v959, 3
    %v996 = vrot.slane %v959, 4
    %v997 = vrot.slane %v960, 5
    %v998 = vrot.slane %v960, 6
    %v999 = vrot.slane %v960, 7
    %v1000 = vrot.slane %v960, 1
    %v1001 = vrot.slane %v960, 2
    %v1002 = vrot.slane %v960, 3
    %v1003 = vrot.slane %v960, 4
    %v1004 = vrot.slane %v961, 5
    %v1005 = vrot.slane %v961, 6
    %v1006 = vrot.slane %v961, 7
    %v1023 = vsub.f32 %v239, %v959
    %v1024 = vsub.f32 %v240, %v993
    %v1025 = vsub.f32 %v241, %v994
    %v1026 = vsub.f32 %v242, %v995
    %v1027 = vsub.f32 %v243, %v996
    %v1028 = vsub.f32 %v244, %v997
    %v1029 = vsub.f32 %v245, %v998
    %v1030 = vsub.f32 %v246, %v999
    %v1031 = vsub.f32 %v247, %v960
    %v1032 = vsub.f32 %v248, %v1000
    %v1033 = vsub.f32 %v249, %v1001
    %v1034 = vsub.f32 %v250, %v1002
    %v1035 = vsub.f32 %v251, %v1003
    %v1036 = vsub.f32 %v252, %v1004
    %v1037 = vsub.f32 %v253, %v1005
    %v1038 = vsub.f32 %v254, %v1006
    %v1039 = vmul.f32 %v959, %v959
    %v1040 = vmul.f32 %v960, %v960
    %v1041 = vmul.f32 %v961, %v961
    %v1042 = vsub.f32 %v987, %v1039
    %v1043 = vsub.f32 %v988, %v1040
    %v1044 = vsub.f32 %v989, %v1041
    %v1045 = vadd.f32 %v1042, 1e-05
    %v1046 = vadd.f32 %v1043, 1e-05
    %v1047 = vadd.f32 %v1044, 1e-05
    %v1048 = vrsqrt.pop %v1045
    %v1049 = vrsqrt.pop %v1046
    %v1050 = vrsqrt.pop %v1047
    %v1054 = vrot.slane %v1048, 1
    %v1055 = vrot.slane %v1048, 2
    %v1056 = vrot.slane %v1048, 3
    %v1057 = vrot.slane %v1048, 4
    %v1058 = vrot.slane %v1049, 5
    %v1059 = vrot.slane %v1049, 6
    %v1060 = vrot.slane %v1049, 7
    %v1061 = vrot.slane %v1049, 1
    %v1062 = vrot.slane %v1049, 2
    %v1063 = vrot.slane %v1049, 3
    %v1064 = vrot.slane %v1049, 4
    %v1065 = vrot.slane %v1050, 5
    %v1066 = vrot.slane %v1050, 6
    %v1067 = vrot.slane %v1050, 7
    %v1084 = vmul.f32 %v1023, %v1048
    %v1085 = vmul.f32 %v1024, %v1054
    %v1086 = vmul.f32 %v1025, %v1055
    %v1087 = vmul.f32 %v1026, %v1056
    %v1088 = vmul.f32 %v1027, %v1057
    %v1089 = vmul.f32 %v1028, %v1058
    %v1090 = vmul.f32 %v1029, %v1059
    %v1091 = vmul.f32 %v1030, %v1060
    %v1092 = vmul.f32 %v1031, %v1049
    %v1093 = vmul.f32 %v1032, %v1061
    %v1094 = vmul.f32 %v1033, %v1062
    %v1095 = vmul.f32 %v1034, %v1063
    %v1096 = vmul.f32 %v1035, %v1064
    %v1097 = vmul.f32 %v1036, %v1065
    %v1098 = vmul.f32 %v1037, %v1066
    %v1099 = vmul.f32 %v1038, %v1067
    %v1100 = vmul.f32 %v1084, %v495
    %v1101 = vmul.f32 %v1085, %v495
    %v1102 = vmul.f32 %v1086, %v495
    %v1103 = vmul.f32 %v1087, %v495
    %v1104 = vmul.f32 %v1088, %v495
    %v1105 = vmul.f32 %v1089, %v495
    %v1106 = vmul.f32 %v1090, %v495
    %v1107 = vmul.f32 %v1091, %v495
    %v1108 = vmul.f32 %v1092, %v495
    %v1109 = vmul.f32 %v1093, %v495
    %v1110 = vmul.f32 %v1094, %v495
    %v1111 = vmul.f32 %v1095, %v495
    %v1112 = vmul.f32 %v1096, %v495
    %v1113 = vmul.f32 %v1097, %v495
    %v1114 = vmul.f32 %v1098, %v495
    %v1115 = vmul.f32 %v1099, %v495
    %v1116 = vadd.f32 %v1100, %v515
    %v1117 = vadd.f32 %v1101, %v515
    %v1118 = vadd.f32 %v1102, %v515
    %v1119 = vadd.f32 %v1103, %v515
    %v1120 = vadd.f32 %v1104, %v515
    %v1121 = vadd.f32 %v1105, %v515
    %v1122 = vadd.f32 %v1106, %v515
    %v1123 = vadd.f32 %v1107, %v515
    %v1124 = vadd.f32 %v1108, %v515
    %v1125 = vadd.f32 %v1109, %v515
    %v1126 = vadd.f32 %v1110, %v515
    %v1127 = vadd.f32 %v1111, %v515
    %v1128 = vadd.f32 %v1112, %v515
    %v1129 = vadd.f32 %v1113, %v515
    %v1130 = vadd.f32 %v1114, %v515
    %v1131 = vadd.f32 %v1115, %v515
    %v1132 = vsel %vm284, %v271, %v239
    %v1133 = vsel %vm287, %v274, %v1132
    %v1134 = vsel %vm290, %v277, %v1133
    %v1135 = vsel %vm272, %v283, %v280
    %v1136 = vsel %vm275, %v286, %v1135
    %v1137 = vsel %vm278, %v289, %v1136
    %v1138 = vsel %vm281, %v247, %v1137
    %v1139 = vsel %vm284, %v292, %v1138
    %v1140 = vsel %vm287, %v294, %v1139
    %v1141 = vsel %vm290, %v296, %v1140
    %v1142 = vsel %vm272, %v300, %v298
    %v1143 = vsel %vm275, %v302, %v1142
    %v1144 = vsel %vm278, %v304, %v1143
    %vm1148 = vcmask 261124
    %v1149 = vsel %vm1148, %v1134, 0.0
    %1150 = vadd.xlane.f32.xlu0 %v1149
    %v1151 = vpop.xlane.xlu0 %1150
    %v1152 = vsel %vm308, %v1141, 0.0
    %1153 = vadd.xlane.f32.xlu0 %v1152
    %v1154 = vpop.xlane.xlu0 %1153
    %vm1155 = vcmask 257024
    %v1156 = vsel %vm1155, %v1144, 0.0
    %1157 = vadd.xlane.f32.xlu0 %v1156
    %v1158 = vpop.xlane.xlu0 %1157
    %v1159 = vmul.f32 %v1151, %v315
    %v1160 = vmul.f32 %v1154, %v315
    %v1161 = vmul.f32 %v1158, %v315
    %v1162 = vsel %vm284, %v350, %v318
    %v1163 = vsel %vm287, %v352, %v1162
    %v1164 = vsel %vm290, %v354, %v1163
    %v1165 = vsel %vm272, %v358, %v356
    %v1166 = vsel %vm275, %v360, %v1165
    %v1167 = vsel %vm278, %v362, %v1166
    %v1168 = vsel %vm281, %v326, %v1167
    %v1169 = vsel %vm284, %v364, %v1168
    %v1170 = vsel %vm287, %v366, %v1169
    %v1171 = vsel %vm290, %v368, %v1170
    %v1172 = vsel %vm272, %v372, %v370
    %v1173 = vsel %vm275, %v374, %v1172
    %v1174 = vsel %vm278, %v376, %v1173
    %v1178 = vsel %vm1148, %v1164, 0.0
    %1179 = vadd.xlane.f32.xlu0 %v1178
    %v1180 = vpop.xlane.xlu0 %1179
    %v1181 = vsel %vm308, %v1171, 0.0
    %1182 = vadd.xlane.f32.xlu0 %v1181
    %v1183 = vpop.xlane.xlu0 %1182
    %v1184 = vsel %vm1155, %v1174, 0.0
    %1185 = vadd.xlane.f32.xlu0 %v1184
    %v1186 = vpop.xlane.xlu0 %1185
    %v1187 = vmul.f32 %v1180, %v315
    %v1188 = vmul.f32 %v1183, %v315
    %v1189 = vmul.f32 %v1186, %v315
    %v1193 = vrot.slane %v1159, 1
    %v1194 = vrot.slane %v1159, 2
    %v1195 = vrot.slane %v1159, 3
    %v1196 = vrot.slane %v1160, 4
    %v1197 = vrot.slane %v1160, 5
    %v1198 = vrot.slane %v1160, 6
    %v1199 = vrot.slane %v1160, 7
    %v1200 = vrot.slane %v1160, 1
    %v1201 = vrot.slane %v1160, 2
    %v1202 = vrot.slane %v1160, 3
    %v1203 = vrot.slane %v1161, 4
    %v1204 = vrot.slane %v1161, 5
    %v1205 = vrot.slane %v1161, 6
    %v1206 = vrot.slane %v1161, 7
    %v1223 = vsub.f32 %v239, %v1159
    %v1224 = vsub.f32 %v240, %v1193
    %v1225 = vsub.f32 %v241, %v1194
    %v1226 = vsub.f32 %v242, %v1195
    %v1227 = vsub.f32 %v243, %v1196
    %v1228 = vsub.f32 %v244, %v1197
    %v1229 = vsub.f32 %v245, %v1198
    %v1230 = vsub.f32 %v246, %v1199
    %v1231 = vsub.f32 %v247, %v1160
    %v1232 = vsub.f32 %v248, %v1200
    %v1233 = vsub.f32 %v249, %v1201
    %v1234 = vsub.f32 %v250, %v1202
    %v1235 = vsub.f32 %v251, %v1203
    %v1236 = vsub.f32 %v252, %v1204
    %v1237 = vsub.f32 %v253, %v1205
    %v1238 = vsub.f32 %v254, %v1206
    %v1239 = vmul.f32 %v1159, %v1159
    %v1240 = vmul.f32 %v1160, %v1160
    %v1241 = vmul.f32 %v1161, %v1161
    %v1242 = vsub.f32 %v1187, %v1239
    %v1243 = vsub.f32 %v1188, %v1240
    %v1244 = vsub.f32 %v1189, %v1241
    %v1245 = vadd.f32 %v1242, 1e-05
    %v1246 = vadd.f32 %v1243, 1e-05
    %v1247 = vadd.f32 %v1244, 1e-05
    %v1248 = vrsqrt.pop %v1245
    %v1249 = vrsqrt.pop %v1246
    %v1250 = vrsqrt.pop %v1247
    %v1254 = vrot.slane %v1248, 1
    %v1255 = vrot.slane %v1248, 2
    %v1256 = vrot.slane %v1248, 3
    %v1257 = vrot.slane %v1249, 4
    %v1258 = vrot.slane %v1249, 5
    %v1259 = vrot.slane %v1249, 6
    %v1260 = vrot.slane %v1249, 7
    %v1261 = vrot.slane %v1249, 1
    %v1262 = vrot.slane %v1249, 2
    %v1263 = vrot.slane %v1249, 3
    %v1264 = vrot.slane %v1250, 4
    %v1265 = vrot.slane %v1250, 5
    %v1266 = vrot.slane %v1250, 6
    %v1267 = vrot.slane %v1250, 7
    %v1284 = vmul.f32 %v1223, %v1248
    %v1285 = vmul.f32 %v1224, %v1254
    %v1286 = vmul.f32 %v1225, %v1255
    %v1287 = vmul.f32 %v1226, %v1256
    %v1288 = vmul.f32 %v1227, %v1257
    %v1289 = vmul.f32 %v1228, %v1258
    %v1290 = vmul.f32 %v1229, %v1259
    %v1291 = vmul.f32 %v1230, %v1260
    %v1292 = vmul.f32 %v1231, %v1249
    %v1293 = vmul.f32 %v1232, %v1261
    %v1294 = vmul.f32 %v1233, %v1262
    %v1295 = vmul.f32 %v1234, %v1263
    %v1296 = vmul.f32 %v1235, %v1264
    %v1297 = vmul.f32 %v1236, %v1265
    %v1298 = vmul.f32 %v1237, %v1266
    %v1299 = vmul.f32 %v1238, %v1267
    %v1300 = vmul.f32 %v1284, %v495
    %v1301 = vmul.f32 %v1285, %v495
    %v1302 = vmul.f32 %v1286, %v495
    %v1303 = vmul.f32 %v1287, %v495
    %v1304 = vmul.f32 %v1288, %v495
    %v1305 = vmul.f32 %v1289, %v495
    %v1306 = vmul.f32 %v1290, %v495
    %v1307 = vmul.f32 %v1291, %v495
    %v1308 = vmul.f32 %v1292, %v495
    %v1309 = vmul.f32 %v1293, %v495
    %v1310 = vmul.f32 %v1294, %v495
    %v1311 = vmul.f32 %v1295, %v495
    %v1312 = vmul.f32 %v1296, %v495
    %v1313 = vmul.f32 %v1297, %v495
    %v1314 = vmul.f32 %v1298, %v495
    %v1315 = vmul.f32 %v1299, %v495
    %v1316 = vadd.f32 %v1300, %v515
    %v1317 = vadd.f32 %v1301, %v515
    %v1318 = vadd.f32 %v1302, %v515
    %v1319 = vadd.f32 %v1303, %v515
    %v1320 = vadd.f32 %v1304, %v515
    %v1321 = vadd.f32 %v1305, %v515
    %v1322 = vadd.f32 %v1306, %v515
    %v1323 = vadd.f32 %v1307, %v515
    %v1324 = vadd.f32 %v1308, %v515
    %v1325 = vadd.f32 %v1309, %v515
    %v1326 = vadd.f32 %v1310, %v515
    %v1327 = vadd.f32 %v1311, %v515
    %v1328 = vadd.f32 %v1312, %v515
    %v1329 = vadd.f32 %v1313, %v515
    %v1330 = vadd.f32 %v1314, %v515
    %v1331 = vadd.f32 %v1315, %v515
    %v1332 = vsel %vm287, %v271, %v239
    %v1333 = vsel %vm290, %v274, %v1332
    %v1334 = vsel %vm272, %v280, %v277
    %v1335 = vsel %vm275, %v283, %v1334
    %v1336 = vsel %vm278, %v286, %v1335
    %v1337 = vsel %vm281, %v289, %v1336
    %v1338 = vsel %vm284, %v247, %v1337
    %v1339 = vsel %vm287, %v292, %v1338
    %v1340 = vsel %vm290, %v294, %v1339
    %v1341 = vsel %vm272, %v298, %v296
    %v1342 = vsel %vm275, %v300, %v1341
    %v1343 = vsel %vm278, %v302, %v1342
    %v1344 = vsel %vm281, %v304, %v1343
    %vm1348 = vcmask 261125
    %v1349 = vsel %vm1348, %v1333, 0.0
    %1350 = vadd.xlane.f32.xlu0 %v1349
    %v1351 = vpop.xlane.xlu0 %1350
    %v1352 = vsel %vm308, %v1340, 0.0
    %1353 = vadd.xlane.f32.xlu0 %v1352
    %v1354 = vpop.xlane.xlu0 %1353
    %vm1355 = vcmask 258048
    %v1356 = vsel %vm1355, %v1344, 0.0
    %1357 = vadd.xlane.f32.xlu0 %v1356
    %v1358 = vpop.xlane.xlu0 %1357
    %v1359 = vmul.f32 %v1351, %v315
    %v1360 = vmul.f32 %v1354, %v315
    %v1361 = vmul.f32 %v1358, %v315
    %v1362 = vsel %vm287, %v350, %v318
    %v1363 = vsel %vm290, %v352, %v1362
    %v1364 = vsel %vm272, %v356, %v354
    %v1365 = vsel %vm275, %v358, %v1364
    %v1366 = vsel %vm278, %v360, %v1365
    %v1367 = vsel %vm281, %v362, %v1366
    %v1368 = vsel %vm284, %v326, %v1367
    %v1369 = vsel %vm287, %v364, %v1368
    %v1370 = vsel %vm290, %v366, %v1369
    %v1371 = vsel %vm272, %v370, %v368
    %v1372 = vsel %vm275, %v372, %v1371
    %v1373 = vsel %vm278, %v374, %v1372
    %v1374 = vsel %vm281, %v376, %v1373
    %v1378 = vsel %vm1348, %v1363, 0.0
    %1379 = vadd.xlane.f32.xlu0 %v1378
    %v1380 = vpop.xlane.xlu0 %1379
    %v1381 = vsel %vm308, %v1370, 0.0
    %1382 = vadd.xlane.f32.xlu0 %v1381
    %v1383 = vpop.xlane.xlu0 %1382
    %v1384 = vsel %vm1355, %v1374, 0.0
    %1385 = vadd.xlane.f32.xlu0 %v1384
    %v1386 = vpop.xlane.xlu0 %1385
    %v1387 = vmul.f32 %v1380, %v315
    %v1388 = vmul.f32 %v1383, %v315
    %v1389 = vmul.f32 %v1386, %v315
    %v1393 = vrot.slane %v1359, 1
    %v1394 = vrot.slane %v1359, 2
    %v1395 = vrot.slane %v1360, 3
    %v1396 = vrot.slane %v1360, 4
    %v1397 = vrot.slane %v1360, 5
    %v1398 = vrot.slane %v1360, 6
    %v1399 = vrot.slane %v1360, 7
    %v1400 = vrot.slane %v1360, 1
    %v1401 = vrot.slane %v1360, 2
    %v1402 = vrot.slane %v1361, 3
    %v1403 = vrot.slane %v1361, 4
    %v1404 = vrot.slane %v1361, 5
    %v1405 = vrot.slane %v1361, 6
    %v1406 = vrot.slane %v1361, 7
    %v1423 = vsub.f32 %v239, %v1359
    %v1424 = vsub.f32 %v240, %v1393
    %v1425 = vsub.f32 %v241, %v1394
    %v1426 = vsub.f32 %v242, %v1395
    %v1427 = vsub.f32 %v243, %v1396
    %v1428 = vsub.f32 %v244, %v1397
    %v1429 = vsub.f32 %v245, %v1398
    %v1430 = vsub.f32 %v246, %v1399
    %v1431 = vsub.f32 %v247, %v1360
    %v1432 = vsub.f32 %v248, %v1400
    %v1433 = vsub.f32 %v249, %v1401
    %v1434 = vsub.f32 %v250, %v1402
    %v1435 = vsub.f32 %v251, %v1403
    %v1436 = vsub.f32 %v252, %v1404
    %v1437 = vsub.f32 %v253, %v1405
    %v1438 = vsub.f32 %v254, %v1406
    %v1439 = vmul.f32 %v1359, %v1359
    %v1440 = vmul.f32 %v1360, %v1360
    %v1441 = vmul.f32 %v1361, %v1361
    %v1442 = vsub.f32 %v1387, %v1439
    %v1443 = vsub.f32 %v1388, %v1440
    %v1444 = vsub.f32 %v1389, %v1441
    %v1445 = vadd.f32 %v1442, 1e-05
    %v1446 = vadd.f32 %v1443, 1e-05
    %v1447 = vadd.f32 %v1444, 1e-05
    %v1448 = vrsqrt.pop %v1445
    %v1449 = vrsqrt.pop %v1446
    %v1450 = vrsqrt.pop %v1447
    %v1454 = vrot.slane %v1448, 1
    %v1455 = vrot.slane %v1448, 2
    %v1456 = vrot.slane %v1449, 3
    %v1457 = vrot.slane %v1449, 4
    %v1458 = vrot.slane %v1449, 5
    %v1459 = vrot.slane %v1449, 6
    %v1460 = vrot.slane %v1449, 7
    %v1461 = vrot.slane %v1449, 1
    %v1462 = vrot.slane %v1449, 2
    %v1463 = vrot.slane %v1450, 3
    %v1464 = vrot.slane %v1450, 4
    %v1465 = vrot.slane %v1450, 5
    %v1466 = vrot.slane %v1450, 6
    %v1467 = vrot.slane %v1450, 7
    %v1484 = vmul.f32 %v1423, %v1448
    %v1485 = vmul.f32 %v1424, %v1454
    %v1486 = vmul.f32 %v1425, %v1455
    %v1487 = vmul.f32 %v1426, %v1456
    %v1488 = vmul.f32 %v1427, %v1457
    %v1489 = vmul.f32 %v1428, %v1458
    %v1490 = vmul.f32 %v1429, %v1459
    %v1491 = vmul.f32 %v1430, %v1460
    %v1492 = vmul.f32 %v1431, %v1449
    %v1493 = vmul.f32 %v1432, %v1461
    %v1494 = vmul.f32 %v1433, %v1462
    %v1495 = vmul.f32 %v1434, %v1463
    %v1496 = vmul.f32 %v1435, %v1464
    %v1497 = vmul.f32 %v1436, %v1465
    %v1498 = vmul.f32 %v1437, %v1466
    %v1499 = vmul.f32 %v1438, %v1467
    %v1500 = vmul.f32 %v1484, %v495
    %v1501 = vmul.f32 %v1485, %v495
    %v1502 = vmul.f32 %v1486, %v495
    %v1503 = vmul.f32 %v1487, %v495
    %v1504 = vmul.f32 %v1488, %v495
    %v1505 = vmul.f32 %v1489, %v495
    %v1506 = vmul.f32 %v1490, %v495
    %v1507 = vmul.f32 %v1491, %v495
    %v1508 = vmul.f32 %v1492, %v495
    %v1509 = vmul.f32 %v1493, %v495
    %v1510 = vmul.f32 %v1494, %v495
    %v1511 = vmul.f32 %v1495, %v495
    %v1512 = vmul.f32 %v1496, %v495
    %v1513 = vmul.f32 %v1497, %v495
    %v1514 = vmul.f32 %v1498, %v495
    %v1515 = vmul.f32 %v1499, %v495
    %v1516 = vadd.f32 %v1500, %v515
    %v1517 = vadd.f32 %v1501, %v515
    %v1518 = vadd.f32 %v1502, %v515
    %v1519 = vadd.f32 %v1503, %v515
    %v1520 = vadd.f32 %v1504, %v515
    %v1521 = vadd.f32 %v1505, %v515
    %v1522 = vadd.f32 %v1506, %v515
    %v1523 = vadd.f32 %v1507, %v515
    %v1524 = vadd.f32 %v1508, %v515
    %v1525 = vadd.f32 %v1509, %v515
    %v1526 = vadd.f32 %v1510, %v515
    %v1527 = vadd.f32 %v1511, %v515
    %v1528 = vadd.f32 %v1512, %v515
    %v1529 = vadd.f32 %v1513, %v515
    %v1530 = vadd.f32 %v1514, %v515
    %v1531 = vadd.f32 %v1515, %v515
    %v1532 = vsel %vm290, %v271, %v239
    %v1533 = vsel %vm272, %v277, %v274
    %v1534 = vsel %vm275, %v280, %v1533
    %v1535 = vsel %vm278, %v283, %v1534
    %v1536 = vsel %vm281, %v286, %v1535
    %v1537 = vsel %vm284, %v289, %v1536
    %v1538 = vsel %vm287, %v247, %v1537
    %v1539 = vsel %vm290, %v292, %v1538
    %v1540 = vsel %vm272, %v296, %v294
    %v1541 = vsel %vm275, %v298, %v1540
    %v1542 = vsel %vm278, %v300, %v1541
    %v1543 = vsel %vm281, %v302, %v1542
    %v1544 = vsel %vm284, %v304, %v1543
    %vm1548 = vcmask 261126
    %v1549 = vsel %vm1548, %v1532, 0.0
    %1550 = vadd.xlane.f32.xlu0 %v1549
    %v1551 = vpop.xlane.xlu0 %1550
    %v1552 = vsel %vm308, %v1539, 0.0
    %1553 = vadd.xlane.f32.xlu0 %v1552
    %v1554 = vpop.xlane.xlu0 %1553
    %vm1555 = vcmask 259072
    %v1556 = vsel %vm1555, %v1544, 0.0
    %1557 = vadd.xlane.f32.xlu0 %v1556
    %v1558 = vpop.xlane.xlu0 %1557
    %v1559 = vmul.f32 %v1551, %v315
    %v1560 = vmul.f32 %v1554, %v315
    %v1561 = vmul.f32 %v1558, %v315
    %v1562 = vsel %vm290, %v350, %v318
    %v1563 = vsel %vm272, %v354, %v352
    %v1564 = vsel %vm275, %v356, %v1563
    %v1565 = vsel %vm278, %v358, %v1564
    %v1566 = vsel %vm281, %v360, %v1565
    %v1567 = vsel %vm284, %v362, %v1566
    %v1568 = vsel %vm287, %v326, %v1567
    %v1569 = vsel %vm290, %v364, %v1568
    %v1570 = vsel %vm272, %v368, %v366
    %v1571 = vsel %vm275, %v370, %v1570
    %v1572 = vsel %vm278, %v372, %v1571
    %v1573 = vsel %vm281, %v374, %v1572
    %v1574 = vsel %vm284, %v376, %v1573
    %v1578 = vsel %vm1548, %v1562, 0.0
    %1579 = vadd.xlane.f32.xlu0 %v1578
    %v1580 = vpop.xlane.xlu0 %1579
    %v1581 = vsel %vm308, %v1569, 0.0
    %1582 = vadd.xlane.f32.xlu0 %v1581
    %v1583 = vpop.xlane.xlu0 %1582
    %v1584 = vsel %vm1555, %v1574, 0.0
    %1585 = vadd.xlane.f32.xlu0 %v1584
    %v1586 = vpop.xlane.xlu0 %1585
    %v1587 = vmul.f32 %v1580, %v315
    %v1588 = vmul.f32 %v1583, %v315
    %v1589 = vmul.f32 %v1586, %v315
    %v1593 = vrot.slane %v1559, 1
    %v1594 = vrot.slane %v1560, 2
    %v1595 = vrot.slane %v1560, 3
    %v1596 = vrot.slane %v1560, 4
    %v1597 = vrot.slane %v1560, 5
    %v1598 = vrot.slane %v1560, 6
    %v1599 = vrot.slane %v1560, 7
    %v1600 = vrot.slane %v1560, 1
    %v1601 = vrot.slane %v1561, 2
    %v1602 = vrot.slane %v1561, 3
    %v1603 = vrot.slane %v1561, 4
    %v1604 = vrot.slane %v1561, 5
    %v1605 = vrot.slane %v1561, 6
    %v1606 = vrot.slane %v1561, 7
    %v1623 = vsub.f32 %v239, %v1559
    %v1624 = vsub.f32 %v240, %v1593
    %v1625 = vsub.f32 %v241, %v1594
    %v1626 = vsub.f32 %v242, %v1595
    %v1627 = vsub.f32 %v243, %v1596
    %v1628 = vsub.f32 %v244, %v1597
    %v1629 = vsub.f32 %v245, %v1598
    %v1630 = vsub.f32 %v246, %v1599
    %v1631 = vsub.f32 %v247, %v1560
    %v1632 = vsub.f32 %v248, %v1600
    %v1633 = vsub.f32 %v249, %v1601
    %v1634 = vsub.f32 %v250, %v1602
    %v1635 = vsub.f32 %v251, %v1603
    %v1636 = vsub.f32 %v252, %v1604
    %v1637 = vsub.f32 %v253, %v1605
    %v1638 = vsub.f32 %v254, %v1606
    %v1639 = vmul.f32 %v1559, %v1559
    %v1640 = vmul.f32 %v1560, %v1560
    %v1641 = vmul.f32 %v1561, %v1561
    %v1642 = vsub.f32 %v1587, %v1639
    %v1643 = vsub.f32 %v1588, %v1640
    %v1644 = vsub.f32 %v1589, %v1641
    %v1645 = vadd.f32 %v1642, 1e-05
    %v1646 = vadd.f32 %v1643, 1e-05
    %v1647 = vadd.f32 %v1644, 1e-05
    %v1648 = vrsqrt.pop %v1645
    %v1649 = vrsqrt.pop %v1646
    %v1650 = vrsqrt.pop %v1647
    %v1654 = vrot.slane %v1648, 1
    %v1655 = vrot.slane %v1649, 2
    %v1656 = vrot.slane %v1649, 3
    %v1657 = vrot.slane %v1649, 4
    %v1658 = vrot.slane %v1649, 5
    %v1659 = vrot.slane %v1649, 6
    %v1660 = vrot.slane %v1649, 7
    %v1661 = vrot.slane %v1649, 1
    %v1662 = vrot.slane %v1650, 2
    %v1663 = vrot.slane %v1650, 3
    %v1664 = vrot.slane %v1650, 4
    %v1665 = vrot.slane %v1650, 5
    %v1666 = vrot.slane %v1650, 6
    %v1667 = vrot.slane %v1650, 7
    %v1684 = vmul.f32 %v1623, %v1648
    %v1685 = vmul.f32 %v1624, %v1654
    %v1686 = vmul.f32 %v1625, %v1655
    %v1687 = vmul.f32 %v1626, %v1656
    %v1688 = vmul.f32 %v1627, %v1657
    %v1689 = vmul.f32 %v1628, %v1658
    %v1690 = vmul.f32 %v1629, %v1659
    %v1691 = vmul.f32 %v1630, %v1660
    %v1692 = vmul.f32 %v1631, %v1649
    %v1693 = vmul.f32 %v1632, %v1661
    %v1694 = vmul.f32 %v1633, %v1662
    %v1695 = vmul.f32 %v1634, %v1663
    %v1696 = vmul.f32 %v1635, %v1664
    %v1697 = vmul.f32 %v1636, %v1665
    %v1698 = vmul.f32 %v1637, %v1666
    %v1699 = vmul.f32 %v1638, %v1667
    %v1700 = vmul.f32 %v1684, %v495
    %v1701 = vmul.f32 %v1685, %v495
    %v1702 = vmul.f32 %v1686, %v495
    %v1703 = vmul.f32 %v1687, %v495
    %v1704 = vmul.f32 %v1688, %v495
    %v1705 = vmul.f32 %v1689, %v495
    %v1706 = vmul.f32 %v1690, %v495
    %v1707 = vmul.f32 %v1691, %v495
    %v1708 = vmul.f32 %v1692, %v495
    %v1709 = vmul.f32 %v1693, %v495
    %v1710 = vmul.f32 %v1694, %v495
    %v1711 = vmul.f32 %v1695, %v495
    %v1712 = vmul.f32 %v1696, %v495
    %v1713 = vmul.f32 %v1697, %v495
    %v1714 = vmul.f32 %v1698, %v495
    %v1715 = vmul.f32 %v1699, %v495
    %v1716 = vadd.f32 %v1700, %v515
    %v1717 = vadd.f32 %v1701, %v515
    %v1718 = vadd.f32 %v1702, %v515
    %v1719 = vadd.f32 %v1703, %v515
    %v1720 = vadd.f32 %v1704, %v515
    %v1721 = vadd.f32 %v1705, %v515
    %v1722 = vadd.f32 %v1706, %v515
    %v1723 = vadd.f32 %v1707, %v515
    %v1724 = vadd.f32 %v1708, %v515
    %v1725 = vadd.f32 %v1709, %v515
    %v1726 = vadd.f32 %v1710, %v515
    %v1727 = vadd.f32 %v1711, %v515
    %v1728 = vadd.f32 %v1712, %v515
    %v1729 = vadd.f32 %v1713, %v515
    %v1730 = vadd.f32 %v1714, %v515
    %v1731 = vadd.f32 %v1715, %v515
    %v1732 = vsel %vm272, %v274, %v271
    %v1733 = vsel %vm275, %v277, %v1732
    %v1734 = vsel %vm278, %v280, %v1733
    %v1735 = vsel %vm281, %v283, %v1734
    %v1736 = vsel %vm284, %v286, %v1735
    %v1737 = vsel %vm287, %v289, %v1736
    %v1738 = vsel %vm290, %v247, %v1737
    %v1739 = vsel %vm272, %v294, %v292
    %v1740 = vsel %vm275, %v296, %v1739
    %v1741 = vsel %vm278, %v298, %v1740
    %v1742 = vsel %vm281, %v300, %v1741
    %v1743 = vsel %vm284, %v302, %v1742
    %v1744 = vsel %vm287, %v304, %v1743
    %vm1748 = vcmask 261127
    %v1749 = vsel %vm1748, %v239, 0.0
    %1750 = vadd.xlane.f32.xlu0 %v1749
    %v1751 = vpop.xlane.xlu0 %1750
    %v1752 = vsel %vm308, %v1738, 0.0
    %1753 = vadd.xlane.f32.xlu0 %v1752
    %v1754 = vpop.xlane.xlu0 %1753
    %vm1755 = vcmask 260096
    %v1756 = vsel %vm1755, %v1744, 0.0
    %1757 = vadd.xlane.f32.xlu0 %v1756
    %v1758 = vpop.xlane.xlu0 %1757
    %v1759 = vmul.f32 %v1751, %v315
    %v1760 = vmul.f32 %v1754, %v315
    %v1761 = vmul.f32 %v1758, %v315
    %v1762 = vsel %vm272, %v352, %v350
    %v1763 = vsel %vm275, %v354, %v1762
    %v1764 = vsel %vm278, %v356, %v1763
    %v1765 = vsel %vm281, %v358, %v1764
    %v1766 = vsel %vm284, %v360, %v1765
    %v1767 = vsel %vm287, %v362, %v1766
    %v1768 = vsel %vm290, %v326, %v1767
    %v1769 = vsel %vm272, %v366, %v364
    %v1770 = vsel %vm275, %v368, %v1769
    %v1771 = vsel %vm278, %v370, %v1770
    %v1772 = vsel %vm281, %v372, %v1771
    %v1773 = vsel %vm284, %v374, %v1772
    %v1774 = vsel %vm287, %v376, %v1773
    %v1778 = vsel %vm1748, %v318, 0.0
    %1779 = vadd.xlane.f32.xlu0 %v1778
    %v1780 = vpop.xlane.xlu0 %1779
    %v1781 = vsel %vm308, %v1768, 0.0
    %1782 = vadd.xlane.f32.xlu0 %v1781
    %v1783 = vpop.xlane.xlu0 %1782
    %v1784 = vsel %vm1755, %v1774, 0.0
    %1785 = vadd.xlane.f32.xlu0 %v1784
    %v1786 = vpop.xlane.xlu0 %1785
    %v1787 = vmul.f32 %v1780, %v315
    %v1788 = vmul.f32 %v1783, %v315
    %v1789 = vmul.f32 %v1786, %v315
    %v1793 = vrot.slane %v1760, 1
    %v1794 = vrot.slane %v1760, 2
    %v1795 = vrot.slane %v1760, 3
    %v1796 = vrot.slane %v1760, 4
    %v1797 = vrot.slane %v1760, 5
    %v1798 = vrot.slane %v1760, 6
    %v1799 = vrot.slane %v1760, 7
    %v1800 = vrot.slane %v1761, 1
    %v1801 = vrot.slane %v1761, 2
    %v1802 = vrot.slane %v1761, 3
    %v1803 = vrot.slane %v1761, 4
    %v1804 = vrot.slane %v1761, 5
    %v1805 = vrot.slane %v1761, 6
    %v1806 = vrot.slane %v1761, 7
    %v1823 = vsub.f32 %v239, %v1759
    %v1824 = vsub.f32 %v240, %v1793
    %v1825 = vsub.f32 %v241, %v1794
    %v1826 = vsub.f32 %v242, %v1795
    %v1827 = vsub.f32 %v243, %v1796
    %v1828 = vsub.f32 %v244, %v1797
    %v1829 = vsub.f32 %v245, %v1798
    %v1830 = vsub.f32 %v246, %v1799
    %v1831 = vsub.f32 %v247, %v1760
    %v1832 = vsub.f32 %v248, %v1800
    %v1833 = vsub.f32 %v249, %v1801
    %v1834 = vsub.f32 %v250, %v1802
    %v1835 = vsub.f32 %v251, %v1803
    %v1836 = vsub.f32 %v252, %v1804
    %v1837 = vsub.f32 %v253, %v1805
    %v1838 = vsub.f32 %v254, %v1806
    %v1839 = vmul.f32 %v1759, %v1759
    %v1840 = vmul.f32 %v1760, %v1760
    %v1841 = vmul.f32 %v1761, %v1761
    %v1842 = vsub.f32 %v1787, %v1839
    %v1843 = vsub.f32 %v1788, %v1840
    %v1844 = vsub.f32 %v1789, %v1841
    %v1845 = vadd.f32 %v1842, 1e-05
    %v1846 = vadd.f32 %v1843, 1e-05
    %v1847 = vadd.f32 %v1844, 1e-05
    %v1848 = vrsqrt.pop %v1845
    %v1849 = vrsqrt.pop %v1846
    %v1850 = vrsqrt.pop %v1847
    %v1854 = vrot.slane %v1849, 1
    %v1855 = vrot.slane %v1849, 2
    %v1856 = vrot.slane %v1849, 3
    %v1857 = vrot.slane %v1849, 4
    %v1858 = vrot.slane %v1849, 5
    %v1859 = vrot.slane %v1849, 6
    %v1860 = vrot.slane %v1849, 7
    %v1861 = vrot.slane %v1850, 1
    %v1862 = vrot.slane %v1850, 2
    %v1863 = vrot.slane %v1850, 3
    %v1864 = vrot.slane %v1850, 4
    %v1865 = vrot.slane %v1850, 5
    %v1866 = vrot.slane %v1850, 6
    %v1867 = vrot.slane %v1850, 7
    %v1884 = vmul.f32 %v1823, %v1848
    %v1885 = vmul.f32 %v1824, %v1854
    %v1886 = vmul.f32 %v1825, %v1855
    %v1887 = vmul.f32 %v1826, %v1856
    %v1888 = vmul.f32 %v1827, %v1857
    %v1889 = vmul.f32 %v1828, %v1858
    %v1890 = vmul.f32 %v1829, %v1859
    %v1891 = vmul.f32 %v1830, %v1860
    %v1892 = vmul.f32 %v1831, %v1849
    %v1893 = vmul.f32 %v1832, %v1861
    %v1894 = vmul.f32 %v1833, %v1862
    %v1895 = vmul.f32 %v1834, %v1863
    %v1896 = vmul.f32 %v1835, %v1864
    %v1897 = vmul.f32 %v1836, %v1865
    %v1898 = vmul.f32 %v1837, %v1866
    %v1899 = vmul.f32 %v1838, %v1867
    %v1900 = vmul.f32 %v1884, %v495
    %v1901 = vmul.f32 %v1885, %v495
    %v1902 = vmul.f32 %v1886, %v495
    %v1903 = vmul.f32 %v1887, %v495
    %v1904 = vmul.f32 %v1888, %v495
    %v1905 = vmul.f32 %v1889, %v495
    %v1906 = vmul.f32 %v1890, %v495
    %v1907 = vmul.f32 %v1891, %v495
    %v1908 = vmul.f32 %v1892, %v495
    %v1909 = vmul.f32 %v1893, %v495
    %v1910 = vmul.f32 %v1894, %v495
    %v1911 = vmul.f32 %v1895, %v495
    %v1912 = vmul.f32 %v1896, %v495
    %v1913 = vmul.f32 %v1897, %v495
    %v1914 = vmul.f32 %v1898, %v495
    %v1915 = vmul.f32 %v1899, %v495
    %v1916 = vadd.f32 %v1900, %v515
    %v1917 = vadd.f32 %v1901, %v515
    %v1918 = vadd.f32 %v1902, %v515
    %v1919 = vadd.f32 %v1903, %v515
    %v1920 = vadd.f32 %v1904, %v515
    %v1921 = vadd.f32 %v1905, %v515
    %v1922 = vadd.f32 %v1906, %v515
    %v1923 = vadd.f32 %v1907, %v515
    %v1924 = vadd.f32 %v1908, %v515
    %v1925 = vadd.f32 %v1909, %v515
    %v1926 = vadd.f32 %v1910, %v515
    %v1927 = vadd.f32 %v1911, %v515
    %v1928 = vadd.f32 %v1912, %v515
    %v1929 = vadd.f32 %v1913, %v515
    %v1930 = vadd.f32 %v1914, %v515
    %v1931 = vadd.f32 %v1915, %v515
    %s1932 = sld [smem:[#allocation2]]
    %v1933 = vstv %s1932
    %v1934 = vmul.f32 %v516, %v1933
    %v1935 = vmul.f32 %v517, %v1933
    %v1936 = vmul.f32 %v518, %v1933
    %v1937 = vmul.f32 %v519, %v1933
    %v1938 = vmul.f32 %v520, %v1933
    %v1939 = vmul.f32 %v521, %v1933
    %v1940 = vmul.f32 %v522, %v1933
    %v1941 = vmul.f32 %v523, %v1933
    %v1942 = vmul.f32 %v524, %v1933
    %v1943 = vmul.f32 %v525, %v1933
    %v1944 = vmul.f32 %v526, %v1933
    %v1945 = vmul.f32 %v527, %v1933
    %v1946 = vmul.f32 %v528, %v1933
    %v1947 = vmul.f32 %v529, %v1933
    %v1948 = vmul.f32 %v530, %v1933
    %v1949 = vmul.f32 %v531, %v1933
    %s1950 = sld [smem:[#allocation2 + $0x1]]
    %v1951 = vstv %s1950
    %v1952 = vmul.f32 %v716, %v1951
    %v1953 = vmul.f32 %v717, %v1951
    %v1954 = vmul.f32 %v718, %v1951
    %v1955 = vmul.f32 %v719, %v1951
    %v1956 = vmul.f32 %v720, %v1951
    %v1957 = vmul.f32 %v721, %v1951
    %v1958 = vmul.f32 %v722, %v1951
    %v1959 = vmul.f32 %v723, %v1951
    %v1960 = vmul.f32 %v724, %v1951
    %v1961 = vmul.f32 %v725, %v1951
    %v1962 = vmul.f32 %v726, %v1951
    %v1963 = vmul.f32 %v727, %v1951
    %v1964 = vmul.f32 %v728, %v1951
    %v1965 = vmul.f32 %v729, %v1951
    %v1966 = vmul.f32 %v730, %v1951
    %v1967 = vmul.f32 %v731, %v1951
    %v1984 = vrot.slane %v1952, 1
    %v1985 = vrot.slane %v1953, 1
    %v1986 = vrot.slane %v1954, 1
    %v1987 = vrot.slane %v1955, 1
    %v1988 = vrot.slane %v1956, 1
    %v1989 = vrot.slane %v1957, 1
    %v1990 = vrot.slane %v1958, 1
    %v1991 = vrot.slane %v1959, 1
    %v1992 = vrot.slane %v1960, 1
    %v1993 = vrot.slane %v1961, 1
    %v1994 = vrot.slane %v1962, 1
    %v1995 = vrot.slane %v1963, 1
    %v1996 = vrot.slane %v1964, 1
    %v1997 = vrot.slane %v1965, 1
    %v1998 = vrot.slane %v1966, 1
    %v1999 = vrot.slane %v1967, 1
    %v2016 = vadd.f32 %v1934, %v1984
    %v2017 = vadd.f32 %v1935, %v1985
    %v2018 = vadd.f32 %v1936, %v1986
    %v2019 = vadd.f32 %v1937, %v1987
    %v2020 = vadd.f32 %v1938, %v1988
    %v2021 = vadd.f32 %v1939, %v1989
    %v2022 = vadd.f32 %v1940, %v1990
    %v2023 = vadd.f32 %v1941, %v1991
    %v2024 = vadd.f32 %v1942, %v1992
    %v2025 = vadd.f32 %v1943, %v1993
    %v2026 = vadd.f32 %v1944, %v1994
    %v2027 = vadd.f32 %v1945, %v1995
    %v2028 = vadd.f32 %v1946, %v1996
    %v2029 = vadd.f32 %v1947, %v1997
    %v2030 = vadd.f32 %v1948, %v1998
    %v2031 = vadd.f32 %v1949, %v1999
    %s2032 = sld [smem:[#allocation2 + $0x2]]
    %v2033 = vstv %s2032
    %v2034 = vmul.f32 %v916, %v2033
    %v2035 = vmul.f32 %v917, %v2033
    %v2036 = vmul.f32 %v918, %v2033
    %v2037 = vmul.f32 %v919, %v2033
    %v2038 = vmul.f32 %v920, %v2033
    %v2039 = vmul.f32 %v921, %v2033
    %v2040 = vmul.f32 %v922, %v2033
    %v2041 = vmul.f32 %v923, %v2033
    %v2042 = vmul.f32 %v924, %v2033
    %v2043 = vmul.f32 %v925, %v2033
    %v2044 = vmul.f32 %v926, %v2033
    %v2045 = vmul.f32 %v927, %v2033
    %v2046 = vmul.f32 %v928, %v2033
    %v2047 = vmul.f32 %v929, %v2033
    %v2048 = vmul.f32 %v930, %v2033
    %v2049 = vmul.f32 %v931, %v2033
    %v2066 = vrot.slane %v2034, 2
    %v2067 = vrot.slane %v2035, 2
    %v2068 = vrot.slane %v2036, 2
    %v2069 = vrot.slane %v2037, 2
    %v2070 = vrot.slane %v2038, 2
    %v2071 = vrot.slane %v2039, 2
    %v2072 = vrot.slane %v2040, 2
    %v2073 = vrot.slane %v2041, 2
    %v2074 = vrot.slane %v2042, 2
    %v2075 = vrot.slane %v2043, 2
    %v2076 = vrot.slane %v2044, 2
    %v2077 = vrot.slane %v2045, 2
    %v2078 = vrot.slane %v2046, 2
    %v2079 = vrot.slane %v2047, 2
    %v2080 = vrot.slane %v2048, 2
    %v2081 = vrot.slane %v2049, 2
    %v2098 = vadd.f32 %v2016, %v2066
    %v2099 = vadd.f32 %v2017, %v2067
    %v2100 = vadd.f32 %v2018, %v2068
    %v2101 = vadd.f32 %v2019, %v2069
    %v2102 = vadd.f32 %v2020, %v2070
    %v2103 = vadd.f32 %v2021, %v2071
    %v2104 = vadd.f32 %v2022, %v2072
    %v2105 = vadd.f32 %v2023, %v2073
    %v2106 = vadd.f32 %v2024, %v2074
    %v2107 = vadd.f32 %v2025, %v2075
    %v2108 = vadd.f32 %v2026, %v2076
    %v2109 = vadd.f32 %v2027, %v2077
    %v2110 = vadd.f32 %v2028, %v2078
    %v2111 = vadd.f32 %v2029, %v2079
    %v2112 = vadd.f32 %v2030, %v2080
    %v2113 = vadd.f32 %v2031, %v2081
    %s2114 = sld [smem:[#allocation2 + $0x3]]
    %v2115 = vstv %s2114
    %v2116 = vmul.f32 %v1116, %v2115
    %v2117 = vmul.f32 %v1117, %v2115
    %v2118 = vmul.f32 %v1118, %v2115
    %v2119 = vmul.f32 %v1119, %v2115
    %v2120 = vmul.f32 %v1120, %v2115
    %v2121 = vmul.f32 %v1121, %v2115
    %v2122 = vmul.f32 %v1122, %v2115
    %v2123 = vmul.f32 %v1123, %v2115
    %v2124 = vmul.f32 %v1124, %v2115
    %v2125 = vmul.f32 %v1125, %v2115
    %v2126 = vmul.f32 %v1126, %v2115
    %v2127 = vmul.f32 %v1127, %v2115
    %v2128 = vmul.f32 %v1128, %v2115
    %v2129 = vmul.f32 %v1129, %v2115
    %v2130 = vmul.f32 %v1130, %v2115
    %v2131 = vmul.f32 %v1131, %v2115
    %v2148 = vrot.slane %v2116, 3
    %v2149 = vrot.slane %v2117, 3
    %v2150 = vrot.slane %v2118, 3
    %v2151 = vrot.slane %v2119, 3
    %v2152 = vrot.slane %v2120, 3
    %v2153 = vrot.slane %v2121, 3
    %v2154 = vrot.slane %v2122, 3
    %v2155 = vrot.slane %v2123, 3
    %v2156 = vrot.slane %v2124, 3
    %v2157 = vrot.slane %v2125, 3
    %v2158 = vrot.slane %v2126, 3
    %v2159 = vrot.slane %v2127, 3
    %v2160 = vrot.slane %v2128, 3
    %v2161 = vrot.slane %v2129, 3
    %v2162 = vrot.slane %v2130, 3
    %v2163 = vrot.slane %v2131, 3
    %v2180 = vadd.f32 %v2098, %v2148
    %v2181 = vadd.f32 %v2099, %v2149
    %v2182 = vadd.f32 %v2100, %v2150
    %v2183 = vadd.f32 %v2101, %v2151
    %v2184 = vadd.f32 %v2102, %v2152
    %v2185 = vadd.f32 %v2103, %v2153
    %v2186 = vadd.f32 %v2104, %v2154
    %v2187 = vadd.f32 %v2105, %v2155
    %v2188 = vadd.f32 %v2106, %v2156
    %v2189 = vadd.f32 %v2107, %v2157
    %v2190 = vadd.f32 %v2108, %v2158
    %v2191 = vadd.f32 %v2109, %v2159
    %v2192 = vadd.f32 %v2110, %v2160
    %v2193 = vadd.f32 %v2111, %v2161
    %v2194 = vadd.f32 %v2112, %v2162
    %v2195 = vadd.f32 %v2113, %v2163
    %s2196 = sld [smem:[#allocation2 + $0x4]]
    %v2197 = vstv %s2196
    %v2198 = vmul.f32 %v1316, %v2197
    %v2199 = vmul.f32 %v1317, %v2197
    %v2200 = vmul.f32 %v1318, %v2197
    %v2201 = vmul.f32 %v1319, %v2197
    %v2202 = vmul.f32 %v1320, %v2197
    %v2203 = vmul.f32 %v1321, %v2197
    %v2204 = vmul.f32 %v1322, %v2197
    %v2205 = vmul.f32 %v1323, %v2197
    %v2206 = vmul.f32 %v1324, %v2197
    %v2207 = vmul.f32 %v1325, %v2197
    %v2208 = vmul.f32 %v1326, %v2197
    %v2209 = vmul.f32 %v1327, %v2197
    %v2210 = vmul.f32 %v1328, %v2197
    %v2211 = vmul.f32 %v1329, %v2197
    %v2212 = vmul.f32 %v1330, %v2197
    %v2213 = vmul.f32 %v1331, %v2197
    %v2230 = vrot.slane %v2198, 4
    %v2231 = vrot.slane %v2199, 4
    %v2232 = vrot.slane %v2200, 4
    %v2233 = vrot.slane %v2201, 4
    %v2234 = vrot.slane %v2202, 4
    %v2235 = vrot.slane %v2203, 4
    %v2236 = vrot.slane %v2204, 4
    %v2237 = vrot.slane %v2205, 4
    %v2238 = vrot.slane %v2206, 4
    %v2239 = vrot.slane %v2207, 4
    %v2240 = vrot.slane %v2208, 4
    %v2241 = vrot.slane %v2209, 4
    %v2242 = vrot.slane %v2210, 4
    %v2243 = vrot.slane %v2211, 4
    %v2244 = vrot.slane %v2212, 4
    %v2245 = vrot.slane %v2213, 4
    %v2262 = vadd.f32 %v2180, %v2230
    %v2263 = vadd.f32 %v2181, %v2231
    %v2264 = vadd.f32 %v2182, %v2232
    %v2265 = vadd.f32 %v2183, %v2233
    %v2266 = vadd.f32 %v2184, %v2234
    %v2267 = vadd.f32 %v2185, %v2235
    %v2268 = vadd.f32 %v2186, %v2236
    %v2269 = vadd.f32 %v2187, %v2237
    %v2270 = vadd.f32 %v2188, %v2238
    %v2271 = vadd.f32 %v2189, %v2239
    %v2272 = vadd.f32 %v2190, %v2240
    %v2273 = vadd.f32 %v2191, %v2241
    %v2274 = vadd.f32 %v2192, %v2242
    %v2275 = vadd.f32 %v2193, %v2243
    %v2276 = vadd.f32 %v2194, %v2244
    %v2277 = vadd.f32 %v2195, %v2245
    %s2278 = sld [smem:[#allocation2 + $0x5]]
    %v2279 = vstv %s2278
    %v2280 = vmul.f32 %v1516, %v2279
    %v2281 = vmul.f32 %v1517, %v2279
    %v2282 = vmul.f32 %v1518, %v2279
    %v2283 = vmul.f32 %v1519, %v2279
    %v2284 = vmul.f32 %v1520, %v2279
    %v2285 = vmul.f32 %v1521, %v2279
    %v2286 = vmul.f32 %v1522, %v2279
    %v2287 = vmul.f32 %v1523, %v2279
    %v2288 = vmul.f32 %v1524, %v2279
    %v2289 = vmul.f32 %v1525, %v2279
    %v2290 = vmul.f32 %v1526, %v2279
    %v2291 = vmul.f32 %v1527, %v2279
    %v2292 = vmul.f32 %v1528, %v2279
    %v2293 = vmul.f32 %v1529, %v2279
    %v2294 = vmul.f32 %v1530, %v2279
    %v2295 = vmul.f32 %v1531, %v2279
    %v2312 = vrot.slane %v2280, 5
    %v2313 = vrot.slane %v2281, 5
    %v2314 = vrot.slane %v2282, 5
    %v2315 = vrot.slane %v2283, 5
    %v2316 = vrot.slane %v2284, 5
    %v2317 = vrot.slane %v2285, 5
    %v2318 = vrot.slane %v2286, 5
    %v2319 = vrot.slane %v2287, 5
    %v2320 = vrot.slane %v2288, 5
    %v2321 = vrot.slane %v2289, 5
    %v2322 = vrot.slane %v2290, 5
    %v2323 = vrot.slane %v2291, 5
    %v2324 = vrot.slane %v2292, 5
    %v2325 = vrot.slane %v2293, 5
    %v2326 = vrot.slane %v2294, 5
    %v2327 = vrot.slane %v2295, 5
    %v2344 = vadd.f32 %v2262, %v2312
    %v2345 = vadd.f32 %v2263, %v2313
    %v2346 = vadd.f32 %v2264, %v2314
    %v2347 = vadd.f32 %v2265, %v2315
    %v2348 = vadd.f32 %v2266, %v2316
    %v2349 = vadd.f32 %v2267, %v2317
    %v2350 = vadd.f32 %v2268, %v2318
    %v2351 = vadd.f32 %v2269, %v2319
    %v2352 = vadd.f32 %v2270, %v2320
    %v2353 = vadd.f32 %v2271, %v2321
    %v2354 = vadd.f32 %v2272, %v2322
    %v2355 = vadd.f32 %v2273, %v2323
    %v2356 = vadd.f32 %v2274, %v2324
    %v2357 = vadd.f32 %v2275, %v2325
    %v2358 = vadd.f32 %v2276, %v2326
    %v2359 = vadd.f32 %v2277, %v2327
    %s2360 = sld [smem:[#allocation2 + $0x6]]
    %v2361 = vstv %s2360
    %v2362 = vmul.f32 %v1716, %v2361
    %v2363 = vmul.f32 %v1717, %v2361
    %v2364 = vmul.f32 %v1718, %v2361
    %v2365 = vmul.f32 %v1719, %v2361
    %v2366 = vmul.f32 %v1720, %v2361
    %v2367 = vmul.f32 %v1721, %v2361
    %v2368 = vmul.f32 %v1722, %v2361
    %v2369 = vmul.f32 %v1723, %v2361
    %v2370 = vmul.f32 %v1724, %v2361
    %v2371 = vmul.f32 %v1725, %v2361
    %v2372 = vmul.f32 %v1726, %v2361
    %v2373 = vmul.f32 %v1727, %v2361
    %v2374 = vmul.f32 %v1728, %v2361
    %v2375 = vmul.f32 %v1729, %v2361
    %v2376 = vmul.f32 %v1730, %v2361
    %v2377 = vmul.f32 %v1731, %v2361
    %v2394 = vrot.slane %v2362, 6
    %v2395 = vrot.slane %v2363, 6
    %v2396 = vrot.slane %v2364, 6
    %v2397 = vrot.slane %v2365, 6
    %v2398 = vrot.slane %v2366, 6
    %v2399 = vrot.slane %v2367, 6
    %v2400 = vrot.slane %v2368, 6
    %v2401 = vrot.slane %v2369, 6
    %v2402 = vrot.slane %v2370, 6
    %v2403 = vrot.slane %v2371, 6
    %v2404 = vrot.slane %v2372, 6
    %v2405 = vrot.slane %v2373, 6
    %v2406 = vrot.slane %v2374, 6
    %v2407 = vrot.slane %v2375, 6
    %v2408 = vrot.slane %v2376, 6
    %v2409 = vrot.slane %v2377, 6
    %v2426 = vadd.f32 %v2344, %v2394
    %v2427 = vadd.f32 %v2345, %v2395
    %v2428 = vadd.f32 %v2346, %v2396
    %v2429 = vadd.f32 %v2347, %v2397
    %v2430 = vadd.f32 %v2348, %v2398
    %v2431 = vadd.f32 %v2349, %v2399
    %v2432 = vadd.f32 %v2350, %v2400
    %v2433 = vadd.f32 %v2351, %v2401
    %v2434 = vadd.f32 %v2352, %v2402
    %v2435 = vadd.f32 %v2353, %v2403
    %v2436 = vadd.f32 %v2354, %v2404
    %v2437 = vadd.f32 %v2355, %v2405
    %v2438 = vadd.f32 %v2356, %v2406
    %v2439 = vadd.f32 %v2357, %v2407
    %v2440 = vadd.f32 %v2358, %v2408
    %v2441 = vadd.f32 %v2359, %v2409
    %s2442 = sld [smem:[#allocation2 + $0x7]]
    %v2443 = vstv %s2442
    %v2444 = vmul.f32 %v1916, %v2443
    %v2445 = vmul.f32 %v1917, %v2443
    %v2446 = vmul.f32 %v1918, %v2443
    %v2447 = vmul.f32 %v1919, %v2443
    %v2448 = vmul.f32 %v1920, %v2443
    %v2449 = vmul.f32 %v1921, %v2443
    %v2450 = vmul.f32 %v1922, %v2443
    %v2451 = vmul.f32 %v1923, %v2443
    %v2452 = vmul.f32 %v1924, %v2443
    %v2453 = vmul.f32 %v1925, %v2443
    %v2454 = vmul.f32 %v1926, %v2443
    %v2455 = vmul.f32 %v1927, %v2443
    %v2456 = vmul.f32 %v1928, %v2443
    %v2457 = vmul.f32 %v1929, %v2443
    %v2458 = vmul.f32 %v1930, %v2443
    %v2459 = vmul.f32 %v1931, %v2443
    %v2476 = vrot.slane %v2444, 7
    %v2477 = vrot.slane %v2445, 7
    %v2478 = vrot.slane %v2446, 7
    %v2479 = vrot.slane %v2447, 7
    %v2480 = vrot.slane %v2448, 7
    %v2481 = vrot.slane %v2449, 7
    %v2482 = vrot.slane %v2450, 7
    %v2483 = vrot.slane %v2451, 7
    %v2484 = vrot.slane %v2452, 7
    %v2485 = vrot.slane %v2453, 7
    %v2486 = vrot.slane %v2454, 7
    %v2487 = vrot.slane %v2455, 7
    %v2488 = vrot.slane %v2456, 7
    %v2489 = vrot.slane %v2457, 7
    %v2490 = vrot.slane %v2458, 7
    %v2491 = vrot.slane %v2459, 7
    %v2508 = vadd.f32 %v2426, %v2476
    %v2509 = vadd.f32 %v2427, %v2477
    %v2510 = vadd.f32 %v2428, %v2478
    %v2511 = vadd.f32 %v2429, %v2479
    %v2512 = vadd.f32 %v2430, %v2480
    %v2513 = vadd.f32 %v2431, %v2481
    %v2514 = vadd.f32 %v2432, %v2482
    %v2515 = vadd.f32 %v2433, %v2483
    %v2516 = vadd.f32 %v2434, %v2484
    %v2517 = vadd.f32 %v2435, %v2485
    %v2518 = vadd.f32 %v2436, %v2486
    %v2519 = vadd.f32 %v2437, %v2487
    %v2520 = vadd.f32 %v2438, %v2488
    %v2521 = vadd.f32 %v2439, %v2489
    %v2522 = vadd.f32 %v2440, %v2490
    %v2523 = vadd.f32 %v2441, %v2491
    %s2524 = sld [smem:[#allocation2 + $0x20]]
    %v2525 = vstv %s2524
    %v2526 = vadd.f32 %v2508, %v2525
    %v2527 = vadd.f32 %v2509, %v2525
    %v2528 = vadd.f32 %v2510, %v2525
    %v2529 = vadd.f32 %v2511, %v2525
    %v2530 = vadd.f32 %v2512, %v2525
    %v2531 = vadd.f32 %v2513, %v2525
    %v2532 = vadd.f32 %v2514, %v2525
    %v2533 = vadd.f32 %v2515, %v2525
    %v2534 = vadd.f32 %v2516, %v2525
    %v2535 = vadd.f32 %v2517, %v2525
    %v2536 = vadd.f32 %v2518, %v2525
    %v2537 = vadd.f32 %v2519, %v2525
    %v2538 = vadd.f32 %v2520, %v2525
    %v2539 = vadd.f32 %v2521, %v2525
    %v2540 = vadd.f32 %v2522, %v2525
    %v2541 = vadd.f32 %v2523, %v2525
    %v2542 = vmul.f32 %v2526, 0.5
    %v2543 = vmul.f32 %v2527, 0.5
    %v2544 = vmul.f32 %v2528, 0.5
    %v2545 = vmul.f32 %v2529, 0.5
    %v2546 = vmul.f32 %v2530, 0.5
    %v2547 = vmul.f32 %v2531, 0.5
    %v2548 = vmul.f32 %v2532, 0.5
    %v2549 = vmul.f32 %v2533, 0.5
    %v2550 = vmul.f32 %v2534, 0.5
    %v2551 = vmul.f32 %v2535, 0.5
    %v2552 = vmul.f32 %v2536, 0.5
    %v2553 = vmul.f32 %v2537, 0.5
    %v2554 = vmul.f32 %v2538, 0.5
    %v2555 = vmul.f32 %v2539, 0.5
    %v2556 = vmul.f32 %v2540, 0.5
    %v2557 = vmul.f32 %v2541, 0.5
    %v2558 = vmul.f32 %v2526, 0.70710677
    %v2559 = vmul.f32 %v2527, 0.70710677
    %v2560 = vmul.f32 %v2528, 0.70710677
    %v2561 = vmul.f32 %v2529, 0.70710677
    %v2562 = vmul.f32 %v2530, 0.70710677
    %v2563 = vmul.f32 %v2531, 0.70710677
    %v2564 = vmul.f32 %v2532, 0.70710677
    %v2565 = vmul.f32 %v2533, 0.70710677
    %v2566 = vmul.f32 %v2534, 0.70710677
    %v2567 = vmul.f32 %v2535, 0.70710677
    %v2568 = vmul.f32 %v2536, 0.70710677
    %v2569 = vmul.f32 %v2537, 0.70710677
    %v2570 = vmul.f32 %v2538, 0.70710677
    %v2571 = vmul.f32 %v2539, 0.70710677
    %v2572 = vmul.f32 %v2540, 0.70710677
    %v2573 = vmul.f32 %v2541, 0.70710677
    %v2574 = verf.f32.pop %v2558
    %v2575 = verf.f32.pop %v2559
    %v2576 = verf.f32.pop %v2560
    %v2577 = verf.f32.pop %v2561
    %v2578 = verf.f32.pop %v2562
    %v2579 = verf.f32.pop %v2563
    %v2580 = verf.f32.pop %v2564
    %v2581 = verf.f32.pop %v2565
    %v2582 = verf.f32.pop %v2566
    %v2583 = verf.f32.pop %v2567
    %v2584 = verf.f32.pop %v2568
    %v2585 = verf.f32.pop %v2569
    %v2586 = verf.f32.pop %v2570
    %v2587 = verf.f32.pop %v2571
    %v2588 = verf.f32.pop %v2572
    %v2589 = verf.f32.pop %v2573
    %v2590 = vadd.f32 %v2574, 1.0
    %v2591 = vadd.f32 %v2575, 1.0
    %v2592 = vadd.f32 %v2576, 1.0
    %v2593 = vadd.f32 %v2577, 1.0
    %v2594 = vadd.f32 %v2578, 1.0
    %v2595 = vadd.f32 %v2579, 1.0
    %v2596 = vadd.f32 %v2580, 1.0
    %v2597 = vadd.f32 %v2581, 1.0
    %v2598 = vadd.f32 %v2582, 1.0
    %v2599 = vadd.f32 %v2583, 1.0
    %v2600 = vadd.f32 %v2584, 1.0
    %v2601 = vadd.f32 %v2585, 1.0
    %v2602 = vadd.f32 %v2586, 1.0
    %v2603 = vadd.f32 %v2587, 1.0
    %v2604 = vadd.f32 %v2588, 1.0
    %v2605 = vadd.f32 %v2589, 1.0
    %v2606 = vmul.f32 %v2542, %v2590
    %v2607 = vmul.f32 %v2543, %v2591
    %v2608 = vmul.f32 %v2544, %v2592
    %v2609 = vmul.f32 %v2545, %v2593
    %v2610 = vmul.f32 %v2546, %v2594
    %v2611 = vmul.f32 %v2547, %v2595
    %v2612 = vmul.f32 %v2548, %v2596
    %v2613 = vmul.f32 %v2549, %v2597
    %v2614 = vmul.f32 %v2550, %v2598
    %v2615 = vmul.f32 %v2551, %v2599
    %v2616 = vmul.f32 %v2552, %v2600
    %v2617 = vmul.f32 %v2553, %v2601
    %v2618 = vmul.f32 %v2554, %v2602
    %v2619 = vmul.f32 %v2555, %v2603
    %v2620 = vmul.f32 %v2556, %v2604
    %v2621 = vmul.f32 %v2557, %v2605
    %s2622 = sld [smem:[#allocation2 + $0x8]]
    %v2623 = vstv %s2622
    %v2624 = vmul.f32 %v516, %v2623
    %v2625 = vmul.f32 %v517, %v2623
    %v2626 = vmul.f32 %v518, %v2623
    %v2627 = vmul.f32 %v519, %v2623
    %v2628 = vmul.f32 %v520, %v2623
    %v2629 = vmul.f32 %v521, %v2623
    %v2630 = vmul.f32 %v522, %v2623
    %v2631 = vmul.f32 %v523, %v2623
    %v2632 = vmul.f32 %v524, %v2623
    %v2633 = vmul.f32 %v525, %v2623
    %v2634 = vmul.f32 %v526, %v2623
    %v2635 = vmul.f32 %v527, %v2623
    %v2636 = vmul.f32 %v528, %v2623
    %v2637 = vmul.f32 %v529, %v2623
    %v2638 = vmul.f32 %v530, %v2623
    %v2639 = vmul.f32 %v531, %v2623
    %s2640 = sld [smem:[#allocation2 + $0x9]]
    %v2641 = vstv %s2640
    %v2642 = vmul.f32 %v716, %v2641
    %v2643 = vmul.f32 %v717, %v2641
    %v2644 = vmul.f32 %v718, %v2641
    %v2645 = vmul.f32 %v719, %v2641
    %v2646 = vmul.f32 %v720, %v2641
    %v2647 = vmul.f32 %v721, %v2641
    %v2648 = vmul.f32 %v722, %v2641
    %v2649 = vmul.f32 %v723, %v2641
    %v2650 = vmul.f32 %v724, %v2641
    %v2651 = vmul.f32 %v725, %v2641
    %v2652 = vmul.f32 %v726, %v2641
    %v2653 = vmul.f32 %v727, %v2641
    %v2654 = vmul.f32 %v728, %v2641
    %v2655 = vmul.f32 %v729, %v2641
    %v2656 = vmul.f32 %v730, %v2641
    %v2657 = vmul.f32 %v731, %v2641
    %v2674 = vrot.slane %v2642, 1
    %v2675 = vrot.slane %v2643, 1
    %v2676 = vrot.slane %v2644, 1
    %v2677 = vrot.slane %v2645, 1
    %v2678 = vrot.slane %v2646, 1
    %v2679 = vrot.slane %v2647, 1
    %v2680 = vrot.slane %v2648, 1
    %v2681 = vrot.slane %v2649, 1
    %v2682 = vrot.slane %v2650, 1
    %v2683 = vrot.slane %v2651, 1
    %v2684 = vrot.slane %v2652, 1
    %v2685 = vrot.slane %v2653, 1
    %v2686 = vrot.slane %v2654, 1
    %v2687 = vrot.slane %v2655, 1
    %v2688 = vrot.slane %v2656, 1
    %v2689 = vrot.slane %v2657, 1
    %v2706 = vadd.f32 %v2624, %v2674
    %v2707 = vadd.f32 %v2625, %v2675
    %v2708 = vadd.f32 %v2626, %v2676
    %v2709 = vadd.f32 %v2627, %v2677
    %v2710 = vadd.f32 %v2628, %v2678
    %v2711 = vadd.f32 %v2629, %v2679
    %v2712 = vadd.f32 %v2630, %v2680
    %v2713 = vadd.f32 %v2631, %v2681
    %v2714 = vadd.f32 %v2632, %v2682
    %v2715 = vadd.f32 %v2633, %v2683
    %v2716 = vadd.f32 %v2634, %v2684
    %v2717 = vadd.f32 %v2635, %v2685
    %v2718 = vadd.f32 %v2636, %v2686
    %v2719 = vadd.f32 %v2637, %v2687
    %v2720 = vadd.f32 %v2638, %v2688
    %v2721 = vadd.f32 %v2639, %v2689
    %s2722 = sld [smem:[#allocation2 + $0xa]]
    %v2723 = vstv %s2722
    %v2724 = vmul.f32 %v916, %v2723
    %v2725 = vmul.f32 %v917, %v2723
    %v2726 = vmul.f32 %v918, %v2723
    %v2727 = vmul.f32 %v919, %v2723
    %v2728 = vmul.f32 %v920, %v2723
    %v2729 = vmul.f32 %v921, %v2723
    %v2730 = vmul.f32 %v922, %v2723
    %v2731 = vmul.f32 %v923, %v2723
    %v2732 = vmul.f32 %v924, %v2723
    %v2733 = vmul.f32 %v925, %v2723
    %v2734 = vmul.f32 %v926, %v2723
    %v2735 = vmul.f32 %v927, %v2723
    %v2736 = vmul.f32 %v928, %v2723
    %v2737 = vmul.f32 %v929, %v2723
    %v2738 = vmul.f32 %v930, %v2723
    %v2739 = vmul.f32 %v931, %v2723
    %v2756 = vrot.slane %v2724, 2
    %v2757 = vrot.slane %v2725, 2
    %v2758 = vrot.slane %v2726, 2
    %v2759 = vrot.slane %v2727, 2
    %v2760 = vrot.slane %v2728, 2
    %v2761 = vrot.slane %v2729, 2
    %v2762 = vrot.slane %v2730, 2
    %v2763 = vrot.slane %v2731, 2
    %v2764 = vrot.slane %v2732, 2
    %v2765 = vrot.slane %v2733, 2
    %v2766 = vrot.slane %v2734, 2
    %v2767 = vrot.slane %v2735, 2
    %v2768 = vrot.slane %v2736, 2
    %v2769 = vrot.slane %v2737, 2
    %v2770 = vrot.slane %v2738, 2
    %v2771 = vrot.slane %v2739, 2
    %v2788 = vadd.f32 %v2706, %v2756
    %v2789 = vadd.f32 %v2707, %v2757
    %v2790 = vadd.f32 %v2708, %v2758
    %v2791 = vadd.f32 %v2709, %v2759
    %v2792 = vadd.f32 %v2710, %v2760
    %v2793 = vadd.f32 %v2711, %v2761
    %v2794 = vadd.f32 %v2712, %v2762
    %v2795 = vadd.f32 %v2713, %v2763
    %v2796 = vadd.f32 %v2714, %v2764
    %v2797 = vadd.f32 %v2715, %v2765
    %v2798 = vadd.f32 %v2716, %v2766
    %v2799 = vadd.f32 %v2717, %v2767
    %v2800 = vadd.f32 %v2718, %v2768
    %v2801 = vadd.f32 %v2719, %v2769
    %v2802 = vadd.f32 %v2720, %v2770
    %v2803 = vadd.f32 %v2721, %v2771
    %s2804 = sld [smem:[#allocation2 + $0xb]]
    %v2805 = vstv %s2804
    %v2806 = vmul.f32 %v1116, %v2805
    %v2807 = vmul.f32 %v1117, %v2805
    %v2808 = vmul.f32 %v1118, %v2805
    %v2809 = vmul.f32 %v1119, %v2805
    %v2810 = vmul.f32 %v1120, %v2805
    %v2811 = vmul.f32 %v1121, %v2805
    %v2812 = vmul.f32 %v1122, %v2805
    %v2813 = vmul.f32 %v1123, %v2805
    %v2814 = vmul.f32 %v1124, %v2805
    %v2815 = vmul.f32 %v1125, %v2805
    %v2816 = vmul.f32 %v1126, %v2805
    %v2817 = vmul.f32 %v1127, %v2805
    %v2818 = vmul.f32 %v1128, %v2805
    %v2819 = vmul.f32 %v1129, %v2805
    %v2820 = vmul.f32 %v1130, %v2805
    %v2821 = vmul.f32 %v1131, %v2805
    %v2838 = vrot.slane %v2806, 3
    %v2839 = vrot.slane %v2807, 3
    %v2840 = vrot.slane %v2808, 3
    %v2841 = vrot.slane %v2809, 3
    %v2842 = vrot.slane %v2810, 3
    %v2843 = vrot.slane %v2811, 3
    %v2844 = vrot.slane %v2812, 3
    %v2845 = vrot.slane %v2813, 3
    %v2846 = vrot.slane %v2814, 3
    %v2847 = vrot.slane %v2815, 3
    %v2848 = vrot.slane %v2816, 3
    %v2849 = vrot.slane %v2817, 3
    %v2850 = vrot.slane %v2818, 3
    %v2851 = vrot.slane %v2819, 3
    %v2852 = vrot.slane %v2820, 3
    %v2853 = vrot.slane %v2821, 3
    %v2870 = vadd.f32 %v2788, %v2838
    %v2871 = vadd.f32 %v2789, %v2839
    %v2872 = vadd.f32 %v2790, %v2840
    %v2873 = vadd.f32 %v2791, %v2841
    %v2874 = vadd.f32 %v2792, %v2842
    %v2875 = vadd.f32 %v2793, %v2843
    %v2876 = vadd.f32 %v2794, %v2844
    %v2877 = vadd.f32 %v2795, %v2845
    %v2878 = vadd.f32 %v2796, %v2846
    %v2879 = vadd.f32 %v2797, %v2847
    %v2880 = vadd.f32 %v2798, %v2848
    %v2881 = vadd.f32 %v2799, %v2849
    %v2882 = vadd.f32 %v2800, %v2850
    %v2883 = vadd.f32 %v2801, %v2851
    %v2884 = vadd.f32 %v2802, %v2852
    %v2885 = vadd.f32 %v2803, %v2853
    %s2886 = sld [smem:[#allocation2 + $0xc]]
    %v2887 = vstv %s2886
    %v2888 = vmul.f32 %v1316, %v2887
    %v2889 = vmul.f32 %v1317, %v2887
    %v2890 = vmul.f32 %v1318, %v2887
    %v2891 = vmul.f32 %v1319, %v2887
    %v2892 = vmul.f32 %v1320, %v2887
    %v2893 = vmul.f32 %v1321, %v2887
    %v2894 = vmul.f32 %v1322, %v2887
    %v2895 = vmul.f32 %v1323, %v2887
    %v2896 = vmul.f32 %v1324, %v2887
    %v2897 = vmul.f32 %v1325, %v2887
    %v2898 = vmul.f32 %v1326, %v2887
    %v2899 = vmul.f32 %v1327, %v2887
    %v2900 = vmul.f32 %v1328, %v2887
    %v2901 = vmul.f32 %v1329, %v2887
    %v2902 = vmul.f32 %v1330, %v2887
    %v2903 = vmul.f32 %v1331, %v2887
    %v2920 = vrot.slane %v2888, 4
    %v2921 = vrot.slane %v2889, 4
    %v2922 = vrot.slane %v2890, 4
    %v2923 = vrot.slane %v2891, 4
    %v2924 = vrot.slane %v2892, 4
    %v2925 = vrot.slane %v2893, 4
    %v2926 = vrot.slane %v2894, 4
    %v2927 = vrot.slane %v2895, 4
    %v2928 = vrot.slane %v2896, 4
    %v2929 = vrot.slane %v2897, 4
    %v2930 = vrot.slane %v2898, 4
    %v2931 = vrot.slane %v2899, 4
    %v2932 = vrot.slane %v2900, 4
    %v2933 = vrot.slane %v2901, 4
    %v2934 = vrot.slane %v2902, 4
    %v2935 = vrot.slane %v2903, 4
    %v2952 = vadd.f32 %v2870, %v2920
    %v2953 = vadd.f32 %v2871, %v2921
    %v2954 = vadd.f32 %v2872, %v2922
    %v2955 = vadd.f32 %v2873, %v2923
    %v2956 = vadd.f32 %v2874, %v2924
    %v2957 = vadd.f32 %v2875, %v2925
    %v2958 = vadd.f32 %v2876, %v2926
    %v2959 = vadd.f32 %v2877, %v2927
    %v2960 = vadd.f32 %v2878, %v2928
    %v2961 = vadd.f32 %v2879, %v2929
    %v2962 = vadd.f32 %v2880, %v2930
    %v2963 = vadd.f32 %v2881, %v2931
    %v2964 = vadd.f32 %v2882, %v2932
    %v2965 = vadd.f32 %v2883, %v2933
    %v2966 = vadd.f32 %v2884, %v2934
    %v2967 = vadd.f32 %v2885, %v2935
    %s2968 = sld [smem:[#allocation2 + $0xd]]
    %v2969 = vstv %s2968
    %v2970 = vmul.f32 %v1516, %v2969
    %v2971 = vmul.f32 %v1517, %v2969
    %v2972 = vmul.f32 %v1518, %v2969
    %v2973 = vmul.f32 %v1519, %v2969
    %v2974 = vmul.f32 %v1520, %v2969
    %v2975 = vmul.f32 %v1521, %v2969
    %v2976 = vmul.f32 %v1522, %v2969
    %v2977 = vmul.f32 %v1523, %v2969
    %v2978 = vmul.f32 %v1524, %v2969
    %v2979 = vmul.f32 %v1525, %v2969
    %v2980 = vmul.f32 %v1526, %v2969
    %v2981 = vmul.f32 %v1527, %v2969
    %v2982 = vmul.f32 %v1528, %v2969
    %v2983 = vmul.f32 %v1529, %v2969
    %v2984 = vmul.f32 %v1530, %v2969
    %v2985 = vmul.f32 %v1531, %v2969
    %v3002 = vrot.slane %v2970, 5
    %v3003 = vrot.slane %v2971, 5
    %v3004 = vrot.slane %v2972, 5
    %v3005 = vrot.slane %v2973, 5
    %v3006 = vrot.slane %v2974, 5
    %v3007 = vrot.slane %v2975, 5
    %v3008 = vrot.slane %v2976, 5
    %v3009 = vrot.slane %v2977, 5
    %v3010 = vrot.slane %v2978, 5
    %v3011 = vrot.slane %v2979, 5
    %v3012 = vrot.slane %v2980, 5
    %v3013 = vrot.slane %v2981, 5
    %v3014 = vrot.slane %v2982, 5
    %v3015 = vrot.slane %v2983, 5
    %v3016 = vrot.slane %v2984, 5
    %v3017 = vrot.slane %v2985, 5
    %v3034 = vadd.f32 %v2952, %v3002
    %v3035 = vadd.f32 %v2953, %v3003
    %v3036 = vadd.f32 %v2954, %v3004
    %v3037 = vadd.f32 %v2955, %v3005
    %v3038 = vadd.f32 %v2956, %v3006
    %v3039 = vadd.f32 %v2957, %v3007
    %v3040 = vadd.f32 %v2958, %v3008
    %v3041 = vadd.f32 %v2959, %v3009
    %v3042 = vadd.f32 %v2960, %v3010
    %v3043 = vadd.f32 %v2961, %v3011
    %v3044 = vadd.f32 %v2962, %v3012
    %v3045 = vadd.f32 %v2963, %v3013
    %v3046 = vadd.f32 %v2964, %v3014
    %v3047 = vadd.f32 %v2965, %v3015
    %v3048 = vadd.f32 %v2966, %v3016
    %v3049 = vadd.f32 %v2967, %v3017
    %s3050 = sld [smem:[#allocation2 + $0xe]]
    %v3051 = vstv %s3050
    %v3052 = vmul.f32 %v1716, %v3051
    %v3053 = vmul.f32 %v1717, %v3051
    %v3054 = vmul.f32 %v1718, %v3051
    %v3055 = vmul.f32 %v1719, %v3051
    %v3056 = vmul.f32 %v1720, %v3051
    %v3057 = vmul.f32 %v1721, %v3051
    %v3058 = vmul.f32 %v1722, %v3051
    %v3059 = vmul.f32 %v1723, %v3051
    %v3060 = vmul.f32 %v1724, %v3051
    %v3061 = vmul.f32 %v1725, %v3051
    %v3062 = vmul.f32 %v1726, %v3051
    %v3063 = vmul.f32 %v1727, %v3051
    %v3064 = vmul.f32 %v1728, %v3051
    %v3065 = vmul.f32 %v1729, %v3051
    %v3066 = vmul.f32 %v1730, %v3051
    %v3067 = vmul.f32 %v1731, %v3051
    %v3084 = vrot.slane %v3052, 6
    %v3085 = vrot.slane %v3053, 6
    %v3086 = vrot.slane %v3054, 6
    %v3087 = vrot.slane %v3055, 6
    %v3088 = vrot.slane %v3056, 6
    %v3089 = vrot.slane %v3057, 6
    %v3090 = vrot.slane %v3058, 6
    %v3091 = vrot.slane %v3059, 6
    %v3092 = vrot.slane %v3060, 6
    %v3093 = vrot.slane %v3061, 6
    %v3094 = vrot.slane %v3062, 6
    %v3095 = vrot.slane %v3063, 6
    %v3096 = vrot.slane %v3064, 6
    %v3097 = vrot.slane %v3065, 6
    %v3098 = vrot.slane %v3066, 6
    %v3099 = vrot.slane %v3067, 6
    %v3116 = vadd.f32 %v3034, %v3084
    %v3117 = vadd.f32 %v3035, %v3085
    %v3118 = vadd.f32 %v3036, %v3086
    %v3119 = vadd.f32 %v3037, %v3087
    %v3120 = vadd.f32 %v3038, %v3088
    %v3121 = vadd.f32 %v3039, %v3089
    %v3122 = vadd.f32 %v3040, %v3090
    %v3123 = vadd.f32 %v3041, %v3091
    %v3124 = vadd.f32 %v3042, %v3092
    %v3125 = vadd.f32 %v3043, %v3093
    %v3126 = vadd.f32 %v3044, %v3094
    %v3127 = vadd.f32 %v3045, %v3095
    %v3128 = vadd.f32 %v3046, %v3096
    %v3129 = vadd.f32 %v3047, %v3097
    %v3130 = vadd.f32 %v3048, %v3098
    %v3131 = vadd.f32 %v3049, %v3099
    %s3132 = sld [smem:[#allocation2 + $0xf]]
    %v3133 = vstv %s3132
    %v3134 = vmul.f32 %v1916, %v3133
    %v3135 = vmul.f32 %v1917, %v3133
    %v3136 = vmul.f32 %v1918, %v3133
    %v3137 = vmul.f32 %v1919, %v3133
    %v3138 = vmul.f32 %v1920, %v3133
    %v3139 = vmul.f32 %v1921, %v3133
    %v3140 = vmul.f32 %v1922, %v3133
    %v3141 = vmul.f32 %v1923, %v3133
    %v3142 = vmul.f32 %v1924, %v3133
    %v3143 = vmul.f32 %v1925, %v3133
    %v3144 = vmul.f32 %v1926, %v3133
    %v3145 = vmul.f32 %v1927, %v3133
    %v3146 = vmul.f32 %v1928, %v3133
    %v3147 = vmul.f32 %v1929, %v3133
    %v3148 = vmul.f32 %v1930, %v3133
    %v3149 = vmul.f32 %v1931, %v3133
    %v3166 = vrot.slane %v3134, 7
    %v3167 = vrot.slane %v3135, 7
    %v3168 = vrot.slane %v3136, 7
    %v3169 = vrot.slane %v3137, 7
    %v3170 = vrot.slane %v3138, 7
    %v3171 = vrot.slane %v3139, 7
    %v3172 = vrot.slane %v3140, 7
    %v3173 = vrot.slane %v3141, 7
    %v3174 = vrot.slane %v3142, 7
    %v3175 = vrot.slane %v3143, 7
    %v3176 = vrot.slane %v3144, 7
    %v3177 = vrot.slane %v3145, 7
    %v3178 = vrot.slane %v3146, 7
    %v3179 = vrot.slane %v3147, 7
    %v3180 = vrot.slane %v3148, 7
    %v3181 = vrot.slane %v3149, 7
    %v3198 = vadd.f32 %v3116, %v3166
    %v3199 = vadd.f32 %v3117, %v3167
    %v3200 = vadd.f32 %v3118, %v3168
    %v3201 = vadd.f32 %v3119, %v3169
    %v3202 = vadd.f32 %v3120, %v3170
    %v3203 = vadd.f32 %v3121, %v3171
    %v3204 = vadd.f32 %v3122, %v3172
    %v3205 = vadd.f32 %v3123, %v3173
    %v3206 = vadd.f32 %v3124, %v3174
    %v3207 = vadd.f32 %v3125, %v3175
    %v3208 = vadd.f32 %v3126, %v3176
    %v3209 = vadd.f32 %v3127, %v3177
    %v3210 = vadd.f32 %v3128, %v3178
    %v3211 = vadd.f32 %v3129, %v3179
    %v3212 = vadd.f32 %v3130, %v3180
    %v3213 = vadd.f32 %v3131, %v3181
    %s3214 = sld [smem:[#allocation2 + $0x21]]
    %v3215 = vstv %s3214
    %v3216 = vadd.f32 %v3198, %v3215
    %v3217 = vadd.f32 %v3199, %v3215
    %v3218 = vadd.f32 %v3200, %v3215
    %v3219 = vadd.f32 %v3201, %v3215
    %v3220 = vadd.f32 %v3202, %v3215
    %v3221 = vadd.f32 %v3203, %v3215
    %v3222 = vadd.f32 %v3204, %v3215
    %v3223 = vadd.f32 %v3205, %v3215
    %v3224 = vadd.f32 %v3206, %v3215
    %v3225 = vadd.f32 %v3207, %v3215
    %v3226 = vadd.f32 %v3208, %v3215
    %v3227 = vadd.f32 %v3209, %v3215
    %v3228 = vadd.f32 %v3210, %v3215
    %v3229 = vadd.f32 %v3211, %v3215
    %v3230 = vadd.f32 %v3212, %v3215
    %v3231 = vadd.f32 %v3213, %v3215
    %v3232 = vmul.f32 %v3216, 0.5
    %v3233 = vmul.f32 %v3217, 0.5
    %v3234 = vmul.f32 %v3218, 0.5
    %v3235 = vmul.f32 %v3219, 0.5
    %v3236 = vmul.f32 %v3220, 0.5
    %v3237 = vmul.f32 %v3221, 0.5
    %v3238 = vmul.f32 %v3222, 0.5
    %v3239 = vmul.f32 %v3223, 0.5
    %v3240 = vmul.f32 %v3224, 0.5
    %v3241 = vmul.f32 %v3225, 0.5
    %v3242 = vmul.f32 %v3226, 0.5
    %v3243 = vmul.f32 %v3227, 0.5
    %v3244 = vmul.f32 %v3228, 0.5
    %v3245 = vmul.f32 %v3229, 0.5
    %v3246 = vmul.f32 %v3230, 0.5
    %v3247 = vmul.f32 %v3231, 0.5
    %v3248 = vmul.f32 %v3216, 0.70710677
    %v3249 = vmul.f32 %v3217, 0.70710677
    %v3250 = vmul.f32 %v3218, 0.70710677
    %v3251 = vmul.f32 %v3219, 0.70710677
    %v3252 = vmul.f32 %v3220, 0.70710677
    %v3253 = vmul.f32 %v3221, 0.70710677
    %v3254 = vmul.f32 %v3222, 0.70710677
    %v3255 = vmul.f32 %v3223, 0.70710677
    %v3256 = vmul.f32 %v3224, 0.70710677
    %v3257 = vmul.f32 %v3225, 0.70710677
    %v3258 = vmul.f32 %v3226, 0.70710677
    %v3259 = vmul.f32 %v3227, 0.70710677
    %v3260 = vmul.f32 %v3228, 0.70710677
    %v3261 = vmul.f32 %v3229, 0.70710677
    %v3262 = vmul.f32 %v3230, 0.70710677
    %v3263 = vmul.f32 %v3231, 0.70710677
    %v3264 = verf.f32.pop %v3248
    %v3265 = verf.f32.pop %v3249
    %v3266 = verf.f32.pop %v3250
    %v3267 = verf.f32.pop %v3251
    %v3268 = verf.f32.pop %v3252
    %v3269 = verf.f32.pop %v3253
    %v3270 = verf.f32.pop %v3254
    %v3271 = verf.f32.pop %v3255
    %v3272 = verf.f32.pop %v3256
    %v3273 = verf.f32.pop %v3257
    %v3274 = verf.f32.pop %v3258
    %v3275 = verf.f32.pop %v3259
    %v3276 = verf.f32.pop %v3260
    %v3277 = verf.f32.pop %v3261
    %v3278 = verf.f32.pop %v3262
    %v3279 = verf.f32.pop %v3263
    %v3280 = vadd.f32 %v3264, 1.0
    %v3281 = vadd.f32 %v3265, 1.0
    %v3282 = vadd.f32 %v3266, 1.0
    %v3283 = vadd.f32 %v3267, 1.0
    %v3284 = vadd.f32 %v3268, 1.0
    %v3285 = vadd.f32 %v3269, 1.0
    %v3286 = vadd.f32 %v3270, 1.0
    %v3287 = vadd.f32 %v3271, 1.0
    %v3288 = vadd.f32 %v3272, 1.0
    %v3289 = vadd.f32 %v3273, 1.0
    %v3290 = vadd.f32 %v3274, 1.0
    %v3291 = vadd.f32 %v3275, 1.0
    %v3292 = vadd.f32 %v3276, 1.0
    %v3293 = vadd.f32 %v3277, 1.0
    %v3294 = vadd.f32 %v3278, 1.0
    %v3295 = vadd.f32 %v3279, 1.0
    %v3296 = vmul.f32 %v3232, %v3280
    %v3297 = vmul.f32 %v3233, %v3281
    %v3298 = vmul.f32 %v3234, %v3282
    %v3299 = vmul.f32 %v3235, %v3283
    %v3300 = vmul.f32 %v3236, %v3284
    %v3301 = vmul.f32 %v3237, %v3285
    %v3302 = vmul.f32 %v3238, %v3286
    %v3303 = vmul.f32 %v3239, %v3287
    %v3304 = vmul.f32 %v3240, %v3288
    %v3305 = vmul.f32 %v3241, %v3289
    %v3306 = vmul.f32 %v3242, %v3290
    %v3307 = vmul.f32 %v3243, %v3291
    %v3308 = vmul.f32 %v3244, %v3292
    %v3309 = vmul.f32 %v3245, %v3293
    %v3310 = vmul.f32 %v3246, %v3294
    %v3311 = vmul.f32 %v3247, %v3295
    %s3312 = sld [smem:[#allocation2 + $0x10]]
    %v3313 = vstv %s3312
    %v3314 = vmul.f32 %v516, %v3313
    %v3315 = vmul.f32 %v517, %v3313
    %v3316 = vmul.f32 %v518, %v3313
    %v3317 = vmul.f32 %v519, %v3313
    %v3318 = vmul.f32 %v520, %v3313
    %v3319 = vmul.f32 %v521, %v3313
    %v3320 = vmul.f32 %v522, %v3313
    %v3321 = vmul.f32 %v523, %v3313
    %v3322 = vmul.f32 %v524, %v3313
    %v3323 = vmul.f32 %v525, %v3313
    %v3324 = vmul.f32 %v526, %v3313
    %v3325 = vmul.f32 %v527, %v3313
    %v3326 = vmul.f32 %v528, %v3313
    %v3327 = vmul.f32 %v529, %v3313
    %v3328 = vmul.f32 %v530, %v3313
    %v3329 = vmul.f32 %v531, %v3313
    %s3330 = sld [smem:[#allocation2 + $0x11]]
    %v3331 = vstv %s3330
    %v3332 = vmul.f32 %v716, %v3331
    %v3333 = vmul.f32 %v717, %v3331
    %v3334 = vmul.f32 %v718, %v3331
    %v3335 = vmul.f32 %v719, %v3331
    %v3336 = vmul.f32 %v720, %v3331
    %v3337 = vmul.f32 %v721, %v3331
    %v3338 = vmul.f32 %v722, %v3331
    %v3339 = vmul.f32 %v723, %v3331
    %v3340 = vmul.f32 %v724, %v3331
    %v3341 = vmul.f32 %v725, %v3331
    %v3342 = vmul.f32 %v726, %v3331
    %v3343 = vmul.f32 %v727, %v3331
    %v3344 = vmul.f32 %v728, %v3331
    %v3345 = vmul.f32 %v729, %v3331
    %v3346 = vmul.f32 %v730, %v3331
    %v3347 = vmul.f32 %v731, %v3331
    %v3364 = vrot.slane %v3332, 1
    %v3365 = vrot.slane %v3333, 1
    %v3366 = vrot.slane %v3334, 1
    %v3367 = vrot.slane %v3335, 1
    %v3368 = vrot.slane %v3336, 1
    %v3369 = vrot.slane %v3337, 1
    %v3370 = vrot.slane %v3338, 1
    %v3371 = vrot.slane %v3339, 1
    %v3372 = vrot.slane %v3340, 1
    %v3373 = vrot.slane %v3341, 1
    %v3374 = vrot.slane %v3342, 1
    %v3375 = vrot.slane %v3343, 1
    %v3376 = vrot.slane %v3344, 1
    %v3377 = vrot.slane %v3345, 1
    %v3378 = vrot.slane %v3346, 1
    %v3379 = vrot.slane %v3347, 1
    %v3396 = vadd.f32 %v3314, %v3364
    %v3397 = vadd.f32 %v3315, %v3365
    %v3398 = vadd.f32 %v3316, %v3366
    %v3399 = vadd.f32 %v3317, %v3367
    %v3400 = vadd.f32 %v3318, %v3368
    %v3401 = vadd.f32 %v3319, %v3369
    %v3402 = vadd.f32 %v3320, %v3370
    %v3403 = vadd.f32 %v3321, %v3371
    %v3404 = vadd.f32 %v3322, %v3372
    %v3405 = vadd.f32 %v3323, %v3373
    %v3406 = vadd.f32 %v3324, %v3374
    %v3407 = vadd.f32 %v3325, %v3375
    %v3408 = vadd.f32 %v3326, %v3376
    %v3409 = vadd.f32 %v3327, %v3377
    %v3410 = vadd.f32 %v3328, %v3378
    %v3411 = vadd.f32 %v3329, %v3379
    %s3412 = sld [smem:[#allocation2 + $0x12]]
    %v3413 = vstv %s3412
    %v3414 = vmul.f32 %v916, %v3413
    %v3415 = vmul.f32 %v917, %v3413
    %v3416 = vmul.f32 %v918, %v3413
    %v3417 = vmul.f32 %v919, %v3413
    %v3418 = vmul.f32 %v920, %v3413
    %v3419 = vmul.f32 %v921, %v3413
    %v3420 = vmul.f32 %v922, %v3413
    %v3421 = vmul.f32 %v923, %v3413
    %v3422 = vmul.f32 %v924, %v3413
    %v3423 = vmul.f32 %v925, %v3413
    %v3424 = vmul.f32 %v926, %v3413
    %v3425 = vmul.f32 %v927, %v3413
    %v3426 = vmul.f32 %v928, %v3413
    %v3427 = vmul.f32 %v929, %v3413
    %v3428 = vmul.f32 %v930, %v3413
    %v3429 = vmul.f32 %v931, %v3413
    %v3446 = vrot.slane %v3414, 2
    %v3447 = vrot.slane %v3415, 2
    %v3448 = vrot.slane %v3416, 2
    %v3449 = vrot.slane %v3417, 2
    %v3450 = vrot.slane %v3418, 2
    %v3451 = vrot.slane %v3419, 2
    %v3452 = vrot.slane %v3420, 2
    %v3453 = vrot.slane %v3421, 2
    %v3454 = vrot.slane %v3422, 2
    %v3455 = vrot.slane %v3423, 2
    %v3456 = vrot.slane %v3424, 2
    %v3457 = vrot.slane %v3425, 2
    %v3458 = vrot.slane %v3426, 2
    %v3459 = vrot.slane %v3427, 2
    %v3460 = vrot.slane %v3428, 2
    %v3461 = vrot.slane %v3429, 2
    %v3478 = vadd.f32 %v3396, %v3446
    %v3479 = vadd.f32 %v3397, %v3447
    %v3480 = vadd.f32 %v3398, %v3448
    %v3481 = vadd.f32 %v3399, %v3449
    %v3482 = vadd.f32 %v3400, %v3450
    %v3483 = vadd.f32 %v3401, %v3451
    %v3484 = vadd.f32 %v3402, %v3452
    %v3485 = vadd.f32 %v3403, %v3453
    %v3486 = vadd.f32 %v3404, %v3454
    %v3487 = vadd.f32 %v3405, %v3455
    %v3488 = vadd.f32 %v3406, %v3456
    %v3489 = vadd.f32 %v3407, %v3457
    %v3490 = vadd.f32 %v3408, %v3458
    %v3491 = vadd.f32 %v3409, %v3459
    %v3492 = vadd.f32 %v3410, %v3460
    %v3493 = vadd.f32 %v3411, %v3461
    %s3494 = sld [smem:[#allocation2 + $0x13]]
    %v3495 = vstv %s3494
    %v3496 = vmul.f32 %v1116, %v3495
    %v3497 = vmul.f32 %v1117, %v3495
    %v3498 = vmul.f32 %v1118, %v3495
    %v3499 = vmul.f32 %v1119, %v3495
    %v3500 = vmul.f32 %v1120, %v3495
    %v3501 = vmul.f32 %v1121, %v3495
    %v3502 = vmul.f32 %v1122, %v3495
    %v3503 = vmul.f32 %v1123, %v3495
    %v3504 = vmul.f32 %v1124, %v3495
    %v3505 = vmul.f32 %v1125, %v3495
    %v3506 = vmul.f32 %v1126, %v3495
    %v3507 = vmul.f32 %v1127, %v3495
    %v3508 = vmul.f32 %v1128, %v3495
    %v3509 = vmul.f32 %v1129, %v3495
    %v3510 = vmul.f32 %v1130, %v3495
    %v3511 = vmul.f32 %v1131, %v3495
    %v3528 = vrot.slane %v3496, 3
    %v3529 = vrot.slane %v3497, 3
    %v3530 = vrot.slane %v3498, 3
    %v3531 = vrot.slane %v3499, 3
    %v3532 = vrot.slane %v3500, 3
    %v3533 = vrot.slane %v3501, 3
    %v3534 = vrot.slane %v3502, 3
    %v3535 = vrot.slane %v3503, 3
    %v3536 = vrot.slane %v3504, 3
    %v3537 = vrot.slane %v3505, 3
    %v3538 = vrot.slane %v3506, 3
    %v3539 = vrot.slane %v3507, 3
    %v3540 = vrot.slane %v3508, 3
    %v3541 = vrot.slane %v3509, 3
    %v3542 = vrot.slane %v3510, 3
    %v3543 = vrot.slane %v3511, 3
    %v3560 = vadd.f32 %v3478, %v3528
    %v3561 = vadd.f32 %v3479, %v3529
    %v3562 = vadd.f32 %v3480, %v3530
    %v3563 = vadd.f32 %v3481, %v3531
    %v3564 = vadd.f32 %v3482, %v3532
    %v3565 = vadd.f32 %v3483, %v3533
    %v3566 = vadd.f32 %v3484, %v3534
    %v3567 = vadd.f32 %v3485, %v3535
    %v3568 = vadd.f32 %v3486, %v3536
    %v3569 = vadd.f32 %v3487, %v3537
    %v3570 = vadd.f32 %v3488, %v3538
    %v3571 = vadd.f32 %v3489, %v3539
    %v3572 = vadd.f32 %v3490, %v3540
    %v3573 = vadd.f32 %v3491, %v3541
    %v3574 = vadd.f32 %v3492, %v3542
    %v3575 = vadd.f32 %v3493, %v3543
    %s3576 = sld [smem:[#allocation2 + $0x14]]
    %v3577 = vstv %s3576
    %v3578 = vmul.f32 %v1316, %v3577
    %v3579 = vmul.f32 %v1317, %v3577
    %v3580 = vmul.f32 %v1318, %v3577
    %v3581 = vmul.f32 %v1319, %v3577
    %v3582 = vmul.f32 %v1320, %v3577
    %v3583 = vmul.f32 %v1321, %v3577
    %v3584 = vmul.f32 %v1322, %v3577
    %v3585 = vmul.f32 %v1323, %v3577
    %v3586 = vmul.f32 %v1324, %v3577
    %v3587 = vmul.f32 %v1325, %v3577
    %v3588 = vmul.f32 %v1326, %v3577
    %v3589 = vmul.f32 %v1327, %v3577
    %v3590 = vmul.f32 %v1328, %v3577
    %v3591 = vmul.f32 %v1329, %v3577
    %v3592 = vmul.f32 %v1330, %v3577
    %v3593 = vmul.f32 %v1331, %v3577
    %v3610 = vrot.slane %v3578, 4
    %v3611 = vrot.slane %v3579, 4
    %v3612 = vrot.slane %v3580, 4
    %v3613 = vrot.slane %v3581, 4
    %v3614 = vrot.slane %v3582, 4
    %v3615 = vrot.slane %v3583, 4
    %v3616 = vrot.slane %v3584, 4
    %v3617 = vrot.slane %v3585, 4
    %v3618 = vrot.slane %v3586, 4
    %v3619 = vrot.slane %v3587, 4
    %v3620 = vrot.slane %v3588, 4
    %v3621 = vrot.slane %v3589, 4
    %v3622 = vrot.slane %v3590, 4
    %v3623 = vrot.slane %v3591, 4
    %v3624 = vrot.slane %v3592, 4
    %v3625 = vrot.slane %v3593, 4
    %v3642 = vadd.f32 %v3560, %v3610
    %v3643 = vadd.f32 %v3561, %v3611
    %v3644 = vadd.f32 %v3562, %v3612
    %v3645 = vadd.f32 %v3563, %v3613
    %v3646 = vadd.f32 %v3564, %v3614
    %v3647 = vadd.f32 %v3565, %v3615
    %v3648 = vadd.f32 %v3566, %v3616
    %v3649 = vadd.f32 %v3567, %v3617
    %v3650 = vadd.f32 %v3568, %v3618
    %v3651 = vadd.f32 %v3569, %v3619
    %v3652 = vadd.f32 %v3570, %v3620
    %v3653 = vadd.f32 %v3571, %v3621
    %v3654 = vadd.f32 %v3572, %v3622
    %v3655 = vadd.f32 %v3573, %v3623
    %v3656 = vadd.f32 %v3574, %v3624
    %v3657 = vadd.f32 %v3575, %v3625
    %s3658 = sld [smem:[#allocation2 + $0x15]]
    %v3659 = vstv %s3658
    %v3660 = vmul.f32 %v1516, %v3659
    %v3661 = vmul.f32 %v1517, %v3659
    %v3662 = vmul.f32 %v1518, %v3659
    %v3663 = vmul.f32 %v1519, %v3659
    %v3664 = vmul.f32 %v1520, %v3659
    %v3665 = vmul.f32 %v1521, %v3659
    %v3666 = vmul.f32 %v1522, %v3659
    %v3667 = vmul.f32 %v1523, %v3659
    %v3668 = vmul.f32 %v1524, %v3659
    %v3669 = vmul.f32 %v1525, %v3659
    %v3670 = vmul.f32 %v1526, %v3659
    %v3671 = vmul.f32 %v1527, %v3659
    %v3672 = vmul.f32 %v1528, %v3659
    %v3673 = vmul.f32 %v1529, %v3659
    %v3674 = vmul.f32 %v1530, %v3659
    %v3675 = vmul.f32 %v1531, %v3659
    %v3692 = vrot.slane %v3660, 5
    %v3693 = vrot.slane %v3661, 5
    %v3694 = vrot.slane %v3662, 5
    %v3695 = vrot.slane %v3663, 5
    %v3696 = vrot.slane %v3664, 5
    %v3697 = vrot.slane %v3665, 5
    %v3698 = vrot.slane %v3666, 5
    %v3699 = vrot.slane %v3667, 5
    %v3700 = vrot.slane %v3668, 5
    %v3701 = vrot.slane %v3669, 5
    %v3702 = vrot.slane %v3670, 5
    %v3703 = vrot.slane %v3671, 5
    %v3704 = vrot.slane %v3672, 5
    %v3705 = vrot.slane %v3673, 5
    %v3706 = vrot.slane %v3674, 5
    %v3707 = vrot.slane %v3675, 5
    %v3724 = vadd.f32 %v3642, %v3692
    %v3725 = vadd.f32 %v3643, %v3693
    %v3726 = vadd.f32 %v3644, %v3694
    %v3727 = vadd.f32 %v3645, %v3695
    %v3728 = vadd.f32 %v3646, %v3696
    %v3729 = vadd.f32 %v3647, %v3697
    %v3730 = vadd.f32 %v3648, %v3698
    %v3731 = vadd.f32 %v3649, %v3699
    %v3732 = vadd.f32 %v3650, %v3700
    %v3733 = vadd.f32 %v3651, %v3701
    %v3734 = vadd.f32 %v3652, %v3702
    %v3735 = vadd.f32 %v3653, %v3703
    %v3736 = vadd.f32 %v3654, %v3704
    %v3737 = vadd.f32 %v3655, %v3705
    %v3738 = vadd.f32 %v3656, %v3706
    %v3739 = vadd.f32 %v3657, %v3707
    %s3740 = sld [smem:[#allocation2 + $0x16]]
    %v3741 = vstv %s3740
    %v3742 = vmul.f32 %v1716, %v3741
    %v3743 = vmul.f32 %v1717, %v3741
    %v3744 = vmul.f32 %v1718, %v3741
    %v3745 = vmul.f32 %v1719, %v3741
    %v3746 = vmul.f32 %v1720, %v3741
    %v3747 = vmul.f32 %v1721, %v3741
    %v3748 = vmul.f32 %v1722, %v3741
    %v3749 = vmul.f32 %v1723, %v3741
    %v3750 = vmul.f32 %v1724, %v3741
    %v3751 = vmul.f32 %v1725, %v3741
    %v3752 = vmul.f32 %v1726, %v3741
    %v3753 = vmul.f32 %v1727, %v3741
    %v3754 = vmul.f32 %v1728, %v3741
    %v3755 = vmul.f32 %v1729, %v3741
    %v3756 = vmul.f32 %v1730, %v3741
    %v3757 = vmul.f32 %v1731, %v3741
    %v3774 = vrot.slane %v3742, 6
    %v3775 = vrot.slane %v3743, 6
    %v3776 = vrot.slane %v3744, 6
    %v3777 = vrot.slane %v3745, 6
    %v3778 = vrot.slane %v3746, 6
    %v3779 = vrot.slane %v3747, 6
    %v3780 = vrot.slane %v3748, 6
    %v3781 = vrot.slane %v3749, 6
    %v3782 = vrot.slane %v3750, 6
    %v3783 = vrot.slane %v3751, 6
    %v3784 = vrot.slane %v3752, 6
    %v3785 = vrot.slane %v3753, 6
    %v3786 = vrot.slane %v3754, 6
    %v3787 = vrot.slane %v3755, 6
    %v3788 = vrot.slane %v3756, 6
    %v3789 = vrot.slane %v3757, 6
    %v3806 = vadd.f32 %v3724, %v3774
    %v3807 = vadd.f32 %v3725, %v3775
    %v3808 = vadd.f32 %v3726, %v3776
    %v3809 = vadd.f32 %v3727, %v3777
    %v3810 = vadd.f32 %v3728, %v3778
    %v3811 = vadd.f32 %v3729, %v3779
    %v3812 = vadd.f32 %v3730, %v3780
    %v3813 = vadd.f32 %v3731, %v3781
    %v3814 = vadd.f32 %v3732, %v3782
    %v3815 = vadd.f32 %v3733, %v3783
    %v3816 = vadd.f32 %v3734, %v3784
    %v3817 = vadd.f32 %v3735, %v3785
    %v3818 = vadd.f32 %v3736, %v3786
    %v3819 = vadd.f32 %v3737, %v3787
    %v3820 = vadd.f32 %v3738, %v3788
    %v3821 = vadd.f32 %v3739, %v3789
    %s3822 = sld [smem:[#allocation2 + $0x17]]
    %v3823 = vstv %s3822
    %v3824 = vmul.f32 %v1916, %v3823
    %v3825 = vmul.f32 %v1917, %v3823
    %v3826 = vmul.f32 %v1918, %v3823
    %v3827 = vmul.f32 %v1919, %v3823
    %v3828 = vmul.f32 %v1920, %v3823
    %v3829 = vmul.f32 %v1921, %v3823
    %v3830 = vmul.f32 %v1922, %v3823
    %v3831 = vmul.f32 %v1923, %v3823
    %v3832 = vmul.f32 %v1924, %v3823
    %v3833 = vmul.f32 %v1925, %v3823
    %v3834 = vmul.f32 %v1926, %v3823
    %v3835 = vmul.f32 %v1927, %v3823
    %v3836 = vmul.f32 %v1928, %v3823
    %v3837 = vmul.f32 %v1929, %v3823
    %v3838 = vmul.f32 %v1930, %v3823
    %v3839 = vmul.f32 %v1931, %v3823
    %v3856 = vrot.slane %v3824, 7
    %v3857 = vrot.slane %v3825, 7
    %v3858 = vrot.slane %v3826, 7
    %v3859 = vrot.slane %v3827, 7
    %v3860 = vrot.slane %v3828, 7
    %v3861 = vrot.slane %v3829, 7
    %v3862 = vrot.slane %v3830, 7
    %v3863 = vrot.slane %v3831, 7
    %v3864 = vrot.slane %v3832, 7
    %v3865 = vrot.slane %v3833, 7
    %v3866 = vrot.slane %v3834, 7
    %v3867 = vrot.slane %v3835, 7
    %v3868 = vrot.slane %v3836, 7
    %v3869 = vrot.slane %v3837, 7
    %v3870 = vrot.slane %v3838, 7
    %v3871 = vrot.slane %v3839, 7
    %v3888 = vadd.f32 %v3806, %v3856
    %v3889 = vadd.f32 %v3807, %v3857
    %v3890 = vadd.f32 %v3808, %v3858
    %v3891 = vadd.f32 %v3809, %v3859
    %v3892 = vadd.f32 %v3810, %v3860
    %v3893 = vadd.f32 %v3811, %v3861
    %v3894 = vadd.f32 %v3812, %v3862
    %v3895 = vadd.f32 %v3813, %v3863
    %v3896 = vadd.f32 %v3814, %v3864
    %v3897 = vadd.f32 %v3815, %v3865
    %v3898 = vadd.f32 %v3816, %v3866
    %v3899 = vadd.f32 %v3817, %v3867
    %v3900 = vadd.f32 %v3818, %v3868
    %v3901 = vadd.f32 %v3819, %v3869
    %v3902 = vadd.f32 %v3820, %v3870
    %v3903 = vadd.f32 %v3821, %v3871
    %s3904 = sld [smem:[#allocation2 + $0x22]]
    %v3905 = vstv %s3904
    %v3906 = vadd.f32 %v3888, %v3905
    %v3907 = vadd.f32 %v3889, %v3905
    %v3908 = vadd.f32 %v3890, %v3905
    %v3909 = vadd.f32 %v3891, %v3905
    %v3910 = vadd.f32 %v3892, %v3905
    %v3911 = vadd.f32 %v3893, %v3905
    %v3912 = vadd.f32 %v3894, %v3905
    %v3913 = vadd.f32 %v3895, %v3905
    %v3914 = vadd.f32 %v3896, %v3905
    %v3915 = vadd.f32 %v3897, %v3905
    %v3916 = vadd.f32 %v3898, %v3905
    %v3917 = vadd.f32 %v3899, %v3905
    %v3918 = vadd.f32 %v3900, %v3905
    %v3919 = vadd.f32 %v3901, %v3905
    %v3920 = vadd.f32 %v3902, %v3905
    %v3921 = vadd.f32 %v3903, %v3905
    %v3922 = vmul.f32 %v3906, 0.5
    %v3923 = vmul.f32 %v3907, 0.5
    %v3924 = vmul.f32 %v3908, 0.5
    %v3925 = vmul.f32 %v3909, 0.5
    %v3926 = vmul.f32 %v3910, 0.5
    %v3927 = vmul.f32 %v3911, 0.5
    %v3928 = vmul.f32 %v3912, 0.5
    %v3929 = vmul.f32 %v3913, 0.5
    %v3930 = vmul.f32 %v3914, 0.5
    %v3931 = vmul.f32 %v3915, 0.5
    %v3932 = vmul.f32 %v3916, 0.5
    %v3933 = vmul.f32 %v3917, 0.5
    %v3934 = vmul.f32 %v3918, 0.5
    %v3935 = vmul.f32 %v3919, 0.5
    %v3936 = vmul.f32 %v3920, 0.5
    %v3937 = vmul.f32 %v3921, 0.5
    %v3938 = vmul.f32 %v3906, 0.70710677
    %v3939 = vmul.f32 %v3907, 0.70710677
    %v3940 = vmul.f32 %v3908, 0.70710677
    %v3941 = vmul.f32 %v3909, 0.70710677
    %v3942 = vmul.f32 %v3910, 0.70710677
    %v3943 = vmul.f32 %v3911, 0.70710677
    %v3944 = vmul.f32 %v3912, 0.70710677
    %v3945 = vmul.f32 %v3913, 0.70710677
    %v3946 = vmul.f32 %v3914, 0.70710677
    %v3947 = vmul.f32 %v3915, 0.70710677
    %v3948 = vmul.f32 %v3916, 0.70710677
    %v3949 = vmul.f32 %v3917, 0.70710677
    %v3950 = vmul.f32 %v3918, 0.70710677
    %v3951 = vmul.f32 %v3919, 0.70710677
    %v3952 = vmul.f32 %v3920, 0.70710677
    %v3953 = vmul.f32 %v3921, 0.70710677
    %v3954 = verf.f32.pop %v3938
    %v3955 = verf.f32.pop %v3939
    %v3956 = verf.f32.pop %v3940
    %v3957 = verf.f32.pop %v3941
    %v3958 = verf.f32.pop %v3942
    %v3959 = verf.f32.pop %v3943
    %v3960 = verf.f32.pop %v3944
    %v3961 = verf.f32.pop %v3945
    %v3962 = verf.f32.pop %v3946
    %v3963 = verf.f32.pop %v3947
    %v3964 = verf.f32.pop %v3948
    %v3965 = verf.f32.pop %v3949
    %v3966 = verf.f32.pop %v3950
    %v3967 = verf.f32.pop %v3951
    %v3968 = verf.f32.pop %v3952
    %v3969 = verf.f32.pop %v3953
    %v3970 = vadd.f32 %v3954, 1.0
    %v3971 = vadd.f32 %v3955, 1.0
    %v3972 = vadd.f32 %v3956, 1.0
    %v3973 = vadd.f32 %v3957, 1.0
    %v3974 = vadd.f32 %v3958, 1.0
    %v3975 = vadd.f32 %v3959, 1.0
    %v3976 = vadd.f32 %v3960, 1.0
    %v3977 = vadd.f32 %v3961, 1.0
    %v3978 = vadd.f32 %v3962, 1.0
    %v3979 = vadd.f32 %v3963, 1.0
    %v3980 = vadd.f32 %v3964, 1.0
    %v3981 = vadd.f32 %v3965, 1.0
    %v3982 = vadd.f32 %v3966, 1.0
    %v3983 = vadd.f32 %v3967, 1.0
    %v3984 = vadd.f32 %v3968, 1.0
    %v3985 = vadd.f32 %v3969, 1.0
    %v3986 = vmul.f32 %v3922, %v3970
    %v3987 = vmul.f32 %v3923, %v3971
    %v3988 = vmul.f32 %v3924, %v3972
    %v3989 = vmul.f32 %v3925, %v3973
    %v3990 = vmul.f32 %v3926, %v3974
    %v3991 = vmul.f32 %v3927, %v3975
    %v3992 = vmul.f32 %v3928, %v3976
    %v3993 = vmul.f32 %v3929, %v3977
    %v3994 = vmul.f32 %v3930, %v3978
    %v3995 = vmul.f32 %v3931, %v3979
    %v3996 = vmul.f32 %v3932, %v3980
    %v3997 = vmul.f32 %v3933, %v3981
    %v3998 = vmul.f32 %v3934, %v3982
    %v3999 = vmul.f32 %v3935, %v3983
    %v4000 = vmul.f32 %v3936, %v3984
    %v4001 = vmul.f32 %v3937, %v3985
    %s4002 = sld [smem:[#allocation2 + $0x18]]
    %v4003 = vstv %s4002
    %v4004 = vmul.f32 %v516, %v4003
    %v4005 = vmul.f32 %v517, %v4003
    %v4006 = vmul.f32 %v518, %v4003
    %v4007 = vmul.f32 %v519, %v4003
    %v4008 = vmul.f32 %v520, %v4003
    %v4009 = vmul.f32 %v521, %v4003
    %v4010 = vmul.f32 %v522, %v4003
    %v4011 = vmul.f32 %v523, %v4003
    %v4012 = vmul.f32 %v524, %v4003
    %v4013 = vmul.f32 %v525, %v4003
    %v4014 = vmul.f32 %v526, %v4003
    %v4015 = vmul.f32 %v527, %v4003
    %v4016 = vmul.f32 %v528, %v4003
    %v4017 = vmul.f32 %v529, %v4003
    %v4018 = vmul.f32 %v530, %v4003
    %v4019 = vmul.f32 %v531, %v4003
    %s4020 = sld [smem:[#allocation2 + $0x19]]
    %v4021 = vstv %s4020
    %v4022 = vmul.f32 %v716, %v4021
    %v4023 = vmul.f32 %v717, %v4021
    %v4024 = vmul.f32 %v718, %v4021
    %v4025 = vmul.f32 %v719, %v4021
    %v4026 = vmul.f32 %v720, %v4021
    %v4027 = vmul.f32 %v721, %v4021
    %v4028 = vmul.f32 %v722, %v4021
    %v4029 = vmul.f32 %v723, %v4021
    %v4030 = vmul.f32 %v724, %v4021
    %v4031 = vmul.f32 %v725, %v4021
    %v4032 = vmul.f32 %v726, %v4021
    %v4033 = vmul.f32 %v727, %v4021
    %v4034 = vmul.f32 %v728, %v4021
    %v4035 = vmul.f32 %v729, %v4021
    %v4036 = vmul.f32 %v730, %v4021
    %v4037 = vmul.f32 %v731, %v4021
    %v4054 = vrot.slane %v4022, 1
    %v4055 = vrot.slane %v4023, 1
    %v4056 = vrot.slane %v4024, 1
    %v4057 = vrot.slane %v4025, 1
    %v4058 = vrot.slane %v4026, 1
    %v4059 = vrot.slane %v4027, 1
    %v4060 = vrot.slane %v4028, 1
    %v4061 = vrot.slane %v4029, 1
    %v4062 = vrot.slane %v4030, 1
    %v4063 = vrot.slane %v4031, 1
    %v4064 = vrot.slane %v4032, 1
    %v4065 = vrot.slane %v4033, 1
    %v4066 = vrot.slane %v4034, 1
    %v4067 = vrot.slane %v4035, 1
    %v4068 = vrot.slane %v4036, 1
    %v4069 = vrot.slane %v4037, 1
    %v4086 = vadd.f32 %v4004, %v4054
    %v4087 = vadd.f32 %v4005, %v4055
    %v4088 = vadd.f32 %v4006, %v4056
    %v4089 = vadd.f32 %v4007, %v4057
    %v4090 = vadd.f32 %v4008, %v4058
    %v4091 = vadd.f32 %v4009, %v4059
    %v4092 = vadd.f32 %v4010, %v4060
    %v4093 = vadd.f32 %v4011, %v4061
    %v4094 = vadd.f32 %v4012, %v4062
    %v4095 = vadd.f32 %v4013, %v4063
    %v4096 = vadd.f32 %v4014, %v4064
    %v4097 = vadd.f32 %v4015, %v4065
    %v4098 = vadd.f32 %v4016, %v4066
    %v4099 = vadd.f32 %v4017, %v4067
    %v4100 = vadd.f32 %v4018, %v4068
    %v4101 = vadd.f32 %v4019, %v4069
    %s4102 = sld [smem:[#allocation2 + $0x1a]]
    %v4103 = vstv %s4102
    %v4104 = vmul.f32 %v916, %v4103
    %v4105 = vmul.f32 %v917, %v4103
    %v4106 = vmul.f32 %v918, %v4103
    %v4107 = vmul.f32 %v919, %v4103
    %v4108 = vmul.f32 %v920, %v4103
    %v4109 = vmul.f32 %v921, %v4103
    %v4110 = vmul.f32 %v922, %v4103
    %v4111 = vmul.f32 %v923, %v4103
    %v4112 = vmul.f32 %v924, %v4103
    %v4113 = vmul.f32 %v925, %v4103
    %v4114 = vmul.f32 %v926, %v4103
    %v4115 = vmul.f32 %v927, %v4103
    %v4116 = vmul.f32 %v928, %v4103
    %v4117 = vmul.f32 %v929, %v4103
    %v4118 = vmul.f32 %v930, %v4103
    %v4119 = vmul.f32 %v931, %v4103
    %v4136 = vrot.slane %v4104, 2
    %v4137 = vrot.slane %v4105, 2
    %v4138 = vrot.slane %v4106, 2
    %v4139 = vrot.slane %v4107, 2
    %v4140 = vrot.slane %v4108, 2
    %v4141 = vrot.slane %v4109, 2
    %v4142 = vrot.slane %v4110, 2
    %v4143 = vrot.slane %v4111, 2
    %v4144 = vrot.slane %v4112, 2
    %v4145 = vrot.slane %v4113, 2
    %v4146 = vrot.slane %v4114, 2
    %v4147 = vrot.slane %v4115, 2
    %v4148 = vrot.slane %v4116, 2
    %v4149 = vrot.slane %v4117, 2
    %v4150 = vrot.slane %v4118, 2
    %v4151 = vrot.slane %v4119, 2
    %v4168 = vadd.f32 %v4086, %v4136
    %v4169 = vadd.f32 %v4087, %v4137
    %v4170 = vadd.f32 %v4088, %v4138
    %v4171 = vadd.f32 %v4089, %v4139
    %v4172 = vadd.f32 %v4090, %v4140
    %v4173 = vadd.f32 %v4091, %v4141
    %v4174 = vadd.f32 %v4092, %v4142
    %v4175 = vadd.f32 %v4093, %v4143
    %v4176 = vadd.f32 %v4094, %v4144
    %v4177 = vadd.f32 %v4095, %v4145
    %v4178 = vadd.f32 %v4096, %v4146
    %v4179 = vadd.f32 %v4097, %v4147
    %v4180 = vadd.f32 %v4098, %v4148
    %v4181 = vadd.f32 %v4099, %v4149
    %v4182 = vadd.f32 %v4100, %v4150
    %v4183 = vadd.f32 %v4101, %v4151
    %s4184 = sld [smem:[#allocation2 + $0x1b]]
    %v4185 = vstv %s4184
    %v4186 = vmul.f32 %v1116, %v4185
    %v4187 = vmul.f32 %v1117, %v4185
    %v4188 = vmul.f32 %v1118, %v4185
    %v4189 = vmul.f32 %v1119, %v4185
    %v4190 = vmul.f32 %v1120, %v4185
    %v4191 = vmul.f32 %v1121, %v4185
    %v4192 = vmul.f32 %v1122, %v4185
    %v4193 = vmul.f32 %v1123, %v4185
    %v4194 = vmul.f32 %v1124, %v4185
    %v4195 = vmul.f32 %v1125, %v4185
    %v4196 = vmul.f32 %v1126, %v4185
    %v4197 = vmul.f32 %v1127, %v4185
    %v4198 = vmul.f32 %v1128, %v4185
    %v4199 = vmul.f32 %v1129, %v4185
    %v4200 = vmul.f32 %v1130, %v4185
    %v4201 = vmul.f32 %v1131, %v4185
    %v4218 = vrot.slane %v4186, 3
    %v4219 = vrot.slane %v4187, 3
    %v4220 = vrot.slane %v4188, 3
    %v4221 = vrot.slane %v4189, 3
    %v4222 = vrot.slane %v4190, 3
    %v4223 = vrot.slane %v4191, 3
    %v4224 = vrot.slane %v4192, 3
    %v4225 = vrot.slane %v4193, 3
    %v4226 = vrot.slane %v4194, 3
    %v4227 = vrot.slane %v4195, 3
    %v4228 = vrot.slane %v4196, 3
    %v4229 = vrot.slane %v4197, 3
    %v4230 = vrot.slane %v4198, 3
    %v4231 = vrot.slane %v4199, 3
    %v4232 = vrot.slane %v4200, 3
    %v4233 = vrot.slane %v4201, 3
    %v4250 = vadd.f32 %v4168, %v4218
    %v4251 = vadd.f32 %v4169, %v4219
    %v4252 = vadd.f32 %v4170, %v4220
    %v4253 = vadd.f32 %v4171, %v4221
    %v4254 = vadd.f32 %v4172, %v4222
    %v4255 = vadd.f32 %v4173, %v4223
    %v4256 = vadd.f32 %v4174, %v4224
    %v4257 = vadd.f32 %v4175, %v4225
    %v4258 = vadd.f32 %v4176, %v4226
    %v4259 = vadd.f32 %v4177, %v4227
    %v4260 = vadd.f32 %v4178, %v4228
    %v4261 = vadd.f32 %v4179, %v4229
    %v4262 = vadd.f32 %v4180, %v4230
    %v4263 = vadd.f32 %v4181, %v4231
    %v4264 = vadd.f32 %v4182, %v4232
    %v4265 = vadd.f32 %v4183, %v4233
    %s4266 = sld [smem:[#allocation2 + $0x1c]]
    %v4267 = vstv %s4266
    %v4268 = vmul.f32 %v1316, %v4267
    %v4269 = vmul.f32 %v1317, %v4267
    %v4270 = vmul.f32 %v1318, %v4267
    %v4271 = vmul.f32 %v1319, %v4267
    %v4272 = vmul.f32 %v1320, %v4267
    %v4273 = vmul.f32 %v1321, %v4267
    %v4274 = vmul.f32 %v1322, %v4267
    %v4275 = vmul.f32 %v1323, %v4267
    %v4276 = vmul.f32 %v1324, %v4267
    %v4277 = vmul.f32 %v1325, %v4267
    %v4278 = vmul.f32 %v1326, %v4267
    %v4279 = vmul.f32 %v1327, %v4267
    %v4280 = vmul.f32 %v1328, %v4267
    %v4281 = vmul.f32 %v1329, %v4267
    %v4282 = vmul.f32 %v1330, %v4267
    %v4283 = vmul.f32 %v1331, %v4267
    %v4300 = vrot.slane %v4268, 4
    %v4301 = vrot.slane %v4269, 4
    %v4302 = vrot.slane %v4270, 4
    %v4303 = vrot.slane %v4271, 4
    %v4304 = vrot.slane %v4272, 4
    %v4305 = vrot.slane %v4273, 4
    %v4306 = vrot.slane %v4274, 4
    %v4307 = vrot.slane %v4275, 4
    %v4308 = vrot.slane %v4276, 4
    %v4309 = vrot.slane %v4277, 4
    %v4310 = vrot.slane %v4278, 4
    %v4311 = vrot.slane %v4279, 4
    %v4312 = vrot.slane %v4280, 4
    %v4313 = vrot.slane %v4281, 4
    %v4314 = vrot.slane %v4282, 4
    %v4315 = vrot.slane %v4283, 4
    %v4332 = vadd.f32 %v4250, %v4300
    %v4333 = vadd.f32 %v4251, %v4301
    %v4334 = vadd.f32 %v4252, %v4302
    %v4335 = vadd.f32 %v4253, %v4303
    %v4336 = vadd.f32 %v4254, %v4304
    %v4337 = vadd.f32 %v4255, %v4305
    %v4338 = vadd.f32 %v4256, %v4306
    %v4339 = vadd.f32 %v4257, %v4307
    %v4340 = vadd.f32 %v4258, %v4308
    %v4341 = vadd.f32 %v4259, %v4309
    %v4342 = vadd.f32 %v4260, %v4310
    %v4343 = vadd.f32 %v4261, %v4311
    %v4344 = vadd.f32 %v4262, %v4312
    %v4345 = vadd.f32 %v4263, %v4313
    %v4346 = vadd.f32 %v4264, %v4314
    %v4347 = vadd.f32 %v4265, %v4315
    %s4348 = sld [smem:[#allocation2 + $0x1d]]
    %v4349 = vstv %s4348
    %v4350 = vmul.f32 %v1516, %v4349
    %v4351 = vmul.f32 %v1517, %v4349
    %v4352 = vmul.f32 %v1518, %v4349
    %v4353 = vmul.f32 %v1519, %v4349
    %v4354 = vmul.f32 %v1520, %v4349
    %v4355 = vmul.f32 %v1521, %v4349
    %v4356 = vmul.f32 %v1522, %v4349
    %v4357 = vmul.f32 %v1523, %v4349
    %v4358 = vmul.f32 %v1524, %v4349
    %v4359 = vmul.f32 %v1525, %v4349
    %v4360 = vmul.f32 %v1526, %v4349
    %v4361 = vmul.f32 %v1527, %v4349
    %v4362 = vmul.f32 %v1528, %v4349
    %v4363 = vmul.f32 %v1529, %v4349
    %v4364 = vmul.f32 %v1530, %v4349
    %v4365 = vmul.f32 %v1531, %v4349
    %v4382 = vrot.slane %v4350, 5
    %v4383 = vrot.slane %v4351, 5
    %v4384 = vrot.slane %v4352, 5
    %v4385 = vrot.slane %v4353, 5
    %v4386 = vrot.slane %v4354, 5
    %v4387 = vrot.slane %v4355, 5
    %v4388 = vrot.slane %v4356, 5
    %v4389 = vrot.slane %v4357, 5
    %v4390 = vrot.slane %v4358, 5
    %v4391 = vrot.slane %v4359, 5
    %v4392 = vrot.slane %v4360, 5
    %v4393 = vrot.slane %v4361, 5
    %v4394 = vrot.slane %v4362, 5
    %v4395 = vrot.slane %v4363, 5
    %v4396 = vrot.slane %v4364, 5
    %v4397 = vrot.slane %v4365, 5
    %v4414 = vadd.f32 %v4332, %v4382
    %v4415 = vadd.f32 %v4333, %v4383
    %v4416 = vadd.f32 %v4334, %v4384
    %v4417 = vadd.f32 %v4335, %v4385
    %v4418 = vadd.f32 %v4336, %v4386
    %v4419 = vadd.f32 %v4337, %v4387
    %v4420 = vadd.f32 %v4338, %v4388
    %v4421 = vadd.f32 %v4339, %v4389
    %v4422 = vadd.f32 %v4340, %v4390
    %v4423 = vadd.f32 %v4341, %v4391
    %v4424 = vadd.f32 %v4342, %v4392
    %v4425 = vadd.f32 %v4343, %v4393
    %v4426 = vadd.f32 %v4344, %v4394
    %v4427 = vadd.f32 %v4345, %v4395
    %v4428 = vadd.f32 %v4346, %v4396
    %v4429 = vadd.f32 %v4347, %v4397
    %s4430 = sld [smem:[#allocation2 + $0x1e]]
    %v4431 = vstv %s4430
    %v4432 = vmul.f32 %v1716, %v4431
    %v4433 = vmul.f32 %v1717, %v4431
    %v4434 = vmul.f32 %v1718, %v4431
    %v4435 = vmul.f32 %v1719, %v4431
    %v4436 = vmul.f32 %v1720, %v4431
    %v4437 = vmul.f32 %v1721, %v4431
    %v4438 = vmul.f32 %v1722, %v4431
    %v4439 = vmul.f32 %v1723, %v4431
    %v4440 = vmul.f32 %v1724, %v4431
    %v4441 = vmul.f32 %v1725, %v4431
    %v4442 = vmul.f32 %v1726, %v4431
    %v4443 = vmul.f32 %v1727, %v4431
    %v4444 = vmul.f32 %v1728, %v4431
    %v4445 = vmul.f32 %v1729, %v4431
    %v4446 = vmul.f32 %v1730, %v4431
    %v4447 = vmul.f32 %v1731, %v4431
    %v4464 = vrot.slane %v4432, 6
    %v4465 = vrot.slane %v4433, 6
    %v4466 = vrot.slane %v4434, 6
    %v4467 = vrot.slane %v4435, 6
    %v4468 = vrot.slane %v4436, 6
    %v4469 = vrot.slane %v4437, 6
    %v4470 = vrot.slane %v4438, 6
    %v4471 = vrot.slane %v4439, 6
    %v4472 = vrot.slane %v4440, 6
    %v4473 = vrot.slane %v4441, 6
    %v4474 = vrot.slane %v4442, 6
    %v4475 = vrot.slane %v4443, 6
    %v4476 = vrot.slane %v4444, 6
    %v4477 = vrot.slane %v4445, 6
    %v4478 = vrot.slane %v4446, 6
    %v4479 = vrot.slane %v4447, 6
    %v4496 = vadd.f32 %v4414, %v4464
    %v4497 = vadd.f32 %v4415, %v4465
    %v4498 = vadd.f32 %v4416, %v4466
    %v4499 = vadd.f32 %v4417, %v4467
    %v4500 = vadd.f32 %v4418, %v4468
    %v4501 = vadd.f32 %v4419, %v4469
    %v4502 = vadd.f32 %v4420, %v4470
    %v4503 = vadd.f32 %v4421, %v4471
    %v4504 = vadd.f32 %v4422, %v4472
    %v4505 = vadd.f32 %v4423, %v4473
    %v4506 = vadd.f32 %v4424, %v4474
    %v4507 = vadd.f32 %v4425, %v4475
    %v4508 = vadd.f32 %v4426, %v4476
    %v4509 = vadd.f32 %v4427, %v4477
    %v4510 = vadd.f32 %v4428, %v4478
    %v4511 = vadd.f32 %v4429, %v4479
    %s4512 = sld [smem:[#allocation2 + $0x1f]]
    %v4513 = vstv %s4512
    %v4514 = vmul.f32 %v1916, %v4513
    %v4515 = vmul.f32 %v1917, %v4513
    %v4516 = vmul.f32 %v1918, %v4513
    %v4517 = vmul.f32 %v1919, %v4513
    %v4518 = vmul.f32 %v1920, %v4513
    %v4519 = vmul.f32 %v1921, %v4513
    %v4520 = vmul.f32 %v1922, %v4513
    %v4521 = vmul.f32 %v1923, %v4513
    %v4522 = vmul.f32 %v1924, %v4513
    %v4523 = vmul.f32 %v1925, %v4513
    %v4524 = vmul.f32 %v1926, %v4513
    %v4525 = vmul.f32 %v1927, %v4513
    %v4526 = vmul.f32 %v1928, %v4513
    %v4527 = vmul.f32 %v1929, %v4513
    %v4528 = vmul.f32 %v1930, %v4513
    %v4529 = vmul.f32 %v1931, %v4513
    %v4546 = vrot.slane %v4514, 7
    %v4547 = vrot.slane %v4515, 7
    %v4548 = vrot.slane %v4516, 7
    %v4549 = vrot.slane %v4517, 7
    %v4550 = vrot.slane %v4518, 7
    %v4551 = vrot.slane %v4519, 7
    %v4552 = vrot.slane %v4520, 7
    %v4553 = vrot.slane %v4521, 7
    %v4554 = vrot.slane %v4522, 7
    %v4555 = vrot.slane %v4523, 7
    %v4556 = vrot.slane %v4524, 7
    %v4557 = vrot.slane %v4525, 7
    %v4558 = vrot.slane %v4526, 7
    %v4559 = vrot.slane %v4527, 7
    %v4560 = vrot.slane %v4528, 7
    %v4561 = vrot.slane %v4529, 7
    %v4578 = vadd.f32 %v4496, %v4546
    %v4579 = vadd.f32 %v4497, %v4547
    %v4580 = vadd.f32 %v4498, %v4548
    %v4581 = vadd.f32 %v4499, %v4549
    %v4582 = vadd.f32 %v4500, %v4550
    %v4583 = vadd.f32 %v4501, %v4551
    %v4584 = vadd.f32 %v4502, %v4552
    %v4585 = vadd.f32 %v4503, %v4553
    %v4586 = vadd.f32 %v4504, %v4554
    %v4587 = vadd.f32 %v4505, %v4555
    %v4588 = vadd.f32 %v4506, %v4556
    %v4589 = vadd.f32 %v4507, %v4557
    %v4590 = vadd.f32 %v4508, %v4558
    %v4591 = vadd.f32 %v4509, %v4559
    %v4592 = vadd.f32 %v4510, %v4560
    %v4593 = vadd.f32 %v4511, %v4561
    %s4594 = sld [smem:[#allocation2 + $0x23]]
    %v4595 = vstv %s4594
    %v4596 = vadd.f32 %v4578, %v4595
    %v4597 = vadd.f32 %v4579, %v4595
    %v4598 = vadd.f32 %v4580, %v4595
    %v4599 = vadd.f32 %v4581, %v4595
    %v4600 = vadd.f32 %v4582, %v4595
    %v4601 = vadd.f32 %v4583, %v4595
    %v4602 = vadd.f32 %v4584, %v4595
    %v4603 = vadd.f32 %v4585, %v4595
    %v4604 = vadd.f32 %v4586, %v4595
    %v4605 = vadd.f32 %v4587, %v4595
    %v4606 = vadd.f32 %v4588, %v4595
    %v4607 = vadd.f32 %v4589, %v4595
    %v4608 = vadd.f32 %v4590, %v4595
    %v4609 = vadd.f32 %v4591, %v4595
    %v4610 = vadd.f32 %v4592, %v4595
    %v4611 = vadd.f32 %v4593, %v4595
    %v4612 = vmul.f32 %v4596, 0.5
    %v4613 = vmul.f32 %v4597, 0.5
    %v4614 = vmul.f32 %v4598, 0.5
    %v4615 = vmul.f32 %v4599, 0.5
    %v4616 = vmul.f32 %v4600, 0.5
    %v4617 = vmul.f32 %v4601, 0.5
    %v4618 = vmul.f32 %v4602, 0.5
    %v4619 = vmul.f32 %v4603, 0.5
    %v4620 = vmul.f32 %v4604, 0.5
    %v4621 = vmul.f32 %v4605, 0.5
    %v4622 = vmul.f32 %v4606, 0.5
    %v4623 = vmul.f32 %v4607, 0.5
    %v4624 = vmul.f32 %v4608, 0.5
    %v4625 = vmul.f32 %v4609, 0.5
    %v4626 = vmul.f32 %v4610, 0.5
    %v4627 = vmul.f32 %v4611, 0.5
    %v4628 = vmul.f32 %v4596, 0.70710677
    %v4629 = vmul.f32 %v4597, 0.70710677
    %v4630 = vmul.f32 %v4598, 0.70710677
    %v4631 = vmul.f32 %v4599, 0.70710677
    %v4632 = vmul.f32 %v4600, 0.70710677
    %v4633 = vmul.f32 %v4601, 0.70710677
    %v4634 = vmul.f32 %v4602, 0.70710677
    %v4635 = vmul.f32 %v4603, 0.70710677
    %v4636 = vmul.f32 %v4604, 0.70710677
    %v4637 = vmul.f32 %v4605, 0.70710677
    %v4638 = vmul.f32 %v4606, 0.70710677
    %v4639 = vmul.f32 %v4607, 0.70710677
    %v4640 = vmul.f32 %v4608, 0.70710677
    %v4641 = vmul.f32 %v4609, 0.70710677
    %v4642 = vmul.f32 %v4610, 0.70710677
    %v4643 = vmul.f32 %v4611, 0.70710677
    %v4644 = verf.f32.pop %v4628
    %v4645 = verf.f32.pop %v4629
    %v4646 = verf.f32.pop %v4630
    %v4647 = verf.f32.pop %v4631
    %v4648 = verf.f32.pop %v4632
    %v4649 = verf.f32.pop %v4633
    %v4650 = verf.f32.pop %v4634
    %v4651 = verf.f32.pop %v4635
    %v4652 = verf.f32.pop %v4636
    %v4653 = verf.f32.pop %v4637
    %v4654 = verf.f32.pop %v4638
    %v4655 = verf.f32.pop %v4639
    %v4656 = verf.f32.pop %v4640
    %v4657 = verf.f32.pop %v4641
    %v4658 = verf.f32.pop %v4642
    %v4659 = verf.f32.pop %v4643
    %v4660 = vadd.f32 %v4644, 1.0
    %v4661 = vadd.f32 %v4645, 1.0
    %v4662 = vadd.f32 %v4646, 1.0
    %v4663 = vadd.f32 %v4647, 1.0
    %v4664 = vadd.f32 %v4648, 1.0
    %v4665 = vadd.f32 %v4649, 1.0
    %v4666 = vadd.f32 %v4650, 1.0
    %v4667 = vadd.f32 %v4651, 1.0
    %v4668 = vadd.f32 %v4652, 1.0
    %v4669 = vadd.f32 %v4653, 1.0
    %v4670 = vadd.f32 %v4654, 1.0
    %v4671 = vadd.f32 %v4655, 1.0
    %v4672 = vadd.f32 %v4656, 1.0
    %v4673 = vadd.f32 %v4657, 1.0
    %v4674 = vadd.f32 %v4658, 1.0
    %v4675 = vadd.f32 %v4659, 1.0
    %v4676 = vmul.f32 %v4612, %v4660
    %v4677 = vmul.f32 %v4613, %v4661
    %v4678 = vmul.f32 %v4614, %v4662
    %v4679 = vmul.f32 %v4615, %v4663
    %v4680 = vmul.f32 %v4616, %v4664
    %v4681 = vmul.f32 %v4617, %v4665
    %v4682 = vmul.f32 %v4618, %v4666
    %v4683 = vmul.f32 %v4619, %v4667
    %v4684 = vmul.f32 %v4620, %v4668
    %v4685 = vmul.f32 %v4621, %v4669
    %v4686 = vmul.f32 %v4622, %v4670
    %v4687 = vmul.f32 %v4623, %v4671
    %v4688 = vmul.f32 %v4624, %v4672
    %v4689 = vmul.f32 %v4625, %v4673
    %v4690 = vmul.f32 %v4626, %v4674
    %v4691 = vmul.f32 %v4627, %v4675
    %s4692 = sld [smem:[#allocation2 + $0x24]]
    %v4693 = vstv %s4692
    %v4694 = vmul.f32 %v2606, %v4693
    %v4695 = vmul.f32 %v2607, %v4693
    %v4696 = vmul.f32 %v2608, %v4693
    %v4697 = vmul.f32 %v2609, %v4693
    %v4698 = vmul.f32 %v2610, %v4693
    %v4699 = vmul.f32 %v2611, %v4693
    %v4700 = vmul.f32 %v2612, %v4693
    %v4701 = vmul.f32 %v2613, %v4693
    %v4702 = vmul.f32 %v2614, %v4693
    %v4703 = vmul.f32 %v2615, %v4693
    %v4704 = vmul.f32 %v2616, %v4693
    %v4705 = vmul.f32 %v2617, %v4693
    %v4706 = vmul.f32 %v2618, %v4693
    %v4707 = vmul.f32 %v2619, %v4693
    %v4708 = vmul.f32 %v2620, %v4693
    %v4709 = vmul.f32 %v2621, %v4693
    %s4710 = sld [smem:[#allocation2 + $0x25]]
    %v4711 = vstv %s4710
    %v4712 = vmul.f32 %v3296, %v4711
    %v4713 = vmul.f32 %v3297, %v4711
    %v4714 = vmul.f32 %v3298, %v4711
    %v4715 = vmul.f32 %v3299, %v4711
    %v4716 = vmul.f32 %v3300, %v4711
    %v4717 = vmul.f32 %v3301, %v4711
    %v4718 = vmul.f32 %v3302, %v4711
    %v4719 = vmul.f32 %v3303, %v4711
    %v4720 = vmul.f32 %v3304, %v4711
    %v4721 = vmul.f32 %v3305, %v4711
    %v4722 = vmul.f32 %v3306, %v4711
    %v4723 = vmul.f32 %v3307, %v4711
    %v4724 = vmul.f32 %v3308, %v4711
    %v4725 = vmul.f32 %v3309, %v4711
    %v4726 = vmul.f32 %v3310, %v4711
    %v4727 = vmul.f32 %v3311, %v4711
    %v4728 = vadd.f32 %v4694, %v4712
    %v4729 = vadd.f32 %v4695, %v4713
    %v4730 = vadd.f32 %v4696, %v4714
    %v4731 = vadd.f32 %v4697, %v4715
    %v4732 = vadd.f32 %v4698, %v4716
    %v4733 = vadd.f32 %v4699, %v4717
    %v4734 = vadd.f32 %v4700, %v4718
    %v4735 = vadd.f32 %v4701, %v4719
    %v4736 = vadd.f32 %v4702, %v4720
    %v4737 = vadd.f32 %v4703, %v4721
    %v4738 = vadd.f32 %v4704, %v4722
    %v4739 = vadd.f32 %v4705, %v4723
    %v4740 = vadd.f32 %v4706, %v4724
    %v4741 = vadd.f32 %v4707, %v4725
    %v4742 = vadd.f32 %v4708, %v4726
    %v4743 = vadd.f32 %v4709, %v4727
    %s4744 = sld [smem:[#allocation2 + $0x26]]
    %v4745 = vstv %s4744
    %v4746 = vmul.f32 %v3986, %v4745
    %v4747 = vmul.f32 %v3987, %v4745
    %v4748 = vmul.f32 %v3988, %v4745
    %v4749 = vmul.f32 %v3989, %v4745
    %v4750 = vmul.f32 %v3990, %v4745
    %v4751 = vmul.f32 %v3991, %v4745
    %v4752 = vmul.f32 %v3992, %v4745
    %v4753 = vmul.f32 %v3993, %v4745
    %v4754 = vmul.f32 %v3994, %v4745
    %v4755 = vmul.f32 %v3995, %v4745
    %v4756 = vmul.f32 %v3996, %v4745
    %v4757 = vmul.f32 %v3997, %v4745
    %v4758 = vmul.f32 %v3998, %v4745
    %v4759 = vmul.f32 %v3999, %v4745
    %v4760 = vmul.f32 %v4000, %v4745
    %v4761 = vmul.f32 %v4001, %v4745
    %v4762 = vadd.f32 %v4728, %v4746
    %v4763 = vadd.f32 %v4729, %v4747
    %v4764 = vadd.f32 %v4730, %v4748
    %v4765 = vadd.f32 %v4731, %v4749
    %v4766 = vadd.f32 %v4732, %v4750
    %v4767 = vadd.f32 %v4733, %v4751
    %v4768 = vadd.f32 %v4734, %v4752
    %v4769 = vadd.f32 %v4735, %v4753
    %v4770 = vadd.f32 %v4736, %v4754
    %v4771 = vadd.f32 %v4737, %v4755
    %v4772 = vadd.f32 %v4738, %v4756
    %v4773 = vadd.f32 %v4739, %v4757
    %v4774 = vadd.f32 %v4740, %v4758
    %v4775 = vadd.f32 %v4741, %v4759
    %v4776 = vadd.f32 %v4742, %v4760
    %v4777 = vadd.f32 %v4743, %v4761
    %s4778 = sld [smem:[#allocation2 + $0x27]]
    %v4779 = vstv %s4778
    %v4780 = vmul.f32 %v4676, %v4779
    %v4781 = vmul.f32 %v4677, %v4779
    %v4782 = vmul.f32 %v4678, %v4779
    %v4783 = vmul.f32 %v4679, %v4779
    %v4784 = vmul.f32 %v4680, %v4779
    %v4785 = vmul.f32 %v4681, %v4779
    %v4786 = vmul.f32 %v4682, %v4779
    %v4787 = vmul.f32 %v4683, %v4779
    %v4788 = vmul.f32 %v4684, %v4779
    %v4789 = vmul.f32 %v4685, %v4779
    %v4790 = vmul.f32 %v4686, %v4779
    %v4791 = vmul.f32 %v4687, %v4779
    %v4792 = vmul.f32 %v4688, %v4779
    %v4793 = vmul.f32 %v4689, %v4779
    %v4794 = vmul.f32 %v4690, %v4779
    %v4795 = vmul.f32 %v4691, %v4779
    %v4796 = vadd.f32 %v4762, %v4780
    %v4797 = vadd.f32 %v4763, %v4781
    %v4798 = vadd.f32 %v4764, %v4782
    %v4799 = vadd.f32 %v4765, %v4783
    %v4800 = vadd.f32 %v4766, %v4784
    %v4801 = vadd.f32 %v4767, %v4785
    %v4802 = vadd.f32 %v4768, %v4786
    %v4803 = vadd.f32 %v4769, %v4787
    %v4804 = vadd.f32 %v4770, %v4788
    %v4805 = vadd.f32 %v4771, %v4789
    %v4806 = vadd.f32 %v4772, %v4790
    %v4807 = vadd.f32 %v4773, %v4791
    %v4808 = vadd.f32 %v4774, %v4792
    %v4809 = vadd.f32 %v4775, %v4793
    %v4810 = vadd.f32 %v4776, %v4794
    %v4811 = vadd.f32 %v4777, %v4795
    %v4812 = vadd.f32 %v239, %v4796
    %v4813 = vadd.f32 %v240, %v4797
    %v4814 = vadd.f32 %v241, %v4798
    %v4815 = vadd.f32 %v242, %v4799
    %v4816 = vadd.f32 %v243, %v4800
    %v4817 = vadd.f32 %v244, %v4801
    %v4818 = vadd.f32 %v245, %v4802
    %v4819 = vadd.f32 %v246, %v4803
    %v4820 = vadd.f32 %v247, %v4804
    %v4821 = vadd.f32 %v248, %v4805
    %v4822 = vadd.f32 %v249, %v4806
    %v4823 = vadd.f32 %v250, %v4807
    %v4824 = vadd.f32 %v251, %v4808
    %v4825 = vadd.f32 %v252, %v4809
    %v4826 = vadd.f32 %v253, %v4810
    %v4827 = vadd.f32 %v254, %v4811
    %s4828 = sld [smem:[#allocation2 + $0x44]]
    %v4829 = vstv %s4828
    %v4830 = vadd.f32 %v4812, %v4829
    %v4831 = vadd.f32 %v4813, %v4829
    %v4832 = vadd.f32 %v4814, %v4829
    %v4833 = vadd.f32 %v4815, %v4829
    %v4834 = vadd.f32 %v4816, %v4829
    %v4835 = vadd.f32 %v4817, %v4829
    %v4836 = vadd.f32 %v4818, %v4829
    %v4837 = vadd.f32 %v4819, %v4829
    %v4838 = vadd.f32 %v4820, %v4829
    %v4839 = vadd.f32 %v4821, %v4829
    %v4840 = vadd.f32 %v4822, %v4829
    %v4841 = vadd.f32 %v4823, %v4829
    %v4842 = vadd.f32 %v4824, %v4829
    %v4843 = vadd.f32 %v4825, %v4829
    %v4844 = vadd.f32 %v4826, %v4829
    %v4845 = vadd.f32 %v4827, %v4829
    %s4846 = sld [smem:[#allocation2 + $0x28]]
    %v4847 = vstv %s4846
    %v4848 = vmul.f32 %v2606, %v4847
    %v4849 = vmul.f32 %v2607, %v4847
    %v4850 = vmul.f32 %v2608, %v4847
    %v4851 = vmul.f32 %v2609, %v4847
    %v4852 = vmul.f32 %v2610, %v4847
    %v4853 = vmul.f32 %v2611, %v4847
    %v4854 = vmul.f32 %v2612, %v4847
    %v4855 = vmul.f32 %v2613, %v4847
    %v4856 = vmul.f32 %v2614, %v4847
    %v4857 = vmul.f32 %v2615, %v4847
    %v4858 = vmul.f32 %v2616, %v4847
    %v4859 = vmul.f32 %v2617, %v4847
    %v4860 = vmul.f32 %v2618, %v4847
    %v4861 = vmul.f32 %v2619, %v4847
    %v4862 = vmul.f32 %v2620, %v4847
    %v4863 = vmul.f32 %v2621, %v4847
    %s4864 = sld [smem:[#allocation2 + $0x29]]
    %v4865 = vstv %s4864
    %v4866 = vmul.f32 %v3296, %v4865
    %v4867 = vmul.f32 %v3297, %v4865
    %v4868 = vmul.f32 %v3298, %v4865
    %v4869 = vmul.f32 %v3299, %v4865
    %v4870 = vmul.f32 %v3300, %v4865
    %v4871 = vmul.f32 %v3301, %v4865
    %v4872 = vmul.f32 %v3302, %v4865
    %v4873 = vmul.f32 %v3303, %v4865
    %v4874 = vmul.f32 %v3304, %v4865
    %v4875 = vmul.f32 %v3305, %v4865
    %v4876 = vmul.f32 %v3306, %v4865
    %v4877 = vmul.f32 %v3307, %v4865
    %v4878 = vmul.f32 %v3308, %v4865
    %v4879 = vmul.f32 %v3309, %v4865
    %v4880 = vmul.f32 %v3310, %v4865
    %v4881 = vmul.f32 %v3311, %v4865
    %v4882 = vadd.f32 %v4848, %v4866
    %v4883 = vadd.f32 %v4849, %v4867
    %v4884 = vadd.f32 %v4850, %v4868
    %v4885 = vadd.f32 %v4851, %v4869
    %v4886 = vadd.f32 %v4852, %v4870
    %v4887 = vadd.f32 %v4853, %v4871
    %v4888 = vadd.f32 %v4854, %v4872
    %v4889 = vadd.f32 %v4855, %v4873
    %v4890 = vadd.f32 %v4856, %v4874
    %v4891 = vadd.f32 %v4857, %v4875
    %v4892 = vadd.f32 %v4858, %v4876
    %v4893 = vadd.f32 %v4859, %v4877
    %v4894 = vadd.f32 %v4860, %v4878
    %v4895 = vadd.f32 %v4861, %v4879
    %v4896 = vadd.f32 %v4862, %v4880
    %v4897 = vadd.f32 %v4863, %v4881
    %s4898 = sld [smem:[#allocation2 + $0x2a]]
    %v4899 = vstv %s4898
    %v4900 = vmul.f32 %v3986, %v4899
    %v4901 = vmul.f32 %v3987, %v4899
    %v4902 = vmul.f32 %v3988, %v4899
    %v4903 = vmul.f32 %v3989, %v4899
    %v4904 = vmul.f32 %v3990, %v4899
    %v4905 = vmul.f32 %v3991, %v4899
    %v4906 = vmul.f32 %v3992, %v4899
    %v4907 = vmul.f32 %v3993, %v4899
    %v4908 = vmul.f32 %v3994, %v4899
    %v4909 = vmul.f32 %v3995, %v4899
    %v4910 = vmul.f32 %v3996, %v4899
    %v4911 = vmul.f32 %v3997, %v4899
    %v4912 = vmul.f32 %v3998, %v4899
    %v4913 = vmul.f32 %v3999, %v4899
    %v4914 = vmul.f32 %v4000, %v4899
    %v4915 = vmul.f32 %v4001, %v4899
    %v4916 = vadd.f32 %v4882, %v4900
    %v4917 = vadd.f32 %v4883, %v4901
    %v4918 = vadd.f32 %v4884, %v4902
    %v4919 = vadd.f32 %v4885, %v4903
    %v4920 = vadd.f32 %v4886, %v4904
    %v4921 = vadd.f32 %v4887, %v4905
    %v4922 = vadd.f32 %v4888, %v4906
    %v4923 = vadd.f32 %v4889, %v4907
    %v4924 = vadd.f32 %v4890, %v4908
    %v4925 = vadd.f32 %v4891, %v4909
    %v4926 = vadd.f32 %v4892, %v4910
    %v4927 = vadd.f32 %v4893, %v4911
    %v4928 = vadd.f32 %v4894, %v4912
    %v4929 = vadd.f32 %v4895, %v4913
    %v4930 = vadd.f32 %v4896, %v4914
    %v4931 = vadd.f32 %v4897, %v4915
    %s4932 = sld [smem:[#allocation2 + $0x2b]]
    %v4933 = vstv %s4932
    %v4934 = vmul.f32 %v4676, %v4933
    %v4935 = vmul.f32 %v4677, %v4933
    %v4936 = vmul.f32 %v4678, %v4933
    %v4937 = vmul.f32 %v4679, %v4933
    %v4938 = vmul.f32 %v4680, %v4933
    %v4939 = vmul.f32 %v4681, %v4933
    %v4940 = vmul.f32 %v4682, %v4933
    %v4941 = vmul.f32 %v4683, %v4933
    %v4942 = vmul.f32 %v4684, %v4933
    %v4943 = vmul.f32 %v4685, %v4933
    %v4944 = vmul.f32 %v4686, %v4933
    %v4945 = vmul.f32 %v4687, %v4933
    %v4946 = vmul.f32 %v4688, %v4933
    %v4947 = vmul.f32 %v4689, %v4933
    %v4948 = vmul.f32 %v4690, %v4933
    %v4949 = vmul.f32 %v4691, %v4933
    %v4950 = vadd.f32 %v4916, %v4934
    %v4951 = vadd.f32 %v4917, %v4935
    %v4952 = vadd.f32 %v4918, %v4936
    %v4953 = vadd.f32 %v4919, %v4937
    %v4954 = vadd.f32 %v4920, %v4938
    %v4955 = vadd.f32 %v4921, %v4939
    %v4956 = vadd.f32 %v4922, %v4940
    %v4957 = vadd.f32 %v4923, %v4941
    %v4958 = vadd.f32 %v4924, %v4942
    %v4959 = vadd.f32 %v4925, %v4943
    %v4960 = vadd.f32 %v4926, %v4944
    %v4961 = vadd.f32 %v4927, %v4945
    %v4962 = vadd.f32 %v4928, %v4946
    %v4963 = vadd.f32 %v4929, %v4947
    %v4964 = vadd.f32 %v4930, %v4948
    %v4965 = vadd.f32 %v4931, %v4949
    %v4982 = vrot.slane %v4950, 7
    %v4983 = vrot.slane %v4951, 7
    %v4984 = vrot.slane %v4952, 7
    %v4985 = vrot.slane %v4953, 7
    %v4986 = vrot.slane %v4954, 7
    %v4987 = vrot.slane %v4955, 7
    %v4988 = vrot.slane %v4956, 7
    %v4989 = vrot.slane %v4957, 7
    %v4990 = vrot.slane %v4958, 7
    %v4991 = vrot.slane %v4959, 7
    %v4992 = vrot.slane %v4960, 7
    %v4993 = vrot.slane %v4961, 7
    %v4994 = vrot.slane %v4962, 7
    %v4995 = vrot.slane %v4963, 7
    %v4996 = vrot.slane %v4964, 7
    %v4997 = vrot.slane %v4965, 7
    %v5014 = vadd.f32 %v239, %v4982
    %v5015 = vadd.f32 %v240, %v4983
    %v5016 = vadd.f32 %v241, %v4984
    %v5017 = vadd.f32 %v242, %v4985
    %v5018 = vadd.f32 %v243, %v4986
    %v5019 = vadd.f32 %v244, %v4987
    %v5020 = vadd.f32 %v245, %v4988
    %v5021 = vadd.f32 %v246, %v4989
    %v5022 = vadd.f32 %v247, %v4990
    %v5023 = vadd.f32 %v248, %v4991
    %v5024 = vadd.f32 %v249, %v4992
    %v5025 = vadd.f32 %v250, %v4993
    %v5026 = vadd.f32 %v251, %v4994
    %v5027 = vadd.f32 %v252, %v4995
    %v5028 = vadd.f32 %v253, %v4996
    %v5029 = vadd.f32 %v254, %v4997
    %s5030 = sld [smem:[#allocation2 + $0x45]]
    %v5031 = vstv %s5030
    %v5032 = vadd.f32 %v5014, %v5031
    %v5033 = vadd.f32 %v5015, %v5031
    %v5034 = vadd.f32 %v5016, %v5031
    %v5035 = vadd.f32 %v5017, %v5031
    %v5036 = vadd.f32 %v5018, %v5031
    %v5037 = vadd.f32 %v5019, %v5031
    %v5038 = vadd.f32 %v5020, %v5031
    %v5039 = vadd.f32 %v5021, %v5031
    %v5040 = vadd.f32 %v5022, %v5031
    %v5041 = vadd.f32 %v5023, %v5031
    %v5042 = vadd.f32 %v5024, %v5031
    %v5043 = vadd.f32 %v5025, %v5031
    %v5044 = vadd.f32 %v5026, %v5031
    %v5045 = vadd.f32 %v5027, %v5031
    %v5046 = vadd.f32 %v5028, %v5031
    %v5047 = vadd.f32 %v5029, %v5031
    %s5048 = sld [smem:[#allocation2 + $0x2c]]
    %v5049 = vstv %s5048
    %v5050 = vmul.f32 %v2606, %v5049
    %v5051 = vmul.f32 %v2607, %v5049
    %v5052 = vmul.f32 %v2608, %v5049
    %v5053 = vmul.f32 %v2609, %v5049
    %v5054 = vmul.f32 %v2610, %v5049
    %v5055 = vmul.f32 %v2611, %v5049
    %v5056 = vmul.f32 %v2612, %v5049
    %v5057 = vmul.f32 %v2613, %v5049
    %v5058 = vmul.f32 %v2614, %v5049
    %v5059 = vmul.f32 %v2615, %v5049
    %v5060 = vmul.f32 %v2616, %v5049
    %v5061 = vmul.f32 %v2617, %v5049
    %v5062 = vmul.f32 %v2618, %v5049
    %v5063 = vmul.f32 %v2619, %v5049
    %v5064 = vmul.f32 %v2620, %v5049
    %v5065 = vmul.f32 %v2621, %v5049
    %s5066 = sld [smem:[#allocation2 + $0x2d]]
    %v5067 = vstv %s5066
    %v5068 = vmul.f32 %v3296, %v5067
    %v5069 = vmul.f32 %v3297, %v5067
    %v5070 = vmul.f32 %v3298, %v5067
    %v5071 = vmul.f32 %v3299, %v5067
    %v5072 = vmul.f32 %v3300, %v5067
    %v5073 = vmul.f32 %v3301, %v5067
    %v5074 = vmul.f32 %v3302, %v5067
    %v5075 = vmul.f32 %v3303, %v5067
    %v5076 = vmul.f32 %v3304, %v5067
    %v5077 = vmul.f32 %v3305, %v5067
    %v5078 = vmul.f32 %v3306, %v5067
    %v5079 = vmul.f32 %v3307, %v5067
    %v5080 = vmul.f32 %v3308, %v5067
    %v5081 = vmul.f32 %v3309, %v5067
    %v5082 = vmul.f32 %v3310, %v5067
    %v5083 = vmul.f32 %v3311, %v5067
    %v5084 = vadd.f32 %v5050, %v5068
    %v5085 = vadd.f32 %v5051, %v5069
    %v5086 = vadd.f32 %v5052, %v5070
    %v5087 = vadd.f32 %v5053, %v5071
    %v5088 = vadd.f32 %v5054, %v5072
    %v5089 = vadd.f32 %v5055, %v5073
    %v5090 = vadd.f32 %v5056, %v5074
    %v5091 = vadd.f32 %v5057, %v5075
    %v5092 = vadd.f32 %v5058, %v5076
    %v5093 = vadd.f32 %v5059, %v5077
    %v5094 = vadd.f32 %v5060, %v5078
    %v5095 = vadd.f32 %v5061, %v5079
    %v5096 = vadd.f32 %v5062, %v5080
    %v5097 = vadd.f32 %v5063, %v5081
    %v5098 = vadd.f32 %v5064, %v5082
    %v5099 = vadd.f32 %v5065, %v5083
    %s5100 = sld [smem:[#allocation2 + $0x2e]]
    %v5101 = vstv %s5100
    %v5102 = vmul.f32 %v3986, %v5101
    %v5103 = vmul.f32 %v3987, %v5101
    %v5104 = vmul.f32 %v3988, %v5101
    %v5105 = vmul.f32 %v3989, %v5101
    %v5106 = vmul.f32 %v3990, %v5101
    %v5107 = vmul.f32 %v3991, %v5101
    %v5108 = vmul.f32 %v3992, %v5101
    %v5109 = vmul.f32 %v3993, %v5101
    %v5110 = vmul.f32 %v3994, %v5101
    %v5111 = vmul.f32 %v3995, %v5101
    %v5112 = vmul.f32 %v3996, %v5101
    %v5113 = vmul.f32 %v3997, %v5101
    %v5114 = vmul.f32 %v3998, %v5101
    %v5115 = vmul.f32 %v3999, %v5101
    %v5116 = vmul.f32 %v4000, %v5101
    %v5117 = vmul.f32 %v4001, %v5101
    %v5118 = vadd.f32 %v5084, %v5102
    %v5119 = vadd.f32 %v5085, %v5103
    %v5120 = vadd.f32 %v5086, %v5104
    %v5121 = vadd.f32 %v5087, %v5105
    %v5122 = vadd.f32 %v5088, %v5106
    %v5123 = vadd.f32 %v5089, %v5107
    %v5124 = vadd.f32 %v5090, %v5108
    %v5125 = vadd.f32 %v5091, %v5109
    %v5126 = vadd.f32 %v5092, %v5110
    %v5127 = vadd.f32 %v5093, %v5111
    %v5128 = vadd.f32 %v5094, %v5112
    %v5129 = vadd.f32 %v5095, %v5113
    %v5130 = vadd.f32 %v5096, %v5114
    %v5131 = vadd.f32 %v5097, %v5115
    %v5132 = vadd.f32 %v5098, %v5116
    %v5133 = vadd.f32 %v5099, %v5117
    %s5134 = sld [smem:[#allocation2 + $0x2f]]
    %v5135 = vstv %s5134
    %v5136 = vmul.f32 %v4676, %v5135
    %v5137 = vmul.f32 %v4677, %v5135
    %v5138 = vmul.f32 %v4678, %v5135
    %v5139 = vmul.f32 %v4679, %v5135
    %v5140 = vmul.f32 %v4680, %v5135
    %v5141 = vmul.f32 %v4681, %v5135
    %v5142 = vmul.f32 %v4682, %v5135
    %v5143 = vmul.f32 %v4683, %v5135
    %v5144 = vmul.f32 %v4684, %v5135
    %v5145 = vmul.f32 %v4685, %v5135
    %v5146 = vmul.f32 %v4686, %v5135
    %v5147 = vmul.f32 %v4687, %v5135
    %v5148 = vmul.f32 %v4688, %v5135
    %v5149 = vmul.f32 %v4689, %v5135
    %v5150 = vmul.f32 %v4690, %v5135
    %v5151 = vmul.f32 %v4691, %v5135
    %v5152 = vadd.f32 %v5118, %v5136
    %v5153 = vadd.f32 %v5119, %v5137
    %v5154 = vadd.f32 %v5120, %v5138
    %v5155 = vadd.f32 %v5121, %v5139
    %v5156 = vadd.f32 %v5122, %v5140
    %v5157 = vadd.f32 %v5123, %v5141
    %v5158 = vadd.f32 %v5124, %v5142
    %v5159 = vadd.f32 %v5125, %v5143
    %v5160 = vadd.f32 %v5126, %v5144
    %v5161 = vadd.f32 %v5127, %v5145
    %v5162 = vadd.f32 %v5128, %v5146
    %v5163 = vadd.f32 %v5129, %v5147
    %v5164 = vadd.f32 %v5130, %v5148
    %v5165 = vadd.f32 %v5131, %v5149
    %v5166 = vadd.f32 %v5132, %v5150
    %v5167 = vadd.f32 %v5133, %v5151
    %v5184 = vrot.slane %v5152, 6
    %v5185 = vrot.slane %v5153, 6
    %v5186 = vrot.slane %v5154, 6
    %v5187 = vrot.slane %v5155, 6
    %v5188 = vrot.slane %v5156, 6
    %v5189 = vrot.slane %v5157, 6
    %v5190 = vrot.slane %v5158, 6
    %v5191 = vrot.slane %v5159, 6
    %v5192 = vrot.slane %v5160, 6
    %v5193 = vrot.slane %v5161, 6
    %v5194 = vrot.slane %v5162, 6
    %v5195 = vrot.slane %v5163, 6
    %v5196 = vrot.slane %v5164, 6
    %v5197 = vrot.slane %v5165, 6
    %v5198 = vrot.slane %v5166, 6
    %v5199 = vrot.slane %v5167, 6
    %v5216 = vadd.f32 %v239, %v5184
    %v5217 = vadd.f32 %v240, %v5185
    %v5218 = vadd.f32 %v241, %v5186
    %v5219 = vadd.f32 %v242, %v5187
    %v5220 = vadd.f32 %v243, %v5188
    %v5221 = vadd.f32 %v244, %v5189
    %v5222 = vadd.f32 %v245, %v5190
    %v5223 = vadd.f32 %v246, %v5191
    %v5224 = vadd.f32 %v247, %v5192
    %v5225 = vadd.f32 %v248, %v5193
    %v5226 = vadd.f32 %v249, %v5194
    %v5227 = vadd.f32 %v250, %v5195
    %v5228 = vadd.f32 %v251, %v5196
    %v5229 = vadd.f32 %v252, %v5197
    %v5230 = vadd.f32 %v253, %v5198
    %v5231 = vadd.f32 %v254, %v5199
    %s5232 = sld [smem:[#allocation2 + $0x46]]
    %v5233 = vstv %s5232
    %v5234 = vadd.f32 %v5216, %v5233
    %v5235 = vadd.f32 %v5217, %v5233
    %v5236 = vadd.f32 %v5218, %v5233
    %v5237 = vadd.f32 %v5219, %v5233
    %v5238 = vadd.f32 %v5220, %v5233
    %v5239 = vadd.f32 %v5221, %v5233
    %v5240 = vadd.f32 %v5222, %v5233
    %v5241 = vadd.f32 %v5223, %v5233
    %v5242 = vadd.f32 %v5224, %v5233
    %v5243 = vadd.f32 %v5225, %v5233
    %v5244 = vadd.f32 %v5226, %v5233
    %v5245 = vadd.f32 %v5227, %v5233
    %v5246 = vadd.f32 %v5228, %v5233
    %v5247 = vadd.f32 %v5229, %v5233
    %v5248 = vadd.f32 %v5230, %v5233
    %v5249 = vadd.f32 %v5231, %v5233
    %s5250 = sld [smem:[#allocation2 + $0x30]]
    %v5251 = vstv %s5250
    %v5252 = vmul.f32 %v2606, %v5251
    %v5253 = vmul.f32 %v2607, %v5251
    %v5254 = vmul.f32 %v2608, %v5251
    %v5255 = vmul.f32 %v2609, %v5251
    %v5256 = vmul.f32 %v2610, %v5251
    %v5257 = vmul.f32 %v2611, %v5251
    %v5258 = vmul.f32 %v2612, %v5251
    %v5259 = vmul.f32 %v2613, %v5251
    %v5260 = vmul.f32 %v2614, %v5251
    %v5261 = vmul.f32 %v2615, %v5251
    %v5262 = vmul.f32 %v2616, %v5251
    %v5263 = vmul.f32 %v2617, %v5251
    %v5264 = vmul.f32 %v2618, %v5251
    %v5265 = vmul.f32 %v2619, %v5251
    %v5266 = vmul.f32 %v2620, %v5251
    %v5267 = vmul.f32 %v2621, %v5251
    %s5268 = sld [smem:[#allocation2 + $0x31]]
    %v5269 = vstv %s5268
    %v5270 = vmul.f32 %v3296, %v5269
    %v5271 = vmul.f32 %v3297, %v5269
    %v5272 = vmul.f32 %v3298, %v5269
    %v5273 = vmul.f32 %v3299, %v5269
    %v5274 = vmul.f32 %v3300, %v5269
    %v5275 = vmul.f32 %v3301, %v5269
    %v5276 = vmul.f32 %v3302, %v5269
    %v5277 = vmul.f32 %v3303, %v5269
    %v5278 = vmul.f32 %v3304, %v5269
    %v5279 = vmul.f32 %v3305, %v5269
    %v5280 = vmul.f32 %v3306, %v5269
    %v5281 = vmul.f32 %v3307, %v5269
    %v5282 = vmul.f32 %v3308, %v5269
    %v5283 = vmul.f32 %v3309, %v5269
    %v5284 = vmul.f32 %v3310, %v5269
    %v5285 = vmul.f32 %v3311, %v5269
    %v5286 = vadd.f32 %v5252, %v5270
    %v5287 = vadd.f32 %v5253, %v5271
    %v5288 = vadd.f32 %v5254, %v5272
    %v5289 = vadd.f32 %v5255, %v5273
    %v5290 = vadd.f32 %v5256, %v5274
    %v5291 = vadd.f32 %v5257, %v5275
    %v5292 = vadd.f32 %v5258, %v5276
    %v5293 = vadd.f32 %v5259, %v5277
    %v5294 = vadd.f32 %v5260, %v5278
    %v5295 = vadd.f32 %v5261, %v5279
    %v5296 = vadd.f32 %v5262, %v5280
    %v5297 = vadd.f32 %v5263, %v5281
    %v5298 = vadd.f32 %v5264, %v5282
    %v5299 = vadd.f32 %v5265, %v5283
    %v5300 = vadd.f32 %v5266, %v5284
    %v5301 = vadd.f32 %v5267, %v5285
    %s5302 = sld [smem:[#allocation2 + $0x32]]
    %v5303 = vstv %s5302
    %v5304 = vmul.f32 %v3986, %v5303
    %v5305 = vmul.f32 %v3987, %v5303
    %v5306 = vmul.f32 %v3988, %v5303
    %v5307 = vmul.f32 %v3989, %v5303
    %v5308 = vmul.f32 %v3990, %v5303
    %v5309 = vmul.f32 %v3991, %v5303
    %v5310 = vmul.f32 %v3992, %v5303
    %v5311 = vmul.f32 %v3993, %v5303
    %v5312 = vmul.f32 %v3994, %v5303
    %v5313 = vmul.f32 %v3995, %v5303
    %v5314 = vmul.f32 %v3996, %v5303
    %v5315 = vmul.f32 %v3997, %v5303
    %v5316 = vmul.f32 %v3998, %v5303
    %v5317 = vmul.f32 %v3999, %v5303
    %v5318 = vmul.f32 %v4000, %v5303
    %v5319 = vmul.f32 %v4001, %v5303
    %v5320 = vadd.f32 %v5286, %v5304
    %v5321 = vadd.f32 %v5287, %v5305
    %v5322 = vadd.f32 %v5288, %v5306
    %v5323 = vadd.f32 %v5289, %v5307
    %v5324 = vadd.f32 %v5290, %v5308
    %v5325 = vadd.f32 %v5291, %v5309
    %v5326 = vadd.f32 %v5292, %v5310
    %v5327 = vadd.f32 %v5293, %v5311
    %v5328 = vadd.f32 %v5294, %v5312
    %v5329 = vadd.f32 %v5295, %v5313
    %v5330 = vadd.f32 %v5296, %v5314
    %v5331 = vadd.f32 %v5297, %v5315
    %v5332 = vadd.f32 %v5298, %v5316
    %v5333 = vadd.f32 %v5299, %v5317
    %v5334 = vadd.f32 %v5300, %v5318
    %v5335 = vadd.f32 %v5301, %v5319
    %s5336 = sld [smem:[#allocation2 + $0x33]]
    %v5337 = vstv %s5336
    %v5338 = vmul.f32 %v4676, %v5337
    %v5339 = vmul.f32 %v4677, %v5337
    %v5340 = vmul.f32 %v4678, %v5337
    %v5341 = vmul.f32 %v4679, %v5337
    %v5342 = vmul.f32 %v4680, %v5337
    %v5343 = vmul.f32 %v4681, %v5337
    %v5344 = vmul.f32 %v4682, %v5337
    %v5345 = vmul.f32 %v4683, %v5337
    %v5346 = vmul.f32 %v4684, %v5337
    %v5347 = vmul.f32 %v4685, %v5337
    %v5348 = vmul.f32 %v4686, %v5337
    %v5349 = vmul.f32 %v4687, %v5337
    %v5350 = vmul.f32 %v4688, %v5337
    %v5351 = vmul.f32 %v4689, %v5337
    %v5352 = vmul.f32 %v4690, %v5337
    %v5353 = vmul.f32 %v4691, %v5337
    %v5354 = vadd.f32 %v5320, %v5338
    %v5355 = vadd.f32 %v5321, %v5339
    %v5356 = vadd.f32 %v5322, %v5340
    %v5357 = vadd.f32 %v5323, %v5341
    %v5358 = vadd.f32 %v5324, %v5342
    %v5359 = vadd.f32 %v5325, %v5343
    %v5360 = vadd.f32 %v5326, %v5344
    %v5361 = vadd.f32 %v5327, %v5345
    %v5362 = vadd.f32 %v5328, %v5346
    %v5363 = vadd.f32 %v5329, %v5347
    %v5364 = vadd.f32 %v5330, %v5348
    %v5365 = vadd.f32 %v5331, %v5349
    %v5366 = vadd.f32 %v5332, %v5350
    %v5367 = vadd.f32 %v5333, %v5351
    %v5368 = vadd.f32 %v5334, %v5352
    %v5369 = vadd.f32 %v5335, %v5353
    %v5386 = vrot.slane %v5354, 5
    %v5387 = vrot.slane %v5355, 5
    %v5388 = vrot.slane %v5356, 5
    %v5389 = vrot.slane %v5357, 5
    %v5390 = vrot.slane %v5358, 5
    %v5391 = vrot.slane %v5359, 5
    %v5392 = vrot.slane %v5360, 5
    %v5393 = vrot.slane %v5361, 5
    %v5394 = vrot.slane %v5362, 5
    %v5395 = vrot.slane %v5363, 5
    %v5396 = vrot.slane %v5364, 5
    %v5397 = vrot.slane %v5365, 5
    %v5398 = vrot.slane %v5366, 5
    %v5399 = vrot.slane %v5367, 5
    %v5400 = vrot.slane %v5368, 5
    %v5401 = vrot.slane %v5369, 5
    %v5418 = vadd.f32 %v239, %v5386
    %v5419 = vadd.f32 %v240, %v5387
    %v5420 = vadd.f32 %v241, %v5388
    %v5421 = vadd.f32 %v242, %v5389
    %v5422 = vadd.f32 %v243, %v5390
    %v5423 = vadd.f32 %v244, %v5391
    %v5424 = vadd.f32 %v245, %v5392
    %v5425 = vadd.f32 %v246, %v5393
    %v5426 = vadd.f32 %v247, %v5394
    %v5427 = vadd.f32 %v248, %v5395
    %v5428 = vadd.f32 %v249, %v5396
    %v5429 = vadd.f32 %v250, %v5397
    %v5430 = vadd.f32 %v251, %v5398
    %v5431 = vadd.f32 %v252, %v5399
    %v5432 = vadd.f32 %v253, %v5400
    %v5433 = vadd.f32 %v254, %v5401
    %s5434 = sld [smem:[#allocation2 + $0x47]]
    %v5435 = vstv %s5434
    %v5436 = vadd.f32 %v5418, %v5435
    %v5437 = vadd.f32 %v5419, %v5435
    %v5438 = vadd.f32 %v5420, %v5435
    %v5439 = vadd.f32 %v5421, %v5435
    %v5440 = vadd.f32 %v5422, %v5435
    %v5441 = vadd.f32 %v5423, %v5435
    %v5442 = vadd.f32 %v5424, %v5435
    %v5443 = vadd.f32 %v5425, %v5435
    %v5444 = vadd.f32 %v5426, %v5435
    %v5445 = vadd.f32 %v5427, %v5435
    %v5446 = vadd.f32 %v5428, %v5435
    %v5447 = vadd.f32 %v5429, %v5435
    %v5448 = vadd.f32 %v5430, %v5435
    %v5449 = vadd.f32 %v5431, %v5435
    %v5450 = vadd.f32 %v5432, %v5435
    %v5451 = vadd.f32 %v5433, %v5435
    %s5452 = sld [smem:[#allocation2 + $0x34]]
    %v5453 = vstv %s5452
    %v5454 = vmul.f32 %v2606, %v5453
    %v5455 = vmul.f32 %v2607, %v5453
    %v5456 = vmul.f32 %v2608, %v5453
    %v5457 = vmul.f32 %v2609, %v5453
    %v5458 = vmul.f32 %v2610, %v5453
    %v5459 = vmul.f32 %v2611, %v5453
    %v5460 = vmul.f32 %v2612, %v5453
    %v5461 = vmul.f32 %v2613, %v5453
    %v5462 = vmul.f32 %v2614, %v5453
    %v5463 = vmul.f32 %v2615, %v5453
    %v5464 = vmul.f32 %v2616, %v5453
    %v5465 = vmul.f32 %v2617, %v5453
    %v5466 = vmul.f32 %v2618, %v5453
    %v5467 = vmul.f32 %v2619, %v5453
    %v5468 = vmul.f32 %v2620, %v5453
    %v5469 = vmul.f32 %v2621, %v5453
    %s5470 = sld [smem:[#allocation2 + $0x35]]
    %v5471 = vstv %s5470
    %v5472 = vmul.f32 %v3296, %v5471
    %v5473 = vmul.f32 %v3297, %v5471
    %v5474 = vmul.f32 %v3298, %v5471
    %v5475 = vmul.f32 %v3299, %v5471
    %v5476 = vmul.f32 %v3300, %v5471
    %v5477 = vmul.f32 %v3301, %v5471
    %v5478 = vmul.f32 %v3302, %v5471
    %v5479 = vmul.f32 %v3303, %v5471
    %v5480 = vmul.f32 %v3304, %v5471
    %v5481 = vmul.f32 %v3305, %v5471
    %v5482 = vmul.f32 %v3306, %v5471
    %v5483 = vmul.f32 %v3307, %v5471
    %v5484 = vmul.f32 %v3308, %v5471
    %v5485 = vmul.f32 %v3309, %v5471
    %v5486 = vmul.f32 %v3310, %v5471
    %v5487 = vmul.f32 %v3311, %v5471
    %v5488 = vadd.f32 %v5454, %v5472
    %v5489 = vadd.f32 %v5455, %v5473
    %v5490 = vadd.f32 %v5456, %v5474
    %v5491 = vadd.f32 %v5457, %v5475
    %v5492 = vadd.f32 %v5458, %v5476
    %v5493 = vadd.f32 %v5459, %v5477
    %v5494 = vadd.f32 %v5460, %v5478
    %v5495 = vadd.f32 %v5461, %v5479
    %v5496 = vadd.f32 %v5462, %v5480
    %v5497 = vadd.f32 %v5463, %v5481
    %v5498 = vadd.f32 %v5464, %v5482
    %v5499 = vadd.f32 %v5465, %v5483
    %v5500 = vadd.f32 %v5466, %v5484
    %v5501 = vadd.f32 %v5467, %v5485
    %v5502 = vadd.f32 %v5468, %v5486
    %v5503 = vadd.f32 %v5469, %v5487
    %s5504 = sld [smem:[#allocation2 + $0x36]]
    %v5505 = vstv %s5504
    %v5506 = vmul.f32 %v3986, %v5505
    %v5507 = vmul.f32 %v3987, %v5505
    %v5508 = vmul.f32 %v3988, %v5505
    %v5509 = vmul.f32 %v3989, %v5505
    %v5510 = vmul.f32 %v3990, %v5505
    %v5511 = vmul.f32 %v3991, %v5505
    %v5512 = vmul.f32 %v3992, %v5505
    %v5513 = vmul.f32 %v3993, %v5505
    %v5514 = vmul.f32 %v3994, %v5505
    %v5515 = vmul.f32 %v3995, %v5505
    %v5516 = vmul.f32 %v3996, %v5505
    %v5517 = vmul.f32 %v3997, %v5505
    %v5518 = vmul.f32 %v3998, %v5505
    %v5519 = vmul.f32 %v3999, %v5505
    %v5520 = vmul.f32 %v4000, %v5505
    %v5521 = vmul.f32 %v4001, %v5505
    %v5522 = vadd.f32 %v5488, %v5506
    %v5523 = vadd.f32 %v5489, %v5507
    %v5524 = vadd.f32 %v5490, %v5508
    %v5525 = vadd.f32 %v5491, %v5509
    %v5526 = vadd.f32 %v5492, %v5510
    %v5527 = vadd.f32 %v5493, %v5511
    %v5528 = vadd.f32 %v5494, %v5512
    %v5529 = vadd.f32 %v5495, %v5513
    %v5530 = vadd.f32 %v5496, %v5514
    %v5531 = vadd.f32 %v5497, %v5515
    %v5532 = vadd.f32 %v5498, %v5516
    %v5533 = vadd.f32 %v5499, %v5517
    %v5534 = vadd.f32 %v5500, %v5518
    %v5535 = vadd.f32 %v5501, %v5519
    %v5536 = vadd.f32 %v5502, %v5520
    %v5537 = vadd.f32 %v5503, %v5521
    %s5538 = sld [smem:[#allocation2 + $0x37]]
    %v5539 = vstv %s5538
    %v5540 = vmul.f32 %v4676, %v5539
    %v5541 = vmul.f32 %v4677, %v5539
    %v5542 = vmul.f32 %v4678, %v5539
    %v5543 = vmul.f32 %v4679, %v5539
    %v5544 = vmul.f32 %v4680, %v5539
    %v5545 = vmul.f32 %v4681, %v5539
    %v5546 = vmul.f32 %v4682, %v5539
    %v5547 = vmul.f32 %v4683, %v5539
    %v5548 = vmul.f32 %v4684, %v5539
    %v5549 = vmul.f32 %v4685, %v5539
    %v5550 = vmul.f32 %v4686, %v5539
    %v5551 = vmul.f32 %v4687, %v5539
    %v5552 = vmul.f32 %v4688, %v5539
    %v5553 = vmul.f32 %v4689, %v5539
    %v5554 = vmul.f32 %v4690, %v5539
    %v5555 = vmul.f32 %v4691, %v5539
    %v5556 = vadd.f32 %v5522, %v5540
    %v5557 = vadd.f32 %v5523, %v5541
    %v5558 = vadd.f32 %v5524, %v5542
    %v5559 = vadd.f32 %v5525, %v5543
    %v5560 = vadd.f32 %v5526, %v5544
    %v5561 = vadd.f32 %v5527, %v5545
    %v5562 = vadd.f32 %v5528, %v5546
    %v5563 = vadd.f32 %v5529, %v5547
    %v5564 = vadd.f32 %v5530, %v5548
    %v5565 = vadd.f32 %v5531, %v5549
    %v5566 = vadd.f32 %v5532, %v5550
    %v5567 = vadd.f32 %v5533, %v5551
    %v5568 = vadd.f32 %v5534, %v5552
    %v5569 = vadd.f32 %v5535, %v5553
    %v5570 = vadd.f32 %v5536, %v5554
    %v5571 = vadd.f32 %v5537, %v5555
    %v5588 = vrot.slane %v5556, 4
    %v5589 = vrot.slane %v5557, 4
    %v5590 = vrot.slane %v5558, 4
    %v5591 = vrot.slane %v5559, 4
    %v5592 = vrot.slane %v5560, 4
    %v5593 = vrot.slane %v5561, 4
    %v5594 = vrot.slane %v5562, 4
    %v5595 = vrot.slane %v5563, 4
    %v5596 = vrot.slane %v5564, 4
    %v5597 = vrot.slane %v5565, 4
    %v5598 = vrot.slane %v5566, 4
    %v5599 = vrot.slane %v5567, 4
    %v5600 = vrot.slane %v5568, 4
    %v5601 = vrot.slane %v5569, 4
    %v5602 = vrot.slane %v5570, 4
    %v5603 = vrot.slane %v5571, 4
    %v5620 = vadd.f32 %v239, %v5588
    %v5621 = vadd.f32 %v240, %v5589
    %v5622 = vadd.f32 %v241, %v5590
    %v5623 = vadd.f32 %v242, %v5591
    %v5624 = vadd.f32 %v243, %v5592
    %v5625 = vadd.f32 %v244, %v5593
    %v5626 = vadd.f32 %v245, %v5594
    %v5627 = vadd.f32 %v246, %v5595
    %v5628 = vadd.f32 %v247, %v5596
    %v5629 = vadd.f32 %v248, %v5597
    %v5630 = vadd.f32 %v249, %v5598
    %v5631 = vadd.f32 %v250, %v5599
    %v5632 = vadd.f32 %v251, %v5600
    %v5633 = vadd.f32 %v252, %v5601
    %v5634 = vadd.f32 %v253, %v5602
    %v5635 = vadd.f32 %v254, %v5603
    %s5636 = sld [smem:[#allocation2 + $0x48]]
    %v5637 = vstv %s5636
    %v5638 = vadd.f32 %v5620, %v5637
    %v5639 = vadd.f32 %v5621, %v5637
    %v5640 = vadd.f32 %v5622, %v5637
    %v5641 = vadd.f32 %v5623, %v5637
    %v5642 = vadd.f32 %v5624, %v5637
    %v5643 = vadd.f32 %v5625, %v5637
    %v5644 = vadd.f32 %v5626, %v5637
    %v5645 = vadd.f32 %v5627, %v5637
    %v5646 = vadd.f32 %v5628, %v5637
    %v5647 = vadd.f32 %v5629, %v5637
    %v5648 = vadd.f32 %v5630, %v5637
    %v5649 = vadd.f32 %v5631, %v5637
    %v5650 = vadd.f32 %v5632, %v5637
    %v5651 = vadd.f32 %v5633, %v5637
    %v5652 = vadd.f32 %v5634, %v5637
    %v5653 = vadd.f32 %v5635, %v5637
    %s5654 = sld [smem:[#allocation2 + $0x38]]
    %v5655 = vstv %s5654
    %v5656 = vmul.f32 %v2606, %v5655
    %v5657 = vmul.f32 %v2607, %v5655
    %v5658 = vmul.f32 %v2608, %v5655
    %v5659 = vmul.f32 %v2609, %v5655
    %v5660 = vmul.f32 %v2610, %v5655
    %v5661 = vmul.f32 %v2611, %v5655
    %v5662 = vmul.f32 %v2612, %v5655
    %v5663 = vmul.f32 %v2613, %v5655
    %v5664 = vmul.f32 %v2614, %v5655
    %v5665 = vmul.f32 %v2615, %v5655
    %v5666 = vmul.f32 %v2616, %v5655
    %v5667 = vmul.f32 %v2617, %v5655
    %v5668 = vmul.f32 %v2618, %v5655
    %v5669 = vmul.f32 %v2619, %v5655
    %v5670 = vmul.f32 %v2620, %v5655
    %v5671 = vmul.f32 %v2621, %v5655
    %s5672 = sld [smem:[#allocation2 + $0x39]]
    %v5673 = vstv %s5672
    %v5674 = vmul.f32 %v3296, %v5673
    %v5675 = vmul.f32 %v3297, %v5673
    %v5676 = vmul.f32 %v3298, %v5673
    %v5677 = vmul.f32 %v3299, %v5673
    %v5678 = vmul.f32 %v3300, %v5673
    %v5679 = vmul.f32 %v3301, %v5673
    %v5680 = vmul.f32 %v3302, %v5673
    %v5681 = vmul.f32 %v3303, %v5673
    %v5682 = vmul.f32 %v3304, %v5673
    %v5683 = vmul.f32 %v3305, %v5673
    %v5684 = vmul.f32 %v3306, %v5673
    %v5685 = vmul.f32 %v3307, %v5673
    %v5686 = vmul.f32 %v3308, %v5673
    %v5687 = vmul.f32 %v3309, %v5673
    %v5688 = vmul.f32 %v3310, %v5673
    %v5689 = vmul.f32 %v3311, %v5673
    %v5690 = vadd.f32 %v5656, %v5674
    %v5691 = vadd.f32 %v5657, %v5675
    %v5692 = vadd.f32 %v5658, %v5676
    %v5693 = vadd.f32 %v5659, %v5677
    %v5694 = vadd.f32 %v5660, %v5678
    %v5695 = vadd.f32 %v5661, %v5679
    %v5696 = vadd.f32 %v5662, %v5680
    %v5697 = vadd.f32 %v5663, %v5681
    %v5698 = vadd.f32 %v5664, %v5682
    %v5699 = vadd.f32 %v5665, %v5683
    %v5700 = vadd.f32 %v5666, %v5684
    %v5701 = vadd.f32 %v5667, %v5685
    %v5702 = vadd.f32 %v5668, %v5686
    %v5703 = vadd.f32 %v5669, %v5687
    %v5704 = vadd.f32 %v5670, %v5688
    %v5705 = vadd.f32 %v5671, %v5689
    %s5706 = sld [smem:[#allocation2 + $0x3a]]
    %v5707 = vstv %s5706
    %v5708 = vmul.f32 %v3986, %v5707
    %v5709 = vmul.f32 %v3987, %v5707
    %v5710 = vmul.f32 %v3988, %v5707
    %v5711 = vmul.f32 %v3989, %v5707
    %v5712 = vmul.f32 %v3990, %v5707
    %v5713 = vmul.f32 %v3991, %v5707
    %v5714 = vmul.f32 %v3992, %v5707
    %v5715 = vmul.f32 %v3993, %v5707
    %v5716 = vmul.f32 %v3994, %v5707
    %v5717 = vmul.f32 %v3995, %v5707
    %v5718 = vmul.f32 %v3996, %v5707
    %v5719 = vmul.f32 %v3997, %v5707
    %v5720 = vmul.f32 %v3998, %v5707
    %v5721 = vmul.f32 %v3999, %v5707
    %v5722 = vmul.f32 %v4000, %v5707
    %v5723 = vmul.f32 %v4001, %v5707
    %v5724 = vadd.f32 %v5690, %v5708
    %v5725 = vadd.f32 %v5691, %v5709
    %v5726 = vadd.f32 %v5692, %v5710
    %v5727 = vadd.f32 %v5693, %v5711
    %v5728 = vadd.f32 %v5694, %v5712
    %v5729 = vadd.f32 %v5695, %v5713
    %v5730 = vadd.f32 %v5696, %v5714
    %v5731 = vadd.f32 %v5697, %v5715
    %v5732 = vadd.f32 %v5698, %v5716
    %v5733 = vadd.f32 %v5699, %v5717
    %v5734 = vadd.f32 %v5700, %v5718
    %v5735 = vadd.f32 %v5701, %v5719
    %v5736 = vadd.f32 %v5702, %v5720
    %v5737 = vadd.f32 %v5703, %v5721
    %v5738 = vadd.f32 %v5704, %v5722
    %v5739 = vadd.f32 %v5705, %v5723
    %s5740 = sld [smem:[#allocation2 + $0x3b]]
    %v5741 = vstv %s5740
    %v5742 = vmul.f32 %v4676, %v5741
    %v5743 = vmul.f32 %v4677, %v5741
    %v5744 = vmul.f32 %v4678, %v5741
    %v5745 = vmul.f32 %v4679, %v5741
    %v5746 = vmul.f32 %v4680, %v5741
    %v5747 = vmul.f32 %v4681, %v5741
    %v5748 = vmul.f32 %v4682, %v5741
    %v5749 = vmul.f32 %v4683, %v5741
    %v5750 = vmul.f32 %v4684, %v5741
    %v5751 = vmul.f32 %v4685, %v5741
    %v5752 = vmul.f32 %v4686, %v5741
    %v5753 = vmul.f32 %v4687, %v5741
    %v5754 = vmul.f32 %v4688, %v5741
    %v5755 = vmul.f32 %v4689, %v5741
    %v5756 = vmul.f32 %v4690, %v5741
    %v5757 = vmul.f32 %v4691, %v5741
    %v5758 = vadd.f32 %v5724, %v5742
    %v5759 = vadd.f32 %v5725, %v5743
    %v5760 = vadd.f32 %v5726, %v5744
    %v5761 = vadd.f32 %v5727, %v5745
    %v5762 = vadd.f32 %v5728, %v5746
    %v5763 = vadd.f32 %v5729, %v5747
    %v5764 = vadd.f32 %v5730, %v5748
    %v5765 = vadd.f32 %v5731, %v5749
    %v5766 = vadd.f32 %v5732, %v5750
    %v5767 = vadd.f32 %v5733, %v5751
    %v5768 = vadd.f32 %v5734, %v5752
    %v5769 = vadd.f32 %v5735, %v5753
    %v5770 = vadd.f32 %v5736, %v5754
    %v5771 = vadd.f32 %v5737, %v5755
    %v5772 = vadd.f32 %v5738, %v5756
    %v5773 = vadd.f32 %v5739, %v5757
    %v5790 = vrot.slane %v5758, 3
    %v5791 = vrot.slane %v5759, 3
    %v5792 = vrot.slane %v5760, 3
    %v5793 = vrot.slane %v5761, 3
    %v5794 = vrot.slane %v5762, 3
    %v5795 = vrot.slane %v5763, 3
    %v5796 = vrot.slane %v5764, 3
    %v5797 = vrot.slane %v5765, 3
    %v5798 = vrot.slane %v5766, 3
    %v5799 = vrot.slane %v5767, 3
    %v5800 = vrot.slane %v5768, 3
    %v5801 = vrot.slane %v5769, 3
    %v5802 = vrot.slane %v5770, 3
    %v5803 = vrot.slane %v5771, 3
    %v5804 = vrot.slane %v5772, 3
    %v5805 = vrot.slane %v5773, 3
    %v5822 = vadd.f32 %v239, %v5790
    %v5823 = vadd.f32 %v240, %v5791
    %v5824 = vadd.f32 %v241, %v5792
    %v5825 = vadd.f32 %v242, %v5793
    %v5826 = vadd.f32 %v243, %v5794
    %v5827 = vadd.f32 %v244, %v5795
    %v5828 = vadd.f32 %v245, %v5796
    %v5829 = vadd.f32 %v246, %v5797
    %v5830 = vadd.f32 %v247, %v5798
    %v5831 = vadd.f32 %v248, %v5799
    %v5832 = vadd.f32 %v249, %v5800
    %v5833 = vadd.f32 %v250, %v5801
    %v5834 = vadd.f32 %v251, %v5802
    %v5835 = vadd.f32 %v252, %v5803
    %v5836 = vadd.f32 %v253, %v5804
    %v5837 = vadd.f32 %v254, %v5805
    %s5838 = sld [smem:[#allocation2 + $0x49]]
    %v5839 = vstv %s5838
    %v5840 = vadd.f32 %v5822, %v5839
    %v5841 = vadd.f32 %v5823, %v5839
    %v5842 = vadd.f32 %v5824, %v5839
    %v5843 = vadd.f32 %v5825, %v5839
    %v5844 = vadd.f32 %v5826, %v5839
    %v5845 = vadd.f32 %v5827, %v5839
    %v5846 = vadd.f32 %v5828, %v5839
    %v5847 = vadd.f32 %v5829, %v5839
    %v5848 = vadd.f32 %v5830, %v5839
    %v5849 = vadd.f32 %v5831, %v5839
    %v5850 = vadd.f32 %v5832, %v5839
    %v5851 = vadd.f32 %v5833, %v5839
    %v5852 = vadd.f32 %v5834, %v5839
    %v5853 = vadd.f32 %v5835, %v5839
    %v5854 = vadd.f32 %v5836, %v5839
    %v5855 = vadd.f32 %v5837, %v5839
    %s5856 = sld [smem:[#allocation2 + $0x3c]]
    %v5857 = vstv %s5856
    %v5858 = vmul.f32 %v2606, %v5857
    %v5859 = vmul.f32 %v2607, %v5857
    %v5860 = vmul.f32 %v2608, %v5857
    %v5861 = vmul.f32 %v2609, %v5857
    %v5862 = vmul.f32 %v2610, %v5857
    %v5863 = vmul.f32 %v2611, %v5857
    %v5864 = vmul.f32 %v2612, %v5857
    %v5865 = vmul.f32 %v2613, %v5857
    %v5866 = vmul.f32 %v2614, %v5857
    %v5867 = vmul.f32 %v2615, %v5857
    %v5868 = vmul.f32 %v2616, %v5857
    %v5869 = vmul.f32 %v2617, %v5857
    %v5870 = vmul.f32 %v2618, %v5857
    %v5871 = vmul.f32 %v2619, %v5857
    %v5872 = vmul.f32 %v2620, %v5857
    %v5873 = vmul.f32 %v2621, %v5857
    %s5874 = sld [smem:[#allocation2 + $0x3d]]
    %v5875 = vstv %s5874
    %v5876 = vmul.f32 %v3296, %v5875
    %v5877 = vmul.f32 %v3297, %v5875
    %v5878 = vmul.f32 %v3298, %v5875
    %v5879 = vmul.f32 %v3299, %v5875
    %v5880 = vmul.f32 %v3300, %v5875
    %v5881 = vmul.f32 %v3301, %v5875
    %v5882 = vmul.f32 %v3302, %v5875
    %v5883 = vmul.f32 %v3303, %v5875
    %v5884 = vmul.f32 %v3304, %v5875
    %v5885 = vmul.f32 %v3305, %v5875
    %v5886 = vmul.f32 %v3306, %v5875
    %v5887 = vmul.f32 %v3307, %v5875
    %v5888 = vmul.f32 %v3308, %v5875
    %v5889 = vmul.f32 %v3309, %v5875
    %v5890 = vmul.f32 %v3310, %v5875
    %v5891 = vmul.f32 %v3311, %v5875
    %v5892 = vadd.f32 %v5858, %v5876
    %v5893 = vadd.f32 %v5859, %v5877
    %v5894 = vadd.f32 %v5860, %v5878
    %v5895 = vadd.f32 %v5861, %v5879
    %v5896 = vadd.f32 %v5862, %v5880
    %v5897 = vadd.f32 %v5863, %v5881
    %v5898 = vadd.f32 %v5864, %v5882
    %v5899 = vadd.f32 %v5865, %v5883
    %v5900 = vadd.f32 %v5866, %v5884
    %v5901 = vadd.f32 %v5867, %v5885
    %v5902 = vadd.f32 %v5868, %v5886
    %v5903 = vadd.f32 %v5869, %v5887
    %v5904 = vadd.f32 %v5870, %v5888
    %v5905 = vadd.f32 %v5871, %v5889
    %v5906 = vadd.f32 %v5872, %v5890
    %v5907 = vadd.f32 %v5873, %v5891
    %s5908 = sld [smem:[#allocation2 + $0x3e]]
    %v5909 = vstv %s5908
    %v5910 = vmul.f32 %v3986, %v5909
    %v5911 = vmul.f32 %v3987, %v5909
    %v5912 = vmul.f32 %v3988, %v5909
    %v5913 = vmul.f32 %v3989, %v5909
    %v5914 = vmul.f32 %v3990, %v5909
    %v5915 = vmul.f32 %v3991, %v5909
    %v5916 = vmul.f32 %v3992, %v5909
    %v5917 = vmul.f32 %v3993, %v5909
    %v5918 = vmul.f32 %v3994, %v5909
    %v5919 = vmul.f32 %v3995, %v5909
    %v5920 = vmul.f32 %v3996, %v5909
    %v5921 = vmul.f32 %v3997, %v5909
    %v5922 = vmul.f32 %v3998, %v5909
    %v5923 = vmul.f32 %v3999, %v5909
    %v5924 = vmul.f32 %v4000, %v5909
    %v5925 = vmul.f32 %v4001, %v5909
    %v5926 = vadd.f32 %v5892, %v5910
    %v5927 = vadd.f32 %v5893, %v5911
    %v5928 = vadd.f32 %v5894, %v5912
    %v5929 = vadd.f32 %v5895, %v5913
    %v5930 = vadd.f32 %v5896, %v5914
    %v5931 = vadd.f32 %v5897, %v5915
    %v5932 = vadd.f32 %v5898, %v5916
    %v5933 = vadd.f32 %v5899, %v5917
    %v5934 = vadd.f32 %v5900, %v5918
    %v5935 = vadd.f32 %v5901, %v5919
    %v5936 = vadd.f32 %v5902, %v5920
    %v5937 = vadd.f32 %v5903, %v5921
    %v5938 = vadd.f32 %v5904, %v5922
    %v5939 = vadd.f32 %v5905, %v5923
    %v5940 = vadd.f32 %v5906, %v5924
    %v5941 = vadd.f32 %v5907, %v5925
    %s5942 = sld [smem:[#allocation2 + $0x3f]]
    %v5943 = vstv %s5942
    %v5944 = vmul.f32 %v4676, %v5943
    %v5945 = vmul.f32 %v4677, %v5943
    %v5946 = vmul.f32 %v4678, %v5943
    %v5947 = vmul.f32 %v4679, %v5943
    %v5948 = vmul.f32 %v4680, %v5943
    %v5949 = vmul.f32 %v4681, %v5943
    %v5950 = vmul.f32 %v4682, %v5943
    %v5951 = vmul.f32 %v4683, %v5943
    %v5952 = vmul.f32 %v4684, %v5943
    %v5953 = vmul.f32 %v4685, %v5943
    %v5954 = vmul.f32 %v4686, %v5943
    %v5955 = vmul.f32 %v4687, %v5943
    %v5956 = vmul.f32 %v4688, %v5943
    %v5957 = vmul.f32 %v4689, %v5943
    %v5958 = vmul.f32 %v4690, %v5943
    %v5959 = vmul.f32 %v4691, %v5943
    %v5960 = vadd.f32 %v5926, %v5944
    %v5961 = vadd.f32 %v5927, %v5945
    %v5962 = vadd.f32 %v5928, %v5946
    %v5963 = vadd.f32 %v5929, %v5947
    %v5964 = vadd.f32 %v5930, %v5948
    %v5965 = vadd.f32 %v5931, %v5949
    %v5966 = vadd.f32 %v5932, %v5950
    %v5967 = vadd.f32 %v5933, %v5951
    %v5968 = vadd.f32 %v5934, %v5952
    %v5969 = vadd.f32 %v5935, %v5953
    %v5970 = vadd.f32 %v5936, %v5954
    %v5971 = vadd.f32 %v5937, %v5955
    %v5972 = vadd.f32 %v5938, %v5956
    %v5973 = vadd.f32 %v5939, %v5957
    %v5974 = vadd.f32 %v5940, %v5958
    %v5975 = vadd.f32 %v5941, %v5959
    %v5992 = vrot.slane %v5960, 2
    %v5993 = vrot.slane %v5961, 2
    %v5994 = vrot.slane %v5962, 2
    %v5995 = vrot.slane %v5963, 2
    %v5996 = vrot.slane %v5964, 2
    %v5997 = vrot.slane %v5965, 2
    %v5998 = vrot.slane %v5966, 2
    %v5999 = vrot.slane %v5967, 2
    %v6000 = vrot.slane %v5968, 2
    %v6001 = vrot.slane %v5969, 2
    %v6002 = vrot.slane %v5970, 2
    %v6003 = vrot.slane %v5971, 2
    %v6004 = vrot.slane %v5972, 2
    %v6005 = vrot.slane %v5973, 2
    %v6006 = vrot.slane %v5974, 2
    %v6007 = vrot.slane %v5975, 2
    %v6024 = vadd.f32 %v239, %v5992
    %v6025 = vadd.f32 %v240, %v5993
    %v6026 = vadd.f32 %v241, %v5994
    %v6027 = vadd.f32 %v242, %v5995
    %v6028 = vadd.f32 %v243, %v5996
    %v6029 = vadd.f32 %v244, %v5997
    %v6030 = vadd.f32 %v245, %v5998
    %v6031 = vadd.f32 %v246, %v5999
    %v6032 = vadd.f32 %v247, %v6000
    %v6033 = vadd.f32 %v248, %v6001
    %v6034 = vadd.f32 %v249, %v6002
    %v6035 = vadd.f32 %v250, %v6003
    %v6036 = vadd.f32 %v251, %v6004
    %v6037 = vadd.f32 %v252, %v6005
    %v6038 = vadd.f32 %v253, %v6006
    %v6039 = vadd.f32 %v254, %v6007
    %s6040 = sld [smem:[#allocation2 + $0x4a]]
    %v6041 = vstv %s6040
    %v6042 = vadd.f32 %v6024, %v6041
    %v6043 = vadd.f32 %v6025, %v6041
    %v6044 = vadd.f32 %v6026, %v6041
    %v6045 = vadd.f32 %v6027, %v6041
    %v6046 = vadd.f32 %v6028, %v6041
    %v6047 = vadd.f32 %v6029, %v6041
    %v6048 = vadd.f32 %v6030, %v6041
    %v6049 = vadd.f32 %v6031, %v6041
    %v6050 = vadd.f32 %v6032, %v6041
    %v6051 = vadd.f32 %v6033, %v6041
    %v6052 = vadd.f32 %v6034, %v6041
    %v6053 = vadd.f32 %v6035, %v6041
    %v6054 = vadd.f32 %v6036, %v6041
    %v6055 = vadd.f32 %v6037, %v6041
    %v6056 = vadd.f32 %v6038, %v6041
    %v6057 = vadd.f32 %v6039, %v6041
    %s6058 = sld [smem:[#allocation2 + $0x40]]
    %v6059 = vstv %s6058
    %v6060 = vmul.f32 %v2606, %v6059
    %v6061 = vmul.f32 %v2607, %v6059
    %v6062 = vmul.f32 %v2608, %v6059
    %v6063 = vmul.f32 %v2609, %v6059
    %v6064 = vmul.f32 %v2610, %v6059
    %v6065 = vmul.f32 %v2611, %v6059
    %v6066 = vmul.f32 %v2612, %v6059
    %v6067 = vmul.f32 %v2613, %v6059
    %v6068 = vmul.f32 %v2614, %v6059
    %v6069 = vmul.f32 %v2615, %v6059
    %v6070 = vmul.f32 %v2616, %v6059
    %v6071 = vmul.f32 %v2617, %v6059
    %v6072 = vmul.f32 %v2618, %v6059
    %v6073 = vmul.f32 %v2619, %v6059
    %v6074 = vmul.f32 %v2620, %v6059
    %v6075 = vmul.f32 %v2621, %v6059
    %s6076 = sld [smem:[#allocation2 + $0x41]]
    %v6077 = vstv %s6076
    %v6078 = vmul.f32 %v3296, %v6077
    %v6079 = vmul.f32 %v3297, %v6077
    %v6080 = vmul.f32 %v3298, %v6077
    %v6081 = vmul.f32 %v3299, %v6077
    %v6082 = vmul.f32 %v3300, %v6077
    %v6083 = vmul.f32 %v3301, %v6077
    %v6084 = vmul.f32 %v3302, %v6077
    %v6085 = vmul.f32 %v3303, %v6077
    %v6086 = vmul.f32 %v3304, %v6077
    %v6087 = vmul.f32 %v3305, %v6077
    %v6088 = vmul.f32 %v3306, %v6077
    %v6089 = vmul.f32 %v3307, %v6077
    %v6090 = vmul.f32 %v3308, %v6077
    %v6091 = vmul.f32 %v3309, %v6077
    %v6092 = vmul.f32 %v3310, %v6077
    %v6093 = vmul.f32 %v3311, %v6077
    %v6094 = vadd.f32 %v6060, %v6078
    %v6095 = vadd.f32 %v6061, %v6079
    %v6096 = vadd.f32 %v6062, %v6080
    %v6097 = vadd.f32 %v6063, %v6081
    %v6098 = vadd.f32 %v6064, %v6082
    %v6099 = vadd.f32 %v6065, %v6083
    %v6100 = vadd.f32 %v6066, %v6084
    %v6101 = vadd.f32 %v6067, %v6085
    %v6102 = vadd.f32 %v6068, %v6086
    %v6103 = vadd.f32 %v6069, %v6087
    %v6104 = vadd.f32 %v6070, %v6088
    %v6105 = vadd.f32 %v6071, %v6089
    %v6106 = vadd.f32 %v6072, %v6090
    %v6107 = vadd.f32 %v6073, %v6091
    %v6108 = vadd.f32 %v6074, %v6092
    %v6109 = vadd.f32 %v6075, %v6093
    %s6110 = sld [smem:[#allocation2 + $0x42]]
    %v6111 = vstv %s6110
    %v6112 = vmul.f32 %v3986, %v6111
    %v6113 = vmul.f32 %v3987, %v6111
    %v6114 = vmul.f32 %v3988, %v6111
    %v6115 = vmul.f32 %v3989, %v6111
    %v6116 = vmul.f32 %v3990, %v6111
    %v6117 = vmul.f32 %v3991, %v6111
    %v6118 = vmul.f32 %v3992, %v6111
    %v6119 = vmul.f32 %v3993, %v6111
    %v6120 = vmul.f32 %v3994, %v6111
    %v6121 = vmul.f32 %v3995, %v6111
    %v6122 = vmul.f32 %v3996, %v6111
    %v6123 = vmul.f32 %v3997, %v6111
    %v6124 = vmul.f32 %v3998, %v6111
    %v6125 = vmul.f32 %v3999, %v6111
    %v6126 = vmul.f32 %v4000, %v6111
    %v6127 = vmul.f32 %v4001, %v6111
    %v6128 = vadd.f32 %v6094, %v6112
    %v6129 = vadd.f32 %v6095, %v6113
    %v6130 = vadd.f32 %v6096, %v6114
    %v6131 = vadd.f32 %v6097, %v6115
    %v6132 = vadd.f32 %v6098, %v6116
    %v6133 = vadd.f32 %v6099, %v6117
    %v6134 = vadd.f32 %v6100, %v6118
    %v6135 = vadd.f32 %v6101, %v6119
    %v6136 = vadd.f32 %v6102, %v6120
    %v6137 = vadd.f32 %v6103, %v6121
    %v6138 = vadd.f32 %v6104, %v6122
    %v6139 = vadd.f32 %v6105, %v6123
    %v6140 = vadd.f32 %v6106, %v6124
    %v6141 = vadd.f32 %v6107, %v6125
    %v6142 = vadd.f32 %v6108, %v6126
    %v6143 = vadd.f32 %v6109, %v6127
    %s6144 = sld [smem:[#allocation2 + $0x43]]
    %v6145 = vstv %s6144
    %v6146 = vmul.f32 %v4676, %v6145
    %v6147 = vmul.f32 %v4677, %v6145
    %v6148 = vmul.f32 %v4678, %v6145
    %v6149 = vmul.f32 %v4679, %v6145
    %v6150 = vmul.f32 %v4680, %v6145
    %v6151 = vmul.f32 %v4681, %v6145
    %v6152 = vmul.f32 %v4682, %v6145
    %v6153 = vmul.f32 %v4683, %v6145
    %v6154 = vmul.f32 %v4684, %v6145
    %v6155 = vmul.f32 %v4685, %v6145
    %v6156 = vmul.f32 %v4686, %v6145
    %v6157 = vmul.f32 %v4687, %v6145
    %v6158 = vmul.f32 %v4688, %v6145
    %v6159 = vmul.f32 %v4689, %v6145
    %v6160 = vmul.f32 %v4690, %v6145
    %v6161 = vmul.f32 %v4691, %v6145
    %v6162 = vadd.f32 %v6128, %v6146
    %v6163 = vadd.f32 %v6129, %v6147
    %v6164 = vadd.f32 %v6130, %v6148
    %v6165 = vadd.f32 %v6131, %v6149
    %v6166 = vadd.f32 %v6132, %v6150
    %v6167 = vadd.f32 %v6133, %v6151
    %v6168 = vadd.f32 %v6134, %v6152
    %v6169 = vadd.f32 %v6135, %v6153
    %v6170 = vadd.f32 %v6136, %v6154
    %v6171 = vadd.f32 %v6137, %v6155
    %v6172 = vadd.f32 %v6138, %v6156
    %v6173 = vadd.f32 %v6139, %v6157
    %v6174 = vadd.f32 %v6140, %v6158
    %v6175 = vadd.f32 %v6141, %v6159
    %v6176 = vadd.f32 %v6142, %v6160
    %v6177 = vadd.f32 %v6143, %v6161
    %v6194 = vrot.slane %v6162, 1
    %v6195 = vrot.slane %v6163, 1
    %v6196 = vrot.slane %v6164, 1
    %v6197 = vrot.slane %v6165, 1
    %v6198 = vrot.slane %v6166, 1
    %v6199 = vrot.slane %v6167, 1
    %v6200 = vrot.slane %v6168, 1
    %v6201 = vrot.slane %v6169, 1
    %v6202 = vrot.slane %v6170, 1
    %v6203 = vrot.slane %v6171, 1
    %v6204 = vrot.slane %v6172, 1
    %v6205 = vrot.slane %v6173, 1
    %v6206 = vrot.slane %v6174, 1
    %v6207 = vrot.slane %v6175, 1
    %v6208 = vrot.slane %v6176, 1
    %v6209 = vrot.slane %v6177, 1
    %v6226 = vadd.f32 %v239, %v6194
    %v6227 = vadd.f32 %v240, %v6195
    %v6228 = vadd.f32 %v241, %v6196
    %v6229 = vadd.f32 %v242, %v6197
    %v6230 = vadd.f32 %v243, %v6198
    %v6231 = vadd.f32 %v244, %v6199
    %v6232 = vadd.f32 %v245, %v6200
    %v6233 = vadd.f32 %v246, %v6201
    %v6234 = vadd.f32 %v247, %v6202
    %v6235 = vadd.f32 %v248, %v6203
    %v6236 = vadd.f32 %v249, %v6204
    %v6237 = vadd.f32 %v250, %v6205
    %v6238 = vadd.f32 %v251, %v6206
    %v6239 = vadd.f32 %v252, %v6207
    %v6240 = vadd.f32 %v253, %v6208
    %v6241 = vadd.f32 %v254, %v6209
    %s6242 = sld [smem:[#allocation2 + $0x4b]]
    %v6243 = vstv %s6242
    %v6244 = vadd.f32 %v6226, %v6243
    %v6245 = vadd.f32 %v6227, %v6243
    %v6246 = vadd.f32 %v6228, %v6243
    %v6247 = vadd.f32 %v6229, %v6243
    %v6248 = vadd.f32 %v6230, %v6243
    %v6249 = vadd.f32 %v6231, %v6243
    %v6250 = vadd.f32 %v6232, %v6243
    %v6251 = vadd.f32 %v6233, %v6243
    %v6252 = vadd.f32 %v6234, %v6243
    %v6253 = vadd.f32 %v6235, %v6243
    %v6254 = vadd.f32 %v6236, %v6243
    %v6255 = vadd.f32 %v6237, %v6243
    %v6256 = vadd.f32 %v6238, %v6243
    %v6257 = vadd.f32 %v6239, %v6243
    %v6258 = vadd.f32 %v6240, %v6243
    %v6259 = vadd.f32 %v6241, %v6243
    %v6276 = vrot.slane %v4831, 7
    %v6277 = vsel %vm272, %v6276, %v4830
    %v6278 = vrot.slane %v4832, 6
    %v6279 = vsel %vm275, %v6278, %v6277
    %v6280 = vrot.slane %v4833, 5
    %v6281 = vsel %vm278, %v6280, %v6279
    %v6282 = vrot.slane %v4834, 4
    %v6283 = vsel %vm281, %v6282, %v6281
    %v6284 = vrot.slane %v4835, 3
    %v6285 = vsel %vm284, %v6284, %v6283
    %v6286 = vrot.slane %v4836, 2
    %v6287 = vsel %vm287, %v6286, %v6285
    %v6288 = vrot.slane %v4837, 1
    %v6289 = vsel %vm290, %v6288, %v6287
    %v6290 = vrot.slane %v4839, 7
    %v6291 = vsel %vm272, %v6290, %v4838
    %v6292 = vrot.slane %v4840, 6
    %v6293 = vsel %vm275, %v6292, %v6291
    %v6294 = vrot.slane %v4841, 5
    %v6295 = vsel %vm278, %v6294, %v6293
    %v6296 = vrot.slane %v4842, 4
    %v6297 = vsel %vm281, %v6296, %v6295
    %v6298 = vrot.slane %v4843, 3
    %v6299 = vsel %vm284, %v6298, %v6297
    %v6300 = vrot.slane %v4844, 2
    %v6301 = vsel %vm287, %v6300, %v6299
    %v6302 = vrot.slane %v4845, 1
    %v6303 = vsel %vm290, %v6302, %v6301
    %v6306 = vsel %vm308, %v6289, 0.0
    %6307 = vadd.xlane.f32.xlu0 %v6306
    %v6308 = vpop.xlane.xlu0 %6307
    %v6309 = vsel %vm308, %v6303, 0.0
    %6310 = vadd.xlane.f32.xlu0 %v6309
    %v6311 = vpop.xlane.xlu0 %6310
    %v6312 = vmul.f32 %v6308, %v315
    %v6313 = vmul.f32 %v6311, %v315
    %v6314 = vmul.f32 %v4830, %v4830
    %v6315 = vmul.f32 %v4831, %v4831
    %v6316 = vmul.f32 %v4832, %v4832
    %v6317 = vmul.f32 %v4833, %v4833
    %v6318 = vmul.f32 %v4834, %v4834
    %v6319 = vmul.f32 %v4835, %v4835
    %v6320 = vmul.f32 %v4836, %v4836
    %v6321 = vmul.f32 %v4837, %v4837
    %v6322 = vmul.f32 %v4838, %v4838
    %v6323 = vmul.f32 %v4839, %v4839
    %v6324 = vmul.f32 %v4840, %v4840
    %v6325 = vmul.f32 %v4841, %v4841
    %v6326 = vmul.f32 %v4842, %v4842
    %v6327 = vmul.f32 %v4843, %v4843
    %v6328 = vmul.f32 %v4844, %v4844
    %v6329 = vmul.f32 %v4845, %v4845
    %v6346 = vrot.slane %v6315, 7
    %v6347 = vsel %vm272, %v6346, %v6314
    %v6348 = vrot.slane %v6316, 6
    %v6349 = vsel %vm275, %v6348, %v6347
    %v6350 = vrot.slane %v6317, 5
    %v6351 = vsel %vm278, %v6350, %v6349
    %v6352 = vrot.slane %v6318, 4
    %v6353 = vsel %vm281, %v6352, %v6351
    %v6354 = vrot.slane %v6319, 3
    %v6355 = vsel %vm284, %v6354, %v6353
    %v6356 = vrot.slane %v6320, 2
    %v6357 = vsel %vm287, %v6356, %v6355
    %v6358 = vrot.slane %v6321, 1
    %v6359 = vsel %vm290, %v6358, %v6357
    %v6360 = vrot.slane %v6323, 7
    %v6361 = vsel %vm272, %v6360, %v6322
    %v6362 = vrot.slane %v6324, 6
    %v6363 = vsel %vm275, %v6362, %v6361
    %v6364 = vrot.slane %v6325, 5
    %v6365 = vsel %vm278, %v6364, %v6363
    %v6366 = vrot.slane %v6326, 4
    %v6367 = vsel %vm281, %v6366, %v6365
    %v6368 = vrot.slane %v6327, 3
    %v6369 = vsel %vm284, %v6368, %v6367
    %v6370 = vrot.slane %v6328, 2
    %v6371 = vsel %vm287, %v6370, %v6369
    %v6372 = vrot.slane %v6329, 1
    %v6373 = vsel %vm290, %v6372, %v6371
    %v6376 = vsel %vm308, %v6359, 0.0
    %6377 = vadd.xlane.f32.xlu0 %v6376
    %v6378 = vpop.xlane.xlu0 %6377
    %v6379 = vsel %vm308, %v6373, 0.0
    %6380 = vadd.xlane.f32.xlu0 %v6379
    %v6381 = vpop.xlane.xlu0 %6380
    %v6382 = vmul.f32 %v6378, %v315
    %v6383 = vmul.f32 %v6381, %v315
    %v6386 = vrot.slane %v6312, 1
    %v6387 = vrot.slane %v6312, 2
    %v6388 = vrot.slane %v6312, 3
    %v6389 = vrot.slane %v6312, 4
    %v6390 = vrot.slane %v6312, 5
    %v6391 = vrot.slane %v6312, 6
    %v6392 = vrot.slane %v6312, 7
    %v6393 = vrot.slane %v6313, 1
    %v6394 = vrot.slane %v6313, 2
    %v6395 = vrot.slane %v6313, 3
    %v6396 = vrot.slane %v6313, 4
    %v6397 = vrot.slane %v6313, 5
    %v6398 = vrot.slane %v6313, 6
    %v6399 = vrot.slane %v6313, 7
    %v6416 = vsub.f32 %v4830, %v6312
    %v6417 = vsub.f32 %v4831, %v6386
    %v6418 = vsub.f32 %v4832, %v6387
    %v6419 = vsub.f32 %v4833, %v6388
    %v6420 = vsub.f32 %v4834, %v6389
    %v6421 = vsub.f32 %v4835, %v6390
    %v6422 = vsub.f32 %v4836, %v6391
    %v6423 = vsub.f32 %v4837, %v6392
    %v6424 = vsub.f32 %v4838, %v6313
    %v6425 = vsub.f32 %v4839, %v6393
    %v6426 = vsub.f32 %v4840, %v6394
    %v6427 = vsub.f32 %v4841, %v6395
    %v6428 = vsub.f32 %v4842, %v6396
    %v6429 = vsub.f32 %v4843, %v6397
    %v6430 = vsub.f32 %v4844, %v6398
    %v6431 = vsub.f32 %v4845, %v6399
    %v6432 = vmul.f32 %v6312, %v6312
    %v6433 = vmul.f32 %v6313, %v6313
    %v6434 = vsub.f32 %v6382, %v6432
    %v6435 = vsub.f32 %v6383, %v6433
    %v6436 = vadd.f32 %v6434, 1e-05
    %v6437 = vadd.f32 %v6435, 1e-05
    %v6438 = vrsqrt.pop %v6436
    %v6439 = vrsqrt.pop %v6437
    %v6442 = vrot.slane %v6438, 1
    %v6443 = vrot.slane %v6438, 2
    %v6444 = vrot.slane %v6438, 3
    %v6445 = vrot.slane %v6438, 4
    %v6446 = vrot.slane %v6438, 5
    %v6447 = vrot.slane %v6438, 6
    %v6448 = vrot.slane %v6438, 7
    %v6449 = vrot.slane %v6439, 1
    %v6450 = vrot.slane %v6439, 2
    %v6451 = vrot.slane %v6439, 3
    %v6452 = vrot.slane %v6439, 4
    %v6453 = vrot.slane %v6439, 5
    %v6454 = vrot.slane %v6439, 6
    %v6455 = vrot.slane %v6439, 7
    %v6472 = vmul.f32 %v6416, %v6438
    %v6473 = vmul.f32 %v6417, %v6442
    %v6474 = vmul.f32 %v6418, %v6443
    %v6475 = vmul.f32 %v6419, %v6444
    %v6476 = vmul.f32 %v6420, %v6445
    %v6477 = vmul.f32 %v6421, %v6446
    %v6478 = vmul.f32 %v6422, %v6447
    %v6479 = vmul.f32 %v6423, %v6448
    %v6480 = vmul.f32 %v6424, %v6439
    %v6481 = vmul.f32 %v6425, %v6449
    %v6482 = vmul.f32 %v6426, %v6450
    %v6483 = vmul.f32 %v6427, %v6451
    %v6484 = vmul.f32 %v6428, %v6452
    %v6485 = vmul.f32 %v6429, %v6453
    %v6486 = vmul.f32 %v6430, %v6454
    %v6487 = vmul.f32 %v6431, %v6455
    %v6488 = vlaneseq
    %v6489 = vshrl.u32 %v6488, 7
    %v6490 = vsub.s32 2, %v6489
    %v6491 = vrot.slane %v43, %v6490
    %v6492 = vmul.f32 %v6472, %v6491
    %v6493 = vmul.f32 %v6473, %v6491
    %v6494 = vmul.f32 %v6474, %v6491
    %v6495 = vmul.f32 %v6475, %v6491
    %v6496 = vmul.f32 %v6476, %v6491
    %v6497 = vmul.f32 %v6477, %v6491
    %v6498 = vmul.f32 %v6478, %v6491
    %v6499 = vmul.f32 %v6479, %v6491
    %v6500 = vmul.f32 %v6480, %v6491
    %v6501 = vmul.f32 %v6481, %v6491
    %v6502 = vmul.f32 %v6482, %v6491
    %v6503 = vmul.f32 %v6483, %v6491
    %v6504 = vmul.f32 %v6484, %v6491
    %v6505 = vmul.f32 %v6485, %v6491
    %v6506 = vmul.f32 %v6486, %v6491
    %v6507 = vmul.f32 %v6487, %v6491
    %v6508 = vlaneseq
    %v6509 = vshrl.u32 %v6508, 7
    %v6510 = vsub.s32 3, %v6509
    %v6511 = vrot.slane %v43, %v6510
    %v6512 = vadd.f32 %v6492, %v6511
    %v6513 = vadd.f32 %v6493, %v6511
    %v6514 = vadd.f32 %v6494, %v6511
    %v6515 = vadd.f32 %v6495, %v6511
    %v6516 = vadd.f32 %v6496, %v6511
    %v6517 = vadd.f32 %v6497, %v6511
    %v6518 = vadd.f32 %v6498, %v6511
    %v6519 = vadd.f32 %v6499, %v6511
    %v6520 = vadd.f32 %v6500, %v6511
    %v6521 = vadd.f32 %v6501, %v6511
    %v6522 = vadd.f32 %v6502, %v6511
    %v6523 = vadd.f32 %v6503, %v6511
    %v6524 = vadd.f32 %v6504, %v6511
    %v6525 = vadd.f32 %v6505, %v6511
    %v6526 = vadd.f32 %v6506, %v6511
    %v6527 = vadd.f32 %v6507, %v6511
    %v6528 = vld [vmem:[%s5] sm:$0xff]
    %v6529 = vld [vmem:[%s5 + $0x8] sm:$0xff]
    %v6530 = vld [vmem:[%s5 + $0x10] sm:$0xff]
    %v6531 = vld [vmem:[%s5 + $0x18] sm:$0xff]
    %v6532 = vlaneseq
    %v6533 = vshrl.u32 %v6532, 7
    %v6534 = vsub.s32 6, %v6533
    %v6535 = vrot.slane %v43, %v6534
    %v6552 = vrot.slane %v6513, 7
    %v6553 = vsel %vm272, %v6552, %v6512
    %v6554 = vrot.slane %v6514, 6
    %v6555 = vsel %vm275, %v6554, %v6553
    %v6556 = vrot.slane %v6515, 5
    %v6557 = vsel %vm278, %v6556, %v6555
    %v6558 = vrot.slane %v6516, 4
    %v6559 = vsel %vm281, %v6558, %v6557
    %v6560 = vrot.slane %v6517, 3
    %v6561 = vsel %vm284, %v6560, %v6559
    %v6562 = vrot.slane %v6518, 2
    %v6563 = vsel %vm287, %v6562, %v6561
    %v6564 = vrot.slane %v6519, 1
    %v6565 = vsel %vm290, %v6564, %v6563
    %v6566 = vrot.slane %v6521, 7
    %v6567 = vsel %vm272, %v6566, %v6520
    %v6568 = vrot.slane %v6522, 6
    %v6569 = vsel %vm275, %v6568, %v6567
    %v6570 = vrot.slane %v6523, 5
    %v6571 = vsel %vm278, %v6570, %v6569
    %v6572 = vrot.slane %v6524, 4
    %v6573 = vsel %vm281, %v6572, %v6571
    %v6574 = vrot.slane %v6525, 3
    %v6575 = vsel %vm284, %v6574, %v6573
    %v6576 = vrot.slane %v6526, 2
    %v6577 = vsel %vm287, %v6576, %v6575
    %v6578 = vrot.slane %v6527, 1
    %v6579 = vsel %vm290, %v6578, %v6577
    %v6580 = vsel %vm308, %v6565, 0
    %v6582 = vsel %vm308, %v6579, 0
    %6584 = vmatprep.subr.mxu0 0.0
    %6585 = vmatpush1.msra.mxu0 0.0
    %6586 = vmatprep.subr.mxu0 0.0
    %6587 = vmatpush1.msra.mxu0 0.0
    %6588 = vmatprep.subr.mxu0 0.0
    %6589 = vmatpush1.msra.mxu0 0.0
    %6590 = vmatprep.subr.mxu0 0.0
    %6591 = vmatpush1.msra.mxu0 0.0
    %6592 = vmatprep.subr.mxu0 0.0
    %6593 = vmatpush1.msra.mxu0 0.0
    %6594 = vmatprep.subr.mxu0 0.0
    %6595 = vmatpush1.msra.mxu0 0.0
    %6596 = vmatprep.subr.mxu0 0.0
    %6597 = vmatpush1.msra.mxu0 0.0
    %6598 = vmatprep.subr.mxu0 0.0
    %6599 = vmatpush1.msra.mxu0 0.0
    %6600 = vmatprep.subr.mxu0 0.0
    %6601 = vmatpush1.msra.mxu0 0.0
    %6602 = vmatprep.subr.mxu0 0.0
    %6603 = vmatpush1.msra.mxu0 0.0
    %6604 = vmatprep.subr.mxu0 0.0
    %6605 = vmatpush1.msra.mxu0 0.0
    %6606 = vmatprep.subr.mxu0 0.0
    %6607 = vmatpush1.msra.mxu0 0.0
    %6608 = vmatprep.subr.mxu0 0.0
    %6609 = vmatpush1.msra.mxu0 %v6531
    %6610 = vmatprep.subr.mxu0 0.0
    %6611 = vmatpush1.msra.mxu0 %v6530
    %6612 = vmatprep.subr.mxu0 0.0
    %6613 = vmatpush1.msra.mxu0 %v6529
    %6614 = vmatprep.subr.mxu0 0.0
    %6615 = vmatpush1.msra.mxu0 %v6528
    %6616 = vmatprep.subr.mxu0 0.0
    %6617 = vmatpush2.msra.mxu0 0.0
    %6618 = vmatprep.subr.mxu0 0.0
    %6619 = vmatpush2.msra.mxu0 0.0
    %6620 = vmatprep.subr.mxu0 0.0
    %6621 = vmatpush2.msra.mxu0 0.0
    %6622 = vmatprep.subr.mxu0 0.0
    %6623 = vmatpush2.msra.mxu0 0.0
    %6624 = vmatprep.subr.mxu0 0.0
    %6625 = vmatpush2.msra.mxu0 0.0
    %6626 = vmatprep.subr.mxu0 0.0
    %6627 = vmatpush2.msra.mxu0 0.0
    %6628 = vmatprep.subr.mxu0 0.0
    %6629 = vmatpush2.msra.mxu0 0.0
    %6630 = vmatprep.subr.mxu0 0.0
    %6631 = vmatpush2.msra.mxu0 0.0
    %6632 = vmatprep.subr.mxu0 0.0
    %6633 = vmatpush2.msra.mxu0 0.0
    %6634 = vmatprep.subr.mxu0 0.0
    %6635 = vmatpush2.msra.mxu0 0.0
    %6636 = vmatprep.subr.mxu0 0.0
    %6637 = vmatpush2.msra.mxu0 0.0
    %6638 = vmatprep.subr.mxu0 0.0
    %6639 = vmatpush2.msra.mxu0 0.0
    %6640 = vmatprep.subr.mxu0 0.0
    %6641 = vmatpush2.msra.mxu0 0.0
    %6642 = vmatprep.subr.mxu0 0.0
    %6643 = vmatpush2.msra.mxu0 0.0
    %6644 = vmatprep.subr.mxu0 0.0
    %6645 = vmatpush2.msra.mxu0 0.0
    %6646 = vmatprep.subr.mxu0 0.0
    %6647 = vmatpush2.msra.mxu0 0.0
    %6648 = vmatprep.mubr.f32.mxu0 0.0
    %6649 = vmatmul.mubr.f32.gmra.mxu0 %v6580
    %v6650 = vpop.f32.mrf.mxu0
    %v6651 = vadd.f32 %v6535, %v6650
    %v6652 = vpop.f32.mrf.mxu0
    %6653 = vmatprep.mubr.f32.mxu0 0.0
    %6654 = vmatmul.mubr.f32.gmra.mxu0 %v6582
    %v6655 = vpop.f32.mrf.mxu0
    %v6656 = vadd.f32 %v6535, %v6655
    %v6657 = vpop.f32.mrf.mxu0
    %6658 = vdwg.mxu0
    %v6659 = vmul.f32 %v6651, 0.5
    %v6660 = vmul.f32 %v6656, 0.5
    %v6661 = vmul.f32 %v6651, 0.70710677
    %v6662 = vmul.f32 %v6656, 0.70710677
    %v6663 = verf.f32.pop %v6661
    %v6664 = verf.f32.pop %v6662
    %v6665 = vadd.f32 %v6663, 1.0
    %v6666 = vadd.f32 %v6664, 1.0
    %v6667 = vmul.f32 %v6659, %v6665
    %v6668 = vmul.f32 %v6660, %v6666
    %v6669 = vld [vmem:[%s6] sm:$0xff]
    %v6670 = vld [vmem:[%s6 + $0x8] sm:$0xff]
    %v6671 = vld [vmem:[%s6 + $0x10] sm:$0xff]
    %v6672 = vld [vmem:[%s6 + $0x18] sm:$0xff]
    %v6673 = vld [vmem:[%s6 + $0x20] sm:$0xff]
    %v6674 = vld [vmem:[%s6 + $0x28] sm:$0xff]
    %v6675 = vld [vmem:[%s6 + $0x30] sm:$0xff]
    %v6676 = vld [vmem:[%s6 + $0x38] sm:$0xff]
    %v6677 = vld [vmem:[%s6 + $0x40] sm:$0xff]
    %v6678 = vld [vmem:[%s6 + $0x48] sm:$0xff]
    %v6679 = vld [vmem:[%s6 + $0x50] sm:$0xff]
    %v6680 = vld [vmem:[%s6 + $0x58] sm:$0xff]
    %v6681 = vld [vmem:[%s6 + $0x60] sm:$0xff]
    %v6682 = vld [vmem:[%s6 + $0x68] sm:$0xff]
    %v6683 = vld [vmem:[%s6 + $0x70] sm:$0xff]
    %v6684 = vld [vmem:[%s6 + $0x78] sm:$0xff]
    %6685 = vmatprep.subr.mxu0 0.0
    %6686 = vmatpush1.msra.mxu0 %v6684
    %6687 = vmatprep.subr.mxu0 0.0
    %6688 = vmatpush1.msra.mxu0 %v6683
    %6689 = vmatprep.subr.mxu0 0.0
    %6690 = vmatpush1.msra.mxu0 %v6682
    %6691 = vmatprep.subr.mxu0 0.0
    %6692 = vmatpush1.msra.mxu0 %v6681
    %6693 = vmatprep.subr.mxu0 0.0
    %6694 = vmatpush1.msra.mxu0 %v6680
    %6695 = vmatprep.subr.mxu0 0.0
    %6696 = vmatpush1.msra.mxu0 %v6679
    %6697 = vmatprep.subr.mxu0 0.0
    %6698 = vmatpush1.msra.mxu0 %v6678
    %6699 = vmatprep.subr.mxu0 0.0
    %6700 = vmatpush1.msra.mxu0 %v6677
    %6701 = vmatprep.subr.mxu0 0.0
    %6702 = vmatpush1.msra.mxu0 %v6676
    %6703 = vmatprep.subr.mxu0 0.0
    %6704 = vmatpush1.msra.mxu0 %v6675
    %6705 = vmatprep.subr.mxu0 0.0
    %6706 = vmatpush1.msra.mxu0 %v6674
    %6707 = vmatprep.subr.mxu0 0.0
    %6708 = vmatpush1.msra.mxu0 %v6673
    %6709 = vmatprep.subr.mxu0 0.0
    %6710 = vmatpush1.msra.mxu0 %v6672
    %6711 = vmatprep.subr.mxu0 0.0
    %6712 = vmatpush1.msra.mxu0 %v6671
    %6713 = vmatprep.subr.mxu0 0.0
    %6714 = vmatpush1.msra.mxu0 %v6670
    %6715 = vmatprep.subr.mxu0 0.0
    %6716 = vmatpush1.msra.mxu0 %v6669
    %6717 = vmatprep.subr.mxu0 0.0
    %6718 = vmatpush2.msra.mxu0 0.0
    %6719 = vmatprep.subr.mxu0 0.0
    %6720 = vmatpush2.msra.mxu0 0.0
    %6721 = vmatprep.subr.mxu0 0.0
    %6722 = vmatpush2.msra.mxu0 0.0
    %6723 = vmatprep.subr.mxu0 0.0
    %6724 = vmatpush2.msra.mxu0 0.0
    %6725 = vmatprep.subr.mxu0 0.0
    %6726 = vmatpush2.msra.mxu0 0.0
    %6727 = vmatprep.subr.mxu0 0.0
    %6728 = vmatpush2.msra.mxu0 0.0
    %6729 = vmatprep.subr.mxu0 0.0
    %6730 = vmatpush2.msra.mxu0 0.0
    %6731 = vmatprep.subr.mxu0 0.0
    %6732 = vmatpush2.msra.mxu0 0.0
    %6733 = vmatprep.subr.mxu0 0.0
    %6734 = vmatpush2.msra.mxu0 0.0
    %6735 = vmatprep.subr.mxu0 0.0
    %6736 = vmatpush2.msra.mxu0 0.0
    %6737 = vmatprep.subr.mxu0 0.0
    %6738 = vmatpush2.msra.mxu0 0.0
    %6739 = vmatprep.subr.mxu0 0.0
    %6740 = vmatpush2.msra.mxu0 0.0
    %6741 = vmatprep.subr.mxu0 0.0
    %6742 = vmatpush2.msra.mxu0 0.0
    %6743 = vmatprep.subr.mxu0 0.0
    %6744 = vmatpush2.msra.mxu0 0.0
    %6745 = vmatprep.subr.mxu0 0.0
    %6746 = vmatpush2.msra.mxu0 0.0
    %6747 = vmatprep.subr.mxu0 0.0
    %6748 = vmatpush2.msra.mxu0 0.0
    %6749 = vmatprep.mubr.f32.mxu0 0.0
    %6750 = vmatmul.mubr.f32.gmra.mxu0 %v6667
    %v6751 = vpop.f32.mrf.mxu0
    %v6752 = vadd.f32 0.0, %v6751
    %v6753 = vpop.f32.mrf.mxu0
    %6754 = vmatprep.mubr.f32.mxu0 0.0
    %6755 = vmatmul.mubr.f32.gmra.mxu0 %v6668
    %v6756 = vpop.f32.mrf.mxu0
    %v6757 = vadd.f32 0.0, %v6756
    %v6758 = vpop.f32.mrf.mxu0
    %6759 = vdwg.mxu0
    %v6762 = vrot.slane %v6752, 1
    %v6763 = vrot.slane %v6752, 2
    %v6764 = vrot.slane %v6752, 3
    %v6765 = vrot.slane %v6752, 4
    %v6766 = vrot.slane %v6752, 5
    %v6767 = vrot.slane %v6752, 6
    %v6768 = vrot.slane %v6752, 7
    %v6769 = vrot.slane %v6757, 1
    %v6770 = vrot.slane %v6757, 2
    %v6771 = vrot.slane %v6757, 3
    %v6772 = vrot.slane %v6757, 4
    %v6773 = vrot.slane %v6757, 5
    %v6774 = vrot.slane %v6757, 6
    %v6775 = vrot.slane %v6757, 7
    %v6792 = vadd.f32 %v4830, %v6752
    %v6793 = vadd.f32 %v4831, %v6762
    %v6794 = vadd.f32 %v4832, %v6763
    %v6795 = vadd.f32 %v4833, %v6764
    %v6796 = vadd.f32 %v4834, %v6765
    %v6797 = vadd.f32 %v4835, %v6766
    %v6798 = vadd.f32 %v4836, %v6767
    %v6799 = vadd.f32 %v4837, %v6768
    %v6800 = vadd.f32 %v4838, %v6757
    %v6801 = vadd.f32 %v4839, %v6769
    %v6802 = vadd.f32 %v4840, %v6770
    %v6803 = vadd.f32 %v4841, %v6771
    %v6804 = vadd.f32 %v4842, %v6772
    %v6805 = vadd.f32 %v4843, %v6773
    %v6806 = vadd.f32 %v4844, %v6774
    %v6807 = vadd.f32 %v4845, %v6775
    %v6808 = vlaneseq
    %v6809 = vshrl.u32 %v6808, 7
    %v6810 = vsub.s32 7, %v6809
    %v6811 = vrot.slane %v43, %v6810
    %v6812 = vadd.f32 %v6792, %v6811
    %v6813 = vadd.f32 %v6793, %v6811
    %v6814 = vadd.f32 %v6794, %v6811
    %v6815 = vadd.f32 %v6795, %v6811
    %v6816 = vadd.f32 %v6796, %v6811
    %v6817 = vadd.f32 %v6797, %v6811
    %v6818 = vadd.f32 %v6798, %v6811
    %v6819 = vadd.f32 %v6799, %v6811
    %v6820 = vadd.f32 %v6800, %v6811
    %v6821 = vadd.f32 %v6801, %v6811
    %v6822 = vadd.f32 %v6802, %v6811
    %v6823 = vadd.f32 %v6803, %v6811
    %v6824 = vadd.f32 %v6804, %v6811
    %v6825 = vadd.f32 %v6805, %v6811
    %v6826 = vadd.f32 %v6806, %v6811
    %v6827 = vadd.f32 %v6807, %v6811
    %v6844 = vrot.slane %v6813, 7
    %v6845 = vsel %vm272, %v6844, %v6812
    %v6846 = vrot.slane %v6814, 6
    %v6847 = vsel %vm275, %v6846, %v6845
    %v6848 = vrot.slane %v6815, 5
    %v6849 = vsel %vm278, %v6848, %v6847
    %v6850 = vrot.slane %v6816, 4
    %v6851 = vsel %vm281, %v6850, %v6849
    %v6852 = vrot.slane %v6817, 3
    %v6853 = vsel %vm284, %v6852, %v6851
    %v6854 = vrot.slane %v6818, 2
    %v6855 = vsel %vm287, %v6854, %v6853
    %v6856 = vrot.slane %v6819, 1
    %v6857 = vsel %vm290, %v6856, %v6855
    %v6858 = vrot.slane %v6821, 7
    %v6859 = vsel %vm272, %v6858, %v6820
    %v6860 = vrot.slane %v6822, 6
    %v6861 = vsel %vm275, %v6860, %v6859
    %v6862 = vrot.slane %v6823, 5
    %v6863 = vsel %vm278, %v6862, %v6861
    %v6864 = vrot.slane %v6824, 4
    %v6865 = vsel %vm281, %v6864, %v6863
    %v6866 = vrot.slane %v6825, 3
    %v6867 = vsel %vm284, %v6866, %v6865
    %v6868 = vrot.slane %v6826, 2
    %v6869 = vsel %vm287, %v6868, %v6867
    %v6870 = vrot.slane %v6827, 1
    %v6871 = vsel %vm290, %v6870, %v6869
    %v6874 = vsel %vm308, %v6857, 0.0
    %6875 = vadd.xlane.f32.xlu0 %v6874
    %v6876 = vpop.xlane.xlu0 %6875
    %v6877 = vsel %vm308, %v6871, 0.0
    %6878 = vadd.xlane.f32.xlu0 %v6877
    %v6879 = vpop.xlane.xlu0 %6878
    %v6880 = vmul.f32 %v6876, %v315
    %v6881 = vmul.f32 %v6879, %v315
    %v6882 = vmul.f32 %v6812, %v6812
    %v6883 = vmul.f32 %v6813, %v6813
    %v6884 = vmul.f32 %v6814, %v6814
    %v6885 = vmul.f32 %v6815, %v6815
    %v6886 = vmul.f32 %v6816, %v6816
    %v6887 = vmul.f32 %v6817, %v6817
    %v6888 = vmul.f32 %v6818, %v6818
    %v6889 = vmul.f32 %v6819, %v6819
    %v6890 = vmul.f32 %v6820, %v6820
    %v6891 = vmul.f32 %v6821, %v6821
    %v6892 = vmul.f32 %v6822, %v6822
    %v6893 = vmul.f32 %v6823, %v6823
    %v6894 = vmul.f32 %v6824, %v6824
    %v6895 = vmul.f32 %v6825, %v6825
    %v6896 = vmul.f32 %v6826, %v6826
    %v6897 = vmul.f32 %v6827, %v6827
    %v6914 = vrot.slane %v6883, 7
    %v6915 = vsel %vm272, %v6914, %v6882
    %v6916 = vrot.slane %v6884, 6
    %v6917 = vsel %vm275, %v6916, %v6915
    %v6918 = vrot.slane %v6885, 5
    %v6919 = vsel %vm278, %v6918, %v6917
    %v6920 = vrot.slane %v6886, 4
    %v6921 = vsel %vm281, %v6920, %v6919
    %v6922 = vrot.slane %v6887, 3
    %v6923 = vsel %vm284, %v6922, %v6921
    %v6924 = vrot.slane %v6888, 2
    %v6925 = vsel %vm287, %v6924, %v6923
    %v6926 = vrot.slane %v6889, 1
    %v6927 = vsel %vm290, %v6926, %v6925
    %v6928 = vrot.slane %v6891, 7
    %v6929 = vsel %vm272, %v6928, %v6890
    %v6930 = vrot.slane %v6892, 6
    %v6931 = vsel %vm275, %v6930, %v6929
    %v6932 = vrot.slane %v6893, 5
    %v6933 = vsel %vm278, %v6932, %v6931
    %v6934 = vrot.slane %v6894, 4
    %v6935 = vsel %vm281, %v6934, %v6933
    %v6936 = vrot.slane %v6895, 3
    %v6937 = vsel %vm284, %v6936, %v6935
    %v6938 = vrot.slane %v6896, 2
    %v6939 = vsel %vm287, %v6938, %v6937
    %v6940 = vrot.slane %v6897, 1
    %v6941 = vsel %vm290, %v6940, %v6939
    %v6944 = vsel %vm308, %v6927, 0.0
    %6945 = vadd.xlane.f32.xlu0 %v6944
    %v6946 = vpop.xlane.xlu0 %6945
    %v6947 = vsel %vm308, %v6941, 0.0
    %6948 = vadd.xlane.f32.xlu0 %v6947
    %v6949 = vpop.xlane.xlu0 %6948
    %v6950 = vmul.f32 %v6946, %v315
    %v6951 = vmul.f32 %v6949, %v315
    %v6954 = vrot.slane %v6880, 1
    %v6955 = vrot.slane %v6880, 2
    %v6956 = vrot.slane %v6880, 3
    %v6957 = vrot.slane %v6880, 4
    %v6958 = vrot.slane %v6880, 5
    %v6959 = vrot.slane %v6880, 6
    %v6960 = vrot.slane %v6880, 7
    %v6961 = vrot.slane %v6881, 1
    %v6962 = vrot.slane %v6881, 2
    %v6963 = vrot.slane %v6881, 3
    %v6964 = vrot.slane %v6881, 4
    %v6965 = vrot.slane %v6881, 5
    %v6966 = vrot.slane %v6881, 6
    %v6967 = vrot.slane %v6881, 7
    %v6984 = vsub.f32 %v6812, %v6880
    %v6985 = vsub.f32 %v6813, %v6954
    %v6986 = vsub.f32 %v6814, %v6955
    %v6987 = vsub.f32 %v6815, %v6956
    %v6988 = vsub.f32 %v6816, %v6957
    %v6989 = vsub.f32 %v6817, %v6958
    %v6990 = vsub.f32 %v6818, %v6959
    %v6991 = vsub.f32 %v6819, %v6960
    %v6992 = vsub.f32 %v6820, %v6881
    %v6993 = vsub.f32 %v6821, %v6961
    %v6994 = vsub.f32 %v6822, %v6962
    %v6995 = vsub.f32 %v6823, %v6963
    %v6996 = vsub.f32 %v6824, %v6964
    %v6997 = vsub.f32 %v6825, %v6965
    %v6998 = vsub.f32 %v6826, %v6966
    %v6999 = vsub.f32 %v6827, %v6967
    %v7000 = vmul.f32 %v6880, %v6880
    %v7001 = vmul.f32 %v6881, %v6881
    %v7002 = vsub.f32 %v6950, %v7000
    %v7003 = vsub.f32 %v6951, %v7001
    %v7004 = vadd.f32 %v7002, 1e-05
    %v7005 = vadd.f32 %v7003, 1e-05
    %v7006 = vrsqrt.pop %v7004
    %v7007 = vrsqrt.pop %v7005
    %v7010 = vrot.slane %v7006, 1
    %v7011 = vrot.slane %v7006, 2
    %v7012 = vrot.slane %v7006, 3
    %v7013 = vrot.slane %v7006, 4
    %v7014 = vrot.slane %v7006, 5
    %v7015 = vrot.slane %v7006, 6
    %v7016 = vrot.slane %v7006, 7
    %v7017 = vrot.slane %v7007, 1
    %v7018 = vrot.slane %v7007, 2
    %v7019 = vrot.slane %v7007, 3
    %v7020 = vrot.slane %v7007, 4
    %v7021 = vrot.slane %v7007, 5
    %v7022 = vrot.slane %v7007, 6
    %v7023 = vrot.slane %v7007, 7
    %v7040 = vmul.f32 %v6984, %v7006
    %v7041 = vmul.f32 %v6985, %v7010
    %v7042 = vmul.f32 %v6986, %v7011
    %v7043 = vmul.f32 %v6987, %v7012
    %v7044 = vmul.f32 %v6988, %v7013
    %v7045 = vmul.f32 %v6989, %v7014
    %v7046 = vmul.f32 %v6990, %v7015
    %v7047 = vmul.f32 %v6991, %v7016
    %v7048 = vmul.f32 %v6992, %v7007
    %v7049 = vmul.f32 %v6993, %v7017
    %v7050 = vmul.f32 %v6994, %v7018
    %v7051 = vmul.f32 %v6995, %v7019
    %v7052 = vmul.f32 %v6996, %v7020
    %v7053 = vmul.f32 %v6997, %v7021
    %v7054 = vmul.f32 %v6998, %v7022
    %v7055 = vmul.f32 %v6999, %v7023
    %v7056 = vlaneseq
    %v7057 = vshrl.u32 %v7056, 7
    %v7058 = vsub.s32 4, %v7057
    %v7059 = vrot.slane %v43, %v7058
    %v7060 = vmul.f32 %v7040, %v7059
    %v7061 = vmul.f32 %v7041, %v7059
    %v7062 = vmul.f32 %v7042, %v7059
    %v7063 = vmul.f32 %v7043, %v7059
    %v7064 = vmul.f32 %v7044, %v7059
    %v7065 = vmul.f32 %v7045, %v7059
    %v7066 = vmul.f32 %v7046, %v7059
    %v7067 = vmul.f32 %v7047, %v7059
    %v7068 = vmul.f32 %v7048, %v7059
    %v7069 = vmul.f32 %v7049, %v7059
    %v7070 = vmul.f32 %v7050, %v7059
    %v7071 = vmul.f32 %v7051, %v7059
    %v7072 = vmul.f32 %v7052, %v7059
    %v7073 = vmul.f32 %v7053, %v7059
    %v7074 = vmul.f32 %v7054, %v7059
    %v7075 = vmul.f32 %v7055, %v7059
    %v7076 = vlaneseq
    %v7077 = vshrl.u32 %v7076, 7
    %v7078 = vsub.s32 5, %v7077
    %v7079 = vrot.slane %v43, %v7078
    %v7080 = vadd.f32 %v7060, %v7079
    %v7081 = vadd.f32 %v7061, %v7079
    %v7082 = vadd.f32 %v7062, %v7079
    %v7083 = vadd.f32 %v7063, %v7079
    %v7084 = vadd.f32 %v7064, %v7079
    %v7085 = vadd.f32 %v7065, %v7079
    %v7086 = vadd.f32 %v7066, %v7079
    %v7087 = vadd.f32 %v7067, %v7079
    %v7088 = vadd.f32 %v7068, %v7079
    %v7089 = vadd.f32 %v7069, %v7079
    %v7090 = vadd.f32 %v7070, %v7079
    %v7091 = vadd.f32 %v7071, %v7079
    %v7092 = vadd.f32 %v7072, %v7079
    %v7093 = vadd.f32 %v7073, %v7079
    %v7094 = vadd.f32 %v7074, %v7079
    %v7095 = vadd.f32 %v7075, %v7079
    %v7112 = vrot.slane %v5033, 7
    %v7113 = vsel %vm275, %v7112, %v5032
    %v7114 = vrot.slane %v5034, 6
    %v7115 = vsel %vm278, %v7114, %v7113
    %v7116 = vrot.slane %v5035, 5
    %v7117 = vsel %vm281, %v7116, %v7115
    %v7118 = vrot.slane %v5036, 4
    %v7119 = vsel %vm284, %v7118, %v7117
    %v7120 = vrot.slane %v5037, 3
    %v7121 = vsel %vm287, %v7120, %v7119
    %v7122 = vrot.slane %v5038, 2
    %v7123 = vsel %vm290, %v7122, %v7121
    %v7124 = vrot.slane %v5039, 1
    %v7125 = vsel %vm272, %v5040, %v7124
    %v7126 = vrot.slane %v5041, 7
    %v7127 = vsel %vm275, %v7126, %v7125
    %v7128 = vrot.slane %v5042, 6
    %v7129 = vsel %vm278, %v7128, %v7127
    %v7130 = vrot.slane %v5043, 5
    %v7131 = vsel %vm281, %v7130, %v7129
    %v7132 = vrot.slane %v5044, 4
    %v7133 = vsel %vm284, %v7132, %v7131
    %v7134 = vrot.slane %v5045, 3
    %v7135 = vsel %vm287, %v7134, %v7133
    %v7136 = vrot.slane %v5046, 2
    %v7137 = vsel %vm290, %v7136, %v7135
    %v7138 = vrot.slane %v5047, 1
    %v7142 = vsel %vm548, %v7123, 0.0
    %7143 = vadd.xlane.f32.xlu0 %v7142
    %v7144 = vpop.xlane.xlu0 %7143
    %v7145 = vsel %vm308, %v7137, 0.0
    %7146 = vadd.xlane.f32.xlu0 %v7145
    %v7147 = vpop.xlane.xlu0 %7146
    %v7148 = vsel %vm555, %v7138, 0.0
    %7149 = vadd.xlane.f32.xlu0 %v7148
    %v7150 = vpop.xlane.xlu0 %7149
    %v7151 = vmul.f32 %v7144, %v315
    %v7152 = vmul.f32 %v7147, %v315
    %v7153 = vmul.f32 %v7150, %v315
    %v7154 = vmul.f32 %v5032, %v5032
    %v7155 = vmul.f32 %v5033, %v5033
    %v7156 = vmul.f32 %v5034, %v5034
    %v7157 = vmul.f32 %v5035, %v5035
    %v7158 = vmul.f32 %v5036, %v5036
    %v7159 = vmul.f32 %v5037, %v5037
    %v7160 = vmul.f32 %v5038, %v5038
    %v7161 = vmul.f32 %v5039, %v5039
    %v7162 = vmul.f32 %v5040, %v5040
    %v7163 = vmul.f32 %v5041, %v5041
    %v7164 = vmul.f32 %v5042, %v5042
    %v7165 = vmul.f32 %v5043, %v5043
    %v7166 = vmul.f32 %v5044, %v5044
    %v7167 = vmul.f32 %v5045, %v5045
    %v7168 = vmul.f32 %v5046, %v5046
    %v7169 = vmul.f32 %v5047, %v5047
    %v7186 = vrot.slane %v7155, 7
    %v7187 = vsel %vm275, %v7186, %v7154
    %v7188 = vrot.slane %v7156, 6
    %v7189 = vsel %vm278, %v7188, %v7187
    %v7190 = vrot.slane %v7157, 5
    %v7191 = vsel %vm281, %v7190, %v7189
    %v7192 = vrot.slane %v7158, 4
    %v7193 = vsel %vm284, %v7192, %v7191
    %v7194 = vrot.slane %v7159, 3
    %v7195 = vsel %vm287, %v7194, %v7193
    %v7196 = vrot.slane %v7160, 2
    %v7197 = vsel %vm290, %v7196, %v7195
    %v7198 = vrot.slane %v7161, 1
    %v7199 = vsel %vm272, %v7162, %v7198
    %v7200 = vrot.slane %v7163, 7
    %v7201 = vsel %vm275, %v7200, %v7199
    %v7202 = vrot.slane %v7164, 6
    %v7203 = vsel %vm278, %v7202, %v7201
    %v7204 = vrot.slane %v7165, 5
    %v7205 = vsel %vm281, %v7204, %v7203
    %v7206 = vrot.slane %v7166, 4
    %v7207 = vsel %vm284, %v7206, %v7205
    %v7208 = vrot.slane %v7167, 3
    %v7209 = vsel %vm287, %v7208, %v7207
    %v7210 = vrot.slane %v7168, 2
    %v7211 = vsel %vm290, %v7210, %v7209
    %v7212 = vrot.slane %v7169, 1
    %v7216 = vsel %vm548, %v7197, 0.0
    %7217 = vadd.xlane.f32.xlu0 %v7216
    %v7218 = vpop.xlane.xlu0 %7217
    %v7219 = vsel %vm308, %v7211, 0.0
    %7220 = vadd.xlane.f32.xlu0 %v7219
    %v7221 = vpop.xlane.xlu0 %7220
    %v7222 = vsel %vm555, %v7212, 0.0
    %7223 = vadd.xlane.f32.xlu0 %v7222
    %v7224 = vpop.xlane.xlu0 %7223
    %v7225 = vmul.f32 %v7218, %v315
    %v7226 = vmul.f32 %v7221, %v315
    %v7227 = vmul.f32 %v7224, %v315
    %v7231 = vrot.slane %v7151, 1
    %v7232 = vrot.slane %v7151, 2
    %v7233 = vrot.slane %v7151, 3
    %v7234 = vrot.slane %v7151, 4
    %v7235 = vrot.slane %v7151, 5
    %v7236 = vrot.slane %v7151, 6
    %v7237 = vrot.slane %v7152, 7
    %v7238 = vrot.slane %v7152, 1
    %v7239 = vrot.slane %v7152, 2
    %v7240 = vrot.slane %v7152, 3
    %v7241 = vrot.slane %v7152, 4
    %v7242 = vrot.slane %v7152, 5
    %v7243 = vrot.slane %v7152, 6
    %v7244 = vrot.slane %v7153, 7
    %v7261 = vsub.f32 %v5032, %v7151
    %v7262 = vsub.f32 %v5033, %v7231
    %v7263 = vsub.f32 %v5034, %v7232
    %v7264 = vsub.f32 %v5035, %v7233
    %v7265 = vsub.f32 %v5036, %v7234
    %v7266 = vsub.f32 %v5037, %v7235
    %v7267 = vsub.f32 %v5038, %v7236
    %v7268 = vsub.f32 %v5039, %v7237
    %v7269 = vsub.f32 %v5040, %v7152
    %v7270 = vsub.f32 %v5041, %v7238
    %v7271 = vsub.f32 %v5042, %v7239
    %v7272 = vsub.f32 %v5043, %v7240
    %v7273 = vsub.f32 %v5044, %v7241
    %v7274 = vsub.f32 %v5045, %v7242
    %v7275 = vsub.f32 %v5046, %v7243
    %v7276 = vsub.f32 %v5047, %v7244
    %v7277 = vmul.f32 %v7151, %v7151
    %v7278 = vmul.f32 %v7152, %v7152
    %v7279 = vmul.f32 %v7153, %v7153
    %v7280 = vsub.f32 %v7225, %v7277
    %v7281 = vsub.f32 %v7226, %v7278
    %v7282 = vsub.f32 %v7227, %v7279
    %v7283 = vadd.f32 %v7280, 1e-05
    %v7284 = vadd.f32 %v7281, 1e-05
    %v7285 = vadd.f32 %v7282, 1e-05
    %v7286 = vrsqrt.pop %v7283
    %v7287 = vrsqrt.pop %v7284
    %v7288 = vrsqrt.pop %v7285
    %v7292 = vrot.slane %v7286, 1
    %v7293 = vrot.slane %v7286, 2
    %v7294 = vrot.slane %v7286, 3
    %v7295 = vrot.slane %v7286, 4
    %v7296 = vrot.slane %v7286, 5
    %v7297 = vrot.slane %v7286, 6
    %v7298 = vrot.slane %v7287, 7
    %v7299 = vrot.slane %v7287, 1
    %v7300 = vrot.slane %v7287, 2
    %v7301 = vrot.slane %v7287, 3
    %v7302 = vrot.slane %v7287, 4
    %v7303 = vrot.slane %v7287, 5
    %v7304 = vrot.slane %v7287, 6
    %v7305 = vrot.slane %v7288, 7
    %v7322 = vmul.f32 %v7261, %v7286
    %v7323 = vmul.f32 %v7262, %v7292
    %v7324 = vmul.f32 %v7263, %v7293
    %v7325 = vmul.f32 %v7264, %v7294
    %v7326 = vmul.f32 %v7265, %v7295
    %v7327 = vmul.f32 %v7266, %v7296
    %v7328 = vmul.f32 %v7267, %v7297
    %v7329 = vmul.f32 %v7268, %v7298
    %v7330 = vmul.f32 %v7269, %v7287
    %v7331 = vmul.f32 %v7270, %v7299
    %v7332 = vmul.f32 %v7271, %v7300
    %v7333 = vmul.f32 %v7272, %v7301
    %v7334 = vmul.f32 %v7273, %v7302
    %v7335 = vmul.f32 %v7274, %v7303
    %v7336 = vmul.f32 %v7275, %v7304
    %v7337 = vmul.f32 %v7276, %v7305
    %v7338 = vmul.f32 %v7322, %v6491
    %v7339 = vmul.f32 %v7323, %v6491
    %v7340 = vmul.f32 %v7324, %v6491
    %v7341 = vmul.f32 %v7325, %v6491
    %v7342 = vmul.f32 %v7326, %v6491
    %v7343 = vmul.f32 %v7327, %v6491
    %v7344 = vmul.f32 %v7328, %v6491
    %v7345 = vmul.f32 %v7329, %v6491
    %v7346 = vmul.f32 %v7330, %v6491
    %v7347 = vmul.f32 %v7331, %v6491
    %v7348 = vmul.f32 %v7332, %v6491
    %v7349 = vmul.f32 %v7333, %v6491
    %v7350 = vmul.f32 %v7334, %v6491
    %v7351 = vmul.f32 %v7335, %v6491
    %v7352 = vmul.f32 %v7336, %v6491
    %v7353 = vmul.f32 %v7337, %v6491
    %v7354 = vadd.f32 %v7338, %v6511
    %v7355 = vadd.f32 %v7339, %v6511
    %v7356 = vadd.f32 %v7340, %v6511
    %v7357 = vadd.f32 %v7341, %v6511
    %v7358 = vadd.f32 %v7342, %v6511
    %v7359 = vadd.f32 %v7343, %v6511
    %v7360 = vadd.f32 %v7344, %v6511
    %v7361 = vadd.f32 %v7345, %v6511
    %v7362 = vadd.f32 %v7346, %v6511
    %v7363 = vadd.f32 %v7347, %v6511
    %v7364 = vadd.f32 %v7348, %v6511
    %v7365 = vadd.f32 %v7349, %v6511
    %v7366 = vadd.f32 %v7350, %v6511
    %v7367 = vadd.f32 %v7351, %v6511
    %v7368 = vadd.f32 %v7352, %v6511
    %v7369 = vadd.f32 %v7353, %v6511
    %v7386 = vrot.slane %v7354, 1
    %v7387 = vsel %vm272, %v7355, %v7386
    %v7388 = vrot.slane %v7356, 7
    %v7389 = vsel %vm275, %v7388, %v7387
    %v7390 = vrot.slane %v7357, 6
    %v7391 = vsel %vm278, %v7390, %v7389
    %v7392 = vrot.slane %v7358, 5
    %v7393 = vsel %vm281, %v7392, %v7391
    %v7394 = vrot.slane %v7359, 4
    %v7395 = vsel %vm284, %v7394, %v7393
    %v7396 = vrot.slane %v7360, 3
    %v7397 = vsel %vm287, %v7396, %v7395
    %v7398 = vrot.slane %v7361, 2
    %v7399 = vsel %vm290, %v7398, %v7397
    %v7400 = vrot.slane %v7362, 1
    %v7401 = vsel %vm272, %v7363, %v7400
    %v7402 = vrot.slane %v7364, 7
    %v7403 = vsel %vm275, %v7402, %v7401
    %v7404 = vrot.slane %v7365, 6
    %v7405 = vsel %vm278, %v7404, %v7403
    %v7406 = vrot.slane %v7366, 5
    %v7407 = vsel %vm281, %v7406, %v7405
    %v7408 = vrot.slane %v7367, 4
    %v7409 = vsel %vm284, %v7408, %v7407
    %v7410 = vrot.slane %v7368, 3
    %v7411 = vsel %vm287, %v7410, %v7409
    %v7412 = vrot.slane %v7369, 2
    %v7413 = vsel %vm290, %v7412, %v7411
    %v7414 = vsel %vm308, %v7399, 0
    %v7416 = vsel %vm308, %v7413, 0
    %7418 = vmatprep.subr.mxu0 0.0
    %7419 = vmatpush1.msra.mxu0 0.0
    %7420 = vmatprep.subr.mxu0 0.0
    %7421 = vmatpush1.msra.mxu0 0.0
    %7422 = vmatprep.subr.mxu0 0.0
    %7423 = vmatpush1.msra.mxu0 0.0
    %7424 = vmatprep.subr.mxu0 0.0
    %7425 = vmatpush1.msra.mxu0 0.0
    %7426 = vmatprep.subr.mxu0 0.0
    %7427 = vmatpush1.msra.mxu0 0.0
    %7428 = vmatprep.subr.mxu0 0.0
    %7429 = vmatpush1.msra.mxu0 0.0
    %7430 = vmatprep.subr.mxu0 0.0
    %7431 = vmatpush1.msra.mxu0 0.0
    %7432 = vmatprep.subr.mxu0 0.0
    %7433 = vmatpush1.msra.mxu0 0.0
    %7434 = vmatprep.subr.mxu0 0.0
    %7435 = vmatpush1.msra.mxu0 0.0
    %7436 = vmatprep.subr.mxu0 0.0
    %7437 = vmatpush1.msra.mxu0 0.0
    %7438 = vmatprep.subr.mxu0 0.0
    %7439 = vmatpush1.msra.mxu0 0.0
    %7440 = vmatprep.subr.mxu0 0.0
    %7441 = vmatpush1.msra.mxu0 0.0
    %7442 = vmatprep.subr.mxu0 0.0
    %7443 = vmatpush1.msra.mxu0 %v6531
    %7444 = vmatprep.subr.mxu0 0.0
    %7445 = vmatpush1.msra.mxu0 %v6530
    %7446 = vmatprep.subr.mxu0 0.0
    %7447 = vmatpush1.msra.mxu0 %v6529
    %7448 = vmatprep.subr.mxu0 0.0
    %7449 = vmatpush1.msra.mxu0 %v6528
    %7450 = vmatprep.subr.mxu0 0.0
    %7451 = vmatpush2.msra.mxu0 0.0
    %7452 = vmatprep.subr.mxu0 0.0
    %7453 = vmatpush2.msra.mxu0 0.0
    %7454 = vmatprep.subr.mxu0 0.0
    %7455 = vmatpush2.msra.mxu0 0.0
    %7456 = vmatprep.subr.mxu0 0.0
    %7457 = vmatpush2.msra.mxu0 0.0
    %7458 = vmatprep.subr.mxu0 0.0
    %7459 = vmatpush2.msra.mxu0 0.0
    %7460 = vmatprep.subr.mxu0 0.0
    %7461 = vmatpush2.msra.mxu0 0.0
    %7462 = vmatprep.subr.mxu0 0.0
    %7463 = vmatpush2.msra.mxu0 0.0
    %7464 = vmatprep.subr.mxu0 0.0
    %7465 = vmatpush2.msra.mxu0 0.0
    %7466 = vmatprep.subr.mxu0 0.0
    %7467 = vmatpush2.msra.mxu0 0.0
    %7468 = vmatprep.subr.mxu0 0.0
    %7469 = vmatpush2.msra.mxu0 0.0
    %7470 = vmatprep.subr.mxu0 0.0
    %7471 = vmatpush2.msra.mxu0 0.0
    %7472 = vmatprep.subr.mxu0 0.0
    %7473 = vmatpush2.msra.mxu0 0.0
    %7474 = vmatprep.subr.mxu0 0.0
    %7475 = vmatpush2.msra.mxu0 0.0
    %7476 = vmatprep.subr.mxu0 0.0
    %7477 = vmatpush2.msra.mxu0 0.0
    %7478 = vmatprep.subr.mxu0 0.0
    %7479 = vmatpush2.msra.mxu0 0.0
    %7480 = vmatprep.subr.mxu0 0.0
    %7481 = vmatpush2.msra.mxu0 0.0
    %7482 = vmatprep.mubr.f32.mxu0 0.0
    %7483 = vmatmul.mubr.f32.gmra.mxu0 %v7414
    %v7484 = vpop.f32.mrf.mxu0
    %v7485 = vadd.f32 %v6535, %v7484
    %v7486 = vpop.f32.mrf.mxu0
    %7487 = vmatprep.mubr.f32.mxu0 0.0
    %7488 = vmatmul.mubr.f32.gmra.mxu0 %v7416
    %v7489 = vpop.f32.mrf.mxu0
    %v7490 = vadd.f32 %v6535, %v7489
    %v7491 = vpop.f32.mrf.mxu0
    %7492 = vdwg.mxu0
    %v7493 = vmul.f32 %v7485, 0.5
    %v7494 = vmul.f32 %v7490, 0.5
    %v7495 = vmul.f32 %v7485, 0.70710677
    %v7496 = vmul.f32 %v7490, 0.70710677
    %v7497 = verf.f32.pop %v7495
    %v7498 = verf.f32.pop %v7496
    %v7499 = vadd.f32 %v7497, 1.0
    %v7500 = vadd.f32 %v7498, 1.0
    %v7501 = vmul.f32 %v7493, %v7499
    %v7502 = vmul.f32 %v7494, %v7500
    %7503 = vmatprep.subr.mxu0 0.0
    %7504 = vmatpush1.msra.mxu0 %v6684
    %7505 = vmatprep.subr.mxu0 0.0
    %7506 = vmatpush1.msra.mxu0 %v6683
    %7507 = vmatprep.subr.mxu0 0.0
    %7508 = vmatpush1.msra.mxu0 %v6682
    %7509 = vmatprep.subr.mxu0 0.0
    %7510 = vmatpush1.msra.mxu0 %v6681
    %7511 = vmatprep.subr.mxu0 0.0
    %7512 = vmatpush1.msra.mxu0 %v6680
    %7513 = vmatprep.subr.mxu0 0.0
    %7514 = vmatpush1.msra.mxu0 %v6679
    %7515 = vmatprep.subr.mxu0 0.0
    %7516 = vmatpush1.msra.mxu0 %v6678
    %7517 = vmatprep.subr.mxu0 0.0
    %7518 = vmatpush1.msra.mxu0 %v6677
    %7519 = vmatprep.subr.mxu0 0.0
    %7520 = vmatpush1.msra.mxu0 %v6676
    %7521 = vmatprep.subr.mxu0 0.0
    %7522 = vmatpush1.msra.mxu0 %v6675
    %7523 = vmatprep.subr.mxu0 0.0
    %7524 = vmatpush1.msra.mxu0 %v6674
    %7525 = vmatprep.subr.mxu0 0.0
    %7526 = vmatpush1.msra.mxu0 %v6673
    %7527 = vmatprep.subr.mxu0 0.0
    %7528 = vmatpush1.msra.mxu0 %v6672
    %7529 = vmatprep.subr.mxu0 0.0
    %7530 = vmatpush1.msra.mxu0 %v6671
    %7531 = vmatprep.subr.mxu0 0.0
    %7532 = vmatpush1.msra.mxu0 %v6670
    %7533 = vmatprep.subr.mxu0 0.0
    %7534 = vmatpush1.msra.mxu0 %v6669
    %7535 = vmatprep.subr.mxu0 0.0
    %7536 = vmatpush2.msra.mxu0 0.0
    %7537 = vmatprep.subr.mxu0 0.0
    %7538 = vmatpush2.msra.mxu0 0.0
    %7539 = vmatprep.subr.mxu0 0.0
    %7540 = vmatpush2.msra.mxu0 0.0
    %7541 = vmatprep.subr.mxu0 0.0
    %7542 = vmatpush2.msra.mxu0 0.0
    %7543 = vmatprep.subr.mxu0 0.0
    %7544 = vmatpush2.msra.mxu0 0.0
    %7545 = vmatprep.subr.mxu0 0.0
    %7546 = vmatpush2.msra.mxu0 0.0
    %7547 = vmatprep.subr.mxu0 0.0
    %7548 = vmatpush2.msra.mxu0 0.0
    %7549 = vmatprep.subr.mxu0 0.0
    %7550 = vmatpush2.msra.mxu0 0.0
    %7551 = vmatprep.subr.mxu0 0.0
    %7552 = vmatpush2.msra.mxu0 0.0
    %7553 = vmatprep.subr.mxu0 0.0
    %7554 = vmatpush2.msra.mxu0 0.0
    %7555 = vmatprep.subr.mxu0 0.0
    %7556 = vmatpush2.msra.mxu0 0.0
    %7557 = vmatprep.subr.mxu0 0.0
    %7558 = vmatpush2.msra.mxu0 0.0
    %7559 = vmatprep.subr.mxu0 0.0
    %7560 = vmatpush2.msra.mxu0 0.0
    %7561 = vmatprep.subr.mxu0 0.0
    %7562 = vmatpush2.msra.mxu0 0.0
    %7563 = vmatprep.subr.mxu0 0.0
    %7564 = vmatpush2.msra.mxu0 0.0
    %7565 = vmatprep.subr.mxu0 0.0
    %7566 = vmatpush2.msra.mxu0 0.0
    %7567 = vmatprep.mubr.f32.mxu0 0.0
    %7568 = vmatmul.mubr.f32.gmra.mxu0 %v7501
    %v7569 = vpop.f32.mrf.mxu0
    %v7570 = vadd.f32 0.0, %v7569
    %v7571 = vpop.f32.mrf.mxu0
    %7572 = vmatprep.mubr.f32.mxu0 0.0
    %7573 = vmatmul.mubr.f32.gmra.mxu0 %v7502
    %v7574 = vpop.f32.mrf.mxu0
    %v7575 = vadd.f32 0.0, %v7574
    %v7576 = vpop.f32.mrf.mxu0
    %7577 = vdwg.mxu0
    %v7580 = vrot.slane %v7570, 7
    %v7581 = vrot.slane %v7570, 1
    %v7582 = vrot.slane %v7570, 2
    %v7583 = vrot.slane %v7570, 3
    %v7584 = vrot.slane %v7570, 4
    %v7585 = vrot.slane %v7570, 5
    %v7586 = vrot.slane %v7570, 6
    %v7587 = vrot.slane %v7575, 7
    %v7588 = vrot.slane %v7575, 1
    %v7589 = vrot.slane %v7575, 2
    %v7590 = vrot.slane %v7575, 3
    %v7591 = vrot.slane %v7575, 4
    %v7592 = vrot.slane %v7575, 5
    %v7593 = vrot.slane %v7575, 6
    %v7610 = vadd.f32 %v5032, %v7580
    %v7611 = vadd.f32 %v5033, %v7570
    %v7612 = vadd.f32 %v5034, %v7581
    %v7613 = vadd.f32 %v5035, %v7582
    %v7614 = vadd.f32 %v5036, %v7583
    %v7615 = vadd.f32 %v5037, %v7584
    %v7616 = vadd.f32 %v5038, %v7585
    %v7617 = vadd.f32 %v5039, %v7586
    %v7618 = vadd.f32 %v5040, %v7587
    %v7619 = vadd.f32 %v5041, %v7575
    %v7620 = vadd.f32 %v5042, %v7588
    %v7621 = vadd.f32 %v5043, %v7589
    %v7622 = vadd.f32 %v5044, %v7590
    %v7623 = vadd.f32 %v5045, %v7591
    %v7624 = vadd.f32 %v5046, %v7592
    %v7625 = vadd.f32 %v5047, %v7593
    %v7626 = vadd.f32 %v7610, %v6811
    %v7627 = vadd.f32 %v7611, %v6811
    %v7628 = vadd.f32 %v7612, %v6811
    %v7629 = vadd.f32 %v7613, %v6811
    %v7630 = vadd.f32 %v7614, %v6811
    %v7631 = vadd.f32 %v7615, %v6811
    %v7632 = vadd.f32 %v7616, %v6811
    %v7633 = vadd.f32 %v7617, %v6811
    %v7634 = vadd.f32 %v7618, %v6811
    %v7635 = vadd.f32 %v7619, %v6811
    %v7636 = vadd.f32 %v7620, %v6811
    %v7637 = vadd.f32 %v7621, %v6811
    %v7638 = vadd.f32 %v7622, %v6811
    %v7639 = vadd.f32 %v7623, %v6811
    %v7640 = vadd.f32 %v7624, %v6811
    %v7641 = vadd.f32 %v7625, %v6811
    %v7658 = vrot.slane %v7627, 7
    %v7659 = vsel %vm275, %v7658, %v7626
    %v7660 = vrot.slane %v7628, 6
    %v7661 = vsel %vm278, %v7660, %v7659
    %v7662 = vrot.slane %v7629, 5
    %v7663 = vsel %vm281, %v7662, %v7661
    %v7664 = vrot.slane %v7630, 4
    %v7665 = vsel %vm284, %v7664, %v7663
    %v7666 = vrot.slane %v7631, 3
    %v7667 = vsel %vm287, %v7666, %v7665
    %v7668 = vrot.slane %v7632, 2
    %v7669 = vsel %vm290, %v7668, %v7667
    %v7670 = vrot.slane %v7633, 1
    %v7671 = vsel %vm272, %v7634, %v7670
    %v7672 = vrot.slane %v7635, 7
    %v7673 = vsel %vm275, %v7672, %v7671
    %v7674 = vrot.slane %v7636, 6
    %v7675 = vsel %vm278, %v7674, %v7673
    %v7676 = vrot.slane %v7637, 5
    %v7677 = vsel %vm281, %v7676, %v7675
    %v7678 = vrot.slane %v7638, 4
    %v7679 = vsel %vm284, %v7678, %v7677
    %v7680 = vrot.slane %v7639, 3
    %v7681 = vsel %vm287, %v7680, %v7679
    %v7682 = vrot.slane %v7640, 2
    %v7683 = vsel %vm290, %v7682, %v7681
    %v7684 = vrot.slane %v7641, 1
    %v7688 = vsel %vm548, %v7669, 0.0
    %7689 = vadd.xlane.f32.xlu0 %v7688
    %v7690 = vpop.xlane.xlu0 %7689
    %v7691 = vsel %vm308, %v7683, 0.0
    %7692 = vadd.xlane.f32.xlu0 %v7691
    %v7693 = vpop.xlane.xlu0 %7692
    %v7694 = vsel %vm555, %v7684, 0.0
    %7695 = vadd.xlane.f32.xlu0 %v7694
    %v7696 = vpop.xlane.xlu0 %7695
    %v7697 = vmul.f32 %v7690, %v315
    %v7698 = vmul.f32 %v7693, %v315
    %v7699 = vmul.f32 %v7696, %v315
    %v7700 = vmul.f32 %v7626, %v7626
    %v7701 = vmul.f32 %v7627, %v7627
    %v7702 = vmul.f32 %v7628, %v7628
    %v7703 = vmul.f32 %v7629, %v7629
    %v7704 = vmul.f32 %v7630, %v7630
    %v7705 = vmul.f32 %v7631, %v7631
    %v7706 = vmul.f32 %v7632, %v7632
    %v7707 = vmul.f32 %v7633, %v7633
    %v7708 = vmul.f32 %v7634, %v7634
    %v7709 = vmul.f32 %v7635, %v7635
    %v7710 = vmul.f32 %v7636, %v7636
    %v7711 = vmul.f32 %v7637, %v7637
    %v7712 = vmul.f32 %v7638, %v7638
    %v7713 = vmul.f32 %v7639, %v7639
    %v7714 = vmul.f32 %v7640, %v7640
    %v7715 = vmul.f32 %v7641, %v7641
    %v7732 = vrot.slane %v7701, 7
    %v7733 = vsel %vm275, %v7732, %v7700
    %v7734 = vrot.slane %v7702, 6
    %v7735 = vsel %vm278, %v7734, %v7733
    %v7736 = vrot.slane %v7703, 5
    %v7737 = vsel %vm281, %v7736, %v7735
    %v7738 = vrot.slane %v7704, 4
    %v7739 = vsel %vm284, %v7738, %v7737
    %v7740 = vrot.slane %v7705, 3
    %v7741 = vsel %vm287, %v7740, %v7739
    %v7742 = vrot.slane %v7706, 2
    %v7743 = vsel %vm290, %v7742, %v7741
    %v7744 = vrot.slane %v7707, 1
    %v7745 = vsel %vm272, %v7708, %v7744
    %v7746 = vrot.slane %v7709, 7
    %v7747 = vsel %vm275, %v7746, %v7745
    %v7748 = vrot.slane %v7710, 6
    %v7749 = vsel %vm278, %v7748, %v7747
    %v7750 = vrot.slane %v7711, 5
    %v7751 = vsel %vm281, %v7750, %v7749
    %v7752 = vrot.slane %v7712, 4
    %v7753 = vsel %vm284, %v7752, %v7751
    %v7754 = vrot.slane %v7713, 3
    %v7755 = vsel %vm287, %v7754, %v7753
    %v7756 = vrot.slane %v7714, 2
    %v7757 = vsel %vm290, %v7756, %v7755
    %v7758 = vrot.slane %v7715, 1
    %v7762 = vsel %vm548, %v7743, 0.0
    %7763 = vadd.xlane.f32.xlu0 %v7762
    %v7764 = vpop.xlane.xlu0 %7763
    %v7765 = vsel %vm308, %v7757, 0.0
    %7766 = vadd.xlane.f32.xlu0 %v7765
    %v7767 = vpop.xlane.xlu0 %7766
    %v7768 = vsel %vm555, %v7758, 0.0
    %7769 = vadd.xlane.f32.xlu0 %v7768
    %v7770 = vpop.xlane.xlu0 %7769
    %v7771 = vmul.f32 %v7764, %v315
    %v7772 = vmul.f32 %v7767, %v315
    %v7773 = vmul.f32 %v7770, %v315
    %v7777 = vrot.slane %v7697, 1
    %v7778 = vrot.slane %v7697, 2
    %v7779 = vrot.slane %v7697, 3
    %v7780 = vrot.slane %v7697, 4
    %v7781 = vrot.slane %v7697, 5
    %v7782 = vrot.slane %v7697, 6
    %v7783 = vrot.slane %v7698, 7
    %v7784 = vrot.slane %v7698, 1
    %v7785 = vrot.slane %v7698, 2
    %v7786 = vrot.slane %v7698, 3
    %v7787 = vrot.slane %v7698, 4
    %v7788 = vrot.slane %v7698, 5
    %v7789 = vrot.slane %v7698, 6
    %v7790 = vrot.slane %v7699, 7
    %v7807 = vsub.f32 %v7626, %v7697
    %v7808 = vsub.f32 %v7627, %v7777
    %v7809 = vsub.f32 %v7628, %v7778
    %v7810 = vsub.f32 %v7629, %v7779
    %v7811 = vsub.f32 %v7630, %v7780
    %v7812 = vsub.f32 %v7631, %v7781
    %v7813 = vsub.f32 %v7632, %v7782
    %v7814 = vsub.f32 %v7633, %v7783
    %v7815 = vsub.f32 %v7634, %v7698
    %v7816 = vsub.f32 %v7635, %v7784
    %v7817 = vsub.f32 %v7636, %v7785
    %v7818 = vsub.f32 %v7637, %v7786
    %v7819 = vsub.f32 %v7638, %v7787
    %v7820 = vsub.f32 %v7639, %v7788
    %v7821 = vsub.f32 %v7640, %v7789
    %v7822 = vsub.f32 %v7641, %v7790
    %v7823 = vmul.f32 %v7697, %v7697
    %v7824 = vmul.f32 %v7698, %v7698
    %v7825 = vmul.f32 %v7699, %v7699
    %v7826 = vsub.f32 %v7771, %v7823
    %v7827 = vsub.f32 %v7772, %v7824
    %v7828 = vsub.f32 %v7773, %v7825
    %v7829 = vadd.f32 %v7826, 1e-05
    %v7830 = vadd.f32 %v7827, 1e-05
    %v7831 = vadd.f32 %v7828, 1e-05
    %v7832 = vrsqrt.pop %v7829
    %v7833 = vrsqrt.pop %v7830
    %v7834 = vrsqrt.pop %v7831
    %v7838 = vrot.slane %v7832, 1
    %v7839 = vrot.slane %v7832, 2
    %v7840 = vrot.slane %v7832, 3
    %v7841 = vrot.slane %v7832, 4
    %v7842 = vrot.slane %v7832, 5
    %v7843 = vrot.slane %v7832, 6
    %v7844 = vrot.slane %v7833, 7
    %v7845 = vrot.slane %v7833, 1
    %v7846 = vrot.slane %v7833, 2
    %v7847 = vrot.slane %v7833, 3
    %v7848 = vrot.slane %v7833, 4
    %v7849 = vrot.slane %v7833, 5
    %v7850 = vrot.slane %v7833, 6
    %v7851 = vrot.slane %v7834, 7
    %v7868 = vmul.f32 %v7807, %v7832
    %v7869 = vmul.f32 %v7808, %v7838
    %v7870 = vmul.f32 %v7809, %v7839
    %v7871 = vmul.f32 %v7810, %v7840
    %v7872 = vmul.f32 %v7811, %v7841
    %v7873 = vmul.f32 %v7812, %v7842
    %v7874 = vmul.f32 %v7813, %v7843
    %v7875 = vmul.f32 %v7814, %v7844
    %v7876 = vmul.f32 %v7815, %v7833
    %v7877 = vmul.f32 %v7816, %v7845
    %v7878 = vmul.f32 %v7817, %v7846
    %v7879 = vmul.f32 %v7818, %v7847
    %v7880 = vmul.f32 %v7819, %v7848
    %v7881 = vmul.f32 %v7820, %v7849
    %v7882 = vmul.f32 %v7821, %v7850
    %v7883 = vmul.f32 %v7822, %v7851
    %v7884 = vmul.f32 %v7868, %v7059
    %v7885 = vmul.f32 %v7869, %v7059
    %v7886 = vmul.f32 %v7870, %v7059
    %v7887 = vmul.f32 %v7871, %v7059
    %v7888 = vmul.f32 %v7872, %v7059
    %v7889 = vmul.f32 %v7873, %v7059
    %v7890 = vmul.f32 %v7874, %v7059
    %v7891 = vmul.f32 %v7875, %v7059
    %v7892 = vmul.f32 %v7876, %v7059
    %v7893 = vmul.f32 %v7877, %v7059
    %v7894 = vmul.f32 %v7878, %v7059
    %v7895 = vmul.f32 %v7879, %v7059
    %v7896 = vmul.f32 %v7880, %v7059
    %v7897 = vmul.f32 %v7881, %v7059
    %v7898 = vmul.f32 %v7882, %v7059
    %v7899 = vmul.f32 %v7883, %v7059
    %v7900 = vadd.f32 %v7884, %v7079
    %v7901 = vadd.f32 %v7885, %v7079
    %v7902 = vadd.f32 %v7886, %v7079
    %v7903 = vadd.f32 %v7887, %v7079
    %v7904 = vadd.f32 %v7888, %v7079
    %v7905 = vadd.f32 %v7889, %v7079
    %v7906 = vadd.f32 %v7890, %v7079
    %v7907 = vadd.f32 %v7891, %v7079
    %v7908 = vadd.f32 %v7892, %v7079
    %v7909 = vadd.f32 %v7893, %v7079
    %v7910 = vadd.f32 %v7894, %v7079
    %v7911 = vadd.f32 %v7895, %v7079
    %v7912 = vadd.f32 %v7896, %v7079
    %v7913 = vadd.f32 %v7897, %v7079
    %v7914 = vadd.f32 %v7898, %v7079
    %v7915 = vadd.f32 %v7899, %v7079
    %v7932 = vrot.slane %v7900, 1
    %v7933 = vrot.slane %v7901, 1
    %v7934 = vrot.slane %v7902, 1
    %v7935 = vrot.slane %v7903, 1
    %v7936 = vrot.slane %v7904, 1
    %v7937 = vrot.slane %v7905, 1
    %v7938 = vrot.slane %v7906, 1
    %v7939 = vrot.slane %v7907, 1
    %v7940 = vrot.slane %v7908, 1
    %v7941 = vrot.slane %v7909, 1
    %v7942 = vrot.slane %v7910, 1
    %v7943 = vrot.slane %v7911, 1
    %v7944 = vrot.slane %v7912, 1
    %v7945 = vrot.slane %v7913, 1
    %v7946 = vrot.slane %v7914, 1
    %v7947 = vrot.slane %v7915, 1
    %v7964 = vadd.f32 %v7080, %v7932
    %v7965 = vadd.f32 %v7081, %v7933
    %v7966 = vadd.f32 %v7082, %v7934
    %v7967 = vadd.f32 %v7083, %v7935
    %v7968 = vadd.f32 %v7084, %v7936
    %v7969 = vadd.f32 %v7085, %v7937
    %v7970 = vadd.f32 %v7086, %v7938
    %v7971 = vadd.f32 %v7087, %v7939
    %v7972 = vadd.f32 %v7088, %v7940
    %v7973 = vadd.f32 %v7089, %v7941
    %v7974 = vadd.f32 %v7090, %v7942
    %v7975 = vadd.f32 %v7091, %v7943
    %v7976 = vadd.f32 %v7092, %v7944
    %v7977 = vadd.f32 %v7093, %v7945
    %v7978 = vadd.f32 %v7094, %v7946
    %v7979 = vadd.f32 %v7095, %v7947
    %v7996 = vrot.slane %v5235, 7
    %v7997 = vsel %vm278, %v7996, %v5234
    %v7998 = vrot.slane %v5236, 6
    %v7999 = vsel %vm281, %v7998, %v7997
    %v8000 = vrot.slane %v5237, 5
    %v8001 = vsel %vm284, %v8000, %v7999
    %v8002 = vrot.slane %v5238, 4
    %v8003 = vsel %vm287, %v8002, %v8001
    %v8004 = vrot.slane %v5239, 3
    %v8005 = vsel %vm290, %v8004, %v8003
    %v8006 = vrot.slane %v5240, 2
    %v8007 = vrot.slane %v5241, 1
    %v8008 = vsel %vm272, %v8007, %v8006
    %v8009 = vsel %vm275, %v5242, %v8008
    %v8010 = vrot.slane %v5243, 7
    %v8011 = vsel %vm278, %v8010, %v8009
    %v8012 = vrot.slane %v5244, 6
    %v8013 = vsel %vm281, %v8012, %v8011
    %v8014 = vrot.slane %v5245, 5
    %v8015 = vsel %vm284, %v8014, %v8013
    %v8016 = vrot.slane %v5246, 4
    %v8017 = vsel %vm287, %v8016, %v8015
    %v8018 = vrot.slane %v5247, 3
    %v8019 = vsel %vm290, %v8018, %v8017
    %v8020 = vrot.slane %v5248, 2
    %v8021 = vrot.slane %v5249, 1
    %v8022 = vsel %vm272, %v8021, %v8020
    %v8026 = vsel %vm748, %v8005, 0.0
    %8027 = vadd.xlane.f32.xlu0 %v8026
    %v8028 = vpop.xlane.xlu0 %8027
    %v8029 = vsel %vm308, %v8019, 0.0
    %8030 = vadd.xlane.f32.xlu0 %v8029
    %v8031 = vpop.xlane.xlu0 %8030
    %v8032 = vsel %vm755, %v8022, 0.0
    %8033 = vadd.xlane.f32.xlu0 %v8032
    %v8034 = vpop.xlane.xlu0 %8033
    %v8035 = vmul.f32 %v8028, %v315
    %v8036 = vmul.f32 %v8031, %v315
    %v8037 = vmul.f32 %v8034, %v315
    %v8038 = vmul.f32 %v5234, %v5234
    %v8039 = vmul.f32 %v5235, %v5235
    %v8040 = vmul.f32 %v5236, %v5236
    %v8041 = vmul.f32 %v5237, %v5237
    %v8042 = vmul.f32 %v5238, %v5238
    %v8043 = vmul.f32 %v5239, %v5239
    %v8044 = vmul.f32 %v5240, %v5240
    %v8045 = vmul.f32 %v5241, %v5241
    %v8046 = vmul.f32 %v5242, %v5242
    %v8047 = vmul.f32 %v5243, %v5243
    %v8048 = vmul.f32 %v5244, %v5244
    %v8049 = vmul.f32 %v5245, %v5245
    %v8050 = vmul.f32 %v5246, %v5246
    %v8051 = vmul.f32 %v5247, %v5247
    %v8052 = vmul.f32 %v5248, %v5248
    %v8053 = vmul.f32 %v5249, %v5249
    %v8070 = vrot.slane %v8039, 7
    %v8071 = vsel %vm278, %v8070, %v8038
    %v8072 = vrot.slane %v8040, 6
    %v8073 = vsel %vm281, %v8072, %v8071
    %v8074 = vrot.slane %v8041, 5
    %v8075 = vsel %vm284, %v8074, %v8073
    %v8076 = vrot.slane %v8042, 4
    %v8077 = vsel %vm287, %v8076, %v8075
    %v8078 = vrot.slane %v8043, 3
    %v8079 = vsel %vm290, %v8078, %v8077
    %v8080 = vrot.slane %v8044, 2
    %v8081 = vrot.slane %v8045, 1
    %v8082 = vsel %vm272, %v8081, %v8080
    %v8083 = vsel %vm275, %v8046, %v8082
    %v8084 = vrot.slane %v8047, 7
    %v8085 = vsel %vm278, %v8084, %v8083
    %v8086 = vrot.slane %v8048, 6
    %v8087 = vsel %vm281, %v8086, %v8085
    %v8088 = vrot.slane %v8049, 5
    %v8089 = vsel %vm284, %v8088, %v8087
    %v8090 = vrot.slane %v8050, 4
    %v8091 = vsel %vm287, %v8090, %v8089
    %v8092 = vrot.slane %v8051, 3
    %v8093 = vsel %vm290, %v8092, %v8091
    %v8094 = vrot.slane %v8052, 2
    %v8095 = vrot.slane %v8053, 1
    %v8096 = vsel %vm272, %v8095, %v8094
    %v8100 = vsel %vm748, %v8079, 0.0
    %8101 = vadd.xlane.f32.xlu0 %v8100
    %v8102 = vpop.xlane.xlu0 %8101
    %v8103 = vsel %vm308, %v8093, 0.0
    %8104 = vadd.xlane.f32.xlu0 %v8103
    %v8105 = vpop.xlane.xlu0 %8104
    %v8106 = vsel %vm755, %v8096, 0.0
    %8107 = vadd.xlane.f32.xlu0 %v8106
    %v8108 = vpop.xlane.xlu0 %8107
    %v8109 = vmul.f32 %v8102, %v315
    %v8110 = vmul.f32 %v8105, %v315
    %v8111 = vmul.f32 %v8108, %v315
    %v8115 = vrot.slane %v8035, 1
    %v8116 = vrot.slane %v8035, 2
    %v8117 = vrot.slane %v8035, 3
    %v8118 = vrot.slane %v8035, 4
    %v8119 = vrot.slane %v8035, 5
    %v8120 = vrot.slane %v8036, 6
    %v8121 = vrot.slane %v8036, 7
    %v8122 = vrot.slane %v8036, 1
    %v8123 = vrot.slane %v8036, 2
    %v8124 = vrot.slane %v8036, 3
    %v8125 = vrot.slane %v8036, 4
    %v8126 = vrot.slane %v8036, 5
    %v8127 = vrot.slane %v8037, 6
    %v8128 = vrot.slane %v8037, 7
    %v8145 = vsub.f32 %v5234, %v8035
    %v8146 = vsub.f32 %v5235, %v8115
    %v8147 = vsub.f32 %v5236, %v8116
    %v8148 = vsub.f32 %v5237, %v8117
    %v8149 = vsub.f32 %v5238, %v8118
    %v8150 = vsub.f32 %v5239, %v8119
    %v8151 = vsub.f32 %v5240, %v8120
    %v8152 = vsub.f32 %v5241, %v8121
    %v8153 = vsub.f32 %v5242, %v8036
    %v8154 = vsub.f32 %v5243, %v8122
    %v8155 = vsub.f32 %v5244, %v8123
    %v8156 = vsub.f32 %v5245, %v8124
    %v8157 = vsub.f32 %v5246, %v8125
    %v8158 = vsub.f32 %v5247, %v8126
    %v8159 = vsub.f32 %v5248, %v8127
    %v8160 = vsub.f32 %v5249, %v8128
    %v8161 = vmul.f32 %v8035, %v8035
    %v8162 = vmul.f32 %v8036, %v8036
    %v8163 = vmul.f32 %v8037, %v8037
    %v8164 = vsub.f32 %v8109, %v8161
    %v8165 = vsub.f32 %v8110, %v8162
    %v8166 = vsub.f32 %v8111, %v8163
    %v8167 = vadd.f32 %v8164, 1e-05
    %v8168 = vadd.f32 %v8165, 1e-05
    %v8169 = vadd.f32 %v8166, 1e-05
    %v8170 = vrsqrt.pop %v8167
    %v8171 = vrsqrt.pop %v8168
    %v8172 = vrsqrt.pop %v8169
    %v8176 = vrot.slane %v8170, 1
    %v8177 = vrot.slane %v8170, 2
    %v8178 = vrot.slane %v8170, 3
    %v8179 = vrot.slane %v8170, 4
    %v8180 = vrot.slane %v8170, 5
    %v8181 = vrot.slane %v8171, 6
    %v8182 = vrot.slane %v8171, 7
    %v8183 = vrot.slane %v8171, 1
    %v8184 = vrot.slane %v8171, 2
    %v8185 = vrot.slane %v8171, 3
    %v8186 = vrot.slane %v8171, 4
    %v8187 = vrot.slane %v8171, 5
    %v8188 = vrot.slane %v8172, 6
    %v8189 = vrot.slane %v8172, 7
    %v8206 = vmul.f32 %v8145, %v8170
    %v8207 = vmul.f32 %v8146, %v8176
    %v8208 = vmul.f32 %v8147, %v8177
    %v8209 = vmul.f32 %v8148, %v8178
    %v8210 = vmul.f32 %v8149, %v8179
    %v8211 = vmul.f32 %v8150, %v8180
    %v8212 = vmul.f32 %v8151, %v8181
    %v8213 = vmul.f32 %v8152, %v8182
    %v8214 = vmul.f32 %v8153, %v8171
    %v8215 = vmul.f32 %v8154, %v8183
    %v8216 = vmul.f32 %v8155, %v8184
    %v8217 = vmul.f32 %v8156, %v8185
    %v8218 = vmul.f32 %v8157, %v8186
    %v8219 = vmul.f32 %v8158, %v8187
    %v8220 = vmul.f32 %v8159, %v8188
    %v8221 = vmul.f32 %v8160, %v8189
    %v8222 = vmul.f32 %v8206, %v6491
    %v8223 = vmul.f32 %v8207, %v6491
    %v8224 = vmul.f32 %v8208, %v6491
    %v8225 = vmul.f32 %v8209, %v6491
    %v8226 = vmul.f32 %v8210, %v6491
    %v8227 = vmul.f32 %v8211, %v6491
    %v8228 = vmul.f32 %v8212, %v6491
    %v8229 = vmul.f32 %v8213, %v6491
    %v8230 = vmul.f32 %v8214, %v6491
    %v8231 = vmul.f32 %v8215, %v6491
    %v8232 = vmul.f32 %v8216, %v6491
    %v8233 = vmul.f32 %v8217, %v6491
    %v8234 = vmul.f32 %v8218, %v6491
    %v8235 = vmul.f32 %v8219, %v6491
    %v8236 = vmul.f32 %v8220, %v6491
    %v8237 = vmul.f32 %v8221, %v6491
    %v8238 = vadd.f32 %v8222, %v6511
    %v8239 = vadd.f32 %v8223, %v6511
    %v8240 = vadd.f32 %v8224, %v6511
    %v8241 = vadd.f32 %v8225, %v6511
    %v8242 = vadd.f32 %v8226, %v6511
    %v8243 = vadd.f32 %v8227, %v6511
    %v8244 = vadd.f32 %v8228, %v6511
    %v8245 = vadd.f32 %v8229, %v6511
    %v8246 = vadd.f32 %v8230, %v6511
    %v8247 = vadd.f32 %v8231, %v6511
    %v8248 = vadd.f32 %v8232, %v6511
    %v8249 = vadd.f32 %v8233, %v6511
    %v8250 = vadd.f32 %v8234, %v6511
    %v8251 = vadd.f32 %v8235, %v6511
    %v8252 = vadd.f32 %v8236, %v6511
    %v8253 = vadd.f32 %v8237, %v6511
    %v8270 = vrot.slane %v8238, 2
    %v8271 = vrot.slane %v8239, 1
    %v8272 = vsel %vm272, %v8271, %v8270
    %v8273 = vsel %vm275, %v8240, %v8272
    %v8274 = vrot.slane %v8241, 7
    %v8275 = vsel %vm278, %v8274, %v8273
    %v8276 = vrot.slane %v8242, 6
    %v8277 = vsel %vm281, %v8276, %v8275
    %v8278 = vrot.slane %v8243, 5
    %v8279 = vsel %vm284, %v8278, %v8277
    %v8280 = vrot.slane %v8244, 4
    %v8281 = vsel %vm287, %v8280, %v8279
    %v8282 = vrot.slane %v8245, 3
    %v8283 = vsel %vm290, %v8282, %v8281
    %v8284 = vrot.slane %v8246, 2
    %v8285 = vrot.slane %v8247, 1
    %v8286 = vsel %vm272, %v8285, %v8284
    %v8287 = vsel %vm275, %v8248, %v8286
    %v8288 = vrot.slane %v8249, 7
    %v8289 = vsel %vm278, %v8288, %v8287
    %v8290 = vrot.slane %v8250, 6
    %v8291 = vsel %vm281, %v8290, %v8289
    %v8292 = vrot.slane %v8251, 5
    %v8293 = vsel %vm284, %v8292, %v8291
    %v8294 = vrot.slane %v8252, 4
    %v8295 = vsel %vm287, %v8294, %v8293
    %v8296 = vrot.slane %v8253, 3
    %v8297 = vsel %vm290, %v8296, %v8295
    %v8298 = vsel %vm308, %v8283, 0
    %v8300 = vsel %vm308, %v8297, 0
    %8302 = vmatprep.subr.mxu0 0.0
    %8303 = vmatpush1.msra.mxu0 0.0
    %8304 = vmatprep.subr.mxu0 0.0
    %8305 = vmatpush1.msra.mxu0 0.0
    %8306 = vmatprep.subr.mxu0 0.0
    %8307 = vmatpush1.msra.mxu0 0.0
    %8308 = vmatprep.subr.mxu0 0.0
    %8309 = vmatpush1.msra.mxu0 0.0
    %8310 = vmatprep.subr.mxu0 0.0
    %8311 = vmatpush1.msra.mxu0 0.0
    %8312 = vmatprep.subr.mxu0 0.0
    %8313 = vmatpush1.msra.mxu0 0.0
    %8314 = vmatprep.subr.mxu0 0.0
    %8315 = vmatpush1.msra.mxu0 0.0
    %8316 = vmatprep.subr.mxu0 0.0
    %8317 = vmatpush1.msra.mxu0 0.0
    %8318 = vmatprep.subr.mxu0 0.0
    %8319 = vmatpush1.msra.mxu0 0.0
    %8320 = vmatprep.subr.mxu0 0.0
    %8321 = vmatpush1.msra.mxu0 0.0
    %8322 = vmatprep.subr.mxu0 0.0
    %8323 = vmatpush1.msra.mxu0 0.0
    %8324 = vmatprep.subr.mxu0 0.0
    %8325 = vmatpush1.msra.mxu0 0.0
    %8326 = vmatprep.subr.mxu0 0.0
    %8327 = vmatpush1.msra.mxu0 %v6531
    %8328 = vmatprep.subr.mxu0 0.0
    %8329 = vmatpush1.msra.mxu0 %v6530
    %8330 = vmatprep.subr.mxu0 0.0
    %8331 = vmatpush1.msra.mxu0 %v6529
    %8332 = vmatprep.subr.mxu0 0.0
    %8333 = vmatpush1.msra.mxu0 %v6528
    %8334 = vmatprep.subr.mxu0 0.0
    %8335 = vmatpush2.msra.mxu0 0.0
    %8336 = vmatprep.subr.mxu0 0.0
    %8337 = vmatpush2.msra.mxu0 0.0
    %8338 = vmatprep.subr.mxu0 0.0
    %8339 = vmatpush2.msra.mxu0 0.0
    %8340 = vmatprep.subr.mxu0 0.0
    %8341 = vmatpush2.msra.mxu0 0.0
    %8342 = vmatprep.subr.mxu0 0.0
    %8343 = vmatpush2.msra.mxu0 0.0
    %8344 = vmatprep.subr.mxu0 0.0
    %8345 = vmatpush2.msra.mxu0 0.0
    %8346 = vmatprep.subr.mxu0 0.0
    %8347 = vmatpush2.msra.mxu0 0.0
    %8348 = vmatprep.subr.mxu0 0.0
    %8349 = vmatpush2.msra.mxu0 0.0
    %8350 = vmatprep.subr.mxu0 0.0
    %8351 = vmatpush2.msra.mxu0 0.0
    %8352 = vmatprep.subr.mxu0 0.0
    %8353 = vmatpush2.msra.mxu0 0.0
    %8354 = vmatprep.subr.mxu0 0.0
    %8355 = vmatpush2.msra.mxu0 0.0
    %8356 = vmatprep.subr.mxu0 0.0
    %8357 = vmatpush2.msra.mxu0 0.0
    %8358 = vmatprep.subr.mxu0 0.0
    %8359 = vmatpush2.msra.mxu0 0.0
    %8360 = vmatprep.subr.mxu0 0.0
    %8361 = vmatpush2.msra.mxu0 0.0
    %8362 = vmatprep.subr.mxu0 0.0
    %8363 = vmatpush2.msra.mxu0 0.0
    %8364 = vmatprep.subr.mxu0 0.0
    %8365 = vmatpush2.msra.mxu0 0.0
    %8366 = vmatprep.mubr.f32.mxu0 0.0
    %8367 = vmatmul.mubr.f32.gmra.mxu0 %v8298
    %v8368 = vpop.f32.mrf.mxu0
    %v8369 = vadd.f32 %v6535, %v8368
    %v8370 = vpop.f32.mrf.mxu0
    %8371 = vmatprep.mubr.f32.mxu0 0.0
    %8372 = vmatmul.mubr.f32.gmra.mxu0 %v8300
    %v8373 = vpop.f32.mrf.mxu0
    %v8374 = vadd.f32 %v6535, %v8373
    %v8375 = vpop.f32.mrf.mxu0
    %8376 = vdwg.mxu0
    %v8377 = vmul.f32 %v8369, 0.5
    %v8378 = vmul.f32 %v8374, 0.5
    %v8379 = vmul.f32 %v8369, 0.70710677
    %v8380 = vmul.f32 %v8374, 0.70710677
    %v8381 = verf.f32.pop %v8379
    %v8382 = verf.f32.pop %v8380
    %v8383 = vadd.f32 %v8381, 1.0
    %v8384 = vadd.f32 %v8382, 1.0
    %v8385 = vmul.f32 %v8377, %v8383
    %v8386 = vmul.f32 %v8378, %v8384
    %8387 = vmatprep.subr.mxu0 0.0
    %8388 = vmatpush1.msra.mxu0 %v6684
    %8389 = vmatprep.subr.mxu0 0.0
    %8390 = vmatpush1.msra.mxu0 %v6683
    %8391 = vmatprep.subr.mxu0 0.0
    %8392 = vmatpush1.msra.mxu0 %v6682
    %8393 = vmatprep.subr.mxu0 0.0
    %8394 = vmatpush1.msra.mxu0 %v6681
    %8395 = vmatprep.subr.mxu0 0.0
    %8396 = vmatpush1.msra.mxu0 %v6680
    %8397 = vmatprep.subr.mxu0 0.0
    %8398 = vmatpush1.msra.mxu0 %v6679
    %8399 = vmatprep.subr.mxu0 0.0
    %8400 = vmatpush1.msra.mxu0 %v6678
    %8401 = vmatprep.subr.mxu0 0.0
    %8402 = vmatpush1.msra.mxu0 %v6677
    %8403 = vmatprep.subr.mxu0 0.0
    %8404 = vmatpush1.msra.mxu0 %v6676
    %8405 = vmatprep.subr.mxu0 0.0
    %8406 = vmatpush1.msra.mxu0 %v6675
    %8407 = vmatprep.subr.mxu0 0.0
    %8408 = vmatpush1.msra.mxu0 %v6674
    %8409 = vmatprep.subr.mxu0 0.0
    %8410 = vmatpush1.msra.mxu0 %v6673
    %8411 = vmatprep.subr.mxu0 0.0
    %8412 = vmatpush1.msra.mxu0 %v6672
    %8413 = vmatprep.subr.mxu0 0.0
    %8414 = vmatpush1.msra.mxu0 %v6671
    %8415 = vmatprep.subr.mxu0 0.0
    %8416 = vmatpush1.msra.mxu0 %v6670
    %8417 = vmatprep.subr.mxu0 0.0
    %8418 = vmatpush1.msra.mxu0 %v6669
    %8419 = vmatprep.subr.mxu0 0.0
    %8420 = vmatpush2.msra.mxu0 0.0
    %8421 = vmatprep.subr.mxu0 0.0
    %8422 = vmatpush2.msra.mxu0 0.0
    %8423 = vmatprep.subr.mxu0 0.0
    %8424 = vmatpush2.msra.mxu0 0.0
    %8425 = vmatprep.subr.mxu0 0.0
    %8426 = vmatpush2.msra.mxu0 0.0
    %8427 = vmatprep.subr.mxu0 0.0
    %8428 = vmatpush2.msra.mxu0 0.0
    %8429 = vmatprep.subr.mxu0 0.0
    %8430 = vmatpush2.msra.mxu0 0.0
    %8431 = vmatprep.subr.mxu0 0.0
    %8432 = vmatpush2.msra.mxu0 0.0
    %8433 = vmatprep.subr.mxu0 0.0
    %8434 = vmatpush2.msra.mxu0 0.0
    %8435 = vmatprep.subr.mxu0 0.0
    %8436 = vmatpush2.msra.mxu0 0.0
    %8437 = vmatprep.subr.mxu0 0.0
    %8438 = vmatpush2.msra.mxu0 0.0
    %8439 = vmatprep.subr.mxu0 0.0
    %8440 = vmatpush2.msra.mxu0 0.0
    %8441 = vmatprep.subr.mxu0 0.0
    %8442 = vmatpush2.msra.mxu0 0.0
    %8443 = vmatprep.subr.mxu0 0.0
    %8444 = vmatpush2.msra.mxu0 0.0
    %8445 = vmatprep.subr.mxu0 0.0
    %8446 = vmatpush2.msra.mxu0 0.0
    %8447 = vmatprep.subr.mxu0 0.0
    %8448 = vmatpush2.msra.mxu0 0.0
    %8449 = vmatprep.subr.mxu0 0.0
    %8450 = vmatpush2.msra.mxu0 0.0
    %8451 = vmatprep.mubr.f32.mxu0 0.0
    %8452 = vmatmul.mubr.f32.gmra.mxu0 %v8385
    %v8453 = vpop.f32.mrf.mxu0
    %v8454 = vadd.f32 0.0, %v8453
    %v8455 = vpop.f32.mrf.mxu0
    %8456 = vmatprep.mubr.f32.mxu0 0.0
    %8457 = vmatmul.mubr.f32.gmra.mxu0 %v8386
    %v8458 = vpop.f32.mrf.mxu0
    %v8459 = vadd.f32 0.0, %v8458
    %v8460 = vpop.f32.mrf.mxu0
    %8461 = vdwg.mxu0
    %v8464 = vrot.slane %v8454, 6
    %v8465 = vrot.slane %v8454, 7
    %v8466 = vrot.slane %v8454, 1
    %v8467 = vrot.slane %v8454, 2
    %v8468 = vrot.slane %v8454, 3
    %v8469 = vrot.slane %v8454, 4
    %v8470 = vrot.slane %v8454, 5
    %v8471 = vrot.slane %v8459, 6
    %v8472 = vrot.slane %v8459, 7
    %v8473 = vrot.slane %v8459, 1
    %v8474 = vrot.slane %v8459, 2
    %v8475 = vrot.slane %v8459, 3
    %v8476 = vrot.slane %v8459, 4
    %v8477 = vrot.slane %v8459, 5
    %v8494 = vadd.f32 %v5234, %v8464
    %v8495 = vadd.f32 %v5235, %v8465
    %v8496 = vadd.f32 %v5236, %v8454
    %v8497 = vadd.f32 %v5237, %v8466
    %v8498 = vadd.f32 %v5238, %v8467
    %v8499 = vadd.f32 %v5239, %v8468
    %v8500 = vadd.f32 %v5240, %v8469
    %v8501 = vadd.f32 %v5241, %v8470
    %v8502 = vadd.f32 %v5242, %v8471
    %v8503 = vadd.f32 %v5243, %v8472
    %v8504 = vadd.f32 %v5244, %v8459
    %v8505 = vadd.f32 %v5245, %v8473
    %v8506 = vadd.f32 %v5246, %v8474
    %v8507 = vadd.f32 %v5247, %v8475
    %v8508 = vadd.f32 %v5248, %v8476
    %v8509 = vadd.f32 %v5249, %v8477
    %v8510 = vadd.f32 %v8494, %v6811
    %v8511 = vadd.f32 %v8495, %v6811
    %v8512 = vadd.f32 %v8496, %v6811
    %v8513 = vadd.f32 %v8497, %v6811
    %v8514 = vadd.f32 %v8498, %v6811
    %v8515 = vadd.f32 %v8499, %v6811
    %v8516 = vadd.f32 %v8500, %v6811
    %v8517 = vadd.f32 %v8501, %v6811
    %v8518 = vadd.f32 %v8502, %v6811
    %v8519 = vadd.f32 %v8503, %v6811
    %v8520 = vadd.f32 %v8504, %v6811
    %v8521 = vadd.f32 %v8505, %v6811
    %v8522 = vadd.f32 %v8506, %v6811
    %v8523 = vadd.f32 %v8507, %v6811
    %v8524 = vadd.f32 %v8508, %v6811
    %v8525 = vadd.f32 %v8509, %v6811
    %v8542 = vrot.slane %v8511, 7
    %v8543 = vsel %vm278, %v8542, %v8510
    %v8544 = vrot.slane %v8512, 6
    %v8545 = vsel %vm281, %v8544, %v8543
    %v8546 = vrot.slane %v8513, 5
    %v8547 = vsel %vm284, %v8546, %v8545
    %v8548 = vrot.slane %v8514, 4
    %v8549 = vsel %vm287, %v8548, %v8547
    %v8550 = vrot.slane %v8515, 3
    %v8551 = vsel %vm290, %v8550, %v8549
    %v8552 = vrot.slane %v8516, 2
    %v8553 = vrot.slane %v8517, 1
    %v8554 = vsel %vm272, %v8553, %v8552
    %v8555 = vsel %vm275, %v8518, %v8554
    %v8556 = vrot.slane %v8519, 7
    %v8557 = vsel %vm278, %v8556, %v8555
    %v8558 = vrot.slane %v8520, 6
    %v8559 = vsel %vm281, %v8558, %v8557
    %v8560 = vrot.slane %v8521, 5
    %v8561 = vsel %vm284, %v8560, %v8559
    %v8562 = vrot.slane %v8522, 4
    %v8563 = vsel %vm287, %v8562, %v8561
    %v8564 = vrot.slane %v8523, 3
    %v8565 = vsel %vm290, %v8564, %v8563
    %v8566 = vrot.slane %v8524, 2
    %v8567 = vrot.slane %v8525, 1
    %v8568 = vsel %vm272, %v8567, %v8566
    %v8572 = vsel %vm748, %v8551, 0.0
    %8573 = vadd.xlane.f32.xlu0 %v8572
    %v8574 = vpop.xlane.xlu0 %8573
    %v8575 = vsel %vm308, %v8565, 0.0
    %8576 = vadd.xlane.f32.xlu0 %v8575
    %v8577 = vpop.xlane.xlu0 %8576
    %v8578 = vsel %vm755, %v8568, 0.0
    %8579 = vadd.xlane.f32.xlu0 %v8578
    %v8580 = vpop.xlane.xlu0 %8579
    %v8581 = vmul.f32 %v8574, %v315
    %v8582 = vmul.f32 %v8577, %v315
    %v8583 = vmul.f32 %v8580, %v315
    %v8584 = vmul.f32 %v8510, %v8510
    %v8585 = vmul.f32 %v8511, %v8511
    %v8586 = vmul.f32 %v8512, %v8512
    %v8587 = vmul.f32 %v8513, %v8513
    %v8588 = vmul.f32 %v8514, %v8514
    %v8589 = vmul.f32 %v8515, %v8515
    %v8590 = vmul.f32 %v8516, %v8516
    %v8591 = vmul.f32 %v8517, %v8517
    %v8592 = vmul.f32 %v8518, %v8518
    %v8593 = vmul.f32 %v8519, %v8519
    %v8594 = vmul.f32 %v8520, %v8520
    %v8595 = vmul.f32 %v8521, %v8521
    %v8596 = vmul.f32 %v8522, %v8522
    %v8597 = vmul.f32 %v8523, %v8523
    %v8598 = vmul.f32 %v8524, %v8524
    %v8599 = vmul.f32 %v8525, %v8525
    %v8616 = vrot.slane %v8585, 7
    %v8617 = vsel %vm278, %v8616, %v8584
    %v8618 = vrot.slane %v8586, 6
    %v8619 = vsel %vm281, %v8618, %v8617
    %v8620 = vrot.slane %v8587, 5
    %v8621 = vsel %vm284, %v8620, %v8619
    %v8622 = vrot.slane %v8588, 4
    %v8623 = vsel %vm287, %v8622, %v8621
    %v8624 = vrot.slane %v8589, 3
    %v8625 = vsel %vm290, %v8624, %v8623
    %v8626 = vrot.slane %v8590, 2
    %v8627 = vrot.slane %v8591, 1
    %v8628 = vsel %vm272, %v8627, %v8626
    %v8629 = vsel %vm275, %v8592, %v8628
    %v8630 = vrot.slane %v8593, 7
    %v8631 = vsel %vm278, %v8630, %v8629
    %v8632 = vrot.slane %v8594, 6
    %v8633 = vsel %vm281, %v8632, %v8631
    %v8634 = vrot.slane %v8595, 5
    %v8635 = vsel %vm284, %v8634, %v8633
    %v8636 = vrot.slane %v8596, 4
    %v8637 = vsel %vm287, %v8636, %v8635
    %v8638 = vrot.slane %v8597, 3
    %v8639 = vsel %vm290, %v8638, %v8637
    %v8640 = vrot.slane %v8598, 2
    %v8641 = vrot.slane %v8599, 1
    %v8642 = vsel %vm272, %v8641, %v8640
    %v8646 = vsel %vm748, %v8625, 0.0
    %8647 = vadd.xlane.f32.xlu0 %v8646
    %v8648 = vpop.xlane.xlu0 %8647
    %v8649 = vsel %vm308, %v8639, 0.0
    %8650 = vadd.xlane.f32.xlu0 %v8649
    %v8651 = vpop.xlane.xlu0 %8650
    %v8652 = vsel %vm755, %v8642, 0.0
    %8653 = vadd.xlane.f32.xlu0 %v8652
    %v8654 = vpop.xlane.xlu0 %8653
    %v8655 = vmul.f32 %v8648, %v315
    %v8656 = vmul.f32 %v8651, %v315
    %v8657 = vmul.f32 %v8654, %v315
    %v8661 = vrot.slane %v8581, 1
    %v8662 = vrot.slane %v8581, 2
    %v8663 = vrot.slane %v8581, 3
    %v8664 = vrot.slane %v8581, 4
    %v8665 = vrot.slane %v8581, 5
    %v8666 = vrot.slane %v8582, 6
    %v8667 = vrot.slane %v8582, 7
    %v8668 = vrot.slane %v8582, 1
    %v8669 = vrot.slane %v8582, 2
    %v8670 = vrot.slane %v8582, 3
    %v8671 = vrot.slane %v8582, 4
    %v8672 = vrot.slane %v8582, 5
    %v8673 = vrot.slane %v8583, 6
    %v8674 = vrot.slane %v8583, 7
    %v8691 = vsub.f32 %v8510, %v8581
    %v8692 = vsub.f32 %v8511, %v8661
    %v8693 = vsub.f32 %v8512, %v8662
    %v8694 = vsub.f32 %v8513, %v8663
    %v8695 = vsub.f32 %v8514, %v8664
    %v8696 = vsub.f32 %v8515, %v8665
    %v8697 = vsub.f32 %v8516, %v8666
    %v8698 = vsub.f32 %v8517, %v8667
    %v8699 = vsub.f32 %v8518, %v8582
    %v8700 = vsub.f32 %v8519, %v8668
    %v8701 = vsub.f32 %v8520, %v8669
    %v8702 = vsub.f32 %v8521, %v8670
    %v8703 = vsub.f32 %v8522, %v8671
    %v8704 = vsub.f32 %v8523, %v8672
    %v8705 = vsub.f32 %v8524, %v8673
    %v8706 = vsub.f32 %v8525, %v8674
    %v8707 = vmul.f32 %v8581, %v8581
    %v8708 = vmul.f32 %v8582, %v8582
    %v8709 = vmul.f32 %v8583, %v8583
    %v8710 = vsub.f32 %v8655, %v8707
    %v8711 = vsub.f32 %v8656, %v8708
    %v8712 = vsub.f32 %v8657, %v8709
    %v8713 = vadd.f32 %v8710, 1e-05
    %v8714 = vadd.f32 %v8711, 1e-05
    %v8715 = vadd.f32 %v8712, 1e-05
    %v8716 = vrsqrt.pop %v8713
    %v8717 = vrsqrt.pop %v8714
    %v8718 = vrsqrt.pop %v8715
    %v8722 = vrot.slane %v8716, 1
    %v8723 = vrot.slane %v8716, 2
    %v8724 = vrot.slane %v8716, 3
    %v8725 = vrot.slane %v8716, 4
    %v8726 = vrot.slane %v8716, 5
    %v8727 = vrot.slane %v8717, 6
    %v8728 = vrot.slane %v8717, 7
    %v8729 = vrot.slane %v8717, 1
    %v8730 = vrot.slane %v8717, 2
    %v8731 = vrot.slane %v8717, 3
    %v8732 = vrot.slane %v8717, 4
    %v8733 = vrot.slane %v8717, 5
    %v8734 = vrot.slane %v8718, 6
    %v8735 = vrot.slane %v8718, 7
    %v8752 = vmul.f32 %v8691, %v8716
    %v8753 = vmul.f32 %v8692, %v8722
    %v8754 = vmul.f32 %v8693, %v8723
    %v8755 = vmul.f32 %v8694, %v8724
    %v8756 = vmul.f32 %v8695, %v8725
    %v8757 = vmul.f32 %v8696, %v8726
    %v8758 = vmul.f32 %v8697, %v8727
    %v8759 = vmul.f32 %v8698, %v8728
    %v8760 = vmul.f32 %v8699, %v8717
    %v8761 = vmul.f32 %v8700, %v8729
    %v8762 = vmul.f32 %v8701, %v8730
    %v8763 = vmul.f32 %v8702, %v8731
    %v8764 = vmul.f32 %v8703, %v8732
    %v8765 = vmul.f32 %v8704, %v8733
    %v8766 = vmul.f32 %v8705, %v8734
    %v8767 = vmul.f32 %v8706, %v8735
    %v8768 = vmul.f32 %v8752, %v7059
    %v8769 = vmul.f32 %v8753, %v7059
    %v8770 = vmul.f32 %v8754, %v7059
    %v8771 = vmul.f32 %v8755, %v7059
    %v8772 = vmul.f32 %v8756, %v7059
    %v8773 = vmul.f32 %v8757, %v7059
    %v8774 = vmul.f32 %v8758, %v7059
    %v8775 = vmul.f32 %v8759, %v7059
    %v8776 = vmul.f32 %v8760, %v7059
    %v8777 = vmul.f32 %v8761, %v7059
    %v8778 = vmul.f32 %v8762, %v7059
    %v8779 = vmul.f32 %v8763, %v7059
    %v8780 = vmul.f32 %v8764, %v7059
    %v8781 = vmul.f32 %v8765, %v7059
    %v8782 = vmul.f32 %v8766, %v7059
    %v8783 = vmul.f32 %v8767, %v7059
    %v8784 = vadd.f32 %v8768, %v7079
    %v8785 = vadd.f32 %v8769, %v7079
    %v8786 = vadd.f32 %v8770, %v7079
    %v8787 = vadd.f32 %v8771, %v7079
    %v8788 = vadd.f32 %v8772, %v7079
    %v8789 = vadd.f32 %v8773, %v7079
    %v8790 = vadd.f32 %v8774, %v7079
    %v8791 = vadd.f32 %v8775, %v7079
    %v8792 = vadd.f32 %v8776, %v7079
    %v8793 = vadd.f32 %v8777, %v7079
    %v8794 = vadd.f32 %v8778, %v7079
    %v8795 = vadd.f32 %v8779, %v7079
    %v8796 = vadd.f32 %v8780, %v7079
    %v8797 = vadd.f32 %v8781, %v7079
    %v8798 = vadd.f32 %v8782, %v7079
    %v8799 = vadd.f32 %v8783, %v7079
    %v8816 = vrot.slane %v8784, 2
    %v8817 = vrot.slane %v8785, 2
    %v8818 = vrot.slane %v8786, 2
    %v8819 = vrot.slane %v8787, 2
    %v8820 = vrot.slane %v8788, 2
    %v8821 = vrot.slane %v8789, 2
    %v8822 = vrot.slane %v8790, 2
    %v8823 = vrot.slane %v8791, 2
    %v8824 = vrot.slane %v8792, 2
    %v8825 = vrot.slane %v8793, 2
    %v8826 = vrot.slane %v8794, 2
    %v8827 = vrot.slane %v8795, 2
    %v8828 = vrot.slane %v8796, 2
    %v8829 = vrot.slane %v8797, 2
    %v8830 = vrot.slane %v8798, 2
    %v8831 = vrot.slane %v8799, 2
    %v8848 = vadd.f32 %v7964, %v8816
    %v8849 = vadd.f32 %v7965, %v8817
    %v8850 = vadd.f32 %v7966, %v8818
    %v8851 = vadd.f32 %v7967, %v8819
    %v8852 = vadd.f32 %v7968, %v8820
    %v8853 = vadd.f32 %v7969, %v8821
    %v8854 = vadd.f32 %v7970, %v8822
    %v8855 = vadd.f32 %v7971, %v8823
    %v8856 = vadd.f32 %v7972, %v8824
    %v8857 = vadd.f32 %v7973, %v8825
    %v8858 = vadd.f32 %v7974, %v8826
    %v8859 = vadd.f32 %v7975, %v8827
    %v8860 = vadd.f32 %v7976, %v8828
    %v8861 = vadd.f32 %v7977, %v8829
    %v8862 = vadd.f32 %v7978, %v8830
    %v8863 = vadd.f32 %v7979, %v8831
    %v8880 = vrot.slane %v5437, 7
    %v8881 = vsel %vm281, %v8880, %v5436
    %v8882 = vrot.slane %v5438, 6
    %v8883 = vsel %vm284, %v8882, %v8881
    %v8884 = vrot.slane %v5439, 5
    %v8885 = vsel %vm287, %v8884, %v8883
    %v8886 = vrot.slane %v5440, 4
    %v8887 = vsel %vm290, %v8886, %v8885
    %v8888 = vrot.slane %v5441, 3
    %v8889 = vrot.slane %v5442, 2
    %v8890 = vsel %vm272, %v8889, %v8888
    %v8891 = vrot.slane %v5443, 1
    %v8892 = vsel %vm275, %v8891, %v8890
    %v8893 = vsel %vm278, %v5444, %v8892
    %v8894 = vrot.slane %v5445, 7
    %v8895 = vsel %vm281, %v8894, %v8893
    %v8896 = vrot.slane %v5446, 6
    %v8897 = vsel %vm284, %v8896, %v8895
    %v8898 = vrot.slane %v5447, 5
    %v8899 = vsel %vm287, %v8898, %v8897
    %v8900 = vrot.slane %v5448, 4
    %v8901 = vsel %vm290, %v8900, %v8899
    %v8902 = vrot.slane %v5449, 3
    %v8903 = vrot.slane %v5450, 2
    %v8904 = vsel %vm272, %v8903, %v8902
    %v8905 = vrot.slane %v5451, 1
    %v8906 = vsel %vm275, %v8905, %v8904
    %v8910 = vsel %vm948, %v8887, 0.0
    %8911 = vadd.xlane.f32.xlu0 %v8910
    %v8912 = vpop.xlane.xlu0 %8911
    %v8913 = vsel %vm308, %v8901, 0.0
    %8914 = vadd.xlane.f32.xlu0 %v8913
    %v8915 = vpop.xlane.xlu0 %8914
    %v8916 = vsel %vm955, %v8906, 0.0
    %8917 = vadd.xlane.f32.xlu0 %v8916
    %v8918 = vpop.xlane.xlu0 %8917
    %v8919 = vmul.f32 %v8912, %v315
    %v8920 = vmul.f32 %v8915, %v315
    %v8921 = vmul.f32 %v8918, %v315
    %v8922 = vmul.f32 %v5436, %v5436
    %v8923 = vmul.f32 %v5437, %v5437
    %v8924 = vmul.f32 %v5438, %v5438
    %v8925 = vmul.f32 %v5439, %v5439
    %v8926 = vmul.f32 %v5440, %v5440
    %v8927 = vmul.f32 %v5441, %v5441
    %v8928 = vmul.f32 %v5442, %v5442
    %v8929 = vmul.f32 %v5443, %v5443
    %v8930 = vmul.f32 %v5444, %v5444
    %v8931 = vmul.f32 %v5445, %v5445
    %v8932 = vmul.f32 %v5446, %v5446
    %v8933 = vmul.f32 %v5447, %v5447
    %v8934 = vmul.f32 %v5448, %v5448
    %v8935 = vmul.f32 %v5449, %v5449
    %v8936 = vmul.f32 %v5450, %v5450
    %v8937 = vmul.f32 %v5451, %v5451
    %v8954 = vrot.slane %v8923, 7
    %v8955 = vsel %vm281, %v8954, %v8922
    %v8956 = vrot.slane %v8924, 6
    %v8957 = vsel %vm284, %v8956, %v8955
    %v8958 = vrot.slane %v8925, 5
    %v8959 = vsel %vm287, %v8958, %v8957
    %v8960 = vrot.slane %v8926, 4
    %v8961 = vsel %vm290, %v8960, %v8959
    %v8962 = vrot.slane %v8927, 3
    %v8963 = vrot.slane %v8928, 2
    %v8964 = vsel %vm272, %v8963, %v8962
    %v8965 = vrot.slane %v8929, 1
    %v8966 = vsel %vm275, %v8965, %v8964
    %v8967 = vsel %vm278, %v8930, %v8966
    %v8968 = vrot.slane %v8931, 7
    %v8969 = vsel %vm281, %v8968, %v8967
    %v8970 = vrot.slane %v8932, 6
    %v8971 = vsel %vm284, %v8970, %v8969
    %v8972 = vrot.slane %v8933, 5
    %v8973 = vsel %vm287, %v8972, %v8971
    %v8974 = vrot.slane %v8934, 4
    %v8975 = vsel %vm290, %v8974, %v8973
    %v8976 = vrot.slane %v8935, 3
    %v8977 = vrot.slane %v8936, 2
    %v8978 = vsel %vm272, %v8977, %v8976
    %v8979 = vrot.slane %v8937, 1
    %v8980 = vsel %vm275, %v8979, %v8978
    %v8984 = vsel %vm948, %v8961, 0.0
    %8985 = vadd.xlane.f32.xlu0 %v8984
    %v8986 = vpop.xlane.xlu0 %8985
    %v8987 = vsel %vm308, %v8975, 0.0
    %8988 = vadd.xlane.f32.xlu0 %v8987
    %v8989 = vpop.xlane.xlu0 %8988
    %v8990 = vsel %vm955, %v8980, 0.0
    %8991 = vadd.xlane.f32.xlu0 %v8990
    %v8992 = vpop.xlane.xlu0 %8991
    %v8993 = vmul.f32 %v8986, %v315
    %v8994 = vmul.f32 %v8989, %v315
    %v8995 = vmul.f32 %v8992, %v315
    %v8999 = vrot.slane %v8919, 1
    %v9000 = vrot.slane %v8919, 2
    %v9001 = vrot.slane %v8919, 3
    %v9002 = vrot.slane %v8919, 4
    %v9003 = vrot.slane %v8920, 5
    %v9004 = vrot.slane %v8920, 6
    %v9005 = vrot.slane %v8920, 7
    %v9006 = vrot.slane %v8920, 1
    %v9007 = vrot.slane %v8920, 2
    %v9008 = vrot.slane %v8920, 3
    %v9009 = vrot.slane %v8920, 4
    %v9010 = vrot.slane %v8921, 5
    %v9011 = vrot.slane %v8921, 6
    %v9012 = vrot.slane %v8921, 7
    %v9029 = vsub.f32 %v5436, %v8919
    %v9030 = vsub.f32 %v5437, %v8999
    %v9031 = vsub.f32 %v5438, %v9000
    %v9032 = vsub.f32 %v5439, %v9001
    %v9033 = vsub.f32 %v5440, %v9002
    %v9034 = vsub.f32 %v5441, %v9003
    %v9035 = vsub.f32 %v5442, %v9004
    %v9036 = vsub.f32 %v5443, %v9005
    %v9037 = vsub.f32 %v5444, %v8920
    %v9038 = vsub.f32 %v5445, %v9006
    %v9039 = vsub.f32 %v5446, %v9007
    %v9040 = vsub.f32 %v5447, %v9008
    %v9041 = vsub.f32 %v5448, %v9009
    %v9042 = vsub.f32 %v5449, %v9010
    %v9043 = vsub.f32 %v5450, %v9011
    %v9044 = vsub.f32 %v5451, %v9012
    %v9045 = vmul.f32 %v8919, %v8919
    %v9046 = vmul.f32 %v8920, %v8920
    %v9047 = vmul.f32 %v8921, %v8921
    %v9048 = vsub.f32 %v8993, %v9045
    %v9049 = vsub.f32 %v8994, %v9046
    %v9050 = vsub.f32 %v8995, %v9047
    %v9051 = vadd.f32 %v9048, 1e-05
    %v9052 = vadd.f32 %v9049, 1e-05
    %v9053 = vadd.f32 %v9050, 1e-05
    %v9054 = vrsqrt.pop %v9051
    %v9055 = vrsqrt.pop %v9052
    %v9056 = vrsqrt.pop %v9053
    %v9060 = vrot.slane %v9054, 1
    %v9061 = vrot.slane %v9054, 2
    %v9062 = vrot.slane %v9054, 3
    %v9063 = vrot.slane %v9054, 4
    %v9064 = vrot.slane %v9055, 5
    %v9065 = vrot.slane %v9055, 6
    %v9066 = vrot.slane %v9055, 7
    %v9067 = vrot.slane %v9055, 1
    %v9068 = vrot.slane %v9055, 2
    %v9069 = vrot.slane %v9055, 3
    %v9070 = vrot.slane %v9055, 4
    %v9071 = vrot.slane %v9056, 5
    %v9072 = vrot.slane %v9056, 6
    %v9073 = vrot.slane %v9056, 7
    %v9090 = vmul.f32 %v9029, %v9054
    %v9091 = vmul.f32 %v9030, %v9060
    %v9092 = vmul.f32 %v9031, %v9061
    %v9093 = vmul.f32 %v9032, %v9062
    %v9094 = vmul.f32 %v9033, %v9063
    %v9095 = vmul.f32 %v9034, %v9064
    %v9096 = vmul.f32 %v9035, %v9065
    %v9097 = vmul.f32 %v9036, %v9066
    %v9098 = vmul.f32 %v9037, %v9055
    %v9099 = vmul.f32 %v9038, %v9067
    %v9100 = vmul.f32 %v9039, %v9068
    %v9101 = vmul.f32 %v9040, %v9069
    %v9102 = vmul.f32 %v9041, %v9070
    %v9103 = vmul.f32 %v9042, %v9071
    %v9104 = vmul.f32 %v9043, %v9072
    %v9105 = vmul.f32 %v9044, %v9073
    %v9106 = vmul.f32 %v9090, %v6491
    %v9107 = vmul.f32 %v9091, %v6491
    %v9108 = vmul.f32 %v9092, %v6491
    %v9109 = vmul.f32 %v9093, %v6491
    %v9110 = vmul.f32 %v9094, %v6491
    %v9111 = vmul.f32 %v9095, %v6491
    %v9112 = vmul.f32 %v9096, %v6491
    %v9113 = vmul.f32 %v9097, %v6491
    %v9114 = vmul.f32 %v9098, %v6491
    %v9115 = vmul.f32 %v9099, %v6491
    %v9116 = vmul.f32 %v9100, %v6491
    %v9117 = vmul.f32 %v9101, %v6491
    %v9118 = vmul.f32 %v9102, %v6491
    %v9119 = vmul.f32 %v9103, %v6491
    %v9120 = vmul.f32 %v9104, %v6491
    %v9121 = vmul.f32 %v9105, %v6491
    %v9122 = vadd.f32 %v9106, %v6511
    %v9123 = vadd.f32 %v9107, %v6511
    %v9124 = vadd.f32 %v9108, %v6511
    %v9125 = vadd.f32 %v9109, %v6511
    %v9126 = vadd.f32 %v9110, %v6511
    %v9127 = vadd.f32 %v9111, %v6511
    %v9128 = vadd.f32 %v9112, %v6511
    %v9129 = vadd.f32 %v9113, %v6511
    %v9130 = vadd.f32 %v9114, %v6511
    %v9131 = vadd.f32 %v9115, %v6511
    %v9132 = vadd.f32 %v9116, %v6511
    %v9133 = vadd.f32 %v9117, %v6511
    %v9134 = vadd.f32 %v9118, %v6511
    %v9135 = vadd.f32 %v9119, %v6511
    %v9136 = vadd.f32 %v9120, %v6511
    %v9137 = vadd.f32 %v9121, %v6511
    %v9154 = vrot.slane %v9122, 3
    %v9155 = vrot.slane %v9123, 2
    %v9156 = vsel %vm272, %v9155, %v9154
    %v9157 = vrot.slane %v9124, 1
    %v9158 = vsel %vm275, %v9157, %v9156
    %v9159 = vsel %vm278, %v9125, %v9158
    %v9160 = vrot.slane %v9126, 7
    %v9161 = vsel %vm281, %v9160, %v9159
    %v9162 = vrot.slane %v9127, 6
    %v9163 = vsel %vm284, %v9162, %v9161
    %v9164 = vrot.slane %v9128, 5
    %v9165 = vsel %vm287, %v9164, %v9163
    %v9166 = vrot.slane %v9129, 4
    %v9167 = vsel %vm290, %v9166, %v9165
    %v9168 = vrot.slane %v9130, 3
    %v9169 = vrot.slane %v9131, 2
    %v9170 = vsel %vm272, %v9169, %v9168
    %v9171 = vrot.slane %v9132, 1
    %v9172 = vsel %vm275, %v9171, %v9170
    %v9173 = vsel %vm278, %v9133, %v9172
    %v9174 = vrot.slane %v9134, 7
    %v9175 = vsel %vm281, %v9174, %v9173
    %v9176 = vrot.slane %v9135, 6
    %v9177 = vsel %vm284, %v9176, %v9175
    %v9178 = vrot.slane %v9136, 5
    %v9179 = vsel %vm287, %v9178, %v9177
    %v9180 = vrot.slane %v9137, 4
    %v9181 = vsel %vm290, %v9180, %v9179
    %v9182 = vsel %vm308, %v9167, 0
    %v9184 = vsel %vm308, %v9181, 0
    %9186 = vmatprep.subr.mxu0 0.0
    %9187 = vmatpush1.msra.mxu0 0.0
    %9188 = vmatprep.subr.mxu0 0.0
    %9189 = vmatpush1.msra.mxu0 0.0
    %9190 = vmatprep.subr.mxu0 0.0
    %9191 = vmatpush1.msra.mxu0 0.0
    %9192 = vmatprep.subr.mxu0 0.0
    %9193 = vmatpush1.msra.mxu0 0.0
    %9194 = vmatprep.subr.mxu0 0.0
    %9195 = vmatpush1.msra.mxu0 0.0
    %9196 = vmatprep.subr.mxu0 0.0
    %9197 = vmatpush1.msra.mxu0 0.0
    %9198 = vmatprep.subr.mxu0 0.0
    %9199 = vmatpush1.msra.mxu0 0.0
    %9200 = vmatprep.subr.mxu0 0.0
    %9201 = vmatpush1.msra.mxu0 0.0
    %9202 = vmatprep.subr.mxu0 0.0
    %9203 = vmatpush1.msra.mxu0 0.0
    %9204 = vmatprep.subr.mxu0 0.0
    %9205 = vmatpush1.msra.mxu0 0.0
    %9206 = vmatprep.subr.mxu0 0.0
    %9207 = vmatpush1.msra.mxu0 0.0
    %9208 = vmatprep.subr.mxu0 0.0
    %9209 = vmatpush1.msra.mxu0 0.0
    %9210 = vmatprep.subr.mxu0 0.0
    %9211 = vmatpush1.msra.mxu0 %v6531
    %9212 = vmatprep.subr.mxu0 0.0
    %9213 = vmatpush1.msra.mxu0 %v6530
    %9214 = vmatprep.subr.mxu0 0.0
    %9215 = vmatpush1.msra.mxu0 %v6529
    %9216 = vmatprep.subr.mxu0 0.0
    %9217 = vmatpush1.msra.mxu0 %v6528
    %9218 = vmatprep.subr.mxu0 0.0
    %9219 = vmatpush2.msra.mxu0 0.0
    %9220 = vmatprep.subr.mxu0 0.0
    %9221 = vmatpush2.msra.mxu0 0.0
    %9222 = vmatprep.subr.mxu0 0.0
    %9223 = vmatpush2.msra.mxu0 0.0
    %9224 = vmatprep.subr.mxu0 0.0
    %9225 = vmatpush2.msra.mxu0 0.0
    %9226 = vmatprep.subr.mxu0 0.0
    %9227 = vmatpush2.msra.mxu0 0.0
    %9228 = vmatprep.subr.mxu0 0.0
    %9229 = vmatpush2.msra.mxu0 0.0
    %9230 = vmatprep.subr.mxu0 0.0
    %9231 = vmatpush2.msra.mxu0 0.0
    %9232 = vmatprep.subr.mxu0 0.0
    %9233 = vmatpush2.msra.mxu0 0.0
    %9234 = vmatprep.subr.mxu0 0.0
    %9235 = vmatpush2.msra.mxu0 0.0
    %9236 = vmatprep.subr.mxu0 0.0
    %9237 = vmatpush2.msra.mxu0 0.0
    %9238 = vmatprep.subr.mxu0 0.0
    %9239 = vmatpush2.msra.mxu0 0.0
    %9240 = vmatprep.subr.mxu0 0.0
    %9241 = vmatpush2.msra.mxu0 0.0
    %9242 = vmatprep.subr.mxu0 0.0
    %9243 = vmatpush2.msra.mxu0 0.0
    %9244 = vmatprep.subr.mxu0 0.0
    %9245 = vmatpush2.msra.mxu0 0.0
    %9246 = vmatprep.subr.mxu0 0.0
    %9247 = vmatpush2.msra.mxu0 0.0
    %9248 = vmatprep.subr.mxu0 0.0
    %9249 = vmatpush2.msra.mxu0 0.0
    %9250 = vmatprep.mubr.f32.mxu0 0.0
    %9251 = vmatmul.mubr.f32.gmra.mxu0 %v9182
    %v9252 = vpop.f32.mrf.mxu0
    %v9253 = vadd.f32 %v6535, %v9252
    %v9254 = vpop.f32.mrf.mxu0
    %9255 = vmatprep.mubr.f32.mxu0 0.0
    %9256 = vmatmul.mubr.f32.gmra.mxu0 %v9184
    %v9257 = vpop.f32.mrf.mxu0
    %v9258 = vadd.f32 %v6535, %v9257
    %v9259 = vpop.f32.mrf.mxu0
    %9260 = vdwg.mxu0
    %v9261 = vmul.f32 %v9253, 0.5
    %v9262 = vmul.f32 %v9258, 0.5
    %v9263 = vmul.f32 %v9253, 0.70710677
    %v9264 = vmul.f32 %v9258, 0.70710677
    %v9265 = verf.f32.pop %v9263
    %v9266 = verf.f32.pop %v9264
    %v9267 = vadd.f32 %v9265, 1.0
    %v9268 = vadd.f32 %v9266, 1.0
    %v9269 = vmul.f32 %v9261, %v9267
    %v9270 = vmul.f32 %v9262, %v9268
    %9271 = vmatprep.subr.mxu0 0.0
    %9272 = vmatpush1.msra.mxu0 %v6684
    %9273 = vmatprep.subr.mxu0 0.0
    %9274 = vmatpush1.msra.mxu0 %v6683
    %9275 = vmatprep.subr.mxu0 0.0
    %9276 = vmatpush1.msra.mxu0 %v6682
    %9277 = vmatprep.subr.mxu0 0.0
    %9278 = vmatpush1.msra.mxu0 %v6681
    %9279 = vmatprep.subr.mxu0 0.0
    %9280 = vmatpush1.msra.mxu0 %v6680
    %9281 = vmatprep.subr.mxu0 0.0
    %9282 = vmatpush1.msra.mxu0 %v6679
    %9283 = vmatprep.subr.mxu0 0.0
    %9284 = vmatpush1.msra.mxu0 %v6678
    %9285 = vmatprep.subr.mxu0 0.0
    %9286 = vmatpush1.msra.mxu0 %v6677
    %9287 = vmatprep.subr.mxu0 0.0
    %9288 = vmatpush1.msra.mxu0 %v6676
    %9289 = vmatprep.subr.mxu0 0.0
    %9290 = vmatpush1.msra.mxu0 %v6675
    %9291 = vmatprep.subr.mxu0 0.0
    %9292 = vmatpush1.msra.mxu0 %v6674
    %9293 = vmatprep.subr.mxu0 0.0
    %9294 = vmatpush1.msra.mxu0 %v6673
    %9295 = vmatprep.subr.mxu0 0.0
    %9296 = vmatpush1.msra.mxu0 %v6672
    %9297 = vmatprep.subr.mxu0 0.0
    %9298 = vmatpush1.msra.mxu0 %v6671
    %9299 = vmatprep.subr.mxu0 0.0
    %9300 = vmatpush1.msra.mxu0 %v6670
    %9301 = vmatprep.subr.mxu0 0.0
    %9302 = vmatpush1.msra.mxu0 %v6669
    %9303 = vmatprep.subr.mxu0 0.0
    %9304 = vmatpush2.msra.mxu0 0.0
    %9305 = vmatprep.subr.mxu0 0.0
    %9306 = vmatpush2.msra.mxu0 0.0
    %9307 = vmatprep.subr.mxu0 0.0
    %9308 = vmatpush2.msra.mxu0 0.0
    %9309 = vmatprep.subr.mxu0 0.0
    %9310 = vmatpush2.msra.mxu0 0.0
    %9311 = vmatprep.subr.mxu0 0.0
    %9312 = vmatpush2.msra.mxu0 0.0
    %9313 = vmatprep.subr.mxu0 0.0
    %9314 = vmatpush2.msra.mxu0 0.0
    %9315 = vmatprep.subr.mxu0 0.0
    %9316 = vmatpush2.msra.mxu0 0.0
    %9317 = vmatprep.subr.mxu0 0.0
    %9318 = vmatpush2.msra.mxu0 0.0
    %9319 = vmatprep.subr.mxu0 0.0
    %9320 = vmatpush2.msra.mxu0 0.0
    %9321 = vmatprep.subr.mxu0 0.0
    %9322 = vmatpush2.msra.mxu0 0.0
    %9323 = vmatprep.subr.mxu0 0.0
    %9324 = vmatpush2.msra.mxu0 0.0
    %9325 = vmatprep.subr.mxu0 0.0
    %9326 = vmatpush2.msra.mxu0 0.0
    %9327 = vmatprep.subr.mxu0 0.0
    %9328 = vmatpush2.msra.mxu0 0.0
    %9329 = vmatprep.subr.mxu0 0.0
    %9330 = vmatpush2.msra.mxu0 0.0
    %9331 = vmatprep.subr.mxu0 0.0
    %9332 = vmatpush2.msra.mxu0 0.0
    %9333 = vmatprep.subr.mxu0 0.0
    %9334 = vmatpush2.msra.mxu0 0.0
    %9335 = vmatprep.mubr.f32.mxu0 0.0
    %9336 = vmatmul.mubr.f32.gmra.mxu0 %v9269
    %v9337 = vpop.f32.mrf.mxu0
    %v9338 = vadd.f32 0.0, %v9337
    %v9339 = vpop.f32.mrf.mxu0
    %9340 = vmatprep.mubr.f32.mxu0 0.0
    %9341 = vmatmul.mubr.f32.gmra.mxu0 %v9270
    %v9342 = vpop.f32.mrf.mxu0
    %v9343 = vadd.f32 0.0, %v9342
    %v9344 = vpop.f32.mrf.mxu0
    %9345 = vdwg.mxu0
    %v9348 = vrot.slane %v9338, 5
    %v9349 = vrot.slane %v9338, 6
    %v9350 = vrot.slane %v9338, 7
    %v9351 = vrot.slane %v9338, 1
    %v9352 = vrot.slane %v9338, 2
    %v9353 = vrot.slane %v9338, 3
    %v9354 = vrot.slane %v9338, 4
    %v9355 = vrot.slane %v9343, 5
    %v9356 = vrot.slane %v9343, 6
    %v9357 = vrot.slane %v9343, 7
    %v9358 = vrot.slane %v9343, 1
    %v9359 = vrot.slane %v9343, 2
    %v9360 = vrot.slane %v9343, 3
    %v9361 = vrot.slane %v9343, 4
    %v9378 = vadd.f32 %v5436, %v9348
    %v9379 = vadd.f32 %v5437, %v9349
    %v9380 = vadd.f32 %v5438, %v9350
    %v9381 = vadd.f32 %v5439, %v9338
    %v9382 = vadd.f32 %v5440, %v9351
    %v9383 = vadd.f32 %v5441, %v9352
    %v9384 = vadd.f32 %v5442, %v9353
    %v9385 = vadd.f32 %v5443, %v9354
    %v9386 = vadd.f32 %v5444, %v9355
    %v9387 = vadd.f32 %v5445, %v9356
    %v9388 = vadd.f32 %v5446, %v9357
    %v9389 = vadd.f32 %v5447, %v9343
    %v9390 = vadd.f32 %v5448, %v9358
    %v9391 = vadd.f32 %v5449, %v9359
    %v9392 = vadd.f32 %v5450, %v9360
    %v9393 = vadd.f32 %v5451, %v9361
    %v9394 = vadd.f32 %v9378, %v6811
    %v9395 = vadd.f32 %v9379, %v6811
    %v9396 = vadd.f32 %v9380, %v6811
    %v9397 = vadd.f32 %v9381, %v6811
    %v9398 = vadd.f32 %v9382, %v6811
    %v9399 = vadd.f32 %v9383, %v6811
    %v9400 = vadd.f32 %v9384, %v6811
    %v9401 = vadd.f32 %v9385, %v6811
    %v9402 = vadd.f32 %v9386, %v6811
    %v9403 = vadd.f32 %v9387, %v6811
    %v9404 = vadd.f32 %v9388, %v6811
    %v9405 = vadd.f32 %v9389, %v6811
    %v9406 = vadd.f32 %v9390, %v6811
    %v9407 = vadd.f32 %v9391, %v6811
    %v9408 = vadd.f32 %v9392, %v6811
    %v9409 = vadd.f32 %v9393, %v6811
    %v9426 = vrot.slane %v9395, 7
    %v9427 = vsel %vm281, %v9426, %v9394
    %v9428 = vrot.slane %v9396, 6
    %v9429 = vsel %vm284, %v9428, %v9427
    %v9430 = vrot.slane %v9397, 5
    %v9431 = vsel %vm287, %v9430, %v9429
    %v9432 = vrot.slane %v9398, 4
    %v9433 = vsel %vm290, %v9432, %v9431
    %v9434 = vrot.slane %v9399, 3
    %v9435 = vrot.slane %v9400, 2
    %v9436 = vsel %vm272, %v9435, %v9434
    %v9437 = vrot.slane %v9401, 1
    %v9438 = vsel %vm275, %v9437, %v9436
    %v9439 = vsel %vm278, %v9402, %v9438
    %v9440 = vrot.slane %v9403, 7
    %v9441 = vsel %vm281, %v9440, %v9439
    %v9442 = vrot.slane %v9404, 6
    %v9443 = vsel %vm284, %v9442, %v9441
    %v9444 = vrot.slane %v9405, 5
    %v9445 = vsel %vm287, %v9444, %v9443
    %v9446 = vrot.slane %v9406, 4
    %v9447 = vsel %vm290, %v9446, %v9445
    %v9448 = vrot.slane %v9407, 3
    %v9449 = vrot.slane %v9408, 2
    %v9450 = vsel %vm272, %v9449, %v9448
    %v9451 = vrot.slane %v9409, 1
    %v9452 = vsel %vm275, %v9451, %v9450
    %v9456 = vsel %vm948, %v9433, 0.0
    %9457 = vadd.xlane.f32.xlu0 %v9456
    %v9458 = vpop.xlane.xlu0 %9457
    %v9459 = vsel %vm308, %v9447, 0.0
    %9460 = vadd.xlane.f32.xlu0 %v9459
    %v9461 = vpop.xlane.xlu0 %9460
    %v9462 = vsel %vm955, %v9452, 0.0
    %9463 = vadd.xlane.f32.xlu0 %v9462
    %v9464 = vpop.xlane.xlu0 %9463
    %v9465 = vmul.f32 %v9458, %v315
    %v9466 = vmul.f32 %v9461, %v315
    %v9467 = vmul.f32 %v9464, %v315
    %v9468 = vmul.f32 %v9394, %v9394
    %v9469 = vmul.f32 %v9395, %v9395
    %v9470 = vmul.f32 %v9396, %v9396
    %v9471 = vmul.f32 %v9397, %v9397
    %v9472 = vmul.f32 %v9398, %v9398
    %v9473 = vmul.f32 %v9399, %v9399
    %v9474 = vmul.f32 %v9400, %v9400
    %v9475 = vmul.f32 %v9401, %v9401
    %v9476 = vmul.f32 %v9402, %v9402
    %v9477 = vmul.f32 %v9403, %v9403
    %v9478 = vmul.f32 %v9404, %v9404
    %v9479 = vmul.f32 %v9405, %v9405
    %v9480 = vmul.f32 %v9406, %v9406
    %v9481 = vmul.f32 %v9407, %v9407
    %v9482 = vmul.f32 %v9408, %v9408
    %v9483 = vmul.f32 %v9409, %v9409
    %v9500 = vrot.slane %v9469, 7
    %v9501 = vsel %vm281, %v9500, %v9468
    %v9502 = vrot.slane %v9470, 6
    %v9503 = vsel %vm284, %v9502, %v9501
    %v9504 = vrot.slane %v9471, 5
    %v9505 = vsel %vm287, %v9504, %v9503
    %v9506 = vrot.slane %v9472, 4
    %v9507 = vsel %vm290, %v9506, %v9505
    %v9508 = vrot.slane %v9473, 3
    %v9509 = vrot.slane %v9474, 2
    %v9510 = vsel %vm272, %v9509, %v9508
    %v9511 = vrot.slane %v9475, 1
    %v9512 = vsel %vm275, %v9511, %v9510
    %v9513 = vsel %vm278, %v9476, %v9512
    %v9514 = vrot.slane %v9477, 7
    %v9515 = vsel %vm281, %v9514, %v9513
    %v9516 = vrot.slane %v9478, 6
    %v9517 = vsel %vm284, %v9516, %v9515
    %v9518 = vrot.slane %v9479, 5
    %v9519 = vsel %vm287, %v9518, %v9517
    %v9520 = vrot.slane %v9480, 4
    %v9521 = vsel %vm290, %v9520, %v9519
    %v9522 = vrot.slane %v9481, 3
    %v9523 = vrot.slane %v9482, 2
    %v9524 = vsel %vm272, %v9523, %v9522
    %v9525 = vrot.slane %v9483, 1
    %v9526 = vsel %vm275, %v9525, %v9524
    %v9530 = vsel %vm948, %v9507, 0.0
    %9531 = vadd.xlane.f32.xlu0 %v9530
    %v9532 = vpop.xlane.xlu0 %9531
    %v9533 = vsel %vm308, %v9521, 0.0
    %9534 = vadd.xlane.f32.xlu0 %v9533
    %v9535 = vpop.xlane.xlu0 %9534
    %v9536 = vsel %vm955, %v9526, 0.0
    %9537 = vadd.xlane.f32.xlu0 %v9536
    %v9538 = vpop.xlane.xlu0 %9537
    %v9539 = vmul.f32 %v9532, %v315
    %v9540 = vmul.f32 %v9535, %v315
    %v9541 = vmul.f32 %v9538, %v315
    %v9545 = vrot.slane %v9465, 1
    %v9546 = vrot.slane %v9465, 2
    %v9547 = vrot.slane %v9465, 3
    %v9548 = vrot.slane %v9465, 4
    %v9549 = vrot.slane %v9466, 5
    %v9550 = vrot.slane %v9466, 6
    %v9551 = vrot.slane %v9466, 7
    %v9552 = vrot.slane %v9466, 1
    %v9553 = vrot.slane %v9466, 2
    %v9554 = vrot.slane %v9466, 3
    %v9555 = vrot.slane %v9466, 4
    %v9556 = vrot.slane %v9467, 5
    %v9557 = vrot.slane %v9467, 6
    %v9558 = vrot.slane %v9467, 7
    %v9575 = vsub.f32 %v9394, %v9465
    %v9576 = vsub.f32 %v9395, %v9545
    %v9577 = vsub.f32 %v9396, %v9546
    %v9578 = vsub.f32 %v9397, %v9547
    %v9579 = vsub.f32 %v9398, %v9548
    %v9580 = vsub.f32 %v9399, %v9549
    %v9581 = vsub.f32 %v9400, %v9550
    %v9582 = vsub.f32 %v9401, %v9551
    %v9583 = vsub.f32 %v9402, %v9466
    %v9584 = vsub.f32 %v9403, %v9552
    %v9585 = vsub.f32 %v9404, %v9553
    %v9586 = vsub.f32 %v9405, %v9554
    %v9587 = vsub.f32 %v9406, %v9555
    %v9588 = vsub.f32 %v9407, %v9556
    %v9589 = vsub.f32 %v9408, %v9557
    %v9590 = vsub.f32 %v9409, %v9558
    %v9591 = vmul.f32 %v9465, %v9465
    %v9592 = vmul.f32 %v9466, %v9466
    %v9593 = vmul.f32 %v9467, %v9467
    %v9594 = vsub.f32 %v9539, %v9591
    %v9595 = vsub.f32 %v9540, %v9592
    %v9596 = vsub.f32 %v9541, %v9593
    %v9597 = vadd.f32 %v9594, 1e-05
    %v9598 = vadd.f32 %v9595, 1e-05
    %v9599 = vadd.f32 %v9596, 1e-05
    %v9600 = vrsqrt.pop %v9597
    %v9601 = vrsqrt.pop %v9598
    %v9602 = vrsqrt.pop %v9599
    %v9606 = vrot.slane %v9600, 1
    %v9607 = vrot.slane %v9600, 2
    %v9608 = vrot.slane %v9600, 3
    %v9609 = vrot.slane %v9600, 4
    %v9610 = vrot.slane %v9601, 5
    %v9611 = vrot.slane %v9601, 6
    %v9612 = vrot.slane %v9601, 7
    %v9613 = vrot.slane %v9601, 1
    %v9614 = vrot.slane %v9601, 2
    %v9615 = vrot.slane %v9601, 3
    %v9616 = vrot.slane %v9601, 4
    %v9617 = vrot.slane %v9602, 5
    %v9618 = vrot.slane %v9602, 6
    %v9619 = vrot.slane %v9602, 7
    %v9636 = vmul.f32 %v9575, %v9600
    %v9637 = vmul.f32 %v9576, %v9606
    %v9638 = vmul.f32 %v9577, %v9607
    %v9639 = vmul.f32 %v9578, %v9608
    %v9640 = vmul.f32 %v9579, %v9609
    %v9641 = vmul.f32 %v9580, %v9610
    %v9642 = vmul.f32 %v9581, %v9611
    %v9643 = vmul.f32 %v9582, %v9612
    %v9644 = vmul.f32 %v9583, %v9601
    %v9645 = vmul.f32 %v9584, %v9613
    %v9646 = vmul.f32 %v9585, %v9614
    %v9647 = vmul.f32 %v9586, %v9615
    %v9648 = vmul.f32 %v9587, %v9616
    %v9649 = vmul.f32 %v9588, %v9617
    %v9650 = vmul.f32 %v9589, %v9618
    %v9651 = vmul.f32 %v9590, %v9619
    %v9652 = vmul.f32 %v9636, %v7059
    %v9653 = vmul.f32 %v9637, %v7059
    %v9654 = vmul.f32 %v9638, %v7059
    %v9655 = vmul.f32 %v9639, %v7059
    %v9656 = vmul.f32 %v9640, %v7059
    %v9657 = vmul.f32 %v9641, %v7059
    %v9658 = vmul.f32 %v9642, %v7059
    %v9659 = vmul.f32 %v9643, %v7059
    %v9660 = vmul.f32 %v9644, %v7059
    %v9661 = vmul.f32 %v9645, %v7059
    %v9662 = vmul.f32 %v9646, %v7059
    %v9663 = vmul.f32 %v9647, %v7059
    %v9664 = vmul.f32 %v9648, %v7059
    %v9665 = vmul.f32 %v9649, %v7059
    %v9666 = vmul.f32 %v9650, %v7059
    %v9667 = vmul.f32 %v9651, %v7059
    %v9668 = vadd.f32 %v9652, %v7079
    %v9669 = vadd.f32 %v9653, %v7079
    %v9670 = vadd.f32 %v9654, %v7079
    %v9671 = vadd.f32 %v9655, %v7079
    %v9672 = vadd.f32 %v9656, %v7079
    %v9673 = vadd.f32 %v9657, %v7079
    %v9674 = vadd.f32 %v9658, %v7079
    %v9675 = vadd.f32 %v9659, %v7079
    %v9676 = vadd.f32 %v9660, %v7079
    %v9677 = vadd.f32 %v9661, %v7079
    %v9678 = vadd.f32 %v9662, %v7079
    %v9679 = vadd.f32 %v9663, %v7079
    %v9680 = vadd.f32 %v9664, %v7079
    %v9681 = vadd.f32 %v9665, %v7079
    %v9682 = vadd.f32 %v9666, %v7079
    %v9683 = vadd.f32 %v9667, %v7079
    %v9700 = vrot.slane %v9668, 3
    %v9701 = vrot.slane %v9669, 3
    %v9702 = vrot.slane %v9670, 3
    %v9703 = vrot.slane %v9671, 3
    %v9704 = vrot.slane %v9672, 3
    %v9705 = vrot.slane %v9673, 3
    %v9706 = vrot.slane %v9674, 3
    %v9707 = vrot.slane %v9675, 3
    %v9708 = vrot.slane %v9676, 3
    %v9709 = vrot.slane %v9677, 3
    %v9710 = vrot.slane %v9678, 3
    %v9711 = vrot.slane %v9679, 3
    %v9712 = vrot.slane %v9680, 3
    %v9713 = vrot.slane %v9681, 3
    %v9714 = vrot.slane %v9682, 3
    %v9715 = vrot.slane %v9683, 3
    %v9732 = vadd.f32 %v8848, %v9700
    %v9733 = vadd.f32 %v8849, %v9701
    %v9734 = vadd.f32 %v8850, %v9702
    %v9735 = vadd.f32 %v8851, %v9703
    %v9736 = vadd.f32 %v8852, %v9704
    %v9737 = vadd.f32 %v8853, %v9705
    %v9738 = vadd.f32 %v8854, %v9706
    %v9739 = vadd.f32 %v8855, %v9707
    %v9740 = vadd.f32 %v8856, %v9708
    %v9741 = vadd.f32 %v8857, %v9709
    %v9742 = vadd.f32 %v8858, %v9710
    %v9743 = vadd.f32 %v8859, %v9711
    %v9744 = vadd.f32 %v8860, %v9712
    %v9745 = vadd.f32 %v8861, %v9713
    %v9746 = vadd.f32 %v8862, %v9714
    %v9747 = vadd.f32 %v8863, %v9715
    %v9764 = vrot.slane %v5639, 7
    %v9765 = vsel %vm284, %v9764, %v5638
    %v9766 = vrot.slane %v5640, 6
    %v9767 = vsel %vm287, %v9766, %v9765
    %v9768 = vrot.slane %v5641, 5
    %v9769 = vsel %vm290, %v9768, %v9767
    %v9770 = vrot.slane %v5642, 4
    %v9771 = vrot.slane %v5643, 3
    %v9772 = vsel %vm272, %v9771, %v9770
    %v9773 = vrot.slane %v5644, 2
    %v9774 = vsel %vm275, %v9773, %v9772
    %v9775 = vrot.slane %v5645, 1
    %v9776 = vsel %vm278, %v9775, %v9774
    %v9777 = vsel %vm281, %v5646, %v9776
    %v9778 = vrot.slane %v5647, 7
    %v9779 = vsel %vm284, %v9778, %v9777
    %v9780 = vrot.slane %v5648, 6
    %v9781 = vsel %vm287, %v9780, %v9779
    %v9782 = vrot.slane %v5649, 5
    %v9783 = vsel %vm290, %v9782, %v9781
    %v9784 = vrot.slane %v5650, 4
    %v9785 = vrot.slane %v5651, 3
    %v9786 = vsel %vm272, %v9785, %v9784
    %v9787 = vrot.slane %v5652, 2
    %v9788 = vsel %vm275, %v9787, %v9786
    %v9789 = vrot.slane %v5653, 1
    %v9790 = vsel %vm278, %v9789, %v9788
    %v9794 = vsel %vm1148, %v9769, 0.0
    %9795 = vadd.xlane.f32.xlu0 %v9794
    %v9796 = vpop.xlane.xlu0 %9795
    %v9797 = vsel %vm308, %v9783, 0.0
    %9798 = vadd.xlane.f32.xlu0 %v9797
    %v9799 = vpop.xlane.xlu0 %9798
    %v9800 = vsel %vm1155, %v9790, 0.0
    %9801 = vadd.xlane.f32.xlu0 %v9800
    %v9802 = vpop.xlane.xlu0 %9801
    %v9803 = vmul.f32 %v9796, %v315
    %v9804 = vmul.f32 %v9799, %v315
    %v9805 = vmul.f32 %v9802, %v315
    %v9806 = vmul.f32 %v5638, %v5638
    %v9807 = vmul.f32 %v5639, %v5639
    %v9808 = vmul.f32 %v5640, %v5640
    %v9809 = vmul.f32 %v5641, %v5641
    %v9810 = vmul.f32 %v5642, %v5642
    %v9811 = vmul.f32 %v5643, %v5643
    %v9812 = vmul.f32 %v5644, %v5644
    %v9813 = vmul.f32 %v5645, %v5645
    %v9814 = vmul.f32 %v5646, %v5646
    %v9815 = vmul.f32 %v5647, %v5647
    %v9816 = vmul.f32 %v5648, %v5648
    %v9817 = vmul.f32 %v5649, %v5649
    %v9818 = vmul.f32 %v5650, %v5650
    %v9819 = vmul.f32 %v5651, %v5651
    %v9820 = vmul.f32 %v5652, %v5652
    %v9821 = vmul.f32 %v5653, %v5653
    %v9838 = vrot.slane %v9807, 7
    %v9839 = vsel %vm284, %v9838, %v9806
    %v9840 = vrot.slane %v9808, 6
    %v9841 = vsel %vm287, %v9840, %v9839
    %v9842 = vrot.slane %v9809, 5
    %v9843 = vsel %vm290, %v9842, %v9841
    %v9844 = vrot.slane %v9810, 4
    %v9845 = vrot.slane %v9811, 3
    %v9846 = vsel %vm272, %v9845, %v9844
    %v9847 = vrot.slane %v9812, 2
    %v9848 = vsel %vm275, %v9847, %v9846
    %v9849 = vrot.slane %v9813, 1
    %v9850 = vsel %vm278, %v9849, %v9848
    %v9851 = vsel %vm281, %v9814, %v9850
    %v9852 = vrot.slane %v9815, 7
    %v9853 = vsel %vm284, %v9852, %v9851
    %v9854 = vrot.slane %v9816, 6
    %v9855 = vsel %vm287, %v9854, %v9853
    %v9856 = vrot.slane %v9817, 5
    %v9857 = vsel %vm290, %v9856, %v9855
    %v9858 = vrot.slane %v9818, 4
    %v9859 = vrot.slane %v9819, 3
    %v9860 = vsel %vm272, %v9859, %v9858
    %v9861 = vrot.slane %v9820, 2
    %v9862 = vsel %vm275, %v9861, %v9860
    %v9863 = vrot.slane %v9821, 1
    %v9864 = vsel %vm278, %v9863, %v9862
    %v9868 = vsel %vm1148, %v9843, 0.0
    %9869 = vadd.xlane.f32.xlu0 %v9868
    %v9870 = vpop.xlane.xlu0 %9869
    %v9871 = vsel %vm308, %v9857, 0.0
    %9872 = vadd.xlane.f32.xlu0 %v9871
    %v9873 = vpop.xlane.xlu0 %9872
    %v9874 = vsel %vm1155, %v9864, 0.0
    %9875 = vadd.xlane.f32.xlu0 %v9874
    %v9876 = vpop.xlane.xlu0 %9875
    %v9877 = vmul.f32 %v9870, %v315
    %v9878 = vmul.f32 %v9873, %v315
    %v9879 = vmul.f32 %v9876, %v315
    %v9883 = vrot.slane %v9803, 1
    %v9884 = vrot.slane %v9803, 2
    %v9885 = vrot.slane %v9803, 3
    %v9886 = vrot.slane %v9804, 4
    %v9887 = vrot.slane %v9804, 5
    %v9888 = vrot.slane %v9804, 6
    %v9889 = vrot.slane %v9804, 7
    %v9890 = vrot.slane %v9804, 1
    %v9891 = vrot.slane %v9804, 2
    %v9892 = vrot.slane %v9804, 3
    %v9893 = vrot.slane %v9805, 4
    %v9894 = vrot.slane %v9805, 5
    %v9895 = vrot.slane %v9805, 6
    %v9896 = vrot.slane %v9805, 7
    %v9913 = vsub.f32 %v5638, %v9803
    %v9914 = vsub.f32 %v5639, %v9883
    %v9915 = vsub.f32 %v5640, %v9884
    %v9916 = vsub.f32 %v5641, %v9885
    %v9917 = vsub.f32 %v5642, %v9886
    %v9918 = vsub.f32 %v5643, %v9887
    %v9919 = vsub.f32 %v5644, %v9888
    %v9920 = vsub.f32 %v5645, %v9889
    %v9921 = vsub.f32 %v5646, %v9804
    %v9922 = vsub.f32 %v5647, %v9890
    %v9923 = vsub.f32 %v5648, %v9891
    %v9924 = vsub.f32 %v5649, %v9892
    %v9925 = vsub.f32 %v5650, %v9893
    %v9926 = vsub.f32 %v5651, %v9894
    %v9927 = vsub.f32 %v5652, %v9895
    %v9928 = vsub.f32 %v5653, %v9896
    %v9929 = vmul.f32 %v9803, %v9803
    %v9930 = vmul.f32 %v9804, %v9804
    %v9931 = vmul.f32 %v9805, %v9805
    %v9932 = vsub.f32 %v9877, %v9929
    %v9933 = vsub.f32 %v9878, %v9930
    %v9934 = vsub.f32 %v9879, %v9931
    %v9935 = vadd.f32 %v9932, 1e-05
    %v9936 = vadd.f32 %v9933, 1e-05
    %v9937 = vadd.f32 %v9934, 1e-05
    %v9938 = vrsqrt.pop %v9935
    %v9939 = vrsqrt.pop %v9936
    %v9940 = vrsqrt.pop %v9937
    %v9944 = vrot.slane %v9938, 1
    %v9945 = vrot.slane %v9938, 2
    %v9946 = vrot.slane %v9938, 3
    %v9947 = vrot.slane %v9939, 4
    %v9948 = vrot.slane %v9939, 5
    %v9949 = vrot.slane %v9939, 6
    %v9950 = vrot.slane %v9939, 7
    %v9951 = vrot.slane %v9939, 1
    %v9952 = vrot.slane %v9939, 2
    %v9953 = vrot.slane %v9939, 3
    %v9954 = vrot.slane %v9940, 4
    %v9955 = vrot.slane %v9940, 5
    %v9956 = vrot.slane %v9940, 6
    %v9957 = vrot.slane %v9940, 7
    %v9974 = vmul.f32 %v9913, %v9938
    %v9975 = vmul.f32 %v9914, %v9944
    %v9976 = vmul.f32 %v9915, %v9945
    %v9977 = vmul.f32 %v9916, %v9946
    %v9978 = vmul.f32 %v9917, %v9947
    %v9979 = vmul.f32 %v9918, %v9948
    %v9980 = vmul.f32 %v9919, %v9949
    %v9981 = vmul.f32 %v9920, %v9950
    %v9982 = vmul.f32 %v9921, %v9939
    %v9983 = vmul.f32 %v9922, %v9951
    %v9984 = vmul.f32 %v9923, %v9952
    %v9985 = vmul.f32 %v9924, %v9953
    %v9986 = vmul.f32 %v9925, %v9954
    %v9987 = vmul.f32 %v9926, %v9955
    %v9988 = vmul.f32 %v9927, %v9956
    %v9989 = vmul.f32 %v9928, %v9957
    %v9990 = vmul.f32 %v9974, %v6491
    %v9991 = vmul.f32 %v9975, %v6491
    %v9992 = vmul.f32 %v9976, %v6491
    %v9993 = vmul.f32 %v9977, %v6491
    %v9994 = vmul.f32 %v9978, %v6491
    %v9995 = vmul.f32 %v9979, %v6491
    %v9996 = vmul.f32 %v9980, %v6491
    %v9997 = vmul.f32 %v9981, %v6491
    %v9998 = vmul.f32 %v9982, %v6491
    %v9999 = vmul.f32 %v9983, %v6491
    %v10000 = vmul.f32 %v9984, %v6491
    %v10001 = vmul.f32 %v9985, %v6491
    %v10002 = vmul.f32 %v9986, %v6491
    %v10003 = vmul.f32 %v9987, %v6491
    %v10004 = vmul.f32 %v9988, %v6491
    %v10005 = vmul.f32 %v9989, %v6491
    %v10006 = vadd.f32 %v9990, %v6511
    %v10007 = vadd.f32 %v9991, %v6511
    %v10008 = vadd.f32 %v9992, %v6511
    %v10009 = vadd.f32 %v9993, %v6511
    %v10010 = vadd.f32 %v9994, %v6511
    %v10011 = vadd.f32 %v9995, %v6511
    %v10012 = vadd.f32 %v9996, %v6511
    %v10013 = vadd.f32 %v9997, %v6511
    %v10014 = vadd.f32 %v9998, %v6511
    %v10015 = vadd.f32 %v9999, %v6511
    %v10016 = vadd.f32 %v10000, %v6511
    %v10017 = vadd.f32 %v10001, %v6511
    %v10018 = vadd.f32 %v10002, %v6511
    %v10019 = vadd.f32 %v10003, %v6511
    %v10020 = vadd.f32 %v10004, %v6511
    %v10021 = vadd.f32 %v10005, %v6511
    %v10038 = vrot.slane %v10006, 4
    %v10039 = vrot.slane %v10007, 3
    %v10040 = vsel %vm272, %v10039, %v10038
    %v10041 = vrot.slane %v10008, 2
    %v10042 = vsel %vm275, %v10041, %v10040
    %v10043 = vrot.slane %v10009, 1
    %v10044 = vsel %vm278, %v10043, %v10042
    %v10045 = vsel %vm281, %v10010, %v10044
    %v10046 = vrot.slane %v10011, 7
    %v10047 = vsel %vm284, %v10046, %v10045
    %v10048 = vrot.slane %v10012, 6
    %v10049 = vsel %vm287, %v10048, %v10047
    %v10050 = vrot.slane %v10013, 5
    %v10051 = vsel %vm290, %v10050, %v10049
    %v10052 = vrot.slane %v10014, 4
    %v10053 = vrot.slane %v10015, 3
    %v10054 = vsel %vm272, %v10053, %v10052
    %v10055 = vrot.slane %v10016, 2
    %v10056 = vsel %vm275, %v10055, %v10054
    %v10057 = vrot.slane %v10017, 1
    %v10058 = vsel %vm278, %v10057, %v10056
    %v10059 = vsel %vm281, %v10018, %v10058
    %v10060 = vrot.slane %v10019, 7
    %v10061 = vsel %vm284, %v10060, %v10059
    %v10062 = vrot.slane %v10020, 6
    %v10063 = vsel %vm287, %v10062, %v10061
    %v10064 = vrot.slane %v10021, 5
    %v10065 = vsel %vm290, %v10064, %v10063
    %v10066 = vsel %vm308, %v10051, 0
    %v10068 = vsel %vm308, %v10065, 0
    %10070 = vmatprep.subr.mxu0 0.0
    %10071 = vmatpush1.msra.mxu0 0.0
    %10072 = vmatprep.subr.mxu0 0.0
    %10073 = vmatpush1.msra.mxu0 0.0
    %10074 = vmatprep.subr.mxu0 0.0
    %10075 = vmatpush1.msra.mxu0 0.0
    %10076 = vmatprep.subr.mxu0 0.0
    %10077 = vmatpush1.msra.mxu0 0.0
    %10078 = vmatprep.subr.mxu0 0.0
    %10079 = vmatpush1.msra.mxu0 0.0
    %10080 = vmatprep.subr.mxu0 0.0
    %10081 = vmatpush1.msra.mxu0 0.0
    %10082 = vmatprep.subr.mxu0 0.0
    %10083 = vmatpush1.msra.mxu0 0.0
    %10084 = vmatprep.subr.mxu0 0.0
    %10085 = vmatpush1.msra.mxu0 0.0
    %10086 = vmatprep.subr.mxu0 0.0
    %10087 = vmatpush1.msra.mxu0 0.0
    %10088 = vmatprep.subr.mxu0 0.0
    %10089 = vmatpush1.msra.mxu0 0.0
    %10090 = vmatprep.subr.mxu0 0.0
    %10091 = vmatpush1.msra.mxu0 0.0
    %10092 = vmatprep.subr.mxu0 0.0
    %10093 = vmatpush1.msra.mxu0 0.0
    %10094 = vmatprep.subr.mxu0 0.0
    %10095 = vmatpush1.msra.mxu0 %v6531
    %10096 = vmatprep.subr.mxu0 0.0
    %10097 = vmatpush1.msra.mxu0 %v6530
    %10098 = vmatprep.subr.mxu0 0.0
    %10099 = vmatpush1.msra.mxu0 %v6529
    %10100 = vmatprep.subr.mxu0 0.0
    %10101 = vmatpush1.msra.mxu0 %v6528
    %10102 = vmatprep.subr.mxu0 0.0
    %10103 = vmatpush2.msra.mxu0 0.0
    %10104 = vmatprep.subr.mxu0 0.0
    %10105 = vmatpush2.msra.mxu0 0.0
    %10106 = vmatprep.subr.mxu0 0.0
    %10107 = vmatpush2.msra.mxu0 0.0
    %10108 = vmatprep.subr.mxu0 0.0
    %10109 = vmatpush2.msra.mxu0 0.0
    %10110 = vmatprep.subr.mxu0 0.0
    %10111 = vmatpush2.msra.mxu0 0.0
    %10112 = vmatprep.subr.mxu0 0.0
    %10113 = vmatpush2.msra.mxu0 0.0
    %10114 = vmatprep.subr.mxu0 0.0
    %10115 = vmatpush2.msra.mxu0 0.0
    %10116 = vmatprep.subr.mxu0 0.0
    %10117 = vmatpush2.msra.mxu0 0.0
    %10118 = vmatprep.subr.mxu0 0.0
    %10119 = vmatpush2.msra.mxu0 0.0
    %10120 = vmatprep.subr.mxu0 0.0
    %10121 = vmatpush2.msra.mxu0 0.0
    %10122 = vmatprep.subr.mxu0 0.0
    %10123 = vmatpush2.msra.mxu0 0.0
    %10124 = vmatprep.subr.mxu0 0.0
    %10125 = vmatpush2.msra.mxu0 0.0
    %10126 = vmatprep.subr.mxu0 0.0
    %10127 = vmatpush2.msra.mxu0 0.0
    %10128 = vmatprep.subr.mxu0 0.0
    %10129 = vmatpush2.msra.mxu0 0.0
    %10130 = vmatprep.subr.mxu0 0.0
    %10131 = vmatpush2.msra.mxu0 0.0
    %10132 = vmatprep.subr.mxu0 0.0
    %10133 = vmatpush2.msra.mxu0 0.0
    %10134 = vmatprep.mubr.f32.mxu0 0.0
    %10135 = vmatmul.mubr.f32.gmra.mxu0 %v10066
    %v10136 = vpop.f32.mrf.mxu0
    %v10137 = vadd.f32 %v6535, %v10136
    %v10138 = vpop.f32.mrf.mxu0
    %10139 = vmatprep.mubr.f32.mxu0 0.0
    %10140 = vmatmul.mubr.f32.gmra.mxu0 %v10068
    %v10141 = vpop.f32.mrf.mxu0
    %v10142 = vadd.f32 %v6535, %v10141
    %v10143 = vpop.f32.mrf.mxu0
    %10144 = vdwg.mxu0
    %v10145 = vmul.f32 %v10137, 0.5
    %v10146 = vmul.f32 %v10142, 0.5
    %v10147 = vmul.f32 %v10137, 0.70710677
    %v10148 = vmul.f32 %v10142, 0.70710677
    %v10149 = verf.f32.pop %v10147
    %v10150 = verf.f32.pop %v10148
    %v10151 = vadd.f32 %v10149, 1.0
    %v10152 = vadd.f32 %v10150, 1.0
    %v10153 = vmul.f32 %v10145, %v10151
    %v10154 = vmul.f32 %v10146, %v10152
    %10155 = vmatprep.subr.mxu0 0.0
    %10156 = vmatpush1.msra.mxu0 %v6684
    %10157 = vmatprep.subr.mxu0 0.0
    %10158 = vmatpush1.msra.mxu0 %v6683
    %10159 = vmatprep.subr.mxu0 0.0
    %10160 = vmatpush1.msra.mxu0 %v6682
    %10161 = vmatprep.subr.mxu0 0.0
    %10162 = vmatpush1.msra.mxu0 %v6681
    %10163 = vmatprep.subr.mxu0 0.0
    %10164 = vmatpush1.msra.mxu0 %v6680
    %10165 = vmatprep.subr.mxu0 0.0
    %10166 = vmatpush1.msra.mxu0 %v6679
    %10167 = vmatprep.subr.mxu0 0.0
    %10168 = vmatpush1.msra.mxu0 %v6678
    %10169 = vmatprep.subr.mxu0 0.0
    %10170 = vmatpush1.msra.mxu0 %v6677
    %10171 = vmatprep.subr.mxu0 0.0
    %10172 = vmatpush1.msra.mxu0 %v6676
    %10173 = vmatprep.subr.mxu0 0.0
    %10174 = vmatpush1.msra.mxu0 %v6675
    %10175 = vmatprep.subr.mxu0 0.0
    %10176 = vmatpush1.msra.mxu0 %v6674
    %10177 = vmatprep.subr.mxu0 0.0
    %10178 = vmatpush1.msra.mxu0 %v6673
    %10179 = vmatprep.subr.mxu0 0.0
    %10180 = vmatpush1.msra.mxu0 %v6672
    %10181 = vmatprep.subr.mxu0 0.0
    %10182 = vmatpush1.msra.mxu0 %v6671
    %10183 = vmatprep.subr.mxu0 0.0
    %10184 = vmatpush1.msra.mxu0 %v6670
    %10185 = vmatprep.subr.mxu0 0.0
    %10186 = vmatpush1.msra.mxu0 %v6669
    %10187 = vmatprep.subr.mxu0 0.0
    %10188 = vmatpush2.msra.mxu0 0.0
    %10189 = vmatprep.subr.mxu0 0.0
    %10190 = vmatpush2.msra.mxu0 0.0
    %10191 = vmatprep.subr.mxu0 0.0
    %10192 = vmatpush2.msra.mxu0 0.0
    %10193 = vmatprep.subr.mxu0 0.0
    %10194 = vmatpush2.msra.mxu0 0.0
    %10195 = vmatprep.subr.mxu0 0.0
    %10196 = vmatpush2.msra.mxu0 0.0
    %10197 = vmatprep.subr.mxu0 0.0
    %10198 = vmatpush2.msra.mxu0 0.0
    %10199 = vmatprep.subr.mxu0 0.0
    %10200 = vmatpush2.msra.mxu0 0.0
    %10201 = vmatprep.subr.mxu0 0.0
    %10202 = vmatpush2.msra.mxu0 0.0
    %10203 = vmatprep.subr.mxu0 0.0
    %10204 = vmatpush2.msra.mxu0 0.0
    %10205 = vmatprep.subr.mxu0 0.0
    %10206 = vmatpush2.msra.mxu0 0.0
    %10207 = vmatprep.subr.mxu0 0.0
    %10208 = vmatpush2.msra.mxu0 0.0
    %10209 = vmatprep.subr.mxu0 0.0
    %10210 = vmatpush2.msra.mxu0 0.0
    %10211 = vmatprep.subr.mxu0 0.0
    %10212 = vmatpush2.msra.mxu0 0.0
    %10213 = vmatprep.subr.mxu0 0.0
    %10214 = vmatpush2.msra.mxu0 0.0
    %10215 = vmatprep.subr.mxu0 0.0
    %10216 = vmatpush2.msra.mxu0 0.0
    %10217 = vmatprep.subr.mxu0 0.0
    %10218 = vmatpush2.msra.mxu0 0.0
    %10219 = vmatprep.mubr.f32.mxu0 0.0
    %10220 = vmatmul.mubr.f32.gmra.mxu0 %v10153
    %v10221 = vpop.f32.mrf.mxu0
    %v10222 = vadd.f32 0.0, %v10221
    %v10223 = vpop.f32.mrf.mxu0
    %10224 = vmatprep.mubr.f32.mxu0 0.0
    %10225 = vmatmul.mubr.f32.gmra.mxu0 %v10154
    %v10226 = vpop.f32.mrf.mxu0
    %v10227 = vadd.f32 0.0, %v10226
    %v10228 = vpop.f32.mrf.mxu0
    %10229 = vdwg.mxu0
    %v10232 = vrot.slane %v10222, 4
    %v10233 = vrot.slane %v10222, 5
    %v10234 = vrot.slane %v10222, 6
    %v10235 = vrot.slane %v10222, 7
    %v10236 = vrot.slane %v10222, 1
    %v10237 = vrot.slane %v10222, 2
    %v10238 = vrot.slane %v10222, 3
    %v10239 = vrot.slane %v10227, 4
    %v10240 = vrot.slane %v10227, 5
    %v10241 = vrot.slane %v10227, 6
    %v10242 = vrot.slane %v10227, 7
    %v10243 = vrot.slane %v10227, 1
    %v10244 = vrot.slane %v10227, 2
    %v10245 = vrot.slane %v10227, 3
    %v10262 = vadd.f32 %v5638, %v10232
    %v10263 = vadd.f32 %v5639, %v10233
    %v10264 = vadd.f32 %v5640, %v10234
    %v10265 = vadd.f32 %v5641, %v10235
    %v10266 = vadd.f32 %v5642, %v10222
    %v10267 = vadd.f32 %v5643, %v10236
    %v10268 = vadd.f32 %v5644, %v10237
    %v10269 = vadd.f32 %v5645, %v10238
    %v10270 = vadd.f32 %v5646, %v10239
    %v10271 = vadd.f32 %v5647, %v10240
    %v10272 = vadd.f32 %v5648, %v10241
    %v10273 = vadd.f32 %v5649, %v10242
    %v10274 = vadd.f32 %v5650, %v10227
    %v10275 = vadd.f32 %v5651, %v10243
    %v10276 = vadd.f32 %v5652, %v10244
    %v10277 = vadd.f32 %v5653, %v10245
    %v10278 = vadd.f32 %v10262, %v6811
    %v10279 = vadd.f32 %v10263, %v6811
    %v10280 = vadd.f32 %v10264, %v6811
    %v10281 = vadd.f32 %v10265, %v6811
    %v10282 = vadd.f32 %v10266, %v6811
    %v10283 = vadd.f32 %v10267, %v6811
    %v10284 = vadd.f32 %v10268, %v6811
    %v10285 = vadd.f32 %v10269, %v6811
    %v10286 = vadd.f32 %v10270, %v6811
    %v10287 = vadd.f32 %v10271, %v6811
    %v10288 = vadd.f32 %v10272, %v6811
    %v10289 = vadd.f32 %v10273, %v6811
    %v10290 = vadd.f32 %v10274, %v6811
    %v10291 = vadd.f32 %v10275, %v6811
    %v10292 = vadd.f32 %v10276, %v6811
    %v10293 = vadd.f32 %v10277, %v6811
    %v10310 = vrot.slane %v10279, 7
    %v10311 = vsel %vm284, %v10310, %v10278
    %v10312 = vrot.slane %v10280, 6
    %v10313 = vsel %vm287, %v10312, %v10311
    %v10314 = vrot.slane %v10281, 5
    %v10315 = vsel %vm290, %v10314, %v10313
    %v10316 = vrot.slane %v10282, 4
    %v10317 = vrot.slane %v10283, 3
    %v10318 = vsel %vm272, %v10317, %v10316
    %v10319 = vrot.slane %v10284, 2
    %v10320 = vsel %vm275, %v10319, %v10318
    %v10321 = vrot.slane %v10285, 1
    %v10322 = vsel %vm278, %v10321, %v10320
    %v10323 = vsel %vm281, %v10286, %v10322
    %v10324 = vrot.slane %v10287, 7
    %v10325 = vsel %vm284, %v10324, %v10323
    %v10326 = vrot.slane %v10288, 6
    %v10327 = vsel %vm287, %v10326, %v10325
    %v10328 = vrot.slane %v10289, 5
    %v10329 = vsel %vm290, %v10328, %v10327
    %v10330 = vrot.slane %v10290, 4
    %v10331 = vrot.slane %v10291, 3
    %v10332 = vsel %vm272, %v10331, %v10330
    %v10333 = vrot.slane %v10292, 2
    %v10334 = vsel %vm275, %v10333, %v10332
    %v10335 = vrot.slane %v10293, 1
    %v10336 = vsel %vm278, %v10335, %v10334
    %v10340 = vsel %vm1148, %v10315, 0.0
    %10341 = vadd.xlane.f32.xlu0 %v10340
    %v10342 = vpop.xlane.xlu0 %10341
    %v10343 = vsel %vm308, %v10329, 0.0
    %10344 = vadd.xlane.f32.xlu0 %v10343
    %v10345 = vpop.xlane.xlu0 %10344
    %v10346 = vsel %vm1155, %v10336, 0.0
    %10347 = vadd.xlane.f32.xlu0 %v10346
    %v10348 = vpop.xlane.xlu0 %10347
    %v10349 = vmul.f32 %v10342, %v315
    %v10350 = vmul.f32 %v10345, %v315
    %v10351 = vmul.f32 %v10348, %v315
    %v10352 = vmul.f32 %v10278, %v10278
    %v10353 = vmul.f32 %v10279, %v10279
    %v10354 = vmul.f32 %v10280, %v10280
    %v10355 = vmul.f32 %v10281, %v10281
    %v10356 = vmul.f32 %v10282, %v10282
    %v10357 = vmul.f32 %v10283, %v10283
    %v10358 = vmul.f32 %v10284, %v10284
    %v10359 = vmul.f32 %v10285, %v10285
    %v10360 = vmul.f32 %v10286, %v10286
    %v10361 = vmul.f32 %v10287, %v10287
    %v10362 = vmul.f32 %v10288, %v10288
    %v10363 = vmul.f32 %v10289, %v10289
    %v10364 = vmul.f32 %v10290, %v10290
    %v10365 = vmul.f32 %v10291, %v10291
    %v10366 = vmul.f32 %v10292, %v10292
    %v10367 = vmul.f32 %v10293, %v10293
    %v10384 = vrot.slane %v10353, 7
    %v10385 = vsel %vm284, %v10384, %v10352
    %v10386 = vrot.slane %v10354, 6
    %v10387 = vsel %vm287, %v10386, %v10385
    %v10388 = vrot.slane %v10355, 5
    %v10389 = vsel %vm290, %v10388, %v10387
    %v10390 = vrot.slane %v10356, 4
    %v10391 = vrot.slane %v10357, 3
    %v10392 = vsel %vm272, %v10391, %v10390
    %v10393 = vrot.slane %v10358, 2
    %v10394 = vsel %vm275, %v10393, %v10392
    %v10395 = vrot.slane %v10359, 1
    %v10396 = vsel %vm278, %v10395, %v10394
    %v10397 = vsel %vm281, %v10360, %v10396
    %v10398 = vrot.slane %v10361, 7
    %v10399 = vsel %vm284, %v10398, %v10397
    %v10400 = vrot.slane %v10362, 6
    %v10401 = vsel %vm287, %v10400, %v10399
    %v10402 = vrot.slane %v10363, 5
    %v10403 = vsel %vm290, %v10402, %v10401
    %v10404 = vrot.slane %v10364, 4
    %v10405 = vrot.slane %v10365, 3
    %v10406 = vsel %vm272, %v10405, %v10404
    %v10407 = vrot.slane %v10366, 2
    %v10408 = vsel %vm275, %v10407, %v10406
    %v10409 = vrot.slane %v10367, 1
    %v10410 = vsel %vm278, %v10409, %v10408
    %v10414 = vsel %vm1148, %v10389, 0.0
    %10415 = vadd.xlane.f32.xlu0 %v10414
    %v10416 = vpop.xlane.xlu0 %10415
    %v10417 = vsel %vm308, %v10403, 0.0
    %10418 = vadd.xlane.f32.xlu0 %v10417
    %v10419 = vpop.xlane.xlu0 %10418
    %v10420 = vsel %vm1155, %v10410, 0.0
    %10421 = vadd.xlane.f32.xlu0 %v10420
    %v10422 = vpop.xlane.xlu0 %10421
    %v10423 = vmul.f32 %v10416, %v315
    %v10424 = vmul.f32 %v10419, %v315
    %v10425 = vmul.f32 %v10422, %v315
    %v10429 = vrot.slane %v10349, 1
    %v10430 = vrot.slane %v10349, 2
    %v10431 = vrot.slane %v10349, 3
    %v10432 = vrot.slane %v10350, 4
    %v10433 = vrot.slane %v10350, 5
    %v10434 = vrot.slane %v10350, 6
    %v10435 = vrot.slane %v10350, 7
    %v10436 = vrot.slane %v10350, 1
    %v10437 = vrot.slane %v10350, 2
    %v10438 = vrot.slane %v10350, 3
    %v10439 = vrot.slane %v10351, 4
    %v10440 = vrot.slane %v10351, 5
    %v10441 = vrot.slane %v10351, 6
    %v10442 = vrot.slane %v10351, 7
    %v10459 = vsub.f32 %v10278, %v10349
    %v10460 = vsub.f32 %v10279, %v10429
    %v10461 = vsub.f32 %v10280, %v10430
    %v10462 = vsub.f32 %v10281, %v10431
    %v10463 = vsub.f32 %v10282, %v10432
    %v10464 = vsub.f32 %v10283, %v10433
    %v10465 = vsub.f32 %v10284, %v10434
    %v10466 = vsub.f32 %v10285, %v10435
    %v10467 = vsub.f32 %v10286, %v10350
    %v10468 = vsub.f32 %v10287, %v10436
    %v10469 = vsub.f32 %v10288, %v10437
    %v10470 = vsub.f32 %v10289, %v10438
    %v10471 = vsub.f32 %v10290, %v10439
    %v10472 = vsub.f32 %v10291, %v10440
    %v10473 = vsub.f32 %v10292, %v10441
    %v10474 = vsub.f32 %v10293, %v10442
    %v10475 = vmul.f32 %v10349, %v10349
    %v10476 = vmul.f32 %v10350, %v10350
    %v10477 = vmul.f32 %v10351, %v10351
    %v10478 = vsub.f32 %v10423, %v10475
    %v10479 = vsub.f32 %v10424, %v10476
    %v10480 = vsub.f32 %v10425, %v10477
    %v10481 = vadd.f32 %v10478, 1e-05
    %v10482 = vadd.f32 %v10479, 1e-05
    %v10483 = vadd.f32 %v10480, 1e-05
    %v10484 = vrsqrt.pop %v10481
    %v10485 = vrsqrt.pop %v10482
    %v10486 = vrsqrt.pop %v10483
    %v10490 = vrot.slane %v10484, 1
    %v10491 = vrot.slane %v10484, 2
    %v10492 = vrot.slane %v10484, 3
    %v10493 = vrot.slane %v10485, 4
    %v10494 = vrot.slane %v10485, 5
    %v10495 = vrot.slane %v10485, 6
    %v10496 = vrot.slane %v10485, 7
    %v10497 = vrot.slane %v10485, 1
    %v10498 = vrot.slane %v10485, 2
    %v10499 = vrot.slane %v10485, 3
    %v10500 = vrot.slane %v10486, 4
    %v10501 = vrot.slane %v10486, 5
    %v10502 = vrot.slane %v10486, 6
    %v10503 = vrot.slane %v10486, 7
    %v10520 = vmul.f32 %v10459, %v10484
    %v10521 = vmul.f32 %v10460, %v10490
    %v10522 = vmul.f32 %v10461, %v10491
    %v10523 = vmul.f32 %v10462, %v10492
    %v10524 = vmul.f32 %v10463, %v10493
    %v10525 = vmul.f32 %v10464, %v10494
    %v10526 = vmul.f32 %v10465, %v10495
    %v10527 = vmul.f32 %v10466, %v10496
    %v10528 = vmul.f32 %v10467, %v10485
    %v10529 = vmul.f32 %v10468, %v10497
    %v10530 = vmul.f32 %v10469, %v10498
    %v10531 = vmul.f32 %v10470, %v10499
    %v10532 = vmul.f32 %v10471, %v10500
    %v10533 = vmul.f32 %v10472, %v10501
    %v10534 = vmul.f32 %v10473, %v10502
    %v10535 = vmul.f32 %v10474, %v10503
    %v10536 = vmul.f32 %v10520, %v7059
    %v10537 = vmul.f32 %v10521, %v7059
    %v10538 = vmul.f32 %v10522, %v7059
    %v10539 = vmul.f32 %v10523, %v7059
    %v10540 = vmul.f32 %v10524, %v7059
    %v10541 = vmul.f32 %v10525, %v7059
    %v10542 = vmul.f32 %v10526, %v7059
    %v10543 = vmul.f32 %v10527, %v7059
    %v10544 = vmul.f32 %v10528, %v7059
    %v10545 = vmul.f32 %v10529, %v7059
    %v10546 = vmul.f32 %v10530, %v7059
    %v10547 = vmul.f32 %v10531, %v7059
    %v10548 = vmul.f32 %v10532, %v7059
    %v10549 = vmul.f32 %v10533, %v7059
    %v10550 = vmul.f32 %v10534, %v7059
    %v10551 = vmul.f32 %v10535, %v7059
    %v10552 = vadd.f32 %v10536, %v7079
    %v10553 = vadd.f32 %v10537, %v7079
    %v10554 = vadd.f32 %v10538, %v7079
    %v10555 = vadd.f32 %v10539, %v7079
    %v10556 = vadd.f32 %v10540, %v7079
    %v10557 = vadd.f32 %v10541, %v7079
    %v10558 = vadd.f32 %v10542, %v7079
    %v10559 = vadd.f32 %v10543, %v7079
    %v10560 = vadd.f32 %v10544, %v7079
    %v10561 = vadd.f32 %v10545, %v7079
    %v10562 = vadd.f32 %v10546, %v7079
    %v10563 = vadd.f32 %v10547, %v7079
    %v10564 = vadd.f32 %v10548, %v7079
    %v10565 = vadd.f32 %v10549, %v7079
    %v10566 = vadd.f32 %v10550, %v7079
    %v10567 = vadd.f32 %v10551, %v7079
    %v10584 = vrot.slane %v10552, 4
    %v10585 = vrot.slane %v10553, 4
    %v10586 = vrot.slane %v10554, 4
    %v10587 = vrot.slane %v10555, 4
    %v10588 = vrot.slane %v10556, 4
    %v10589 = vrot.slane %v10557, 4
    %v10590 = vrot.slane %v10558, 4
    %v10591 = vrot.slane %v10559, 4
    %v10592 = vrot.slane %v10560, 4
    %v10593 = vrot.slane %v10561, 4
    %v10594 = vrot.slane %v10562, 4
    %v10595 = vrot.slane %v10563, 4
    %v10596 = vrot.slane %v10564, 4
    %v10597 = vrot.slane %v10565, 4
    %v10598 = vrot.slane %v10566, 4
    %v10599 = vrot.slane %v10567, 4
    %v10616 = vadd.f32 %v9732, %v10584
    %v10617 = vadd.f32 %v9733, %v10585
    %v10618 = vadd.f32 %v9734, %v10586
    %v10619 = vadd.f32 %v9735, %v10587
    %v10620 = vadd.f32 %v9736, %v10588
    %v10621 = vadd.f32 %v9737, %v10589
    %v10622 = vadd.f32 %v9738, %v10590
    %v10623 = vadd.f32 %v9739, %v10591
    %v10624 = vadd.f32 %v9740, %v10592
    %v10625 = vadd.f32 %v9741, %v10593
    %v10626 = vadd.f32 %v9742, %v10594
    %v10627 = vadd.f32 %v9743, %v10595
    %v10628 = vadd.f32 %v9744, %v10596
    %v10629 = vadd.f32 %v9745, %v10597
    %v10630 = vadd.f32 %v9746, %v10598
    %v10631 = vadd.f32 %v9747, %v10599
    %v10648 = vrot.slane %v5841, 7
    %v10649 = vsel %vm287, %v10648, %v5840
    %v10650 = vrot.slane %v5842, 6
    %v10651 = vsel %vm290, %v10650, %v10649
    %v10652 = vrot.slane %v5843, 5
    %v10653 = vrot.slane %v5844, 4
    %v10654 = vsel %vm272, %v10653, %v10652
    %v10655 = vrot.slane %v5845, 3
    %v10656 = vsel %vm275, %v10655, %v10654
    %v10657 = vrot.slane %v5846, 2
    %v10658 = vsel %vm278, %v10657, %v10656
    %v10659 = vrot.slane %v5847, 1
    %v10660 = vsel %vm281, %v10659, %v10658
    %v10661 = vsel %vm284, %v5848, %v10660
    %v10662 = vrot.slane %v5849, 7
    %v10663 = vsel %vm287, %v10662, %v10661
    %v10664 = vrot.slane %v5850, 6
    %v10665 = vsel %vm290, %v10664, %v10663
    %v10666 = vrot.slane %v5851, 5
    %v10667 = vrot.slane %v5852, 4
    %v10668 = vsel %vm272, %v10667, %v10666
    %v10669 = vrot.slane %v5853, 3
    %v10670 = vsel %vm275, %v10669, %v10668
    %v10671 = vrot.slane %v5854, 2
    %v10672 = vsel %vm278, %v10671, %v10670
    %v10673 = vrot.slane %v5855, 1
    %v10674 = vsel %vm281, %v10673, %v10672
    %v10678 = vsel %vm1348, %v10651, 0.0
    %10679 = vadd.xlane.f32.xlu0 %v10678
    %v10680 = vpop.xlane.xlu0 %10679
    %v10681 = vsel %vm308, %v10665, 0.0
    %10682 = vadd.xlane.f32.xlu0 %v10681
    %v10683 = vpop.xlane.xlu0 %10682
    %v10684 = vsel %vm1355, %v10674, 0.0
    %10685 = vadd.xlane.f32.xlu0 %v10684
    %v10686 = vpop.xlane.xlu0 %10685
    %v10687 = vmul.f32 %v10680, %v315
    %v10688 = vmul.f32 %v10683, %v315
    %v10689 = vmul.f32 %v10686, %v315
    %v10690 = vmul.f32 %v5840, %v5840
    %v10691 = vmul.f32 %v5841, %v5841
    %v10692 = vmul.f32 %v5842, %v5842
    %v10693 = vmul.f32 %v5843, %v5843
    %v10694 = vmul.f32 %v5844, %v5844
    %v10695 = vmul.f32 %v5845, %v5845
    %v10696 = vmul.f32 %v5846, %v5846
    %v10697 = vmul.f32 %v5847, %v5847
    %v10698 = vmul.f32 %v5848, %v5848
    %v10699 = vmul.f32 %v5849, %v5849
    %v10700 = vmul.f32 %v5850, %v5850
    %v10701 = vmul.f32 %v5851, %v5851
    %v10702 = vmul.f32 %v5852, %v5852
    %v10703 = vmul.f32 %v5853, %v5853
    %v10704 = vmul.f32 %v5854, %v5854
    %v10705 = vmul.f32 %v5855, %v5855
    %v10722 = vrot.slane %v10691, 7
    %v10723 = vsel %vm287, %v10722, %v10690
    %v10724 = vrot.slane %v10692, 6
    %v10725 = vsel %vm290, %v10724, %v10723
    %v10726 = vrot.slane %v10693, 5
    %v10727 = vrot.slane %v10694, 4
    %v10728 = vsel %vm272, %v10727, %v10726
    %v10729 = vrot.slane %v10695, 3
    %v10730 = vsel %vm275, %v10729, %v10728
    %v10731 = vrot.slane %v10696, 2
    %v10732 = vsel %vm278, %v10731, %v10730
    %v10733 = vrot.slane %v10697, 1
    %v10734 = vsel %vm281, %v10733, %v10732
    %v10735 = vsel %vm284, %v10698, %v10734
    %v10736 = vrot.slane %v10699, 7
    %v10737 = vsel %vm287, %v10736, %v10735
    %v10738 = vrot.slane %v10700, 6
    %v10739 = vsel %vm290, %v10738, %v10737
    %v10740 = vrot.slane %v10701, 5
    %v10741 = vrot.slane %v10702, 4
    %v10742 = vsel %vm272, %v10741, %v10740
    %v10743 = vrot.slane %v10703, 3
    %v10744 = vsel %vm275, %v10743, %v10742
    %v10745 = vrot.slane %v10704, 2
    %v10746 = vsel %vm278, %v10745, %v10744
    %v10747 = vrot.slane %v10705, 1
    %v10748 = vsel %vm281, %v10747, %v10746
    %v10752 = vsel %vm1348, %v10725, 0.0
    %10753 = vadd.xlane.f32.xlu0 %v10752
    %v10754 = vpop.xlane.xlu0 %10753
    %v10755 = vsel %vm308, %v10739, 0.0
    %10756 = vadd.xlane.f32.xlu0 %v10755
    %v10757 = vpop.xlane.xlu0 %10756
    %v10758 = vsel %vm1355, %v10748, 0.0
    %10759 = vadd.xlane.f32.xlu0 %v10758
    %v10760 = vpop.xlane.xlu0 %10759
    %v10761 = vmul.f32 %v10754, %v315
    %v10762 = vmul.f32 %v10757, %v315
    %v10763 = vmul.f32 %v10760, %v315
    %v10767 = vrot.slane %v10687, 1
    %v10768 = vrot.slane %v10687, 2
    %v10769 = vrot.slane %v10688, 3
    %v10770 = vrot.slane %v10688, 4
    %v10771 = vrot.slane %v10688, 5
    %v10772 = vrot.slane %v10688, 6
    %v10773 = vrot.slane %v10688, 7
    %v10774 = vrot.slane %v10688, 1
    %v10775 = vrot.slane %v10688, 2
    %v10776 = vrot.slane %v10689, 3
    %v10777 = vrot.slane %v10689, 4
    %v10778 = vrot.slane %v10689, 5
    %v10779 = vrot.slane %v10689, 6
    %v10780 = vrot.slane %v10689, 7
    %v10797 = vsub.f32 %v5840, %v10687
    %v10798 = vsub.f32 %v5841, %v10767
    %v10799 = vsub.f32 %v5842, %v10768
    %v10800 = vsub.f32 %v5843, %v10769
    %v10801 = vsub.f32 %v5844, %v10770
    %v10802 = vsub.f32 %v5845, %v10771
    %v10803 = vsub.f32 %v5846, %v10772
    %v10804 = vsub.f32 %v5847, %v10773
    %v10805 = vsub.f32 %v5848, %v10688
    %v10806 = vsub.f32 %v5849, %v10774
    %v10807 = vsub.f32 %v5850, %v10775
    %v10808 = vsub.f32 %v5851, %v10776
    %v10809 = vsub.f32 %v5852, %v10777
    %v10810 = vsub.f32 %v5853, %v10778
    %v10811 = vsub.f32 %v5854, %v10779
    %v10812 = vsub.f32 %v5855, %v10780
    %v10813 = vmul.f32 %v10687, %v10687
    %v10814 = vmul.f32 %v10688, %v10688
    %v10815 = vmul.f32 %v10689, %v10689
    %v10816 = vsub.f32 %v10761, %v10813
    %v10817 = vsub.f32 %v10762, %v10814
    %v10818 = vsub.f32 %v10763, %v10815
    %v10819 = vadd.f32 %v10816, 1e-05
    %v10820 = vadd.f32 %v10817, 1e-05
    %v10821 = vadd.f32 %v10818, 1e-05
    %v10822 = vrsqrt.pop %v10819
    %v10823 = vrsqrt.pop %v10820
    %v10824 = vrsqrt.pop %v10821
    %v10828 = vrot.slane %v10822, 1
    %v10829 = vrot.slane %v10822, 2
    %v10830 = vrot.slane %v10823, 3
    %v10831 = vrot.slane %v10823, 4
    %v10832 = vrot.slane %v10823, 5
    %v10833 = vrot.slane %v10823, 6
    %v10834 = vrot.slane %v10823, 7
    %v10835 = vrot.slane %v10823, 1
    %v10836 = vrot.slane %v10823, 2
    %v10837 = vrot.slane %v10824, 3
    %v10838 = vrot.slane %v10824, 4
    %v10839 = vrot.slane %v10824, 5
    %v10840 = vrot.slane %v10824, 6
    %v10841 = vrot.slane %v10824, 7
    %v10858 = vmul.f32 %v10797, %v10822
    %v10859 = vmul.f32 %v10798, %v10828
    %v10860 = vmul.f32 %v10799, %v10829
    %v10861 = vmul.f32 %v10800, %v10830
    %v10862 = vmul.f32 %v10801, %v10831
    %v10863 = vmul.f32 %v10802, %v10832
    %v10864 = vmul.f32 %v10803, %v10833
    %v10865 = vmul.f32 %v10804, %v10834
    %v10866 = vmul.f32 %v10805, %v10823
    %v10867 = vmul.f32 %v10806, %v10835
    %v10868 = vmul.f32 %v10807, %v10836
    %v10869 = vmul.f32 %v10808, %v10837
    %v10870 = vmul.f32 %v10809, %v10838
    %v10871 = vmul.f32 %v10810, %v10839
    %v10872 = vmul.f32 %v10811, %v10840
    %v10873 = vmul.f32 %v10812, %v10841
    %v10874 = vmul.f32 %v10858, %v6491
    %v10875 = vmul.f32 %v10859, %v6491
    %v10876 = vmul.f32 %v10860, %v6491
    %v10877 = vmul.f32 %v10861, %v6491
    %v10878 = vmul.f32 %v10862, %v6491
    %v10879 = vmul.f32 %v10863, %v6491
    %v10880 = vmul.f32 %v10864, %v6491
    %v10881 = vmul.f32 %v10865, %v6491
    %v10882 = vmul.f32 %v10866, %v6491
    %v10883 = vmul.f32 %v10867, %v6491
    %v10884 = vmul.f32 %v10868, %v6491
    %v10885 = vmul.f32 %v10869, %v6491
    %v10886 = vmul.f32 %v10870, %v6491
    %v10887 = vmul.f32 %v10871, %v6491
    %v10888 = vmul.f32 %v10872, %v6491
    %v10889 = vmul.f32 %v10873, %v6491
    %v10890 = vadd.f32 %v10874, %v6511
    %v10891 = vadd.f32 %v10875, %v6511
    %v10892 = vadd.f32 %v10876, %v6511
    %v10893 = vadd.f32 %v10877, %v6511
    %v10894 = vadd.f32 %v10878, %v6511
    %v10895 = vadd.f32 %v10879, %v6511
    %v10896 = vadd.f32 %v10880, %v6511
    %v10897 = vadd.f32 %v10881, %v6511
    %v10898 = vadd.f32 %v10882, %v6511
    %v10899 = vadd.f32 %v10883, %v6511
    %v10900 = vadd.f32 %v10884, %v6511
    %v10901 = vadd.f32 %v10885, %v6511
    %v10902 = vadd.f32 %v10886, %v6511
    %v10903 = vadd.f32 %v10887, %v6511
    %v10904 = vadd.f32 %v10888, %v6511
    %v10905 = vadd.f32 %v10889, %v6511
    %v10922 = vrot.slane %v10890, 5
    %v10923 = vrot.slane %v10891, 4
    %v10924 = vsel %vm272, %v10923, %v10922
    %v10925 = vrot.slane %v10892, 3
    %v10926 = vsel %vm275, %v10925, %v10924
    %v10927 = vrot.slane %v10893, 2
    %v10928 = vsel %vm278, %v10927, %v10926
    %v10929 = vrot.slane %v10894, 1
    %v10930 = vsel %vm281, %v10929, %v10928
    %v10931 = vsel %vm284, %v10895, %v10930
    %v10932 = vrot.slane %v10896, 7
    %v10933 = vsel %vm287, %v10932, %v10931
    %v10934 = vrot.slane %v10897, 6
    %v10935 = vsel %vm290, %v10934, %v10933
    %v10936 = vrot.slane %v10898, 5
    %v10937 = vrot.slane %v10899, 4
    %v10938 = vsel %vm272, %v10937, %v10936
    %v10939 = vrot.slane %v10900, 3
    %v10940 = vsel %vm275, %v10939, %v10938
    %v10941 = vrot.slane %v10901, 2
    %v10942 = vsel %vm278, %v10941, %v10940
    %v10943 = vrot.slane %v10902, 1
    %v10944 = vsel %vm281, %v10943, %v10942
    %v10945 = vsel %vm284, %v10903, %v10944
    %v10946 = vrot.slane %v10904, 7
    %v10947 = vsel %vm287, %v10946, %v10945
    %v10948 = vrot.slane %v10905, 6
    %v10949 = vsel %vm290, %v10948, %v10947
    %v10950 = vsel %vm308, %v10935, 0
    %v10952 = vsel %vm308, %v10949, 0
    %10954 = vmatprep.subr.mxu0 0.0
    %10955 = vmatpush1.msra.mxu0 0.0
    %10956 = vmatprep.subr.mxu0 0.0
    %10957 = vmatpush1.msra.mxu0 0.0
    %10958 = vmatprep.subr.mxu0 0.0
    %10959 = vmatpush1.msra.mxu0 0.0
    %10960 = vmatprep.subr.mxu0 0.0
    %10961 = vmatpush1.msra.mxu0 0.0
    %10962 = vmatprep.subr.mxu0 0.0
    %10963 = vmatpush1.msra.mxu0 0.0
    %10964 = vmatprep.subr.mxu0 0.0
    %10965 = vmatpush1.msra.mxu0 0.0
    %10966 = vmatprep.subr.mxu0 0.0
    %10967 = vmatpush1.msra.mxu0 0.0
    %10968 = vmatprep.subr.mxu0 0.0
    %10969 = vmatpush1.msra.mxu0 0.0
    %10970 = vmatprep.subr.mxu0 0.0
    %10971 = vmatpush1.msra.mxu0 0.0
    %10972 = vmatprep.subr.mxu0 0.0
    %10973 = vmatpush1.msra.mxu0 0.0
    %10974 = vmatprep.subr.mxu0 0.0
    %10975 = vmatpush1.msra.mxu0 0.0
    %10976 = vmatprep.subr.mxu0 0.0
    %10977 = vmatpush1.msra.mxu0 0.0
    %10978 = vmatprep.subr.mxu0 0.0
    %10979 = vmatpush1.msra.mxu0 %v6531
    %10980 = vmatprep.subr.mxu0 0.0
    %10981 = vmatpush1.msra.mxu0 %v6530
    %10982 = vmatprep.subr.mxu0 0.0
    %10983 = vmatpush1.msra.mxu0 %v6529
    %10984 = vmatprep.subr.mxu0 0.0
    %10985 = vmatpush1.msra.mxu0 %v6528
    %10986 = vmatprep.subr.mxu0 0.0
    %10987 = vmatpush2.msra.mxu0 0.0
    %10988 = vmatprep.subr.mxu0 0.0
    %10989 = vmatpush2.msra.mxu0 0.0
    %10990 = vmatprep.subr.mxu0 0.0
    %10991 = vmatpush2.msra.mxu0 0.0
    %10992 = vmatprep.subr.mxu0 0.0
    %10993 = vmatpush2.msra.mxu0 0.0
    %10994 = vmatprep.subr.mxu0 0.0
    %10995 = vmatpush2.msra.mxu0 0.0
    %10996 = vmatprep.subr.mxu0 0.0
    %10997 = vmatpush2.msra.mxu0 0.0
    %10998 = vmatprep.subr.mxu0 0.0
    %10999 = vmatpush2.msra.mxu0 0.0
    %11000 = vmatprep.subr.mxu0 0.0
    %11001 = vmatpush2.msra.mxu0 0.0
    %11002 = vmatprep.subr.mxu0 0.0
    %11003 = vmatpush2.msra.mxu0 0.0
    %11004 = vmatprep.subr.mxu0 0.0
    %11005 = vmatpush2.msra.mxu0 0.0
    %11006 = vmatprep.subr.mxu0 0.0
    %11007 = vmatpush2.msra.mxu0 0.0
    %11008 = vmatprep.subr.mxu0 0.0
    %11009 = vmatpush2.msra.mxu0 0.0
    %11010 = vmatprep.subr.mxu0 0.0
    %11011 = vmatpush2.msra.mxu0 0.0
    %11012 = vmatprep.subr.mxu0 0.0
    %11013 = vmatpush2.msra.mxu0 0.0
    %11014 = vmatprep.subr.mxu0 0.0
    %11015 = vmatpush2.msra.mxu0 0.0
    %11016 = vmatprep.subr.mxu0 0.0
    %11017 = vmatpush2.msra.mxu0 0.0
    %11018 = vmatprep.mubr.f32.mxu0 0.0
    %11019 = vmatmul.mubr.f32.gmra.mxu0 %v10950
    %v11020 = vpop.f32.mrf.mxu0
    %v11021 = vadd.f32 %v6535, %v11020
    %v11022 = vpop.f32.mrf.mxu0
    %11023 = vmatprep.mubr.f32.mxu0 0.0
    %11024 = vmatmul.mubr.f32.gmra.mxu0 %v10952
    %v11025 = vpop.f32.mrf.mxu0
    %v11026 = vadd.f32 %v6535, %v11025
    %v11027 = vpop.f32.mrf.mxu0
    %11028 = vdwg.mxu0
    %v11029 = vmul.f32 %v11021, 0.5
    %v11030 = vmul.f32 %v11026, 0.5
    %v11031 = vmul.f32 %v11021, 0.70710677
    %v11032 = vmul.f32 %v11026, 0.70710677
    %v11033 = verf.f32.pop %v11031
    %v11034 = verf.f32.pop %v11032
    %v11035 = vadd.f32 %v11033, 1.0
    %v11036 = vadd.f32 %v11034, 1.0
    %v11037 = vmul.f32 %v11029, %v11035
    %v11038 = vmul.f32 %v11030, %v11036
    %11039 = vmatprep.subr.mxu0 0.0
    %11040 = vmatpush1.msra.mxu0 %v6684
    %11041 = vmatprep.subr.mxu0 0.0
    %11042 = vmatpush1.msra.mxu0 %v6683
    %11043 = vmatprep.subr.mxu0 0.0
    %11044 = vmatpush1.msra.mxu0 %v6682
    %11045 = vmatprep.subr.mxu0 0.0
    %11046 = vmatpush1.msra.mxu0 %v6681
    %11047 = vmatprep.subr.mxu0 0.0
    %11048 = vmatpush1.msra.mxu0 %v6680
    %11049 = vmatprep.subr.mxu0 0.0
    %11050 = vmatpush1.msra.mxu0 %v6679
    %11051 = vmatprep.subr.mxu0 0.0
    %11052 = vmatpush1.msra.mxu0 %v6678
    %11053 = vmatprep.subr.mxu0 0.0
    %11054 = vmatpush1.msra.mxu0 %v6677
    %11055 = vmatprep.subr.mxu0 0.0
    %11056 = vmatpush1.msra.mxu0 %v6676
    %11057 = vmatprep.subr.mxu0 0.0
    %11058 = vmatpush1.msra.mxu0 %v6675
    %11059 = vmatprep.subr.mxu0 0.0
    %11060 = vmatpush1.msra.mxu0 %v6674
    %11061 = vmatprep.subr.mxu0 0.0
    %11062 = vmatpush1.msra.mxu0 %v6673
    %11063 = vmatprep.subr.mxu0 0.0
    %11064 = vmatpush1.msra.mxu0 %v6672
    %11065 = vmatprep.subr.mxu0 0.0
    %11066 = vmatpush1.msra.mxu0 %v6671
    %11067 = vmatprep.subr.mxu0 0.0
    %11068 = vmatpush1.msra.mxu0 %v6670
    %11069 = vmatprep.subr.mxu0 0.0
    %11070 = vmatpush1.msra.mxu0 %v6669
    %11071 = vmatprep.subr.mxu0 0.0
    %11072 = vmatpush2.msra.mxu0 0.0
    %11073 = vmatprep.subr.mxu0 0.0
    %11074 = vmatpush2.msra.mxu0 0.0
    %11075 = vmatprep.subr.mxu0 0.0
    %11076 = vmatpush2.msra.mxu0 0.0
    %11077 = vmatprep.subr.mxu0 0.0
    %11078 = vmatpush2.msra.mxu0 0.0
    %11079 = vmatprep.subr.mxu0 0.0
    %11080 = vmatpush2.msra.mxu0 0.0
    %11081 = vmatprep.subr.mxu0 0.0
    %11082 = vmatpush2.msra.mxu0 0.0
    %11083 = vmatprep.subr.mxu0 0.0
    %11084 = vmatpush2.msra.mxu0 0.0
    %11085 = vmatprep.subr.mxu0 0.0
    %11086 = vmatpush2.msra.mxu0 0.0
    %11087 = vmatprep.subr.mxu0 0.0
    %11088 = vmatpush2.msra.mxu0 0.0
    %11089 = vmatprep.subr.mxu0 0.0
    %11090 = vmatpush2.msra.mxu0 0.0
    %11091 = vmatprep.subr.mxu0 0.0
    %11092 = vmatpush2.msra.mxu0 0.0
    %11093 = vmatprep.subr.mxu0 0.0
    %11094 = vmatpush2.msra.mxu0 0.0
    %11095 = vmatprep.subr.mxu0 0.0
    %11096 = vmatpush2.msra.mxu0 0.0
    %11097 = vmatprep.subr.mxu0 0.0
    %11098 = vmatpush2.msra.mxu0 0.0
    %11099 = vmatprep.subr.mxu0 0.0
    %11100 = vmatpush2.msra.mxu0 0.0
    %11101 = vmatprep.subr.mxu0 0.0
    %11102 = vmatpush2.msra.mxu0 0.0
    %11103 = vmatprep.mubr.f32.mxu0 0.0
    %11104 = vmatmul.mubr.f32.gmra.mxu0 %v11037
    %v11105 = vpop.f32.mrf.mxu0
    %v11106 = vadd.f32 0.0, %v11105
    %v11107 = vpop.f32.mrf.mxu0
    %11108 = vmatprep.mubr.f32.mxu0 0.0
    %11109 = vmatmul.mubr.f32.gmra.mxu0 %v11038
    %v11110 = vpop.f32.mrf.mxu0
    %v11111 = vadd.f32 0.0, %v11110
    %v11112 = vpop.f32.mrf.mxu0
    %11113 = vdwg.mxu0
    %v11116 = vrot.slane %v11106, 3
    %v11117 = vrot.slane %v11106, 4
    %v11118 = vrot.slane %v11106, 5
    %v11119 = vrot.slane %v11106, 6
    %v11120 = vrot.slane %v11106, 7
    %v11121 = vrot.slane %v11106, 1
    %v11122 = vrot.slane %v11106, 2
    %v11123 = vrot.slane %v11111, 3
    %v11124 = vrot.slane %v11111, 4
    %v11125 = vrot.slane %v11111, 5
    %v11126 = vrot.slane %v11111, 6
    %v11127 = vrot.slane %v11111, 7
    %v11128 = vrot.slane %v11111, 1
    %v11129 = vrot.slane %v11111, 2
    %v11146 = vadd.f32 %v5840, %v11116
    %v11147 = vadd.f32 %v5841, %v11117
    %v11148 = vadd.f32 %v5842, %v11118
    %v11149 = vadd.f32 %v5843, %v11119
    %v11150 = vadd.f32 %v5844, %v11120
    %v11151 = vadd.f32 %v5845, %v11106
    %v11152 = vadd.f32 %v5846, %v11121
    %v11153 = vadd.f32 %v5847, %v11122
    %v11154 = vadd.f32 %v5848, %v11123
    %v11155 = vadd.f32 %v5849, %v11124
    %v11156 = vadd.f32 %v5850, %v11125
    %v11157 = vadd.f32 %v5851, %v11126
    %v11158 = vadd.f32 %v5852, %v11127
    %v11159 = vadd.f32 %v5853, %v11111
    %v11160 = vadd.f32 %v5854, %v11128
    %v11161 = vadd.f32 %v5855, %v11129
    %v11162 = vadd.f32 %v11146, %v6811
    %v11163 = vadd.f32 %v11147, %v6811
    %v11164 = vadd.f32 %v11148, %v6811
    %v11165 = vadd.f32 %v11149, %v6811
    %v11166 = vadd.f32 %v11150, %v6811
    %v11167 = vadd.f32 %v11151, %v6811
    %v11168 = vadd.f32 %v11152, %v6811
    %v11169 = vadd.f32 %v11153, %v6811
    %v11170 = vadd.f32 %v11154, %v6811
    %v11171 = vadd.f32 %v11155, %v6811
    %v11172 = vadd.f32 %v11156, %v6811
    %v11173 = vadd.f32 %v11157, %v6811
    %v11174 = vadd.f32 %v11158, %v6811
    %v11175 = vadd.f32 %v11159, %v6811
    %v11176 = vadd.f32 %v11160, %v6811
    %v11177 = vadd.f32 %v11161, %v6811
    %v11194 = vrot.slane %v11163, 7
    %v11195 = vsel %vm287, %v11194, %v11162
    %v11196 = vrot.slane %v11164, 6
    %v11197 = vsel %vm290, %v11196, %v11195
    %v11198 = vrot.slane %v11165, 5
    %v11199 = vrot.slane %v11166, 4
    %v11200 = vsel %vm272, %v11199, %v11198
    %v11201 = vrot.slane %v11167, 3
    %v11202 = vsel %vm275, %v11201, %v11200
    %v11203 = vrot.slane %v11168, 2
    %v11204 = vsel %vm278, %v11203, %v11202
    %v11205 = vrot.slane %v11169, 1
    %v11206 = vsel %vm281, %v11205, %v11204
    %v11207 = vsel %vm284, %v11170, %v11206
    %v11208 = vrot.slane %v11171, 7
    %v11209 = vsel %vm287, %v11208, %v11207
    %v11210 = vrot.slane %v11172, 6
    %v11211 = vsel %vm290, %v11210, %v11209
    %v11212 = vrot.slane %v11173, 5
    %v11213 = vrot.slane %v11174, 4
    %v11214 = vsel %vm272, %v11213, %v11212
    %v11215 = vrot.slane %v11175, 3
    %v11216 = vsel %vm275, %v11215, %v11214
    %v11217 = vrot.slane %v11176, 2
    %v11218 = vsel %vm278, %v11217, %v11216
    %v11219 = vrot.slane %v11177, 1
    %v11220 = vsel %vm281, %v11219, %v11218
    %v11224 = vsel %vm1348, %v11197, 0.0
    %11225 = vadd.xlane.f32.xlu0 %v11224
    %v11226 = vpop.xlane.xlu0 %11225
    %v11227 = vsel %vm308, %v11211, 0.0
    %11228 = vadd.xlane.f32.xlu0 %v11227
    %v11229 = vpop.xlane.xlu0 %11228
    %v11230 = vsel %vm1355, %v11220, 0.0
    %11231 = vadd.xlane.f32.xlu0 %v11230
    %v11232 = vpop.xlane.xlu0 %11231
    %v11233 = vmul.f32 %v11226, %v315
    %v11234 = vmul.f32 %v11229, %v315
    %v11235 = vmul.f32 %v11232, %v315
    %v11236 = vmul.f32 %v11162, %v11162
    %v11237 = vmul.f32 %v11163, %v11163
    %v11238 = vmul.f32 %v11164, %v11164
    %v11239 = vmul.f32 %v11165, %v11165
    %v11240 = vmul.f32 %v11166, %v11166
    %v11241 = vmul.f32 %v11167, %v11167
    %v11242 = vmul.f32 %v11168, %v11168
    %v11243 = vmul.f32 %v11169, %v11169
    %v11244 = vmul.f32 %v11170, %v11170
    %v11245 = vmul.f32 %v11171, %v11171
    %v11246 = vmul.f32 %v11172, %v11172
    %v11247 = vmul.f32 %v11173, %v11173
    %v11248 = vmul.f32 %v11174, %v11174
    %v11249 = vmul.f32 %v11175, %v11175
    %v11250 = vmul.f32 %v11176, %v11176
    %v11251 = vmul.f32 %v11177, %v11177
    %v11268 = vrot.slane %v11237, 7
    %v11269 = vsel %vm287, %v11268, %v11236
    %v11270 = vrot.slane %v11238, 6
    %v11271 = vsel %vm290, %v11270, %v11269
    %v11272 = vrot.slane %v11239, 5
    %v11273 = vrot.slane %v11240, 4
    %v11274 = vsel %vm272, %v11273, %v11272
    %v11275 = vrot.slane %v11241, 3
    %v11276 = vsel %vm275, %v11275, %v11274
    %v11277 = vrot.slane %v11242, 2
    %v11278 = vsel %vm278, %v11277, %v11276
    %v11279 = vrot.slane %v11243, 1
    %v11280 = vsel %vm281, %v11279, %v11278
    %v11281 = vsel %vm284, %v11244, %v11280
    %v11282 = vrot.slane %v11245, 7
    %v11283 = vsel %vm287, %v11282, %v11281
    %v11284 = vrot.slane %v11246, 6
    %v11285 = vsel %vm290, %v11284, %v11283
    %v11286 = vrot.slane %v11247, 5
    %v11287 = vrot.slane %v11248, 4
    %v11288 = vsel %vm272, %v11287, %v11286
    %v11289 = vrot.slane %v11249, 3
    %v11290 = vsel %vm275, %v11289, %v11288
    %v11291 = vrot.slane %v11250, 2
    %v11292 = vsel %vm278, %v11291, %v11290
    %v11293 = vrot.slane %v11251, 1
    %v11294 = vsel %vm281, %v11293, %v11292
    %v11298 = vsel %vm1348, %v11271, 0.0
    %11299 = vadd.xlane.f32.xlu0 %v11298
    %v11300 = vpop.xlane.xlu0 %11299
    %v11301 = vsel %vm308, %v11285, 0.0
    %11302 = vadd.xlane.f32.xlu0 %v11301
    %v11303 = vpop.xlane.xlu0 %11302
    %v11304 = vsel %vm1355, %v11294, 0.0
    %11305 = vadd.xlane.f32.xlu0 %v11304
    %v11306 = vpop.xlane.xlu0 %11305
    %v11307 = vmul.f32 %v11300, %v315
    %v11308 = vmul.f32 %v11303, %v315
    %v11309 = vmul.f32 %v11306, %v315
    %v11313 = vrot.slane %v11233, 1
    %v11314 = vrot.slane %v11233, 2
    %v11315 = vrot.slane %v11234, 3
    %v11316 = vrot.slane %v11234, 4
    %v11317 = vrot.slane %v11234, 5
    %v11318 = vrot.slane %v11234, 6
    %v11319 = vrot.slane %v11234, 7
    %v11320 = vrot.slane %v11234, 1
    %v11321 = vrot.slane %v11234, 2
    %v11322 = vrot.slane %v11235, 3
    %v11323 = vrot.slane %v11235, 4
    %v11324 = vrot.slane %v11235, 5
    %v11325 = vrot.slane %v11235, 6
    %v11326 = vrot.slane %v11235, 7
    %v11343 = vsub.f32 %v11162, %v11233
    %v11344 = vsub.f32 %v11163, %v11313
    %v11345 = vsub.f32 %v11164, %v11314
    %v11346 = vsub.f32 %v11165, %v11315
    %v11347 = vsub.f32 %v11166, %v11316
    %v11348 = vsub.f32 %v11167, %v11317
    %v11349 = vsub.f32 %v11168, %v11318
    %v11350 = vsub.f32 %v11169, %v11319
    %v11351 = vsub.f32 %v11170, %v11234
    %v11352 = vsub.f32 %v11171, %v11320
    %v11353 = vsub.f32 %v11172, %v11321
    %v11354 = vsub.f32 %v11173, %v11322
    %v11355 = vsub.f32 %v11174, %v11323
    %v11356 = vsub.f32 %v11175, %v11324
    %v11357 = vsub.f32 %v11176, %v11325
    %v11358 = vsub.f32 %v11177, %v11326
    %v11359 = vmul.f32 %v11233, %v11233
    %v11360 = vmul.f32 %v11234, %v11234
    %v11361 = vmul.f32 %v11235, %v11235
    %v11362 = vsub.f32 %v11307, %v11359
    %v11363 = vsub.f32 %v11308, %v11360
    %v11364 = vsub.f32 %v11309, %v11361
    %v11365 = vadd.f32 %v11362, 1e-05
    %v11366 = vadd.f32 %v11363, 1e-05
    %v11367 = vadd.f32 %v11364, 1e-05
    %v11368 = vrsqrt.pop %v11365
    %v11369 = vrsqrt.pop %v11366
    %v11370 = vrsqrt.pop %v11367
    %v11374 = vrot.slane %v11368, 1
    %v11375 = vrot.slane %v11368, 2
    %v11376 = vrot.slane %v11369, 3
    %v11377 = vrot.slane %v11369, 4
    %v11378 = vrot.slane %v11369, 5
    %v11379 = vrot.slane %v11369, 6
    %v11380 = vrot.slane %v11369, 7
    %v11381 = vrot.slane %v11369, 1
    %v11382 = vrot.slane %v11369, 2
    %v11383 = vrot.slane %v11370, 3
    %v11384 = vrot.slane %v11370, 4
    %v11385 = vrot.slane %v11370, 5
    %v11386 = vrot.slane %v11370, 6
    %v11387 = vrot.slane %v11370, 7
    %v11404 = vmul.f32 %v11343, %v11368
    %v11405 = vmul.f32 %v11344, %v11374
    %v11406 = vmul.f32 %v11345, %v11375
    %v11407 = vmul.f32 %v11346, %v11376
    %v11408 = vmul.f32 %v11347, %v11377
    %v11409 = vmul.f32 %v11348, %v11378
    %v11410 = vmul.f32 %v11349, %v11379
    %v11411 = vmul.f32 %v11350, %v11380
    %v11412 = vmul.f32 %v11351, %v11369
    %v11413 = vmul.f32 %v11352, %v11381
    %v11414 = vmul.f32 %v11353, %v11382
    %v11415 = vmul.f32 %v11354, %v11383
    %v11416 = vmul.f32 %v11355, %v11384
    %v11417 = vmul.f32 %v11356, %v11385
    %v11418 = vmul.f32 %v11357, %v11386
    %v11419 = vmul.f32 %v11358, %v11387
    %v11420 = vmul.f32 %v11404, %v7059
    %v11421 = vmul.f32 %v11405, %v7059
    %v11422 = vmul.f32 %v11406, %v7059
    %v11423 = vmul.f32 %v11407, %v7059
    %v11424 = vmul.f32 %v11408, %v7059
    %v11425 = vmul.f32 %v11409, %v7059
    %v11426 = vmul.f32 %v11410, %v7059
    %v11427 = vmul.f32 %v11411, %v7059
    %v11428 = vmul.f32 %v11412, %v7059
    %v11429 = vmul.f32 %v11413, %v7059
    %v11430 = vmul.f32 %v11414, %v7059
    %v11431 = vmul.f32 %v11415, %v7059
    %v11432 = vmul.f32 %v11416, %v7059
    %v11433 = vmul.f32 %v11417, %v7059
    %v11434 = vmul.f32 %v11418, %v7059
    %v11435 = vmul.f32 %v11419, %v7059
    %v11436 = vadd.f32 %v11420, %v7079
    %v11437 = vadd.f32 %v11421, %v7079
    %v11438 = vadd.f32 %v11422, %v7079
    %v11439 = vadd.f32 %v11423, %v7079
    %v11440 = vadd.f32 %v11424, %v7079
    %v11441 = vadd.f32 %v11425, %v7079
    %v11442 = vadd.f32 %v11426, %v7079
    %v11443 = vadd.f32 %v11427, %v7079
    %v11444 = vadd.f32 %v11428, %v7079
    %v11445 = vadd.f32 %v11429, %v7079
    %v11446 = vadd.f32 %v11430, %v7079
    %v11447 = vadd.f32 %v11431, %v7079
    %v11448 = vadd.f32 %v11432, %v7079
    %v11449 = vadd.f32 %v11433, %v7079
    %v11450 = vadd.f32 %v11434, %v7079
    %v11451 = vadd.f32 %v11435, %v7079
    %v11468 = vrot.slane %v11436, 5
    %v11469 = vrot.slane %v11437, 5
    %v11470 = vrot.slane %v11438, 5
    %v11471 = vrot.slane %v11439, 5
    %v11472 = vrot.slane %v11440, 5
    %v11473 = vrot.slane %v11441, 5
    %v11474 = vrot.slane %v11442, 5
    %v11475 = vrot.slane %v11443, 5
    %v11476 = vrot.slane %v11444, 5
    %v11477 = vrot.slane %v11445, 5
    %v11478 = vrot.slane %v11446, 5
    %v11479 = vrot.slane %v11447, 5
    %v11480 = vrot.slane %v11448, 5
    %v11481 = vrot.slane %v11449, 5
    %v11482 = vrot.slane %v11450, 5
    %v11483 = vrot.slane %v11451, 5
    %v11500 = vadd.f32 %v10616, %v11468
    %v11501 = vadd.f32 %v10617, %v11469
    %v11502 = vadd.f32 %v10618, %v11470
    %v11503 = vadd.f32 %v10619, %v11471
    %v11504 = vadd.f32 %v10620, %v11472
    %v11505 = vadd.f32 %v10621, %v11473
    %v11506 = vadd.f32 %v10622, %v11474
    %v11507 = vadd.f32 %v10623, %v11475
    %v11508 = vadd.f32 %v10624, %v11476
    %v11509 = vadd.f32 %v10625, %v11477
    %v11510 = vadd.f32 %v10626, %v11478
    %v11511 = vadd.f32 %v10627, %v11479
    %v11512 = vadd.f32 %v10628, %v11480
    %v11513 = vadd.f32 %v10629, %v11481
    %v11514 = vadd.f32 %v10630, %v11482
    %v11515 = vadd.f32 %v10631, %v11483
    %v11532 = vrot.slane %v6043, 7
    %v11533 = vsel %vm290, %v11532, %v6042
    %v11534 = vrot.slane %v6044, 6
    %v11535 = vrot.slane %v6045, 5
    %v11536 = vsel %vm272, %v11535, %v11534
    %v11537 = vrot.slane %v6046, 4
    %v11538 = vsel %vm275, %v11537, %v11536
    %v11539 = vrot.slane %v6047, 3
    %v11540 = vsel %vm278, %v11539, %v11538
    %v11541 = vrot.slane %v6048, 2
    %v11542 = vsel %vm281, %v11541, %v11540
    %v11543 = vrot.slane %v6049, 1
    %v11544 = vsel %vm284, %v11543, %v11542
    %v11545 = vsel %vm287, %v6050, %v11544
    %v11546 = vrot.slane %v6051, 7
    %v11547 = vsel %vm290, %v11546, %v11545
    %v11548 = vrot.slane %v6052, 6
    %v11549 = vrot.slane %v6053, 5
    %v11550 = vsel %vm272, %v11549, %v11548
    %v11551 = vrot.slane %v6054, 4
    %v11552 = vsel %vm275, %v11551, %v11550
    %v11553 = vrot.slane %v6055, 3
    %v11554 = vsel %vm278, %v11553, %v11552
    %v11555 = vrot.slane %v6056, 2
    %v11556 = vsel %vm281, %v11555, %v11554
    %v11557 = vrot.slane %v6057, 1
    %v11558 = vsel %vm284, %v11557, %v11556
    %v11562 = vsel %vm1548, %v11533, 0.0
    %11563 = vadd.xlane.f32.xlu0 %v11562
    %v11564 = vpop.xlane.xlu0 %11563
    %v11565 = vsel %vm308, %v11547, 0.0
    %11566 = vadd.xlane.f32.xlu0 %v11565
    %v11567 = vpop.xlane.xlu0 %11566
    %v11568 = vsel %vm1555, %v11558, 0.0
    %11569 = vadd.xlane.f32.xlu0 %v11568
    %v11570 = vpop.xlane.xlu0 %11569
    %v11571 = vmul.f32 %v11564, %v315
    %v11572 = vmul.f32 %v11567, %v315
    %v11573 = vmul.f32 %v11570, %v315
    %v11574 = vmul.f32 %v6042, %v6042
    %v11575 = vmul.f32 %v6043, %v6043
    %v11576 = vmul.f32 %v6044, %v6044
    %v11577 = vmul.f32 %v6045, %v6045
    %v11578 = vmul.f32 %v6046, %v6046
    %v11579 = vmul.f32 %v6047, %v6047
    %v11580 = vmul.f32 %v6048, %v6048
    %v11581 = vmul.f32 %v6049, %v6049
    %v11582 = vmul.f32 %v6050, %v6050
    %v11583 = vmul.f32 %v6051, %v6051
    %v11584 = vmul.f32 %v6052, %v6052
    %v11585 = vmul.f32 %v6053, %v6053
    %v11586 = vmul.f32 %v6054, %v6054
    %v11587 = vmul.f32 %v6055, %v6055
    %v11588 = vmul.f32 %v6056, %v6056
    %v11589 = vmul.f32 %v6057, %v6057
    %v11606 = vrot.slane %v11575, 7
    %v11607 = vsel %vm290, %v11606, %v11574
    %v11608 = vrot.slane %v11576, 6
    %v11609 = vrot.slane %v11577, 5
    %v11610 = vsel %vm272, %v11609, %v11608
    %v11611 = vrot.slane %v11578, 4
    %v11612 = vsel %vm275, %v11611, %v11610
    %v11613 = vrot.slane %v11579, 3
    %v11614 = vsel %vm278, %v11613, %v11612
    %v11615 = vrot.slane %v11580, 2
    %v11616 = vsel %vm281, %v11615, %v11614
    %v11617 = vrot.slane %v11581, 1
    %v11618 = vsel %vm284, %v11617, %v11616
    %v11619 = vsel %vm287, %v11582, %v11618
    %v11620 = vrot.slane %v11583, 7
    %v11621 = vsel %vm290, %v11620, %v11619
    %v11622 = vrot.slane %v11584, 6
    %v11623 = vrot.slane %v11585, 5
    %v11624 = vsel %vm272, %v11623, %v11622
    %v11625 = vrot.slane %v11586, 4
    %v11626 = vsel %vm275, %v11625, %v11624
    %v11627 = vrot.slane %v11587, 3
    %v11628 = vsel %vm278, %v11627, %v11626
    %v11629 = vrot.slane %v11588, 2
    %v11630 = vsel %vm281, %v11629, %v11628
    %v11631 = vrot.slane %v11589, 1
    %v11632 = vsel %vm284, %v11631, %v11630
    %v11636 = vsel %vm1548, %v11607, 0.0
    %11637 = vadd.xlane.f32.xlu0 %v11636
    %v11638 = vpop.xlane.xlu0 %11637
    %v11639 = vsel %vm308, %v11621, 0.0
    %11640 = vadd.xlane.f32.xlu0 %v11639
    %v11641 = vpop.xlane.xlu0 %11640
    %v11642 = vsel %vm1555, %v11632, 0.0
    %11643 = vadd.xlane.f32.xlu0 %v11642
    %v11644 = vpop.xlane.xlu0 %11643
    %v11645 = vmul.f32 %v11638, %v315
    %v11646 = vmul.f32 %v11641, %v315
    %v11647 = vmul.f32 %v11644, %v315
    %v11651 = vrot.slane %v11571, 1
    %v11652 = vrot.slane %v11572, 2
    %v11653 = vrot.slane %v11572, 3
    %v11654 = vrot.slane %v11572, 4
    %v11655 = vrot.slane %v11572, 5
    %v11656 = vrot.slane %v11572, 6
    %v11657 = vrot.slane %v11572, 7
    %v11658 = vrot.slane %v11572, 1
    %v11659 = vrot.slane %v11573, 2
    %v11660 = vrot.slane %v11573, 3
    %v11661 = vrot.slane %v11573, 4
    %v11662 = vrot.slane %v11573, 5
    %v11663 = vrot.slane %v11573, 6
    %v11664 = vrot.slane %v11573, 7
    %v11681 = vsub.f32 %v6042, %v11571
    %v11682 = vsub.f32 %v6043, %v11651
    %v11683 = vsub.f32 %v6044, %v11652
    %v11684 = vsub.f32 %v6045, %v11653
    %v11685 = vsub.f32 %v6046, %v11654
    %v11686 = vsub.f32 %v6047, %v11655
    %v11687 = vsub.f32 %v6048, %v11656
    %v11688 = vsub.f32 %v6049, %v11657
    %v11689 = vsub.f32 %v6050, %v11572
    %v11690 = vsub.f32 %v6051, %v11658
    %v11691 = vsub.f32 %v6052, %v11659
    %v11692 = vsub.f32 %v6053, %v11660
    %v11693 = vsub.f32 %v6054, %v11661
    %v11694 = vsub.f32 %v6055, %v11662
    %v11695 = vsub.f32 %v6056, %v11663
    %v11696 = vsub.f32 %v6057, %v11664
    %v11697 = vmul.f32 %v11571, %v11571
    %v11698 = vmul.f32 %v11572, %v11572
    %v11699 = vmul.f32 %v11573, %v11573
    %v11700 = vsub.f32 %v11645, %v11697
    %v11701 = vsub.f32 %v11646, %v11698
    %v11702 = vsub.f32 %v11647, %v11699
    %v11703 = vadd.f32 %v11700, 1e-05
    %v11704 = vadd.f32 %v11701, 1e-05
    %v11705 = vadd.f32 %v11702, 1e-05
    %v11706 = vrsqrt.pop %v11703
    %v11707 = vrsqrt.pop %v11704
    %v11708 = vrsqrt.pop %v11705
    %v11712 = vrot.slane %v11706, 1
    %v11713 = vrot.slane %v11707, 2
    %v11714 = vrot.slane %v11707, 3
    %v11715 = vrot.slane %v11707, 4
    %v11716 = vrot.slane %v11707, 5
    %v11717 = vrot.slane %v11707, 6
    %v11718 = vrot.slane %v11707, 7
    %v11719 = vrot.slane %v11707, 1
    %v11720 = vrot.slane %v11708, 2
    %v11721 = vrot.slane %v11708, 3
    %v11722 = vrot.slane %v11708, 4
    %v11723 = vrot.slane %v11708, 5
    %v11724 = vrot.slane %v11708, 6
    %v11725 = vrot.slane %v11708, 7
    %v11742 = vmul.f32 %v11681, %v11706
    %v11743 = vmul.f32 %v11682, %v11712
    %v11744 = vmul.f32 %v11683, %v11713
    %v11745 = vmul.f32 %v11684, %v11714
    %v11746 = vmul.f32 %v11685, %v11715
    %v11747 = vmul.f32 %v11686, %v11716
    %v11748 = vmul.f32 %v11687, %v11717
    %v11749 = vmul.f32 %v11688, %v11718
    %v11750 = vmul.f32 %v11689, %v11707
    %v11751 = vmul.f32 %v11690, %v11719
    %v11752 = vmul.f32 %v11691, %v11720
    %v11753 = vmul.f32 %v11692, %v11721
    %v11754 = vmul.f32 %v11693, %v11722
    %v11755 = vmul.f32 %v11694, %v11723
    %v11756 = vmul.f32 %v11695, %v11724
    %v11757 = vmul.f32 %v11696, %v11725
    %v11758 = vmul.f32 %v11742, %v6491
    %v11759 = vmul.f32 %v11743, %v6491
    %v11760 = vmul.f32 %v11744, %v6491
    %v11761 = vmul.f32 %v11745, %v6491
    %v11762 = vmul.f32 %v11746, %v6491
    %v11763 = vmul.f32 %v11747, %v6491
    %v11764 = vmul.f32 %v11748, %v6491
    %v11765 = vmul.f32 %v11749, %v6491
    %v11766 = vmul.f32 %v11750, %v6491
    %v11767 = vmul.f32 %v11751, %v6491
    %v11768 = vmul.f32 %v11752, %v6491
    %v11769 = vmul.f32 %v11753, %v6491
    %v11770 = vmul.f32 %v11754, %v6491
    %v11771 = vmul.f32 %v11755, %v6491
    %v11772 = vmul.f32 %v11756, %v6491
    %v11773 = vmul.f32 %v11757, %v6491
    %v11774 = vadd.f32 %v11758, %v6511
    %v11775 = vadd.f32 %v11759, %v6511
    %v11776 = vadd.f32 %v11760, %v6511
    %v11777 = vadd.f32 %v11761, %v6511
    %v11778 = vadd.f32 %v11762, %v6511
    %v11779 = vadd.f32 %v11763, %v6511
    %v11780 = vadd.f32 %v11764, %v6511
    %v11781 = vadd.f32 %v11765, %v6511
    %v11782 = vadd.f32 %v11766, %v6511
    %v11783 = vadd.f32 %v11767, %v6511
    %v11784 = vadd.f32 %v11768, %v6511
    %v11785 = vadd.f32 %v11769, %v6511
    %v11786 = vadd.f32 %v11770, %v6511
    %v11787 = vadd.f32 %v11771, %v6511
    %v11788 = vadd.f32 %v11772, %v6511
    %v11789 = vadd.f32 %v11773, %v6511
    %v11806 = vrot.slane %v11774, 6
    %v11807 = vrot.slane %v11775, 5
    %v11808 = vsel %vm272, %v11807, %v11806
    %v11809 = vrot.slane %v11776, 4
    %v11810 = vsel %vm275, %v11809, %v11808
    %v11811 = vrot.slane %v11777, 3
    %v11812 = vsel %vm278, %v11811, %v11810
    %v11813 = vrot.slane %v11778, 2
    %v11814 = vsel %vm281, %v11813, %v11812
    %v11815 = vrot.slane %v11779, 1
    %v11816 = vsel %vm284, %v11815, %v11814
    %v11817 = vsel %vm287, %v11780, %v11816
    %v11818 = vrot.slane %v11781, 7
    %v11819 = vsel %vm290, %v11818, %v11817
    %v11820 = vrot.slane %v11782, 6
    %v11821 = vrot.slane %v11783, 5
    %v11822 = vsel %vm272, %v11821, %v11820
    %v11823 = vrot.slane %v11784, 4
    %v11824 = vsel %vm275, %v11823, %v11822
    %v11825 = vrot.slane %v11785, 3
    %v11826 = vsel %vm278, %v11825, %v11824
    %v11827 = vrot.slane %v11786, 2
    %v11828 = vsel %vm281, %v11827, %v11826
    %v11829 = vrot.slane %v11787, 1
    %v11830 = vsel %vm284, %v11829, %v11828
    %v11831 = vsel %vm287, %v11788, %v11830
    %v11832 = vrot.slane %v11789, 7
    %v11833 = vsel %vm290, %v11832, %v11831
    %v11834 = vsel %vm308, %v11819, 0
    %v11836 = vsel %vm308, %v11833, 0
    %11838 = vmatprep.subr.mxu0 0.0
    %11839 = vmatpush1.msra.mxu0 0.0
    %11840 = vmatprep.subr.mxu0 0.0
    %11841 = vmatpush1.msra.mxu0 0.0
    %11842 = vmatprep.subr.mxu0 0.0
    %11843 = vmatpush1.msra.mxu0 0.0
    %11844 = vmatprep.subr.mxu0 0.0
    %11845 = vmatpush1.msra.mxu0 0.0
    %11846 = vmatprep.subr.mxu0 0.0
    %11847 = vmatpush1.msra.mxu0 0.0
    %11848 = vmatprep.subr.mxu0 0.0
    %11849 = vmatpush1.msra.mxu0 0.0
    %11850 = vmatprep.subr.mxu0 0.0
    %11851 = vmatpush1.msra.mxu0 0.0
    %11852 = vmatprep.subr.mxu0 0.0
    %11853 = vmatpush1.msra.mxu0 0.0
    %11854 = vmatprep.subr.mxu0 0.0
    %11855 = vmatpush1.msra.mxu0 0.0
    %11856 = vmatprep.subr.mxu0 0.0
    %11857 = vmatpush1.msra.mxu0 0.0
    %11858 = vmatprep.subr.mxu0 0.0
    %11859 = vmatpush1.msra.mxu0 0.0
    %11860 = vmatprep.subr.mxu0 0.0
    %11861 = vmatpush1.msra.mxu0 0.0
    %11862 = vmatprep.subr.mxu0 0.0
    %11863 = vmatpush1.msra.mxu0 %v6531
    %11864 = vmatprep.subr.mxu0 0.0
    %11865 = vmatpush1.msra.mxu0 %v6530
    %11866 = vmatprep.subr.mxu0 0.0
    %11867 = vmatpush1.msra.mxu0 %v6529
    %11868 = vmatprep.subr.mxu0 0.0
    %11869 = vmatpush1.msra.mxu0 %v6528
    %11870 = vmatprep.subr.mxu0 0.0
    %11871 = vmatpush2.msra.mxu0 0.0
    %11872 = vmatprep.subr.mxu0 0.0
    %11873 = vmatpush2.msra.mxu0 0.0
    %11874 = vmatprep.subr.mxu0 0.0
    %11875 = vmatpush2.msra.mxu0 0.0
    %11876 = vmatprep.subr.mxu0 0.0
    %11877 = vmatpush2.msra.mxu0 0.0
    %11878 = vmatprep.subr.mxu0 0.0
    %11879 = vmatpush2.msra.mxu0 0.0
    %11880 = vmatprep.subr.mxu0 0.0
    %11881 = vmatpush2.msra.mxu0 0.0
    %11882 = vmatprep.subr.mxu0 0.0
    %11883 = vmatpush2.msra.mxu0 0.0
    %11884 = vmatprep.subr.mxu0 0.0
    %11885 = vmatpush2.msra.mxu0 0.0
    %11886 = vmatprep.subr.mxu0 0.0
    %11887 = vmatpush2.msra.mxu0 0.0
    %11888 = vmatprep.subr.mxu0 0.0
    %11889 = vmatpush2.msra.mxu0 0.0
    %11890 = vmatprep.subr.mxu0 0.0
    %11891 = vmatpush2.msra.mxu0 0.0
    %11892 = vmatprep.subr.mxu0 0.0
    %11893 = vmatpush2.msra.mxu0 0.0
    %11894 = vmatprep.subr.mxu0 0.0
    %11895 = vmatpush2.msra.mxu0 0.0
    %11896 = vmatprep.subr.mxu0 0.0
    %11897 = vmatpush2.msra.mxu0 0.0
    %11898 = vmatprep.subr.mxu0 0.0
    %11899 = vmatpush2.msra.mxu0 0.0
    %11900 = vmatprep.subr.mxu0 0.0
    %11901 = vmatpush2.msra.mxu0 0.0
    %11902 = vmatprep.mubr.f32.mxu0 0.0
    %11903 = vmatmul.mubr.f32.gmra.mxu0 %v11834
    %v11904 = vpop.f32.mrf.mxu0
    %v11905 = vadd.f32 %v6535, %v11904
    %v11906 = vpop.f32.mrf.mxu0
    %11907 = vmatprep.mubr.f32.mxu0 0.0
    %11908 = vmatmul.mubr.f32.gmra.mxu0 %v11836
    %v11909 = vpop.f32.mrf.mxu0
    %v11910 = vadd.f32 %v6535, %v11909
    %v11911 = vpop.f32.mrf.mxu0
    %11912 = vdwg.mxu0
    %v11913 = vmul.f32 %v11905, 0.5
    %v11914 = vmul.f32 %v11910, 0.5
    %v11915 = vmul.f32 %v11905, 0.70710677
    %v11916 = vmul.f32 %v11910, 0.70710677
    %v11917 = verf.f32.pop %v11915
    %v11918 = verf.f32.pop %v11916
    %v11919 = vadd.f32 %v11917, 1.0
    %v11920 = vadd.f32 %v11918, 1.0
    %v11921 = vmul.f32 %v11913, %v11919
    %v11922 = vmul.f32 %v11914, %v11920
    %11923 = vmatprep.subr.mxu0 0.0
    %11924 = vmatpush1.msra.mxu0 %v6684
    %11925 = vmatprep.subr.mxu0 0.0
    %11926 = vmatpush1.msra.mxu0 %v6683
    %11927 = vmatprep.subr.mxu0 0.0
    %11928 = vmatpush1.msra.mxu0 %v6682
    %11929 = vmatprep.subr.mxu0 0.0
    %11930 = vmatpush1.msra.mxu0 %v6681
    %11931 = vmatprep.subr.mxu0 0.0
    %11932 = vmatpush1.msra.mxu0 %v6680
    %11933 = vmatprep.subr.mxu0 0.0
    %11934 = vmatpush1.msra.mxu0 %v6679
    %11935 = vmatprep.subr.mxu0 0.0
    %11936 = vmatpush1.msra.mxu0 %v6678
    %11937 = vmatprep.subr.mxu0 0.0
    %11938 = vmatpush1.msra.mxu0 %v6677
    %11939 = vmatprep.subr.mxu0 0.0
    %11940 = vmatpush1.msra.mxu0 %v6676
    %11941 = vmatprep.subr.mxu0 0.0
    %11942 = vmatpush1.msra.mxu0 %v6675
    %11943 = vmatprep.subr.mxu0 0.0
    %11944 = vmatpush1.msra.mxu0 %v6674
    %11945 = vmatprep.subr.mxu0 0.0
    %11946 = vmatpush1.msra.mxu0 %v6673
    %11947 = vmatprep.subr.mxu0 0.0
    %11948 = vmatpush1.msra.mxu0 %v6672
    %11949 = vmatprep.subr.mxu0 0.0
    %11950 = vmatpush1.msra.mxu0 %v6671
    %11951 = vmatprep.subr.mxu0 0.0
    %11952 = vmatpush1.msra.mxu0 %v6670
    %11953 = vmatprep.subr.mxu0 0.0
    %11954 = vmatpush1.msra.mxu0 %v6669
    %11955 = vmatprep.subr.mxu0 0.0
    %11956 = vmatpush2.msra.mxu0 0.0
    %11957 = vmatprep.subr.mxu0 0.0
    %11958 = vmatpush2.msra.mxu0 0.0
    %11959 = vmatprep.subr.mxu0 0.0
    %11960 = vmatpush2.msra.mxu0 0.0
    %11961 = vmatprep.subr.mxu0 0.0
    %11962 = vmatpush2.msra.mxu0 0.0
    %11963 = vmatprep.subr.mxu0 0.0
    %11964 = vmatpush2.msra.mxu0 0.0
    %11965 = vmatprep.subr.mxu0 0.0
    %11966 = vmatpush2.msra.mxu0 0.0
    %11967 = vmatprep.subr.mxu0 0.0
    %11968 = vmatpush2.msra.mxu0 0.0
    %11969 = vmatprep.subr.mxu0 0.0
    %11970 = vmatpush2.msra.mxu0 0.0
    %11971 = vmatprep.subr.mxu0 0.0
    %11972 = vmatpush2.msra.mxu0 0.0
    %11973 = vmatprep.subr.mxu0 0.0
    %11974 = vmatpush2.msra.mxu0 0.0
    %11975 = vmatprep.subr.mxu0 0.0
    %11976 = vmatpush2.msra.mxu0 0.0
    %11977 = vmatprep.subr.mxu0 0.0
    %11978 = vmatpush2.msra.mxu0 0.0
    %11979 = vmatprep.subr.mxu0 0.0
    %11980 = vmatpush2.msra.mxu0 0.0
    %11981 = vmatprep.subr.mxu0 0.0
    %11982 = vmatpush2.msra.mxu0 0.0
    %11983 = vmatprep.subr.mxu0 0.0
    %11984 = vmatpush2.msra.mxu0 0.0
    %11985 = vmatprep.subr.mxu0 0.0
    %11986 = vmatpush2.msra.mxu0 0.0
    %11987 = vmatprep.mubr.f32.mxu0 0.0
    %11988 = vmatmul.mubr.f32.gmra.mxu0 %v11921
    %v11989 = vpop.f32.mrf.mxu0
    %v11990 = vadd.f32 0.0, %v11989
    %v11991 = vpop.f32.mrf.mxu0
    %11992 = vmatprep.mubr.f32.mxu0 0.0
    %11993 = vmatmul.mubr.f32.gmra.mxu0 %v11922
    %v11994 = vpop.f32.mrf.mxu0
    %v11995 = vadd.f32 0.0, %v11994
    %v11996 = vpop.f32.mrf.mxu0
    %11997 = vdwg.mxu0
    %v12000 = vrot.slane %v11990, 2
    %v12001 = vrot.slane %v11990, 3
    %v12002 = vrot.slane %v11990, 4
    %v12003 = vrot.slane %v11990, 5
    %v12004 = vrot.slane %v11990, 6
    %v12005 = vrot.slane %v11990, 7
    %v12006 = vrot.slane %v11990, 1
    %v12007 = vrot.slane %v11995, 2
    %v12008 = vrot.slane %v11995, 3
    %v12009 = vrot.slane %v11995, 4
    %v12010 = vrot.slane %v11995, 5
    %v12011 = vrot.slane %v11995, 6
    %v12012 = vrot.slane %v11995, 7
    %v12013 = vrot.slane %v11995, 1
    %v12030 = vadd.f32 %v6042, %v12000
    %v12031 = vadd.f32 %v6043, %v12001
    %v12032 = vadd.f32 %v6044, %v12002
    %v12033 = vadd.f32 %v6045, %v12003
    %v12034 = vadd.f32 %v6046, %v12004
    %v12035 = vadd.f32 %v6047, %v12005
    %v12036 = vadd.f32 %v6048, %v11990
    %v12037 = vadd.f32 %v6049, %v12006
    %v12038 = vadd.f32 %v6050, %v12007
    %v12039 = vadd.f32 %v6051, %v12008
    %v12040 = vadd.f32 %v6052, %v12009
    %v12041 = vadd.f32 %v6053, %v12010
    %v12042 = vadd.f32 %v6054, %v12011
    %v12043 = vadd.f32 %v6055, %v12012
    %v12044 = vadd.f32 %v6056, %v11995
    %v12045 = vadd.f32 %v6057, %v12013
    %v12046 = vadd.f32 %v12030, %v6811
    %v12047 = vadd.f32 %v12031, %v6811
    %v12048 = vadd.f32 %v12032, %v6811
    %v12049 = vadd.f32 %v12033, %v6811
    %v12050 = vadd.f32 %v12034, %v6811
    %v12051 = vadd.f32 %v12035, %v6811
    %v12052 = vadd.f32 %v12036, %v6811
    %v12053 = vadd.f32 %v12037, %v6811
    %v12054 = vadd.f32 %v12038, %v6811
    %v12055 = vadd.f32 %v12039, %v6811
    %v12056 = vadd.f32 %v12040, %v6811
    %v12057 = vadd.f32 %v12041, %v6811
    %v12058 = vadd.f32 %v12042, %v6811
    %v12059 = vadd.f32 %v12043, %v6811
    %v12060 = vadd.f32 %v12044, %v6811
    %v12061 = vadd.f32 %v12045, %v6811
    %v12078 = vrot.slane %v12047, 7
    %v12079 = vsel %vm290, %v12078, %v12046
    %v12080 = vrot.slane %v12048, 6
    %v12081 = vrot.slane %v12049, 5
    %v12082 = vsel %vm272, %v12081, %v12080
    %v12083 = vrot.slane %v12050, 4
    %v12084 = vsel %vm275, %v12083, %v12082
    %v12085 = vrot.slane %v12051, 3
    %v12086 = vsel %vm278, %v12085, %v12084
    %v12087 = vrot.slane %v12052, 2
    %v12088 = vsel %vm281, %v12087, %v12086
    %v12089 = vrot.slane %v12053, 1
    %v12090 = vsel %vm284, %v12089, %v12088
    %v12091 = vsel %vm287, %v12054, %v12090
    %v12092 = vrot.slane %v12055, 7
    %v12093 = vsel %vm290, %v12092, %v12091
    %v12094 = vrot.slane %v12056, 6
    %v12095 = vrot.slane %v12057, 5
    %v12096 = vsel %vm272, %v12095, %v12094
    %v12097 = vrot.slane %v12058, 4
    %v12098 = vsel %vm275, %v12097, %v12096
    %v12099 = vrot.slane %v12059, 3
    %v12100 = vsel %vm278, %v12099, %v12098
    %v12101 = vrot.slane %v12060, 2
    %v12102 = vsel %vm281, %v12101, %v12100
    %v12103 = vrot.slane %v12061, 1
    %v12104 = vsel %vm284, %v12103, %v12102
    %v12108 = vsel %vm1548, %v12079, 0.0
    %12109 = vadd.xlane.f32.xlu0 %v12108
    %v12110 = vpop.xlane.xlu0 %12109
    %v12111 = vsel %vm308, %v12093, 0.0
    %12112 = vadd.xlane.f32.xlu0 %v12111
    %v12113 = vpop.xlane.xlu0 %12112
    %v12114 = vsel %vm1555, %v12104, 0.0
    %12115 = vadd.xlane.f32.xlu0 %v12114
    %v12116 = vpop.xlane.xlu0 %12115
    %v12117 = vmul.f32 %v12110, %v315
    %v12118 = vmul.f32 %v12113, %v315
    %v12119 = vmul.f32 %v12116, %v315
    %v12120 = vmul.f32 %v12046, %v12046
    %v12121 = vmul.f32 %v12047, %v12047
    %v12122 = vmul.f32 %v12048, %v12048
    %v12123 = vmul.f32 %v12049, %v12049
    %v12124 = vmul.f32 %v12050, %v12050
    %v12125 = vmul.f32 %v12051, %v12051
    %v12126 = vmul.f32 %v12052, %v12052
    %v12127 = vmul.f32 %v12053, %v12053
    %v12128 = vmul.f32 %v12054, %v12054
    %v12129 = vmul.f32 %v12055, %v12055
    %v12130 = vmul.f32 %v12056, %v12056
    %v12131 = vmul.f32 %v12057, %v12057
    %v12132 = vmul.f32 %v12058, %v12058
    %v12133 = vmul.f32 %v12059, %v12059
    %v12134 = vmul.f32 %v12060, %v12060
    %v12135 = vmul.f32 %v12061, %v12061
    %v12152 = vrot.slane %v12121, 7
    %v12153 = vsel %vm290, %v12152, %v12120
    %v12154 = vrot.slane %v12122, 6
    %v12155 = vrot.slane %v12123, 5
    %v12156 = vsel %vm272, %v12155, %v12154
    %v12157 = vrot.slane %v12124, 4
    %v12158 = vsel %vm275, %v12157, %v12156
    %v12159 = vrot.slane %v12125, 3
    %v12160 = vsel %vm278, %v12159, %v12158
    %v12161 = vrot.slane %v12126, 2
    %v12162 = vsel %vm281, %v12161, %v12160
    %v12163 = vrot.slane %v12127, 1
    %v12164 = vsel %vm284, %v12163, %v12162
    %v12165 = vsel %vm287, %v12128, %v12164
    %v12166 = vrot.slane %v12129, 7
    %v12167 = vsel %vm290, %v12166, %v12165
    %v12168 = vrot.slane %v12130, 6
    %v12169 = vrot.slane %v12131, 5
    %v12170 = vsel %vm272, %v12169, %v12168
    %v12171 = vrot.slane %v12132, 4
    %v12172 = vsel %vm275, %v12171, %v12170
    %v12173 = vrot.slane %v12133, 3
    %v12174 = vsel %vm278, %v12173, %v12172
    %v12175 = vrot.slane %v12134, 2
    %v12176 = vsel %vm281, %v12175, %v12174
    %v12177 = vrot.slane %v12135, 1
    %v12178 = vsel %vm284, %v12177, %v12176
    %v12182 = vsel %vm1548, %v12153, 0.0
    %12183 = vadd.xlane.f32.xlu0 %v12182
    %v12184 = vpop.xlane.xlu0 %12183
    %v12185 = vsel %vm308, %v12167, 0.0
    %12186 = vadd.xlane.f32.xlu0 %v12185
    %v12187 = vpop.xlane.xlu0 %12186
    %v12188 = vsel %vm1555, %v12178, 0.0
    %12189 = vadd.xlane.f32.xlu0 %v12188
    %v12190 = vpop.xlane.xlu0 %12189
    %v12191 = vmul.f32 %v12184, %v315
    %v12192 = vmul.f32 %v12187, %v315
    %v12193 = vmul.f32 %v12190, %v315
    %v12197 = vrot.slane %v12117, 1
    %v12198 = vrot.slane %v12118, 2
    %v12199 = vrot.slane %v12118, 3
    %v12200 = vrot.slane %v12118, 4
    %v12201 = vrot.slane %v12118, 5
    %v12202 = vrot.slane %v12118, 6
    %v12203 = vrot.slane %v12118, 7
    %v12204 = vrot.slane %v12118, 1
    %v12205 = vrot.slane %v12119, 2
    %v12206 = vrot.slane %v12119, 3
    %v12207 = vrot.slane %v12119, 4
    %v12208 = vrot.slane %v12119, 5
    %v12209 = vrot.slane %v12119, 6
    %v12210 = vrot.slane %v12119, 7
    %v12227 = vsub.f32 %v12046, %v12117
    %v12228 = vsub.f32 %v12047, %v12197
    %v12229 = vsub.f32 %v12048, %v12198
    %v12230 = vsub.f32 %v12049, %v12199
    %v12231 = vsub.f32 %v12050, %v12200
    %v12232 = vsub.f32 %v12051, %v12201
    %v12233 = vsub.f32 %v12052, %v12202
    %v12234 = vsub.f32 %v12053, %v12203
    %v12235 = vsub.f32 %v12054, %v12118
    %v12236 = vsub.f32 %v12055, %v12204
    %v12237 = vsub.f32 %v12056, %v12205
    %v12238 = vsub.f32 %v12057, %v12206
    %v12239 = vsub.f32 %v12058, %v12207
    %v12240 = vsub.f32 %v12059, %v12208
    %v12241 = vsub.f32 %v12060, %v12209
    %v12242 = vsub.f32 %v12061, %v12210
    %v12243 = vmul.f32 %v12117, %v12117
    %v12244 = vmul.f32 %v12118, %v12118
    %v12245 = vmul.f32 %v12119, %v12119
    %v12246 = vsub.f32 %v12191, %v12243
    %v12247 = vsub.f32 %v12192, %v12244
    %v12248 = vsub.f32 %v12193, %v12245
    %v12249 = vadd.f32 %v12246, 1e-05
    %v12250 = vadd.f32 %v12247, 1e-05
    %v12251 = vadd.f32 %v12248, 1e-05
    %v12252 = vrsqrt.pop %v12249
    %v12253 = vrsqrt.pop %v12250
    %v12254 = vrsqrt.pop %v12251
    %v12258 = vrot.slane %v12252, 1
    %v12259 = vrot.slane %v12253, 2
    %v12260 = vrot.slane %v12253, 3
    %v12261 = vrot.slane %v12253, 4
    %v12262 = vrot.slane %v12253, 5
    %v12263 = vrot.slane %v12253, 6
    %v12264 = vrot.slane %v12253, 7
    %v12265 = vrot.slane %v12253, 1
    %v12266 = vrot.slane %v12254, 2
    %v12267 = vrot.slane %v12254, 3
    %v12268 = vrot.slane %v12254, 4
    %v12269 = vrot.slane %v12254, 5
    %v12270 = vrot.slane %v12254, 6
    %v12271 = vrot.slane %v12254, 7
    %v12288 = vmul.f32 %v12227, %v12252
    %v12289 = vmul.f32 %v12228, %v12258
    %v12290 = vmul.f32 %v12229, %v12259
    %v12291 = vmul.f32 %v12230, %v12260
    %v12292 = vmul.f32 %v12231, %v12261
    %v12293 = vmul.f32 %v12232, %v12262
    %v12294 = vmul.f32 %v12233, %v12263
    %v12295 = vmul.f32 %v12234, %v12264
    %v12296 = vmul.f32 %v12235, %v12253
    %v12297 = vmul.f32 %v12236, %v12265
    %v12298 = vmul.f32 %v12237, %v12266
    %v12299 = vmul.f32 %v12238, %v12267
    %v12300 = vmul.f32 %v12239, %v12268
    %v12301 = vmul.f32 %v12240, %v12269
    %v12302 = vmul.f32 %v12241, %v12270
    %v12303 = vmul.f32 %v12242, %v12271
    %v12304 = vmul.f32 %v12288, %v7059
    %v12305 = vmul.f32 %v12289, %v7059
    %v12306 = vmul.f32 %v12290, %v7059
    %v12307 = vmul.f32 %v12291, %v7059
    %v12308 = vmul.f32 %v12292, %v7059
    %v12309 = vmul.f32 %v12293, %v7059
    %v12310 = vmul.f32 %v12294, %v7059
    %v12311 = vmul.f32 %v12295, %v7059
    %v12312 = vmul.f32 %v12296, %v7059
    %v12313 = vmul.f32 %v12297, %v7059
    %v12314 = vmul.f32 %v12298, %v7059
    %v12315 = vmul.f32 %v12299, %v7059
    %v12316 = vmul.f32 %v12300, %v7059
    %v12317 = vmul.f32 %v12301, %v7059
    %v12318 = vmul.f32 %v12302, %v7059
    %v12319 = vmul.f32 %v12303, %v7059
    %v12320 = vadd.f32 %v12304, %v7079
    %v12321 = vadd.f32 %v12305, %v7079
    %v12322 = vadd.f32 %v12306, %v7079
    %v12323 = vadd.f32 %v12307, %v7079
    %v12324 = vadd.f32 %v12308, %v7079
    %v12325 = vadd.f32 %v12309, %v7079
    %v12326 = vadd.f32 %v12310, %v7079
    %v12327 = vadd.f32 %v12311, %v7079
    %v12328 = vadd.f32 %v12312, %v7079
    %v12329 = vadd.f32 %v12313, %v7079
    %v12330 = vadd.f32 %v12314, %v7079
    %v12331 = vadd.f32 %v12315, %v7079
    %v12332 = vadd.f32 %v12316, %v7079
    %v12333 = vadd.f32 %v12317, %v7079
    %v12334 = vadd.f32 %v12318, %v7079
    %v12335 = vadd.f32 %v12319, %v7079
    %v12352 = vrot.slane %v12320, 6
    %v12353 = vrot.slane %v12321, 6
    %v12354 = vrot.slane %v12322, 6
    %v12355 = vrot.slane %v12323, 6
    %v12356 = vrot.slane %v12324, 6
    %v12357 = vrot.slane %v12325, 6
    %v12358 = vrot.slane %v12326, 6
    %v12359 = vrot.slane %v12327, 6
    %v12360 = vrot.slane %v12328, 6
    %v12361 = vrot.slane %v12329, 6
    %v12362 = vrot.slane %v12330, 6
    %v12363 = vrot.slane %v12331, 6
    %v12364 = vrot.slane %v12332, 6
    %v12365 = vrot.slane %v12333, 6
    %v12366 = vrot.slane %v12334, 6
    %v12367 = vrot.slane %v12335, 6
    %v12384 = vadd.f32 %v11500, %v12352
    %v12385 = vadd.f32 %v11501, %v12353
    %v12386 = vadd.f32 %v11502, %v12354
    %v12387 = vadd.f32 %v11503, %v12355
    %v12388 = vadd.f32 %v11504, %v12356
    %v12389 = vadd.f32 %v11505, %v12357
    %v12390 = vadd.f32 %v11506, %v12358
    %v12391 = vadd.f32 %v11507, %v12359
    %v12392 = vadd.f32 %v11508, %v12360
    %v12393 = vadd.f32 %v11509, %v12361
    %v12394 = vadd.f32 %v11510, %v12362
    %v12395 = vadd.f32 %v11511, %v12363
    %v12396 = vadd.f32 %v11512, %v12364
    %v12397 = vadd.f32 %v11513, %v12365
    %v12398 = vadd.f32 %v11514, %v12366
    %v12399 = vadd.f32 %v11515, %v12367
    %v12416 = vrot.slane %v6245, 7
    %v12417 = vrot.slane %v6246, 6
    %v12418 = vsel %vm272, %v12417, %v12416
    %v12419 = vrot.slane %v6247, 5
    %v12420 = vsel %vm275, %v12419, %v12418
    %v12421 = vrot.slane %v6248, 4
    %v12422 = vsel %vm278, %v12421, %v12420
    %v12423 = vrot.slane %v6249, 3
    %v12424 = vsel %vm281, %v12423, %v12422
    %v12425 = vrot.slane %v6250, 2
    %v12426 = vsel %vm284, %v12425, %v12424
    %v12427 = vrot.slane %v6251, 1
    %v12428 = vsel %vm287, %v12427, %v12426
    %v12429 = vsel %vm290, %v6252, %v12428
    %v12430 = vrot.slane %v6253, 7
    %v12431 = vrot.slane %v6254, 6
    %v12432 = vsel %vm272, %v12431, %v12430
    %v12433 = vrot.slane %v6255, 5
    %v12434 = vsel %vm275, %v12433, %v12432
    %v12435 = vrot.slane %v6256, 4
    %v12436 = vsel %vm278, %v12435, %v12434
    %v12437 = vrot.slane %v6257, 3
    %v12438 = vsel %vm281, %v12437, %v12436
    %v12439 = vrot.slane %v6258, 2
    %v12440 = vsel %vm284, %v12439, %v12438
    %v12441 = vrot.slane %v6259, 1
    %v12442 = vsel %vm287, %v12441, %v12440
    %v12446 = vsel %vm1748, %v6244, 0.0
    %12447 = vadd.xlane.f32.xlu0 %v12446
    %v12448 = vpop.xlane.xlu0 %12447
    %v12449 = vsel %vm308, %v12429, 0.0
    %12450 = vadd.xlane.f32.xlu0 %v12449
    %v12451 = vpop.xlane.xlu0 %12450
    %v12452 = vsel %vm1755, %v12442, 0.0
    %12453 = vadd.xlane.f32.xlu0 %v12452
    %v12454 = vpop.xlane.xlu0 %12453
    %v12455 = vmul.f32 %v12448, %v315
    %v12456 = vmul.f32 %v12451, %v315
    %v12457 = vmul.f32 %v12454, %v315
    %v12458 = vmul.f32 %v6244, %v6244
    %v12459 = vmul.f32 %v6245, %v6245
    %v12460 = vmul.f32 %v6246, %v6246
    %v12461 = vmul.f32 %v6247, %v6247
    %v12462 = vmul.f32 %v6248, %v6248
    %v12463 = vmul.f32 %v6249, %v6249
    %v12464 = vmul.f32 %v6250, %v6250
    %v12465 = vmul.f32 %v6251, %v6251
    %v12466 = vmul.f32 %v6252, %v6252
    %v12467 = vmul.f32 %v6253, %v6253
    %v12468 = vmul.f32 %v6254, %v6254
    %v12469 = vmul.f32 %v6255, %v6255
    %v12470 = vmul.f32 %v6256, %v6256
    %v12471 = vmul.f32 %v6257, %v6257
    %v12472 = vmul.f32 %v6258, %v6258
    %v12473 = vmul.f32 %v6259, %v6259
    %v12490 = vrot.slane %v12459, 7
    %v12491 = vrot.slane %v12460, 6
    %v12492 = vsel %vm272, %v12491, %v12490
    %v12493 = vrot.slane %v12461, 5
    %v12494 = vsel %vm275, %v12493, %v12492
    %v12495 = vrot.slane %v12462, 4
    %v12496 = vsel %vm278, %v12495, %v12494
    %v12497 = vrot.slane %v12463, 3
    %v12498 = vsel %vm281, %v12497, %v12496
    %v12499 = vrot.slane %v12464, 2
    %v12500 = vsel %vm284, %v12499, %v12498
    %v12501 = vrot.slane %v12465, 1
    %v12502 = vsel %vm287, %v12501, %v12500
    %v12503 = vsel %vm290, %v12466, %v12502
    %v12504 = vrot.slane %v12467, 7
    %v12505 = vrot.slane %v12468, 6
    %v12506 = vsel %vm272, %v12505, %v12504
    %v12507 = vrot.slane %v12469, 5
    %v12508 = vsel %vm275, %v12507, %v12506
    %v12509 = vrot.slane %v12470, 4
    %v12510 = vsel %vm278, %v12509, %v12508
    %v12511 = vrot.slane %v12471, 3
    %v12512 = vsel %vm281, %v12511, %v12510
    %v12513 = vrot.slane %v12472, 2
    %v12514 = vsel %vm284, %v12513, %v12512
    %v12515 = vrot.slane %v12473, 1
    %v12516 = vsel %vm287, %v12515, %v12514
    %v12520 = vsel %vm1748, %v12458, 0.0
    %12521 = vadd.xlane.f32.xlu0 %v12520
    %v12522 = vpop.xlane.xlu0 %12521
    %v12523 = vsel %vm308, %v12503, 0.0
    %12524 = vadd.xlane.f32.xlu0 %v12523
    %v12525 = vpop.xlane.xlu0 %12524
    %v12526 = vsel %vm1755, %v12516, 0.0
    %12527 = vadd.xlane.f32.xlu0 %v12526
    %v12528 = vpop.xlane.xlu0 %12527
    %v12529 = vmul.f32 %v12522, %v315
    %v12530 = vmul.f32 %v12525, %v315
    %v12531 = vmul.f32 %v12528, %v315
    %v12535 = vrot.slane %v12456, 1
    %v12536 = vrot.slane %v12456, 2
    %v12537 = vrot.slane %v12456, 3
    %v12538 = vrot.slane %v12456, 4
    %v12539 = vrot.slane %v12456, 5
    %v12540 = vrot.slane %v12456, 6
    %v12541 = vrot.slane %v12456, 7
    %v12542 = vrot.slane %v12457, 1
    %v12543 = vrot.slane %v12457, 2
    %v12544 = vrot.slane %v12457, 3
    %v12545 = vrot.slane %v12457, 4
    %v12546 = vrot.slane %v12457, 5
    %v12547 = vrot.slane %v12457, 6
    %v12548 = vrot.slane %v12457, 7
    %v12565 = vsub.f32 %v6244, %v12455
    %v12566 = vsub.f32 %v6245, %v12535
    %v12567 = vsub.f32 %v6246, %v12536
    %v12568 = vsub.f32 %v6247, %v12537
    %v12569 = vsub.f32 %v6248, %v12538
    %v12570 = vsub.f32 %v6249, %v12539
    %v12571 = vsub.f32 %v6250, %v12540
    %v12572 = vsub.f32 %v6251, %v12541
    %v12573 = vsub.f32 %v6252, %v12456
    %v12574 = vsub.f32 %v6253, %v12542
    %v12575 = vsub.f32 %v6254, %v12543
    %v12576 = vsub.f32 %v6255, %v12544
    %v12577 = vsub.f32 %v6256, %v12545
    %v12578 = vsub.f32 %v6257, %v12546
    %v12579 = vsub.f32 %v6258, %v12547
    %v12580 = vsub.f32 %v6259, %v12548
    %v12581 = vmul.f32 %v12455, %v12455
    %v12582 = vmul.f32 %v12456, %v12456
    %v12583 = vmul.f32 %v12457, %v12457
    %v12584 = vsub.f32 %v12529, %v12581
    %v12585 = vsub.f32 %v12530, %v12582
    %v12586 = vsub.f32 %v12531, %v12583
    %v12587 = vadd.f32 %v12584, 1e-05
    %v12588 = vadd.f32 %v12585, 1e-05
    %v12589 = vadd.f32 %v12586, 1e-05
    %v12590 = vrsqrt.pop %v12587
    %v12591 = vrsqrt.pop %v12588
    %v12592 = vrsqrt.pop %v12589
    %v12596 = vrot.slane %v12591, 1
    %v12597 = vrot.slane %v12591, 2
    %v12598 = vrot.slane %v12591, 3
    %v12599 = vrot.slane %v12591, 4
    %v12600 = vrot.slane %v12591, 5
    %v12601 = vrot.slane %v12591, 6
    %v12602 = vrot.slane %v12591, 7
    %v12603 = vrot.slane %v12592, 1
    %v12604 = vrot.slane %v12592, 2
    %v12605 = vrot.slane %v12592, 3
    %v12606 = vrot.slane %v12592, 4
    %v12607 = vrot.slane %v12592, 5
    %v12608 = vrot.slane %v12592, 6
    %v12609 = vrot.slane %v12592, 7
    %v12626 = vmul.f32 %v12565, %v12590
    %v12627 = vmul.f32 %v12566, %v12596
    %v12628 = vmul.f32 %v12567, %v12597
    %v12629 = vmul.f32 %v12568, %v12598
    %v12630 = vmul.f32 %v12569, %v12599
    %v12631 = vmul.f32 %v12570, %v12600
    %v12632 = vmul.f32 %v12571, %v12601
    %v12633 = vmul.f32 %v12572, %v12602
    %v12634 = vmul.f32 %v12573, %v12591
    %v12635 = vmul.f32 %v12574, %v12603
    %v12636 = vmul.f32 %v12575, %v12604
    %v12637 = vmul.f32 %v12576, %v12605
    %v12638 = vmul.f32 %v12577, %v12606
    %v12639 = vmul.f32 %v12578, %v12607
    %v12640 = vmul.f32 %v12579, %v12608
    %v12641 = vmul.f32 %v12580, %v12609
    %v12642 = vmul.f32 %v12626, %v6491
    %v12643 = vmul.f32 %v12627, %v6491
    %v12644 = vmul.f32 %v12628, %v6491
    %v12645 = vmul.f32 %v12629, %v6491
    %v12646 = vmul.f32 %v12630, %v6491
    %v12647 = vmul.f32 %v12631, %v6491
    %v12648 = vmul.f32 %v12632, %v6491
    %v12649 = vmul.f32 %v12633, %v6491
    %v12650 = vmul.f32 %v12634, %v6491
    %v12651 = vmul.f32 %v12635, %v6491
    %v12652 = vmul.f32 %v12636, %v6491
    %v12653 = vmul.f32 %v12637, %v6491
    %v12654 = vmul.f32 %v12638, %v6491
    %v12655 = vmul.f32 %v12639, %v6491
    %v12656 = vmul.f32 %v12640, %v6491
    %v12657 = vmul.f32 %v12641, %v6491
    %v12658 = vadd.f32 %v12642, %v6511
    %v12659 = vadd.f32 %v12643, %v6511
    %v12660 = vadd.f32 %v12644, %v6511
    %v12661 = vadd.f32 %v12645, %v6511
    %v12662 = vadd.f32 %v12646, %v6511
    %v12663 = vadd.f32 %v12647, %v6511
    %v12664 = vadd.f32 %v12648, %v6511
    %v12665 = vadd.f32 %v12649, %v6511
    %v12666 = vadd.f32 %v12650, %v6511
    %v12667 = vadd.f32 %v12651, %v6511
    %v12668 = vadd.f32 %v12652, %v6511
    %v12669 = vadd.f32 %v12653, %v6511
    %v12670 = vadd.f32 %v12654, %v6511
    %v12671 = vadd.f32 %v12655, %v6511
    %v12672 = vadd.f32 %v12656, %v6511
    %v12673 = vadd.f32 %v12657, %v6511
    %v12690 = vrot.slane %v12658, 7
    %v12691 = vrot.slane %v12659, 6
    %v12692 = vsel %vm272, %v12691, %v12690
    %v12693 = vrot.slane %v12660, 5
    %v12694 = vsel %vm275, %v12693, %v12692
    %v12695 = vrot.slane %v12661, 4
    %v12696 = vsel %vm278, %v12695, %v12694
    %v12697 = vrot.slane %v12662, 3
    %v12698 = vsel %vm281, %v12697, %v12696
    %v12699 = vrot.slane %v12663, 2
    %v12700 = vsel %vm284, %v12699, %v12698
    %v12701 = vrot.slane %v12664, 1
    %v12702 = vsel %vm287, %v12701, %v12700
    %v12703 = vsel %vm290, %v12665, %v12702
    %v12704 = vrot.slane %v12666, 7
    %v12705 = vrot.slane %v12667, 6
    %v12706 = vsel %vm272, %v12705, %v12704
    %v12707 = vrot.slane %v12668, 5
    %v12708 = vsel %vm275, %v12707, %v12706
    %v12709 = vrot.slane %v12669, 4
    %v12710 = vsel %vm278, %v12709, %v12708
    %v12711 = vrot.slane %v12670, 3
    %v12712 = vsel %vm281, %v12711, %v12710
    %v12713 = vrot.slane %v12671, 2
    %v12714 = vsel %vm284, %v12713, %v12712
    %v12715 = vrot.slane %v12672, 1
    %v12716 = vsel %vm287, %v12715, %v12714
    %v12717 = vsel %vm290, %v12673, %v12716
    %v12718 = vsel %vm308, %v12703, 0
    %v12720 = vsel %vm308, %v12717, 0
    %12722 = vmatprep.subr.mxu0 0.0
    %12723 = vmatpush1.msra.mxu0 0.0
    %12724 = vmatprep.subr.mxu0 0.0
    %12725 = vmatpush1.msra.mxu0 0.0
    %12726 = vmatprep.subr.mxu0 0.0
    %12727 = vmatpush1.msra.mxu0 0.0
    %12728 = vmatprep.subr.mxu0 0.0
    %12729 = vmatpush1.msra.mxu0 0.0
    %12730 = vmatprep.subr.mxu0 0.0
    %12731 = vmatpush1.msra.mxu0 0.0
    %12732 = vmatprep.subr.mxu0 0.0
    %12733 = vmatpush1.msra.mxu0 0.0
    %12734 = vmatprep.subr.mxu0 0.0
    %12735 = vmatpush1.msra.mxu0 0.0
    %12736 = vmatprep.subr.mxu0 0.0
    %12737 = vmatpush1.msra.mxu0 0.0
    %12738 = vmatprep.subr.mxu0 0.0
    %12739 = vmatpush1.msra.mxu0 0.0
    %12740 = vmatprep.subr.mxu0 0.0
    %12741 = vmatpush1.msra.mxu0 0.0
    %12742 = vmatprep.subr.mxu0 0.0
    %12743 = vmatpush1.msra.mxu0 0.0
    %12744 = vmatprep.subr.mxu0 0.0
    %12745 = vmatpush1.msra.mxu0 0.0
    %12746 = vmatprep.subr.mxu0 0.0
    %12747 = vmatpush1.msra.mxu0 %v6531
    %12748 = vmatprep.subr.mxu0 0.0
    %12749 = vmatpush1.msra.mxu0 %v6530
    %12750 = vmatprep.subr.mxu0 0.0
    %12751 = vmatpush1.msra.mxu0 %v6529
    %12752 = vmatprep.subr.mxu0 0.0
    %12753 = vmatpush1.msra.mxu0 %v6528
    %12754 = vmatprep.subr.mxu0 0.0
    %12755 = vmatpush2.msra.mxu0 0.0
    %12756 = vmatprep.subr.mxu0 0.0
    %12757 = vmatpush2.msra.mxu0 0.0
    %12758 = vmatprep.subr.mxu0 0.0
    %12759 = vmatpush2.msra.mxu0 0.0
    %12760 = vmatprep.subr.mxu0 0.0
    %12761 = vmatpush2.msra.mxu0 0.0
    %12762 = vmatprep.subr.mxu0 0.0
    %12763 = vmatpush2.msra.mxu0 0.0
    %12764 = vmatprep.subr.mxu0 0.0
    %12765 = vmatpush2.msra.mxu0 0.0
    %12766 = vmatprep.subr.mxu0 0.0
    %12767 = vmatpush2.msra.mxu0 0.0
    %12768 = vmatprep.subr.mxu0 0.0
    %12769 = vmatpush2.msra.mxu0 0.0
    %12770 = vmatprep.subr.mxu0 0.0
    %12771 = vmatpush2.msra.mxu0 0.0
    %12772 = vmatprep.subr.mxu0 0.0
    %12773 = vmatpush2.msra.mxu0 0.0
    %12774 = vmatprep.subr.mxu0 0.0
    %12775 = vmatpush2.msra.mxu0 0.0
    %12776 = vmatprep.subr.mxu0 0.0
    %12777 = vmatpush2.msra.mxu0 0.0
    %12778 = vmatprep.subr.mxu0 0.0
    %12779 = vmatpush2.msra.mxu0 0.0
    %12780 = vmatprep.subr.mxu0 0.0
    %12781 = vmatpush2.msra.mxu0 0.0
    %12782 = vmatprep.subr.mxu0 0.0
    %12783 = vmatpush2.msra.mxu0 0.0
    %12784 = vmatprep.subr.mxu0 0.0
    %12785 = vmatpush2.msra.mxu0 0.0
    %12786 = vmatprep.mubr.f32.mxu0 0.0
    %12787 = vmatmul.mubr.f32.gmra.mxu0 %v12718
    %v12788 = vpop.f32.mrf.mxu0
    %v12789 = vadd.f32 %v6535, %v12788
    %v12790 = vpop.f32.mrf.mxu0
    %12791 = vmatprep.mubr.f32.mxu0 0.0
    %12792 = vmatmul.mubr.f32.gmra.mxu0 %v12720
    %v12793 = vpop.f32.mrf.mxu0
    %v12794 = vadd.f32 %v6535, %v12793
    %v12795 = vpop.f32.mrf.mxu0
    %12796 = vdwg.mxu0
    %v12797 = vmul.f32 %v12789, 0.5
    %v12798 = vmul.f32 %v12794, 0.5
    %v12799 = vmul.f32 %v12789, 0.70710677
    %v12800 = vmul.f32 %v12794, 0.70710677
    %v12801 = verf.f32.pop %v12799
    %v12802 = verf.f32.pop %v12800
    %v12803 = vadd.f32 %v12801, 1.0
    %v12804 = vadd.f32 %v12802, 1.0
    %v12805 = vmul.f32 %v12797, %v12803
    %v12806 = vmul.f32 %v12798, %v12804
    %12807 = vmatprep.subr.mxu0 0.0
    %12808 = vmatpush1.msra.mxu0 %v6684
    %12809 = vmatprep.subr.mxu0 0.0
    %12810 = vmatpush1.msra.mxu0 %v6683
    %12811 = vmatprep.subr.mxu0 0.0
    %12812 = vmatpush1.msra.mxu0 %v6682
    %12813 = vmatprep.subr.mxu0 0.0
    %12814 = vmatpush1.msra.mxu0 %v6681
    %12815 = vmatprep.subr.mxu0 0.0
    %12816 = vmatpush1.msra.mxu0 %v6680
    %12817 = vmatprep.subr.mxu0 0.0
    %12818 = vmatpush1.msra.mxu0 %v6679
    %12819 = vmatprep.subr.mxu0 0.0
    %12820 = vmatpush1.msra.mxu0 %v6678
    %12821 = vmatprep.subr.mxu0 0.0
    %12822 = vmatpush1.msra.mxu0 %v6677
    %12823 = vmatprep.subr.mxu0 0.0
    %12824 = vmatpush1.msra.mxu0 %v6676
    %12825 = vmatprep.subr.mxu0 0.0
    %12826 = vmatpush1.msra.mxu0 %v6675
    %12827 = vmatprep.subr.mxu0 0.0
    %12828 = vmatpush1.msra.mxu0 %v6674
    %12829 = vmatprep.subr.mxu0 0.0
    %12830 = vmatpush1.msra.mxu0 %v6673
    %12831 = vmatprep.subr.mxu0 0.0
    %12832 = vmatpush1.msra.mxu0 %v6672
    %12833 = vmatprep.subr.mxu0 0.0
    %12834 = vmatpush1.msra.mxu0 %v6671
    %12835 = vmatprep.subr.mxu0 0.0
    %12836 = vmatpush1.msra.mxu0 %v6670
    %12837 = vmatprep.subr.mxu0 0.0
    %12838 = vmatpush1.msra.mxu0 %v6669
    %12839 = vmatprep.subr.mxu0 0.0
    %12840 = vmatpush2.msra.mxu0 0.0
    %12841 = vmatprep.subr.mxu0 0.0
    %12842 = vmatpush2.msra.mxu0 0.0
    %12843 = vmatprep.subr.mxu0 0.0
    %12844 = vmatpush2.msra.mxu0 0.0
    %12845 = vmatprep.subr.mxu0 0.0
    %12846 = vmatpush2.msra.mxu0 0.0
    %12847 = vmatprep.subr.mxu0 0.0
    %12848 = vmatpush2.msra.mxu0 0.0
    %12849 = vmatprep.subr.mxu0 0.0
    %12850 = vmatpush2.msra.mxu0 0.0
    %12851 = vmatprep.subr.mxu0 0.0
    %12852 = vmatpush2.msra.mxu0 0.0
    %12853 = vmatprep.subr.mxu0 0.0
    %12854 = vmatpush2.msra.mxu0 0.0
    %12855 = vmatprep.subr.mxu0 0.0
    %12856 = vmatpush2.msra.mxu0 0.0
    %12857 = vmatprep.subr.mxu0 0.0
    %12858 = vmatpush2.msra.mxu0 0.0
    %12859 = vmatprep.subr.mxu0 0.0
    %12860 = vmatpush2.msra.mxu0 0.0
    %12861 = vmatprep.subr.mxu0 0.0
    %12862 = vmatpush2.msra.mxu0 0.0
    %12863 = vmatprep.subr.mxu0 0.0
    %12864 = vmatpush2.msra.mxu0 0.0
    %12865 = vmatprep.subr.mxu0 0.0
    %12866 = vmatpush2.msra.mxu0 0.0
    %12867 = vmatprep.subr.mxu0 0.0
    %12868 = vmatpush2.msra.mxu0 0.0
    %12869 = vmatprep.subr.mxu0 0.0
    %12870 = vmatpush2.msra.mxu0 0.0
    %12871 = vmatprep.mubr.f32.mxu0 0.0
    %12872 = vmatmul.mubr.f32.gmra.mxu0 %v12805
    %v12873 = vpop.f32.mrf.mxu0
    %v12874 = vadd.f32 0.0, %v12873
    %v12875 = vpop.f32.mrf.mxu0
    %12876 = vmatprep.mubr.f32.mxu0 0.0
    %12877 = vmatmul.mubr.f32.gmra.mxu0 %v12806
    %v12878 = vpop.f32.mrf.mxu0
    %v12879 = vadd.f32 0.0, %v12878
    %v12880 = vpop.f32.mrf.mxu0
    %12881 = vdwg.mxu0
    %v12884 = vrot.slane %v12874, 1
    %v12885 = vrot.slane %v12874, 2
    %v12886 = vrot.slane %v12874, 3
    %v12887 = vrot.slane %v12874, 4
    %v12888 = vrot.slane %v12874, 5
    %v12889 = vrot.slane %v12874, 6
    %v12890 = vrot.slane %v12874, 7
    %v12891 = vrot.slane %v12879, 1
    %v12892 = vrot.slane %v12879, 2
    %v12893 = vrot.slane %v12879, 3
    %v12894 = vrot.slane %v12879, 4
    %v12895 = vrot.slane %v12879, 5
    %v12896 = vrot.slane %v12879, 6
    %v12897 = vrot.slane %v12879, 7
    %v12914 = vadd.f32 %v6244, %v12884
    %v12915 = vadd.f32 %v6245, %v12885
    %v12916 = vadd.f32 %v6246, %v12886
    %v12917 = vadd.f32 %v6247, %v12887
    %v12918 = vadd.f32 %v6248, %v12888
    %v12919 = vadd.f32 %v6249, %v12889
    %v12920 = vadd.f32 %v6250, %v12890
    %v12921 = vadd.f32 %v6251, %v12874
    %v12922 = vadd.f32 %v6252, %v12891
    %v12923 = vadd.f32 %v6253, %v12892
    %v12924 = vadd.f32 %v6254, %v12893
    %v12925 = vadd.f32 %v6255, %v12894
    %v12926 = vadd.f32 %v6256, %v12895
    %v12927 = vadd.f32 %v6257, %v12896
    %v12928 = vadd.f32 %v6258, %v12897
    %v12929 = vadd.f32 %v6259, %v12879
    %v12930 = vadd.f32 %v12914, %v6811
    %v12931 = vadd.f32 %v12915, %v6811
    %v12932 = vadd.f32 %v12916, %v6811
    %v12933 = vadd.f32 %v12917, %v6811
    %v12934 = vadd.f32 %v12918, %v6811
    %v12935 = vadd.f32 %v12919, %v6811
    %v12936 = vadd.f32 %v12920, %v6811
    %v12937 = vadd.f32 %v12921, %v6811
    %v12938 = vadd.f32 %v12922, %v6811
    %v12939 = vadd.f32 %v12923, %v6811
    %v12940 = vadd.f32 %v12924, %v6811
    %v12941 = vadd.f32 %v12925, %v6811
    %v12942 = vadd.f32 %v12926, %v6811
    %v12943 = vadd.f32 %v12927, %v6811
    %v12944 = vadd.f32 %v12928, %v6811
    %v12945 = vadd.f32 %v12929, %v6811
    %v12962 = vrot.slane %v12931, 7
    %v12963 = vrot.slane %v12932, 6
    %v12964 = vsel %vm272, %v12963, %v12962
    %v12965 = vrot.slane %v12933, 5
    %v12966 = vsel %vm275, %v12965, %v12964
    %v12967 = vrot.slane %v12934, 4
    %v12968 = vsel %vm278, %v12967, %v12966
    %v12969 = vrot.slane %v12935, 3
    %v12970 = vsel %vm281, %v12969, %v12968
    %v12971 = vrot.slane %v12936, 2
    %v12972 = vsel %vm284, %v12971, %v12970
    %v12973 = vrot.slane %v12937, 1
    %v12974 = vsel %vm287, %v12973, %v12972
    %v12975 = vsel %vm290, %v12938, %v12974
    %v12976 = vrot.slane %v12939, 7
    %v12977 = vrot.slane %v12940, 6
    %v12978 = vsel %vm272, %v12977, %v12976
    %v12979 = vrot.slane %v12941, 5
    %v12980 = vsel %vm275, %v12979, %v12978
    %v12981 = vrot.slane %v12942, 4
    %v12982 = vsel %vm278, %v12981, %v12980
    %v12983 = vrot.slane %v12943, 3
    %v12984 = vsel %vm281, %v12983, %v12982
    %v12985 = vrot.slane %v12944, 2
    %v12986 = vsel %vm284, %v12985, %v12984
    %v12987 = vrot.slane %v12945, 1
    %v12988 = vsel %vm287, %v12987, %v12986
    %v12992 = vsel %vm1748, %v12930, 0.0
    %12993 = vadd.xlane.f32.xlu0 %v12992
    %v12994 = vpop.xlane.xlu0 %12993
    %v12995 = vsel %vm308, %v12975, 0.0
    %12996 = vadd.xlane.f32.xlu0 %v12995
    %v12997 = vpop.xlane.xlu0 %12996
    %v12998 = vsel %vm1755, %v12988, 0.0
    %12999 = vadd.xlane.f32.xlu0 %v12998
    %v13000 = vpop.xlane.xlu0 %12999
    %v13001 = vmul.f32 %v12994, %v315
    %v13002 = vmul.f32 %v12997, %v315
    %v13003 = vmul.f32 %v13000, %v315
    %v13004 = vmul.f32 %v12930, %v12930
    %v13005 = vmul.f32 %v12931, %v12931
    %v13006 = vmul.f32 %v12932, %v12932
    %v13007 = vmul.f32 %v12933, %v12933
    %v13008 = vmul.f32 %v12934, %v12934
    %v13009 = vmul.f32 %v12935, %v12935
    %v13010 = vmul.f32 %v12936, %v12936
    %v13011 = vmul.f32 %v12937, %v12937
    %v13012 = vmul.f32 %v12938, %v12938
    %v13013 = vmul.f32 %v12939, %v12939
    %v13014 = vmul.f32 %v12940, %v12940
    %v13015 = vmul.f32 %v12941, %v12941
    %v13016 = vmul.f32 %v12942, %v12942
    %v13017 = vmul.f32 %v12943, %v12943
    %v13018 = vmul.f32 %v12944, %v12944
    %v13019 = vmul.f32 %v12945, %v12945
    %v13036 = vrot.slane %v13005, 7
    %v13037 = vrot.slane %v13006, 6
    %v13038 = vsel %vm272, %v13037, %v13036
    %v13039 = vrot.slane %v13007, 5
    %v13040 = vsel %vm275, %v13039, %v13038
    %v13041 = vrot.slane %v13008, 4
    %v13042 = vsel %vm278, %v13041, %v13040
    %v13043 = vrot.slane %v13009, 3
    %v13044 = vsel %vm281, %v13043, %v13042
    %v13045 = vrot.slane %v13010, 2
    %v13046 = vsel %vm284, %v13045, %v13044
    %v13047 = vrot.slane %v13011, 1
    %v13048 = vsel %vm287, %v13047, %v13046
    %v13049 = vsel %vm290, %v13012, %v13048
    %v13050 = vrot.slane %v13013, 7
    %v13051 = vrot.slane %v13014, 6
    %v13052 = vsel %vm272, %v13051, %v13050
    %v13053 = vrot.slane %v13015, 5
    %v13054 = vsel %vm275, %v13053, %v13052
    %v13055 = vrot.slane %v13016, 4
    %v13056 = vsel %vm278, %v13055, %v13054
    %v13057 = vrot.slane %v13017, 3
    %v13058 = vsel %vm281, %v13057, %v13056
    %v13059 = vrot.slane %v13018, 2
    %v13060 = vsel %vm284, %v13059, %v13058
    %v13061 = vrot.slane %v13019, 1
    %v13062 = vsel %vm287, %v13061, %v13060
    %v13066 = vsel %vm1748, %v13004, 0.0
    %13067 = vadd.xlane.f32.xlu0 %v13066
    %v13068 = vpop.xlane.xlu0 %13067
    %v13069 = vsel %vm308, %v13049, 0.0
    %13070 = vadd.xlane.f32.xlu0 %v13069
    %v13071 = vpop.xlane.xlu0 %13070
    %v13072 = vsel %vm1755, %v13062, 0.0
    %13073 = vadd.xlane.f32.xlu0 %v13072
    %v13074 = vpop.xlane.xlu0 %13073
    %v13075 = vmul.f32 %v13068, %v315
    %v13076 = vmul.f32 %v13071, %v315
    %v13077 = vmul.f32 %v13074, %v315
    %v13081 = vrot.slane %v13002, 1
    %v13082 = vrot.slane %v13002, 2
    %v13083 = vrot.slane %v13002, 3
    %v13084 = vrot.slane %v13002, 4
    %v13085 = vrot.slane %v13002, 5
    %v13086 = vrot.slane %v13002, 6
    %v13087 = vrot.slane %v13002, 7
    %v13088 = vrot.slane %v13003, 1
    %v13089 = vrot.slane %v13003, 2
    %v13090 = vrot.slane %v13003, 3
    %v13091 = vrot.slane %v13003, 4
    %v13092 = vrot.slane %v13003, 5
    %v13093 = vrot.slane %v13003, 6
    %v13094 = vrot.slane %v13003, 7
    %v13111 = vsub.f32 %v12930, %v13001
    %v13112 = vsub.f32 %v12931, %v13081
    %v13113 = vsub.f32 %v12932, %v13082
    %v13114 = vsub.f32 %v12933, %v13083
    %v13115 = vsub.f32 %v12934, %v13084
    %v13116 = vsub.f32 %v12935, %v13085
    %v13117 = vsub.f32 %v12936, %v13086
    %v13118 = vsub.f32 %v12937, %v13087
    %v13119 = vsub.f32 %v12938, %v13002
    %v13120 = vsub.f32 %v12939, %v13088
    %v13121 = vsub.f32 %v12940, %v13089
    %v13122 = vsub.f32 %v12941, %v13090
    %v13123 = vsub.f32 %v12942, %v13091
    %v13124 = vsub.f32 %v12943, %v13092
    %v13125 = vsub.f32 %v12944, %v13093
    %v13126 = vsub.f32 %v12945, %v13094
    %v13127 = vmul.f32 %v13001, %v13001
    %v13128 = vmul.f32 %v13002, %v13002
    %v13129 = vmul.f32 %v13003, %v13003
    %v13130 = vsub.f32 %v13075, %v13127
    %v13131 = vsub.f32 %v13076, %v13128
    %v13132 = vsub.f32 %v13077, %v13129
    %v13133 = vadd.f32 %v13130, 1e-05
    %v13134 = vadd.f32 %v13131, 1e-05
    %v13135 = vadd.f32 %v13132, 1e-05
    %v13136 = vrsqrt.pop %v13133
    %v13137 = vrsqrt.pop %v13134
    %v13138 = vrsqrt.pop %v13135
    %v13142 = vrot.slane %v13137, 1
    %v13143 = vrot.slane %v13137, 2
    %v13144 = vrot.slane %v13137, 3
    %v13145 = vrot.slane %v13137, 4
    %v13146 = vrot.slane %v13137, 5
    %v13147 = vrot.slane %v13137, 6
    %v13148 = vrot.slane %v13137, 7
    %v13149 = vrot.slane %v13138, 1
    %v13150 = vrot.slane %v13138, 2
    %v13151 = vrot.slane %v13138, 3
    %v13152 = vrot.slane %v13138, 4
    %v13153 = vrot.slane %v13138, 5
    %v13154 = vrot.slane %v13138, 6
    %v13155 = vrot.slane %v13138, 7
    %v13172 = vmul.f32 %v13111, %v13136
    %v13173 = vmul.f32 %v13112, %v13142
    %v13174 = vmul.f32 %v13113, %v13143
    %v13175 = vmul.f32 %v13114, %v13144
    %v13176 = vmul.f32 %v13115, %v13145
    %v13177 = vmul.f32 %v13116, %v13146
    %v13178 = vmul.f32 %v13117, %v13147
    %v13179 = vmul.f32 %v13118, %v13148
    %v13180 = vmul.f32 %v13119, %v13137
    %v13181 = vmul.f32 %v13120, %v13149
    %v13182 = vmul.f32 %v13121, %v13150
    %v13183 = vmul.f32 %v13122, %v13151
    %v13184 = vmul.f32 %v13123, %v13152
    %v13185 = vmul.f32 %v13124, %v13153
    %v13186 = vmul.f32 %v13125, %v13154
    %v13187 = vmul.f32 %v13126, %v13155
    %v13188 = vmul.f32 %v13172, %v7059
    %v13189 = vmul.f32 %v13173, %v7059
    %v13190 = vmul.f32 %v13174, %v7059
    %v13191 = vmul.f32 %v13175, %v7059
    %v13192 = vmul.f32 %v13176, %v7059
    %v13193 = vmul.f32 %v13177, %v7059
    %v13194 = vmul.f32 %v13178, %v7059
    %v13195 = vmul.f32 %v13179, %v7059
    %v13196 = vmul.f32 %v13180, %v7059
    %v13197 = vmul.f32 %v13181, %v7059
    %v13198 = vmul.f32 %v13182, %v7059
    %v13199 = vmul.f32 %v13183, %v7059
    %v13200 = vmul.f32 %v13184, %v7059
    %v13201 = vmul.f32 %v13185, %v7059
    %v13202 = vmul.f32 %v13186, %v7059
    %v13203 = vmul.f32 %v13187, %v7059
    %v13204 = vadd.f32 %v13188, %v7079
    %v13205 = vadd.f32 %v13189, %v7079
    %v13206 = vadd.f32 %v13190, %v7079
    %v13207 = vadd.f32 %v13191, %v7079
    %v13208 = vadd.f32 %v13192, %v7079
    %v13209 = vadd.f32 %v13193, %v7079
    %v13210 = vadd.f32 %v13194, %v7079
    %v13211 = vadd.f32 %v13195, %v7079
    %v13212 = vadd.f32 %v13196, %v7079
    %v13213 = vadd.f32 %v13197, %v7079
    %v13214 = vadd.f32 %v13198, %v7079
    %v13215 = vadd.f32 %v13199, %v7079
    %v13216 = vadd.f32 %v13200, %v7079
    %v13217 = vadd.f32 %v13201, %v7079
    %v13218 = vadd.f32 %v13202, %v7079
    %v13219 = vadd.f32 %v13203, %v7079
    %v13236 = vrot.slane %v13204, 7
    %v13237 = vrot.slane %v13205, 7
    %v13238 = vrot.slane %v13206, 7
    %v13239 = vrot.slane %v13207, 7
    %v13240 = vrot.slane %v13208, 7
    %v13241 = vrot.slane %v13209, 7
    %v13242 = vrot.slane %v13210, 7
    %v13243 = vrot.slane %v13211, 7
    %v13244 = vrot.slane %v13212, 7
    %v13245 = vrot.slane %v13213, 7
    %v13246 = vrot.slane %v13214, 7
    %v13247 = vrot.slane %v13215, 7
    %v13248 = vrot.slane %v13216, 7
    %v13249 = vrot.slane %v13217, 7
    %v13250 = vrot.slane %v13218, 7
    %v13251 = vrot.slane %v13219, 7
    %v13268 = vadd.f32 %v12384, %v13236
    %v13269 = vadd.f32 %v12385, %v13237
    %v13270 = vadd.f32 %v12386, %v13238
    %v13271 = vadd.f32 %v12387, %v13239
    %v13272 = vadd.f32 %v12388, %v13240
    %v13273 = vadd.f32 %v12389, %v13241
    %v13274 = vadd.f32 %v12390, %v13242
    %v13275 = vadd.f32 %v12391, %v13243
    %v13276 = vadd.f32 %v12392, %v13244
    %v13277 = vadd.f32 %v12393, %v13245
    %v13278 = vadd.f32 %v12394, %v13246
    %v13279 = vadd.f32 %v12395, %v13247
    %v13280 = vadd.f32 %v12396, %v13248
    %v13281 = vadd.f32 %v12397, %v13249
    %v13282 = vadd.f32 %v12398, %v13250
    %v13283 = vadd.f32 %v12399, %v13251
    %v13284 = vmul.f32 %v13268, 0.125
    %v13285 = vmul.f32 %v13269, 0.125
    %v13286 = vmul.f32 %v13270, 0.125
    %v13287 = vmul.f32 %v13271, 0.125
    %v13288 = vmul.f32 %v13272, 0.125
    %v13289 = vmul.f32 %v13273, 0.125
    %v13290 = vmul.f32 %v13274, 0.125
    %v13291 = vmul.f32 %v13275, 0.125
    %v13292 = vmul.f32 %v13276, 0.125
    %v13293 = vmul.f32 %v13277, 0.125
    %v13294 = vmul.f32 %v13278, 0.125
    %v13295 = vmul.f32 %v13279, 0.125
    %v13296 = vmul.f32 %v13280, 0.125
    %v13297 = vmul.f32 %v13281, 0.125
    %v13298 = vmul.f32 %v13282, 0.125
    %v13299 = vmul.f32 %v13283, 0.125
    %v13300 = vld [vmem:[%s7] sm:$0xff]
    %v13301 = vld [vmem:[%s7 + $0x8] sm:$0xff]
    %v13302 = vld [vmem:[%s7 + $0x10] sm:$0xff]
    %v13303 = vld [vmem:[%s7 + $0x18] sm:$0xff]
    %v13304 = vlaneseq
    %v13305 = vshrl.u32 %v13304, 7
    %v13306 = vsub.s32 0, %v13305
    %v13307 = vrot.slane %v44, %v13306
    %v13324 = vrot.slane %v13285, 7
    %v13325 = vsel %vm272, %v13324, %v13284
    %v13326 = vrot.slane %v13286, 6
    %v13327 = vsel %vm275, %v13326, %v13325
    %v13328 = vrot.slane %v13287, 5
    %v13329 = vsel %vm278, %v13328, %v13327
    %v13330 = vrot.slane %v13288, 4
    %v13331 = vsel %vm281, %v13330, %v13329
    %v13332 = vrot.slane %v13289, 3
    %v13333 = vsel %vm284, %v13332, %v13331
    %v13334 = vrot.slane %v13290, 2
    %v13335 = vsel %vm287, %v13334, %v13333
    %v13336 = vrot.slane %v13291, 1
    %v13337 = vsel %vm290, %v13336, %v13335
    %v13338 = vrot.slane %v13293, 7
    %v13339 = vsel %vm272, %v13338, %v13292
    %v13340 = vrot.slane %v13294, 6
    %v13341 = vsel %vm275, %v13340, %v13339
    %v13342 = vrot.slane %v13295, 5
    %v13343 = vsel %vm278, %v13342, %v13341
    %v13344 = vrot.slane %v13296, 4
    %v13345 = vsel %vm281, %v13344, %v13343
    %v13346 = vrot.slane %v13297, 3
    %v13347 = vsel %vm284, %v13346, %v13345
    %v13348 = vrot.slane %v13298, 2
    %v13349 = vsel %vm287, %v13348, %v13347
    %v13350 = vrot.slane %v13299, 1
    %v13351 = vsel %vm290, %v13350, %v13349
    %v13352 = vsel %vm308, %v13337, 0
    %v13354 = vsel %vm308, %v13351, 0
    %13356 = vmatprep.subr.mxu0 0.0
    %13357 = vmatpush1.msra.mxu0 0.0
    %13358 = vmatprep.subr.mxu0 0.0
    %13359 = vmatpush1.msra.mxu0 0.0
    %13360 = vmatprep.subr.mxu0 0.0
    %13361 = vmatpush1.msra.mxu0 0.0
    %13362 = vmatprep.subr.mxu0 0.0
    %13363 = vmatpush1.msra.mxu0 0.0
    %13364 = vmatprep.subr.mxu0 0.0
    %13365 = vmatpush1.msra.mxu0 0.0
    %13366 = vmatprep.subr.mxu0 0.0
    %13367 = vmatpush1.msra.mxu0 0.0
    %13368 = vmatprep.subr.mxu0 0.0
    %13369 = vmatpush1.msra.mxu0 0.0
    %13370 = vmatprep.subr.mxu0 0.0
    %13371 = vmatpush1.msra.mxu0 0.0
    %13372 = vmatprep.subr.mxu0 0.0
    %13373 = vmatpush1.msra.mxu0 0.0
    %13374 = vmatprep.subr.mxu0 0.0
    %13375 = vmatpush1.msra.mxu0 0.0
    %13376 = vmatprep.subr.mxu0 0.0
    %13377 = vmatpush1.msra.mxu0 0.0
    %13378 = vmatprep.subr.mxu0 0.0
    %13379 = vmatpush1.msra.mxu0 0.0
    %13380 = vmatprep.subr.mxu0 0.0
    %13381 = vmatpush1.msra.mxu0 %v13303
    %13382 = vmatprep.subr.mxu0 0.0
    %13383 = vmatpush1.msra.mxu0 %v13302
    %13384 = vmatprep.subr.mxu0 0.0
    %13385 = vmatpush1.msra.mxu0 %v13301
    %13386 = vmatprep.subr.mxu0 0.0
    %13387 = vmatpush1.msra.mxu0 %v13300
    %13388 = vmatprep.subr.mxu0 0.0
    %13389 = vmatpush2.msra.mxu0 0.0
    %13390 = vmatprep.subr.mxu0 0.0
    %13391 = vmatpush2.msra.mxu0 0.0
    %13392 = vmatprep.subr.mxu0 0.0
    %13393 = vmatpush2.msra.mxu0 0.0
    %13394 = vmatprep.subr.mxu0 0.0
    %13395 = vmatpush2.msra.mxu0 0.0
    %13396 = vmatprep.subr.mxu0 0.0
    %13397 = vmatpush2.msra.mxu0 0.0
    %13398 = vmatprep.subr.mxu0 0.0
    %13399 = vmatpush2.msra.mxu0 0.0
    %13400 = vmatprep.subr.mxu0 0.0
    %13401 = vmatpush2.msra.mxu0 0.0
    %13402 = vmatprep.subr.mxu0 0.0
    %13403 = vmatpush2.msra.mxu0 0.0
    %13404 = vmatprep.subr.mxu0 0.0
    %13405 = vmatpush2.msra.mxu0 0.0
    %13406 = vmatprep.subr.mxu0 0.0
    %13407 = vmatpush2.msra.mxu0 0.0
    %13408 = vmatprep.subr.mxu0 0.0
    %13409 = vmatpush2.msra.mxu0 0.0
    %13410 = vmatprep.subr.mxu0 0.0
    %13411 = vmatpush2.msra.mxu0 0.0
    %13412 = vmatprep.subr.mxu0 0.0
    %13413 = vmatpush2.msra.mxu0 0.0
    %13414 = vmatprep.subr.mxu0 0.0
    %13415 = vmatpush2.msra.mxu0 0.0
    %13416 = vmatprep.subr.mxu0 0.0
    %13417 = vmatpush2.msra.mxu0 0.0
    %13418 = vmatprep.subr.mxu0 0.0
    %13419 = vmatpush2.msra.mxu0 0.0
    %13420 = vmatprep.mubr.f32.mxu0 0.0
    %13421 = vmatmul.mubr.f32.gmra.mxu0 %v13352
    %v13422 = vpop.f32.mrf.mxu0
    %v13423 = vadd.f32 %v13307, %v13422
    %v13424 = vpop.f32.mrf.mxu0
    %13425 = vmatprep.mubr.f32.mxu0 0.0
    %13426 = vmatmul.mubr.f32.gmra.mxu0 %v13354
    %v13427 = vpop.f32.mrf.mxu0
    %v13428 = vadd.f32 %v13307, %v13427
    %v13429 = vpop.f32.mrf.mxu0
    %13430 = vdwg.mxu0
    %13431 = vst [vmem:[#allocation5] sm:$0xff] %v13423
    %13432 = vst [vmem:[#allocation5 + $0x8] sm:$0xff] %v13428
    // Predicated region
    $region38: #{tpu_custom_call.1} parent=1 // pred_check
      _
    $region39: #{tpu_custom_call.1} parent=1 // pred_check_branch
      %13434 = sbr.rel (0) target = $region41
    $region40: #{tpu_custom_call.1} parent=1 // pred_region
      %s13436 = ssub.s32 256, 256
      %13437 = vsyncadd [#allocation3], %s13436
      %s13438 = sshll.u32 [#allocation5], 4
      %s13439 = int_to_ptr.vmem [resolvable:$true] %s13438
      %13444 = dma.vmem_to_hbm [thread:$0]  %s13439, 256, %s8, [#allocation3], 128, 128, 8
    $region41: #{tpu_custom_call.1} parent=1 // pred_fallthru
      _
    // Predicated region
    $region42: #{tpu_custom_call.1} parent=1 // pred_check
      _
    $region43: #{tpu_custom_call.1} parent=1 // pred_check_branch
      %13446 = sbr.rel (0) target = $region45
    $region44: #{tpu_custom_call.1} parent=1 // pred_region
      %13447 = dma.done [#allocation3], 256
    $region45: #{tpu_custom_call.1} parent=1 // pred_fallthru
      _
    %13448 = vsyncpa [#allocation3], 1
    %13449 = vsyncpa [#allocation4], 1

</llo_original>
